<compile_context>
chip_gen: v7x
topology: tpu7x:2x2x1
jax: 0.10.0
libtpu: 0.0.40
codegen_flags: <defaults>
</compile_context>

<pallas_src>
import functools

import jax
import jax.numpy as jnp
from jax import lax
from jax.experimental import pallas as pl
from jax.experimental.pallas import tpu as pltpu

EPS = 1e-5
CPAD = 128  # lane-dense channel padding


# ----------------------------------------------------------------------------
# Fused kernel: 4 x (conv -> BN(train) -> ReLU), everything resident in VMEM.
# ----------------------------------------------------------------------------
def _encoder_kernel(x1_ref, w1_ref, g1_ref, b1_ref,
                    s2_ref, w2_ref, g2_ref, b2_ref,
                    s3_ref, w3_ref, g3_ref, b3_ref,
                    s4_ref, w4_ref, g4_ref, b4_ref,
                    o_ref):
    def bn_relu(y, g, b):
        # One-pass batch stats: mean and E[y^2] over the (n, h, w) rows.
        inv_m = 1.0 / y.shape[0]
        mean = jnp.sum(y, axis=0, keepdims=True) * inv_m
        meansq = jnp.sum(y * y, axis=0, keepdims=True) * inv_m
        var = jnp.maximum(meansq - mean * mean, 0.0)      # biased variance
        y_hat = (y - mean) * lax.rsqrt(var + EPS)          # rsqrt -> EUP slot
        return jnp.maximum(g * y_hat + b, 0.0)

    # ---- layer 1: host-provided im2col patches, one lane-dense matmul ------
    f = bn_relu(
        jnp.dot(x1_ref[...], w1_ref[...], preferred_element_type=jnp.float32),
        g1_ref[...], b1_ref[...])

    # ---- layers 2..4: in-kernel stride-2 gather via selection matmuls ------
    for s_ref, w_ref, g_ref, b_ref in ((s2_ref, w2_ref, g2_ref, b2_ref),
                                       (s3_ref, w3_ref, g3_ref, b3_ref),
                                       (s4_ref, w4_ref, g4_ref, b4_ref)):
        m_out = s_ref.shape[1]
        acc = jnp.zeros((m_out, CPAD), jnp.float32)
        for t in range(9):                                 # static unroll (kh, kw)
            xt = jnp.dot(s_ref[t], f, preferred_element_type=jnp.float32)
            acc = acc + jnp.dot(xt, w_ref[t], preferred_element_type=jnp.float32)
        f = bn_relu(acc, g_ref[...], b_ref[...])

    o_ref[...] = f


# ----------------------------------------------------------------------------
# One-time preparation: padded weights/affines + 0/1 gather matrices.
# ----------------------------------------------------------------------------
def _pad_to(x, shape):
    return jnp.pad(x, [(0, s - d) for d, s in zip(x.shape, shape)])


def _out_hw(h, w):
    # 3x3 conv, stride 2, padding 1
    return (h - 1) // 2 + 1, (w - 1) // 2 + 1


def _make_gather(n_batch, hi, wi, ho, wo):
    """(9, N*Ho*Wo, N*Hi*Wi) 0/1 matrices: tap t of a 3x3/stride-2/pad-1 conv."""
    n = jnp.arange(n_batch).reshape(n_batch, 1, 1)
    oh = jnp.arange(ho).reshape(1, ho, 1)
    ow = jnp.arange(wo).reshape(1, 1, wo)
    col = jnp.arange(n_batch * hi * wi)
    taps = []
    for kh in range(3):
        for kw in range(3):
            ih = 2 * oh + kh - 1
            iw = 2 * ow + kw - 1
            valid = (ih >= 0) & (ih < hi) & (iw >= 0) & (iw < wi)
            m_in = (n * hi + jnp.clip(ih, 0, hi - 1)) * wi + jnp.clip(iw, 0, wi - 1)
            m_in = jnp.broadcast_to(m_in, (n_batch, ho, wo)).reshape(-1)
            valid = jnp.broadcast_to(valid, (n_batch, ho, wo)).reshape(-1)
            sel = (m_in[:, None] == col[None, :]) & valid[:, None]
            taps.append(sel.astype(jnp.float32))
    return jnp.stack(taps, axis=0)


def prepare_encoder(params, x_shape):
    """Hoists all per-layer reshapes / padding / gather-matrix construction."""
    n_batch, _, h0, w0 = x_shape
    spatial = [(h0, w0)]
    for _ in range(4):
        spatial.append(_out_hw(*spatial[-1]))

    # Layer 1: (Cout, Cin, 3, 3) -> (9*Cin, Cout), padded to (128, 128).
    w1, _b1, g1, be1 = params[0]
    cin1, cout1 = w1.shape[1], w1.shape[0]
    w1_col = jnp.transpose(w1, (2, 3, 1, 0)).reshape(9 * cin1, cout1)
    consts = [_pad_to(w1_col, (CPAD, CPAD)),
              _pad_to(g1.reshape(1, -1), (1, CPAD)),
              _pad_to(be1.reshape(1, -1), (1, CPAD))]

    # Layers 2..4: per-tap weights (9, Cin, Cout) padded + gather matrices.
    for layer in range(1, 4):
        w, _b, g, be = params[layer]
        hi, wi = spatial[layer]
        ho, wo = spatial[layer + 1]
        sel = _make_gather(n_batch, hi, wi, ho, wo)
        w_taps = jnp.transpose(w, (2, 3, 1, 0)).reshape(9, w.shape[1], w.shape[0])
        consts += [sel,
                   _pad_to(w_taps, (9, CPAD, CPAD)),
                   _pad_to(g.reshape(1, -1), (1, CPAD)),
                   _pad_to(be.reshape(1, -1), (1, CPAD))]
    return tuple(consts)


# ----------------------------------------------------------------------------
# Forward
# ----------------------------------------------------------------------------
@jax.jit
def encoder_forward(x_nchw, consts):
    n_batch, c0, h0, w0 = x_nchw.shape
    spatial = [(h0, w0)]
    for _ in range(4):
        spatial.append(_out_hw(*spatial[-1]))
    ho1, wo1 = spatial[1]
    ho4, wo4 = spatial[4]
    m4 = n_batch * ho4 * wo4

    # NCHW -> NHWC, then im2col for layer 1 only (tiny, runs on the raw input).
    x = jnp.transpose(x_nchw, (0, 2, 3, 1)).astype(jnp.float32)
    xp = jnp.pad(x, ((0, 0), (1, 1), (1, 1), (0, 0)))
    cols = [xp[:, kh:kh + 2 * ho1:2, kw:kw + 2 * wo1:2, :]
            for kh in range(3) for kw in range(3)]
    x1 = jnp.stack(cols, axis=3).reshape(n_batch * ho1 * wo1, 9 * c0)
    x1 = jnp.pad(x1, ((0, 0), (0, CPAD - 9 * c0)))          # lane-dense K

    inputs = (x1,) + tuple(consts)

    def _full_spec(shape):
        nd = len(shape)
        return pl.BlockSpec(shape, lambda i, _nd=nd: (0,) * _nd)

    out = pl.pallas_call(
        _encoder_kernel,
        out_shape=jax.ShapeDtypeStruct((m4, CPAD), jnp.float32),
        grid=(1,),
        in_specs=[_full_spec(a.shape) for a in inputs],
        out_specs=pl.BlockSpec((m4, CPAD), lambda i: (0, 0)),
        compiler_params=pltpu.CompilerParams(
            dimension_semantics=("arbitrary",)),
    )(*inputs)

    # Final layer has exactly 128 channels (== CPAD): no slicing needed.
    y = out.reshape(n_batch, ho4, wo4, CPAD)
    y = jnp.transpose(y, (0, 3, 1, 2))                      # nn.Flatten is NCHW order
    return y.reshape(n_batch, -1)


# ----------------------------------------------------------------------------
# Parameter init (mirrors nn.Conv2d / nn.BatchNorm2d shapes) and JAX reference.
# ----------------------------------------------------------------------------
def init_params(key):
    layer_channels = [(3, 16), (16, 32), (32, 64), (64, 128)]
    params = []
    for cin, cout in layer_channels:
        key, k1, k2, k3, k4 = jax.random.split(key, 5)
        bound = 1.0 / jnp.sqrt(jnp.float32(cin * 9))
        w = jax.random.uniform(k1, (cout, cin, 3, 3), jnp.float32, -bound, bound)
        b = jax.random.uniform(k2, (cout,), jnp.float32, -bound, bound)
        gamma = 1.0 + 0.1 * jax.random.normal(k3, (cout,), jnp.float32)
        beta = 0.1 * jax.random.normal(k4, (cout,), jnp.float32)
        params.append((w, b, gamma, beta))
    return params


def reference_forward(x_nchw, params):
    """Pure-JAX reference (keeps the conv bias; BN in train mode cancels it)."""
    x = x_nchw.astype(jnp.float32)
    for (w, b, g, beta) in params:
        y = lax.conv_general_dilated(
            x, w, window_strides=(2, 2), padding=((1, 1), (1, 1)),
            dimension_numbers=("NCHW", "OIHW", "NCHW"))
        y = y + b[None, :, None, None]
        mean = jnp.mean(y, axis=(0, 2, 3), keepdims=True)
        var = jnp.mean((y - mean) ** 2, axis=(0, 2, 3), keepdims=True)
        y = (y - mean) * lax.rsqrt(var + EPS)
        y = g[None, :, None, None] * y + beta[None, :, None, None]
        x = jnp.maximum(y, 0.0)
    return x.reshape(x.shape[0], -1)


if __name__ == "__main__":
    key = jax.random.PRNGKey(0)
    key, kx = jax.random.split(key)
    # N=2, Cin=3, 16x16 spatial -> 8 -> 4 -> 2 -> 1, output (2, 128).
    x = jax.random.normal(kx, (2, 3, 16, 16), jnp.float32)
    params = init_params(key)

    consts = prepare_encoder(params, x.shape)
    out = jax.block_until_ready(encoder_forward(x, consts))
    ref = jax.block_until_ready(reference_forward(x, params))

    assert out.shape == (2, 128), out.shape
    max_err = float(jnp.max(jnp.abs(out - ref)))
    assert jnp.allclose(out, ref, atol=3e-4, rtol=3e-4), max_err
    print("KERNEL_OK")
</pallas_src>

<mosaic_0001>
module attributes {stable_mosaic.version = 11 : i64} {
  func.func @_encoder_kernel(%arg0: i32, %arg1: memref<128x128xf32, #tpu.memory_space<vmem>>, %arg2: memref<128x128xf32, #tpu.memory_space<vmem>>, %arg3: memref<1x128xf32, #tpu.memory_space<vmem>>, %arg4: memref<1x128xf32, #tpu.memory_space<vmem>>, %arg5: memref<9x32x128xf32, #tpu.memory_space<vmem>>, %arg6: memref<9x128x128xf32, #tpu.memory_space<vmem>>, %arg7: memref<1x128xf32, #tpu.memory_space<vmem>>, %arg8: memref<1x128xf32, #tpu.memory_space<vmem>>, %arg9: memref<9x8x32xf32, #tpu.memory_space<vmem>>, %arg10: memref<9x128x128xf32, #tpu.memory_space<vmem>>, %arg11: memref<1x128xf32, #tpu.memory_space<vmem>>, %arg12: memref<1x128xf32, #tpu.memory_space<vmem>>, %arg13: memref<9x2x8xf32, #tpu.memory_space<vmem>>, %arg14: memref<9x128x128xf32, #tpu.memory_space<vmem>>, %arg15: memref<1x128xf32, #tpu.memory_space<vmem>>, %arg16: memref<1x128xf32, #tpu.memory_space<vmem>>, %arg17: memref<2x128xf32, #tpu.memory_space<vmem>>) attributes {dimension_semantics = [#tpu.dimension_semantics<arbitrary>], iteration_bounds = array<i64: 1>, scalar_prefetch = 0 : i64, scratch_operands = 0 : i64, tpu.core_type = #tpu.core_type<tc>, window_params = [{pipeline_mode = #tpu.pipeline_mode<synchronous>, transform_indices = @transform_0, window_bounds = array<i64: 128, 128>}, {pipeline_mode = #tpu.pipeline_mode<synchronous>, transform_indices = @transform_1, window_bounds = array<i64: 128, 128>}, {pipeline_mode = #tpu.pipeline_mode<synchronous>, transform_indices = @transform_2, window_bounds = array<i64: 1, 128>}, {pipeline_mode = #tpu.pipeline_mode<synchronous>, transform_indices = @transform_3, window_bounds = array<i64: 1, 128>}, {pipeline_mode = #tpu.pipeline_mode<synchronous>, transform_indices = @transform_4, window_bounds = array<i64: 9, 32, 128>}, {pipeline_mode = #tpu.pipeline_mode<synchronous>, transform_indices = @transform_5, window_bounds = array<i64: 9, 128, 128>}, {pipeline_mode = #tpu.pipeline_mode<synchronous>, transform_indices = @transform_6, window_bounds = array<i64: 1, 128>}, {pipeline_mode = #tpu.pipeline_mode<synchronous>, transform_indices = @transform_7, window_bounds = array<i64: 1, 128>}, {pipeline_mode = #tpu.pipeline_mode<synchronous>, transform_indices = @transform_8, window_bounds = array<i64: 9, 8, 32>}, {pipeline_mode = #tpu.pipeline_mode<synchronous>, transform_indices = @transform_9, window_bounds = array<i64: 9, 128, 128>}, {pipeline_mode = #tpu.pipeline_mode<synchronous>, transform_indices = @transform_10, window_bounds = array<i64: 1, 128>}, {pipeline_mode = #tpu.pipeline_mode<synchronous>, transform_indices = @transform_11, window_bounds = array<i64: 1, 128>}, {pipeline_mode = #tpu.pipeline_mode<synchronous>, transform_indices = @transform_12, window_bounds = array<i64: 9, 2, 8>}, {pipeline_mode = #tpu.pipeline_mode<synchronous>, transform_indices = @transform_13, window_bounds = array<i64: 9, 128, 128>}, {pipeline_mode = #tpu.pipeline_mode<synchronous>, transform_indices = @transform_14, window_bounds = array<i64: 1, 128>}, {pipeline_mode = #tpu.pipeline_mode<synchronous>, transform_indices = @transform_15, window_bounds = array<i64: 1, 128>}, {pipeline_mode = #tpu.pipeline_mode<synchronous>, transform_indices = @transform_16, window_bounds = array<i64: 2, 128>}]} {
    %c0 = arith.constant 0 : index
    %c0_0 = arith.constant 0 : index
    %0 = vector.load %arg1[%c0, %c0_0] : memref<128x128xf32, #tpu.memory_space<vmem>>, vector<128x128xf32>
    %c0_1 = arith.constant 0 : index
    %c0_2 = arith.constant 0 : index
    %1 = vector.load %arg2[%c0_1, %c0_2] : memref<128x128xf32, #tpu.memory_space<vmem>>, vector<128x128xf32>
    %cst = arith.constant dense<0.000000e+00> : vector<128x128xf32>
    %2 = tpu.matmul %0, %1, %cst {dimension_numbers = #tpu.dot_dimension_numbers<[1], [0], [0], [1], [0, 0, 1, 1], [], []>} : vector<128x128xf32>, vector<128x128xf32>, vector<128x128xf32> -> vector<128x128xf32>
    %c0_3 = arith.constant 0 : index
    %c0_4 = arith.constant 0 : index
    %3 = vector.load %arg3[%c0_3, %c0_4] : memref<1x128xf32, #tpu.memory_space<vmem>>, vector<1x128xf32>
    %c0_5 = arith.constant 0 : index
    %c0_6 = arith.constant 0 : index
    %4 = vector.load %arg4[%c0_5, %c0_6] : memref<1x128xf32, #tpu.memory_space<vmem>>, vector<1x128xf32>
    %cst_7 = arith.constant dense<0.000000e+00> : vector<128xf32>
    %5 = vector.multi_reduction <add>, %2, %cst_7 [0] : vector<128x128xf32> to vector<128xf32>
    %6 = vector.shape_cast %5 : vector<128xf32> to vector<1x128xf32>
    %cst_8 = arith.constant 7.812500e-03 : f32
    %7 = vector.broadcast %cst_8 : f32 to vector<1x128xf32>
    %8 = arith.mulf %6, %7 : vector<1x128xf32>
    %9 = arith.mulf %2, %2 : vector<128x128xf32>
    %cst_9 = arith.constant dense<0.000000e+00> : vector<128xf32>
    %10 = vector.multi_reduction <add>, %9, %cst_9 [0] : vector<128x128xf32> to vector<128xf32>
    %11 = vector.shape_cast %10 : vector<128xf32> to vector<1x128xf32>
    %cst_10 = arith.constant 7.812500e-03 : f32
    %12 = vector.broadcast %cst_10 : f32 to vector<1x128xf32>
    %13 = arith.mulf %11, %12 : vector<1x128xf32>
    %14 = arith.mulf %8, %8 : vector<1x128xf32>
    %15 = arith.subf %13, %14 : vector<1x128xf32>
    %cst_11 = arith.constant 0.000000e+00 : f32
    %16 = vector.broadcast %cst_11 : f32 to vector<1x128xf32>
    %17 = arith.maximumf %15, %16 : vector<1x128xf32>
    %18 = vector.broadcast %8 : vector<1x128xf32> to vector<128x128xf32>
    %19 = arith.subf %2, %18 : vector<128x128xf32>
    %cst_12 = arith.constant 9.99999974E-6 : f32
    %20 = vector.broadcast %cst_12 : f32 to vector<1x128xf32>
    %21 = arith.addf %17, %20 : vector<1x128xf32>
    %22 = math.rsqrt %21 : vector<1x128xf32>
    %23 = vector.broadcast %22 : vector<1x128xf32> to vector<128x128xf32>
    %24 = arith.mulf %19, %23 : vector<128x128xf32>
    %25 = vector.broadcast %3 : vector<1x128xf32> to vector<128x128xf32>
    %26 = arith.mulf %25, %24 : vector<128x128xf32>
    %27 = vector.broadcast %4 : vector<1x128xf32> to vector<128x128xf32>
    %28 = arith.addf %26, %27 : vector<128x128xf32>
    %cst_13 = arith.constant 0.000000e+00 : f32
    %29 = vector.broadcast %cst_13 : f32 to vector<128x128xf32>
    %30 = arith.maximumf %28, %29 : vector<128x128xf32>
    %cst_14 = arith.constant 0.000000e+00 : f32
    %31 = vector.broadcast %cst_14 : f32 to vector<32x128xf32>
    %c0_15 = arith.constant 0 : index
    %c0_16 = arith.constant 0 : index
    %c0_17 = arith.constant 0 : index
    %32 = vector.load %arg5[%c0_15, %c0_16, %c0_17] : memref<9x32x128xf32, #tpu.memory_space<vmem>>, vector<1x32x128xf32>
    %33 = vector.shape_cast %32 : vector<1x32x128xf32> to vector<32x128xf32>
    %cst_18 = arith.constant dense<0.000000e+00> : vector<32x128xf32>
    %34 = tpu.matmul %33, %30, %cst_18 {dimension_numbers = #tpu.dot_dimension_numbers<[1], [0], [0], [1], [0, 0, 1, 1], [], []>} : vector<32x128xf32>, vector<128x128xf32>, vector<32x128xf32> -> vector<32x128xf32>
    %c0_19 = arith.constant 0 : index
    %c0_20 = arith.constant 0 : index
    %c0_21 = arith.constant 0 : index
    %35 = vector.load %arg6[%c0_19, %c0_20, %c0_21] : memref<9x128x128xf32, #tpu.memory_space<vmem>>, vector<1x128x128xf32>
    %36 = vector.shape_cast %35 : vector<1x128x128xf32> to vector<128x128xf32>
    %cst_22 = arith.constant dense<0.000000e+00> : vector<32x128xf32>
    %37 = tpu.matmul %34, %36, %cst_22 {dimension_numbers = #tpu.dot_dimension_numbers<[1], [0], [0], [1], [0, 0, 1, 1], [], []>} : vector<32x128xf32>, vector<128x128xf32>, vector<32x128xf32> -> vector<32x128xf32>
    %38 = arith.addf %31, %37 : vector<32x128xf32>
    %c1 = arith.constant 1 : index
    %c0_23 = arith.constant 0 : index
    %c0_24 = arith.constant 0 : index
    %39 = vector.load %arg5[%c1, %c0_23, %c0_24] : memref<9x32x128xf32, #tpu.memory_space<vmem>>, vector<1x32x128xf32>
    %40 = vector.shape_cast %39 : vector<1x32x128xf32> to vector<32x128xf32>
    %cst_25 = arith.constant dense<0.000000e+00> : vector<32x128xf32>
    %41 = tpu.matmul %40, %30, %cst_25 {dimension_numbers = #tpu.dot_dimension_numbers<[1], [0], [0], [1], [0, 0, 1, 1], [], []>} : vector<32x128xf32>, vector<128x128xf32>, vector<32x128xf32> -> vector<32x128xf32>
    %c1_26 = arith.constant 1 : index
    %c0_27 = arith.constant 0 : index
    %c0_28 = arith.constant 0 : index
    %42 = vector.load %arg6[%c1_26, %c0_27, %c0_28] : memref<9x128x128xf32, #tpu.memory_space<vmem>>, vector<1x128x128xf32>
    %43 = vector.shape_cast %42 : vector<1x128x128xf32> to vector<128x128xf32>
    %cst_29 = arith.constant dense<0.000000e+00> : vector<32x128xf32>
    %44 = tpu.matmul %41, %43, %cst_29 {dimension_numbers = #tpu.dot_dimension_numbers<[1], [0], [0], [1], [0, 0, 1, 1], [], []>} : vector<32x128xf32>, vector<128x128xf32>, vector<32x128xf32> -> vector<32x128xf32>
    %45 = arith.addf %38, %44 : vector<32x128xf32>
    %c2 = arith.constant 2 : index
    %c0_30 = arith.constant 0 : index
    %c0_31 = arith.constant 0 : index
    %46 = vector.load %arg5[%c2, %c0_30, %c0_31] : memref<9x32x128xf32, #tpu.memory_space<vmem>>, vector<1x32x128xf32>
    %47 = vector.shape_cast %46 : vector<1x32x128xf32> to vector<32x128xf32>
    %cst_32 = arith.constant dense<0.000000e+00> : vector<32x128xf32>
    %48 = tpu.matmul %47, %30, %cst_32 {dimension_numbers = #tpu.dot_dimension_numbers<[1], [0], [0], [1], [0, 0, 1, 1], [], []>} : vector<32x128xf32>, vector<128x128xf32>, vector<32x128xf32> -> vector<32x128xf32>
    %c2_33 = arith.constant 2 : index
    %c0_34 = arith.constant 0 : index
    %c0_35 = arith.constant 0 : index
    %49 = vector.load %arg6[%c2_33, %c0_34, %c0_35] : memref<9x128x128xf32, #tpu.memory_space<vmem>>, vector<1x128x128xf32>
    %50 = vector.shape_cast %49 : vector<1x128x128xf32> to vector<128x128xf32>
    %cst_36 = arith.constant dense<0.000000e+00> : vector<32x128xf32>
    %51 = tpu.matmul %48, %50, %cst_36 {dimension_numbers = #tpu.dot_dimension_numbers<[1], [0], [0], [1], [0, 0, 1, 1], [], []>} : vector<32x128xf32>, vector<128x128xf32>, vector<32x128xf32> -> vector<32x128xf32>
    %52 = arith.addf %45, %51 : vector<32x128xf32>
    %c3 = arith.constant 3 : index
    %c0_37 = arith.constant 0 : index
    %c0_38 = arith.constant 0 : index
    %53 = vector.load %arg5[%c3, %c0_37, %c0_38] : memref<9x32x128xf32, #tpu.memory_space<vmem>>, vector<1x32x128xf32>
    %54 = vector.shape_cast %53 : vector<1x32x128xf32> to vector<32x128xf32>
    %cst_39 = arith.constant dense<0.000000e+00> : vector<32x128xf32>
    %55 = tpu.matmul %54, %30, %cst_39 {dimension_numbers = #tpu.dot_dimension_numbers<[1], [0], [0], [1], [0, 0, 1, 1], [], []>} : vector<32x128xf32>, vector<128x128xf32>, vector<32x128xf32> -> vector<32x128xf32>
    %c3_40 = arith.constant 3 : index
    %c0_41 = arith.constant 0 : index
    %c0_42 = arith.constant 0 : index
    %56 = vector.load %arg6[%c3_40, %c0_41, %c0_42] : memref<9x128x128xf32, #tpu.memory_space<vmem>>, vector<1x128x128xf32>
    %57 = vector.shape_cast %56 : vector<1x128x128xf32> to vector<128x128xf32>
    %cst_43 = arith.constant dense<0.000000e+00> : vector<32x128xf32>
    %58 = tpu.matmul %55, %57, %cst_43 {dimension_numbers = #tpu.dot_dimension_numbers<[1], [0], [0], [1], [0, 0, 1, 1], [], []>} : vector<32x128xf32>, vector<128x128xf32>, vector<32x128xf32> -> vector<32x128xf32>
    %59 = arith.addf %52, %58 : vector<32x128xf32>
    %c4 = arith.constant 4 : index
    %c0_44 = arith.constant 0 : index
    %c0_45 = arith.constant 0 : index
    %60 = vector.load %arg5[%c4, %c0_44, %c0_45] : memref<9x32x128xf32, #tpu.memory_space<vmem>>, vector<1x32x128xf32>
    %61 = vector.shape_cast %60 : vector<1x32x128xf32> to vector<32x128xf32>
    %cst_46 = arith.constant dense<0.000000e+00> : vector<32x128xf32>
    %62 = tpu.matmul %61, %30, %cst_46 {dimension_numbers = #tpu.dot_dimension_numbers<[1], [0], [0], [1], [0, 0, 1, 1], [], []>} : vector<32x128xf32>, vector<128x128xf32>, vector<32x128xf32> -> vector<32x128xf32>
    %c4_47 = arith.constant 4 : index
    %c0_48 = arith.constant 0 : index
    %c0_49 = arith.constant 0 : index
    %63 = vector.load %arg6[%c4_47, %c0_48, %c0_49] : memref<9x128x128xf32, #tpu.memory_space<vmem>>, vector<1x128x128xf32>
    %64 = vector.shape_cast %63 : vector<1x128x128xf32> to vector<128x128xf32>
    %cst_50 = arith.constant dense<0.000000e+00> : vector<32x128xf32>
    %65 = tpu.matmul %62, %64, %cst_50 {dimension_numbers = #tpu.dot_dimension_numbers<[1], [0], [0], [1], [0, 0, 1, 1], [], []>} : vector<32x128xf32>, vector<128x128xf32>, vector<32x128xf32> -> vector<32x128xf32>
    %66 = arith.addf %59, %65 : vector<32x128xf32>
    %c5 = arith.constant 5 : index
    %c0_51 = arith.constant 0 : index
    %c0_52 = arith.constant 0 : index
    %67 = vector.load %arg5[%c5, %c0_51, %c0_52] : memref<9x32x128xf32, #tpu.memory_space<vmem>>, vector<1x32x128xf32>
    %68 = vector.shape_cast %67 : vector<1x32x128xf32> to vector<32x128xf32>
    %cst_53 = arith.constant dense<0.000000e+00> : vector<32x128xf32>
    %69 = tpu.matmul %68, %30, %cst_53 {dimension_numbers = #tpu.dot_dimension_numbers<[1], [0], [0], [1], [0, 0, 1, 1], [], []>} : vector<32x128xf32>, vector<128x128xf32>, vector<32x128xf32> -> vector<32x128xf32>
    %c5_54 = arith.constant 5 : index
    %c0_55 = arith.constant 0 : index
    %c0_56 = arith.constant 0 : index
    %70 = vector.load %arg6[%c5_54, %c0_55, %c0_56] : memref<9x128x128xf32, #tpu.memory_space<vmem>>, vector<1x128x128xf32>
    %71 = vector.shape_cast %70 : vector<1x128x128xf32> to vector<128x128xf32>
    %cst_57 = arith.constant dense<0.000000e+00> : vector<32x128xf32>
    %72 = tpu.matmul %69, %71, %cst_57 {dimension_numbers = #tpu.dot_dimension_numbers<[1], [0], [0], [1], [0, 0, 1, 1], [], []>} : vector<32x128xf32>, vector<128x128xf32>, vector<32x128xf32> -> vector<32x128xf32>
    %73 = arith.addf %66, %72 : vector<32x128xf32>
    %c6 = arith.constant 6 : index
    %c0_58 = arith.constant 0 : index
    %c0_59 = arith.constant 0 : index
    %74 = vector.load %arg5[%c6, %c0_58, %c0_59] : memref<9x32x128xf32, #tpu.memory_space<vmem>>, vector<1x32x128xf32>
    %75 = vector.shape_cast %74 : vector<1x32x128xf32> to vector<32x128xf32>
    %cst_60 = arith.constant dense<0.000000e+00> : vector<32x128xf32>
    %76 = tpu.matmul %75, %30, %cst_60 {dimension_numbers = #tpu.dot_dimension_numbers<[1], [0], [0], [1], [0, 0, 1, 1], [], []>} : vector<32x128xf32>, vector<128x128xf32>, vector<32x128xf32> -> vector<32x128xf32>
    %c6_61 = arith.constant 6 : index
    %c0_62 = arith.constant 0 : index
    %c0_63 = arith.constant 0 : index
    %77 = vector.load %arg6[%c6_61, %c0_62, %c0_63] : memref<9x128x128xf32, #tpu.memory_space<vmem>>, vector<1x128x128xf32>
    %78 = vector.shape_cast %77 : vector<1x128x128xf32> to vector<128x128xf32>
    %cst_64 = arith.constant dense<0.000000e+00> : vector<32x128xf32>
    %79 = tpu.matmul %76, %78, %cst_64 {dimension_numbers = #tpu.dot_dimension_numbers<[1], [0], [0], [1], [0, 0, 1, 1], [], []>} : vector<32x128xf32>, vector<128x128xf32>, vector<32x128xf32> -> vector<32x128xf32>
    %80 = arith.addf %73, %79 : vector<32x128xf32>
    %c7 = arith.constant 7 : index
    %c0_65 = arith.constant 0 : index
    %c0_66 = arith.constant 0 : index
    %81 = vector.load %arg5[%c7, %c0_65, %c0_66] : memref<9x32x128xf32, #tpu.memory_space<vmem>>, vector<1x32x128xf32>
    %82 = vector.shape_cast %81 : vector<1x32x128xf32> to vector<32x128xf32>
    %cst_67 = arith.constant dense<0.000000e+00> : vector<32x128xf32>
    %83 = tpu.matmul %82, %30, %cst_67 {dimension_numbers = #tpu.dot_dimension_numbers<[1], [0], [0], [1], [0, 0, 1, 1], [], []>} : vector<32x128xf32>, vector<128x128xf32>, vector<32x128xf32> -> vector<32x128xf32>
    %c7_68 = arith.constant 7 : index
    %c0_69 = arith.constant 0 : index
    %c0_70 = arith.constant 0 : index
    %84 = vector.load %arg6[%c7_68, %c0_69, %c0_70] : memref<9x128x128xf32, #tpu.memory_space<vmem>>, vector<1x128x128xf32>
    %85 = vector.shape_cast %84 : vector<1x128x128xf32> to vector<128x128xf32>
    %cst_71 = arith.constant dense<0.000000e+00> : vector<32x128xf32>
    %86 = tpu.matmul %83, %85, %cst_71 {dimension_numbers = #tpu.dot_dimension_numbers<[1], [0], [0], [1], [0, 0, 1, 1], [], []>} : vector<32x128xf32>, vector<128x128xf32>, vector<32x128xf32> -> vector<32x128xf32>
    %87 = arith.addf %80, %86 : vector<32x128xf32>
    %c8 = arith.constant 8 : index
    %c0_72 = arith.constant 0 : index
    %c0_73 = arith.constant 0 : index
    %88 = vector.load %arg5[%c8, %c0_72, %c0_73] : memref<9x32x128xf32, #tpu.memory_space<vmem>>, vector<1x32x128xf32>
    %89 = vector.shape_cast %88 : vector<1x32x128xf32> to vector<32x128xf32>
    %cst_74 = arith.constant dense<0.000000e+00> : vector<32x128xf32>
    %90 = tpu.matmul %89, %30, %cst_74 {dimension_numbers = #tpu.dot_dimension_numbers<[1], [0], [0], [1], [0, 0, 1, 1], [], []>} : vector<32x128xf32>, vector<128x128xf32>, vector<32x128xf32> -> vector<32x128xf32>
    %c8_75 = arith.constant 8 : index
    %c0_76 = arith.constant 0 : index
    %c0_77 = arith.constant 0 : index
    %91 = vector.load %arg6[%c8_75, %c0_76, %c0_77] : memref<9x128x128xf32, #tpu.memory_space<vmem>>, vector<1x128x128xf32>
    %92 = vector.shape_cast %91 : vector<1x128x128xf32> to vector<128x128xf32>
    %cst_78 = arith.constant dense<0.000000e+00> : vector<32x128xf32>
    %93 = tpu.matmul %90, %92, %cst_78 {dimension_numbers = #tpu.dot_dimension_numbers<[1], [0], [0], [1], [0, 0, 1, 1], [], []>} : vector<32x128xf32>, vector<128x128xf32>, vector<32x128xf32> -> vector<32x128xf32>
    %94 = arith.addf %87, %93 : vector<32x128xf32>
    %c0_79 = arith.constant 0 : index
    %c0_80 = arith.constant 0 : index
    %95 = vector.load %arg7[%c0_79, %c0_80] : memref<1x128xf32, #tpu.memory_space<vmem>>, vector<1x128xf32>
    %c0_81 = arith.constant 0 : index
    %c0_82 = arith.constant 0 : index
    %96 = vector.load %arg8[%c0_81, %c0_82] : memref<1x128xf32, #tpu.memory_space<vmem>>, vector<1x128xf32>
    %cst_83 = arith.constant dense<0.000000e+00> : vector<128xf32>
    %97 = vector.multi_reduction <add>, %94, %cst_83 [0] : vector<32x128xf32> to vector<128xf32>
    %98 = vector.shape_cast %97 : vector<128xf32> to vector<1x128xf32>
    %cst_84 = arith.constant 3.125000e-02 : f32
    %99 = vector.broadcast %cst_84 : f32 to vector<1x128xf32>
    %100 = arith.mulf %98, %99 : vector<1x128xf32>
    %101 = arith.mulf %94, %94 : vector<32x128xf32>
    %cst_85 = arith.constant dense<0.000000e+00> : vector<128xf32>
    %102 = vector.multi_reduction <add>, %101, %cst_85 [0] : vector<32x128xf32> to vector<128xf32>
    %103 = vector.shape_cast %102 : vector<128xf32> to vector<1x128xf32>
    %cst_86 = arith.constant 3.125000e-02 : f32
    %104 = vector.broadcast %cst_86 : f32 to vector<1x128xf32>
    %105 = arith.mulf %103, %104 : vector<1x128xf32>
    %106 = arith.mulf %100, %100 : vector<1x128xf32>
    %107 = arith.subf %105, %106 : vector<1x128xf32>
    %cst_87 = arith.constant 0.000000e+00 : f32
    %108 = vector.broadcast %cst_87 : f32 to vector<1x128xf32>
    %109 = arith.maximumf %107, %108 : vector<1x128xf32>
    %110 = vector.broadcast %100 : vector<1x128xf32> to vector<32x128xf32>
    %111 = arith.subf %94, %110 : vector<32x128xf32>
    %cst_88 = arith.constant 9.99999974E-6 : f32
    %112 = vector.broadcast %cst_88 : f32 to vector<1x128xf32>
    %113 = arith.addf %109, %112 : vector<1x128xf32>
    %114 = math.rsqrt %113 : vector<1x128xf32>
    %115 = vector.broadcast %114 : vector<1x128xf32> to vector<32x128xf32>
    %116 = arith.mulf %111, %115 : vector<32x128xf32>
    %117 = vector.broadcast %95 : vector<1x128xf32> to vector<32x128xf32>
    %118 = arith.mulf %117, %116 : vector<32x128xf32>
    %119 = vector.broadcast %96 : vector<1x128xf32> to vector<32x128xf32>
    %120 = arith.addf %118, %119 : vector<32x128xf32>
    %cst_89 = arith.constant 0.000000e+00 : f32
    %121 = vector.broadcast %cst_89 : f32 to vector<32x128xf32>
    %122 = arith.maximumf %120, %121 : vector<32x128xf32>
    %cst_90 = arith.constant 0.000000e+00 : f32
    %123 = vector.broadcast %cst_90 : f32 to vector<8x128xf32>
    %c0_91 = arith.constant 0 : index
    %c0_92 = arith.constant 0 : index
    %c0_93 = arith.constant 0 : index
    %124 = vector.load %arg9[%c0_91, %c0_92, %c0_93] : memref<9x8x32xf32, #tpu.memory_space<vmem>>, vector<1x8x32xf32>
    %125 = vector.shape_cast %124 : vector<1x8x32xf32> to vector<8x32xf32>
    %cst_94 = arith.constant dense<0.000000e+00> : vector<8x128xf32>
    %126 = tpu.matmul %125, %122, %cst_94 {dimension_numbers = #tpu.dot_dimension_numbers<[1], [0], [0], [1], [0, 0, 1, 1], [], []>} : vector<8x32xf32>, vector<32x128xf32>, vector<8x128xf32> -> vector<8x128xf32>
    %c0_95 = arith.constant 0 : index
    %c0_96 = arith.constant 0 : index
    %c0_97 = arith.constant 0 : index
    %127 = vector.load %arg10[%c0_95, %c0_96, %c0_97] : memref<9x128x128xf32, #tpu.memory_space<vmem>>, vector<1x128x128xf32>
    %128 = vector.shape_cast %127 : vector<1x128x128xf32> to vector<128x128xf32>
    %cst_98 = arith.constant dense<0.000000e+00> : vector<8x128xf32>
    %129 = tpu.matmul %126, %128, %cst_98 {dimension_numbers = #tpu.dot_dimension_numbers<[1], [0], [0], [1], [0, 0, 1, 1], [], []>} : vector<8x128xf32>, vector<128x128xf32>, vector<8x128xf32> -> vector<8x128xf32>
    %130 = arith.addf %123, %129 : vector<8x128xf32>
    %c1_99 = arith.constant 1 : index
    %c0_100 = arith.constant 0 : index
    %c0_101 = arith.constant 0 : index
    %131 = vector.load %arg9[%c1_99, %c0_100, %c0_101] : memref<9x8x32xf32, #tpu.memory_space<vmem>>, vector<1x8x32xf32>
    %132 = vector.shape_cast %131 : vector<1x8x32xf32> to vector<8x32xf32>
    %cst_102 = arith.constant dense<0.000000e+00> : vector<8x128xf32>
    %133 = tpu.matmul %132, %122, %cst_102 {dimension_numbers = #tpu.dot_dimension_numbers<[1], [0], [0], [1], [0, 0, 1, 1], [], []>} : vector<8x32xf32>, vector<32x128xf32>, vector<8x128xf32> -> vector<8x128xf32>
    %c1_103 = arith.constant 1 : index
    %c0_104 = arith.constant 0 : index
    %c0_105 = arith.constant 0 : index
    %134 = vector.load %arg10[%c1_103, %c0_104, %c0_105] : memref<9x128x128xf32, #tpu.memory_space<vmem>>, vector<1x128x128xf32>
    %135 = vector.shape_cast %134 : vector<1x128x128xf32> to vector<128x128xf32>
    %cst_106 = arith.constant dense<0.000000e+00> : vector<8x128xf32>
    %136 = tpu.matmul %133, %135, %cst_106 {dimension_numbers = #tpu.dot_dimension_numbers<[1], [0], [0], [1], [0, 0, 1, 1], [], []>} : vector<8x128xf32>, vector<128x128xf32>, vector<8x128xf32> -> vector<8x128xf32>
    %137 = arith.addf %130, %136 : vector<8x128xf32>
    %c2_107 = arith.constant 2 : index
    %c0_108 = arith.constant 0 : index
    %c0_109 = arith.constant 0 : index
    %138 = vector.load %arg9[%c2_107, %c0_108, %c0_109] : memref<9x8x32xf32, #tpu.memory_space<vmem>>, vector<1x8x32xf32>
    %139 = vector.shape_cast %138 : vector<1x8x32xf32> to vector<8x32xf32>
    %cst_110 = arith.constant dense<0.000000e+00> : vector<8x128xf32>
    %140 = tpu.matmul %139, %122, %cst_110 {dimension_numbers = #tpu.dot_dimension_numbers<[1], [0], [0], [1], [0, 0, 1, 1], [], []>} : vector<8x32xf32>, vector<32x128xf32>, vector<8x128xf32> -> vector<8x128xf32>
    %c2_111 = arith.constant 2 : index
    %c0_112 = arith.constant 0 : index
    %c0_113 = arith.constant 0 : index
    %141 = vector.load %arg10[%c2_111, %c0_112, %c0_113] : memref<9x128x128xf32, #tpu.memory_space<vmem>>, vector<1x128x128xf32>
    %142 = vector.shape_cast %141 : vector<1x128x128xf32> to vector<128x128xf32>
    %cst_114 = arith.constant dense<0.000000e+00> : vector<8x128xf32>
    %143 = tpu.matmul %140, %142, %cst_114 {dimension_numbers = #tpu.dot_dimension_numbers<[1], [0], [0], [1], [0, 0, 1, 1], [], []>} : vector<8x128xf32>, vector<128x128xf32>, vector<8x128xf32> -> vector<8x128xf32>
    %144 = arith.addf %137, %143 : vector<8x128xf32>
    %c3_115 = arith.constant 3 : index
    %c0_116 = arith.constant 0 : index
    %c0_117 = arith.constant 0 : index
    %145 = vector.load %arg9[%c3_115, %c0_116, %c0_117] : memref<9x8x32xf32, #tpu.memory_space<vmem>>, vector<1x8x32xf32>
    %146 = vector.shape_cast %145 : vector<1x8x32xf32> to vector<8x32xf32>
    %cst_118 = arith.constant dense<0.000000e+00> : vector<8x128xf32>
    %147 = tpu.matmul %146, %122, %cst_118 {dimension_numbers = #tpu.dot_dimension_numbers<[1], [0], [0], [1], [0, 0, 1, 1], [], []>} : vector<8x32xf32>, vector<32x128xf32>, vector<8x128xf32> -> vector<8x128xf32>
    %c3_119 = arith.constant 3 : index
    %c0_120 = arith.constant 0 : index
    %c0_121 = arith.constant 0 : index
    %148 = vector.load %arg10[%c3_119, %c0_120, %c0_121] : memref<9x128x128xf32, #tpu.memory_space<vmem>>, vector<1x128x128xf32>
    %149 = vector.shape_cast %148 : vector<1x128x128xf32> to vector<128x128xf32>
    %cst_122 = arith.constant dense<0.000000e+00> : vector<8x128xf32>
    %150 = tpu.matmul %147, %149, %cst_122 {dimension_numbers = #tpu.dot_dimension_numbers<[1], [0], [0], [1], [0, 0, 1, 1], [], []>} : vector<8x128xf32>, vector<128x128xf32>, vector<8x128xf32> -> vector<8x128xf32>
    %151 = arith.addf %144, %150 : vector<8x128xf32>
    %c4_123 = arith.constant 4 : index
    %c0_124 = arith.constant 0 : index
    %c0_125 = arith.constant 0 : index
    %152 = vector.load %arg9[%c4_123, %c0_124, %c0_125] : memref<9x8x32xf32, #tpu.memory_space<vmem>>, vector<1x8x32xf32>
    %153 = vector.shape_cast %152 : vector<1x8x32xf32> to vector<8x32xf32>
    %cst_126 = arith.constant dense<0.000000e+00> : vector<8x128xf32>
    %154 = tpu.matmul %153, %122, %cst_126 {dimension_numbers = #tpu.dot_dimension_numbers<[1], [0], [0], [1], [0, 0, 1, 1], [], []>} : vector<8x32xf32>, vector<32x128xf32>, vector<8x128xf32> -> vector<8x128xf32>
    %c4_127 = arith.constant 4 : index
    %c0_128 = arith.constant 0 : index
    %c0_129 = arith.constant 0 : index
    %155 = vector.load %arg10[%c4_127, %c0_128, %c0_129] : memref<9x128x128xf32, #tpu.memory_space<vmem>>, vector<1x128x128xf32>
    %156 = vector.shape_cast %155 : vector<1x128x128xf32> to vector<128x128xf32>
    %cst_130 = arith.constant dense<0.000000e+00> : vector<8x128xf32>
    %157 = tpu.matmul %154, %156, %cst_130 {dimension_numbers = #tpu.dot_dimension_numbers<[1], [0], [0], [1], [0, 0, 1, 1], [], []>} : vector<8x128xf32>, vector<128x128xf32>, vector<8x128xf32> -> vector<8x128xf32>
    %158 = arith.addf %151, %157 : vector<8x128xf32>
    %c5_131 = arith.constant 5 : index
    %c0_132 = arith.constant 0 : index
    %c0_133 = arith.constant 0 : index
    %159 = vector.load %arg9[%c5_131, %c0_132, %c0_133] : memref<9x8x32xf32, #tpu.memory_space<vmem>>, vector<1x8x32xf32>
    %160 = vector.shape_cast %159 : vector<1x8x32xf32> to vector<8x32xf32>
    %cst_134 = arith.constant dense<0.000000e+00> : vector<8x128xf32>
    %161 = tpu.matmul %160, %122, %cst_134 {dimension_numbers = #tpu.dot_dimension_numbers<[1], [0], [0], [1], [0, 0, 1, 1], [], []>} : vector<8x32xf32>, vector<32x128xf32>, vector<8x128xf32> -> vector<8x128xf32>
    %c5_135 = arith.constant 5 : index
    %c0_136 = arith.constant 0 : index
    %c0_137 = arith.constant 0 : index
    %162 = vector.load %arg10[%c5_135, %c0_136, %c0_137] : memref<9x128x128xf32, #tpu.memory_space<vmem>>, vector<1x128x128xf32>
    %163 = vector.shape_cast %162 : vector<1x128x128xf32> to vector<128x128xf32>
    %cst_138 = arith.constant dense<0.000000e+00> : vector<8x128xf32>
    %164 = tpu.matmul %161, %163, %cst_138 {dimension_numbers = #tpu.dot_dimension_numbers<[1], [0], [0], [1], [0, 0, 1, 1], [], []>} : vector<8x128xf32>, vector<128x128xf32>, vector<8x128xf32> -> vector<8x128xf32>
    %165 = arith.addf %158, %164 : vector<8x128xf32>
    %c6_139 = arith.constant 6 : index
    %c0_140 = arith.constant 0 : index
    %c0_141 = arith.constant 0 : index
    %166 = vector.load %arg9[%c6_139, %c0_140, %c0_141] : memref<9x8x32xf32, #tpu.memory_space<vmem>>, vector<1x8x32xf32>
    %167 = vector.shape_cast %166 : vector<1x8x32xf32> to vector<8x32xf32>
    %cst_142 = arith.constant dense<0.000000e+00> : vector<8x128xf32>
    %168 = tpu.matmul %167, %122, %cst_142 {dimension_numbers = #tpu.dot_dimension_numbers<[1], [0], [0], [1], [0, 0, 1, 1], [], []>} : vector<8x32xf32>, vector<32x128xf32>, vector<8x128xf32> -> vector<8x128xf32>
    %c6_143 = arith.constant 6 : index
    %c0_144 = arith.constant 0 : index
    %c0_145 = arith.constant 0 : index
    %169 = vector.load %arg10[%c6_143, %c0_144, %c0_145] : memref<9x128x128xf32, #tpu.memory_space<vmem>>, vector<1x128x128xf32>
    %170 = vector.shape_cast %169 : vector<1x128x128xf32> to vector<128x128xf32>
    %cst_146 = arith.constant dense<0.000000e+00> : vector<8x128xf32>
    %171 = tpu.matmul %168, %170, %cst_146 {dimension_numbers = #tpu.dot_dimension_numbers<[1], [0], [0], [1], [0, 0, 1, 1], [], []>} : vector<8x128xf32>, vector<128x128xf32>, vector<8x128xf32> -> vector<8x128xf32>
    %172 = arith.addf %165, %171 : vector<8x128xf32>
    %c7_147 = arith.constant 7 : index
    %c0_148 = arith.constant 0 : index
    %c0_149 = arith.constant 0 : index
    %173 = vector.load %arg9[%c7_147, %c0_148, %c0_149] : memref<9x8x32xf32, #tpu.memory_space<vmem>>, vector<1x8x32xf32>
    %174 = vector.shape_cast %173 : vector<1x8x32xf32> to vector<8x32xf32>
    %cst_150 = arith.constant dense<0.000000e+00> : vector<8x128xf32>
    %175 = tpu.matmul %174, %122, %cst_150 {dimension_numbers = #tpu.dot_dimension_numbers<[1], [0], [0], [1], [0, 0, 1, 1], [], []>} : vector<8x32xf32>, vector<32x128xf32>, vector<8x128xf32> -> vector<8x128xf32>
    %c7_151 = arith.constant 7 : index
    %c0_152 = arith.constant 0 : index
    %c0_153 = arith.constant 0 : index
    %176 = vector.load %arg10[%c7_151, %c0_152, %c0_153] : memref<9x128x128xf32, #tpu.memory_space<vmem>>, vector<1x128x128xf32>
    %177 = vector.shape_cast %176 : vector<1x128x128xf32> to vector<128x128xf32>
    %cst_154 = arith.constant dense<0.000000e+00> : vector<8x128xf32>
    %178 = tpu.matmul %175, %177, %cst_154 {dimension_numbers = #tpu.dot_dimension_numbers<[1], [0], [0], [1], [0, 0, 1, 1], [], []>} : vector<8x128xf32>, vector<128x128xf32>, vector<8x128xf32> -> vector<8x128xf32>
    %179 = arith.addf %172, %178 : vector<8x128xf32>
    %c8_155 = arith.constant 8 : index
    %c0_156 = arith.constant 0 : index
    %c0_157 = arith.constant 0 : index
    %180 = vector.load %arg9[%c8_155, %c0_156, %c0_157] : memref<9x8x32xf32, #tpu.memory_space<vmem>>, vector<1x8x32xf32>
    %181 = vector.shape_cast %180 : vector<1x8x32xf32> to vector<8x32xf32>
    %cst_158 = arith.constant dense<0.000000e+00> : vector<8x128xf32>
    %182 = tpu.matmul %181, %122, %cst_158 {dimension_numbers = #tpu.dot_dimension_numbers<[1], [0], [0], [1], [0, 0, 1, 1], [], []>} : vector<8x32xf32>, vector<32x128xf32>, vector<8x128xf32> -> vector<8x128xf32>
    %c8_159 = arith.constant 8 : index
    %c0_160 = arith.constant 0 : index
    %c0_161 = arith.constant 0 : index
    %183 = vector.load %arg10[%c8_159, %c0_160, %c0_161] : memref<9x128x128xf32, #tpu.memory_space<vmem>>, vector<1x128x128xf32>
    %184 = vector.shape_cast %183 : vector<1x128x128xf32> to vector<128x128xf32>
    %cst_162 = arith.constant dense<0.000000e+00> : vector<8x128xf32>
    %185 = tpu.matmul %182, %184, %cst_162 {dimension_numbers = #tpu.dot_dimension_numbers<[1], [0], [0], [1], [0, 0, 1, 1], [], []>} : vector<8x128xf32>, vector<128x128xf32>, vector<8x128xf32> -> vector<8x128xf32>
    %186 = arith.addf %179, %185 : vector<8x128xf32>
    %c0_163 = arith.constant 0 : index
    %c0_164 = arith.constant 0 : index
    %187 = vector.load %arg11[%c0_163, %c0_164] : memref<1x128xf32, #tpu.memory_space<vmem>>, vector<1x128xf32>
    %c0_165 = arith.constant 0 : index
    %c0_166 = arith.constant 0 : index
    %188 = vector.load %arg12[%c0_165, %c0_166] : memref<1x128xf32, #tpu.memory_space<vmem>>, vector<1x128xf32>
    %cst_167 = arith.constant dense<0.000000e+00> : vector<128xf32>
    %189 = vector.multi_reduction <add>, %186, %cst_167 [0] : vector<8x128xf32> to vector<128xf32>
    %190 = vector.shape_cast %189 : vector<128xf32> to vector<1x128xf32>
    %cst_168 = arith.constant 1.250000e-01 : f32
    %191 = vector.broadcast %cst_168 : f32 to vector<1x128xf32>
    %192 = arith.mulf %190, %191 : vector<1x128xf32>
    %193 = arith.mulf %186, %186 : vector<8x128xf32>
    %cst_169 = arith.constant dense<0.000000e+00> : vector<128xf32>
    %194 = vector.multi_reduction <add>, %193, %cst_169 [0] : vector<8x128xf32> to vector<128xf32>
    %195 = vector.shape_cast %194 : vector<128xf32> to vector<1x128xf32>
    %cst_170 = arith.constant 1.250000e-01 : f32
    %196 = vector.broadcast %cst_170 : f32 to vector<1x128xf32>
    %197 = arith.mulf %195, %196 : vector<1x128xf32>
    %198 = arith.mulf %192, %192 : vector<1x128xf32>
    %199 = arith.subf %197, %198 : vector<1x128xf32>
    %cst_171 = arith.constant 0.000000e+00 : f32
    %200 = vector.broadcast %cst_171 : f32 to vector<1x128xf32>
    %201 = arith.maximumf %199, %200 : vector<1x128xf32>
    %202 = vector.broadcast %192 : vector<1x128xf32> to vector<8x128xf32>
    %203 = arith.subf %186, %202 : vector<8x128xf32>
    %cst_172 = arith.constant 9.99999974E-6 : f32
    %204 = vector.broadcast %cst_172 : f32 to vector<1x128xf32>
    %205 = arith.addf %201, %204 : vector<1x128xf32>
    %206 = math.rsqrt %205 : vector<1x128xf32>
    %207 = vector.broadcast %206 : vector<1x128xf32> to vector<8x128xf32>
    %208 = arith.mulf %203, %207 : vector<8x128xf32>
    %209 = vector.broadcast %187 : vector<1x128xf32> to vector<8x128xf32>
    %210 = arith.mulf %209, %208 : vector<8x128xf32>
    %211 = vector.broadcast %188 : vector<1x128xf32> to vector<8x128xf32>
    %212 = arith.addf %210, %211 : vector<8x128xf32>
    %cst_173 = arith.constant 0.000000e+00 : f32
    %213 = vector.broadcast %cst_173 : f32 to vector<8x128xf32>
    %214 = arith.maximumf %212, %213 : vector<8x128xf32>
    %cst_174 = arith.constant 0.000000e+00 : f32
    %215 = vector.broadcast %cst_174 : f32 to vector<2x128xf32>
    %c0_175 = arith.constant 0 : index
    %c0_176 = arith.constant 0 : index
    %c0_177 = arith.constant 0 : index
    %216 = vector.load %arg13[%c0_175, %c0_176, %c0_177] : memref<9x2x8xf32, #tpu.memory_space<vmem>>, vector<1x2x8xf32>
    %217 = vector.shape_cast %216 : vector<1x2x8xf32> to vector<2x8xf32>
    %cst_178 = arith.constant dense<0.000000e+00> : vector<2x128xf32>
    %218 = tpu.matmul %217, %214, %cst_178 {dimension_numbers = #tpu.dot_dimension_numbers<[1], [0], [0], [1], [0, 0, 1, 1], [], []>} : vector<2x8xf32>, vector<8x128xf32>, vector<2x128xf32> -> vector<2x128xf32>
    %c0_179 = arith.constant 0 : index
    %c0_180 = arith.constant 0 : index
    %c0_181 = arith.constant 0 : index
    %219 = vector.load %arg14[%c0_179, %c0_180, %c0_181] : memref<9x128x128xf32, #tpu.memory_space<vmem>>, vector<1x128x128xf32>
    %220 = vector.shape_cast %219 : vector<1x128x128xf32> to vector<128x128xf32>
    %cst_182 = arith.constant dense<0.000000e+00> : vector<2x128xf32>
    %221 = tpu.matmul %218, %220, %cst_182 {dimension_numbers = #tpu.dot_dimension_numbers<[1], [0], [0], [1], [0, 0, 1, 1], [], []>} : vector<2x128xf32>, vector<128x128xf32>, vector<2x128xf32> -> vector<2x128xf32>
    %222 = arith.addf %215, %221 : vector<2x128xf32>
    %c1_183 = arith.constant 1 : index
    %c0_184 = arith.constant 0 : index
    %c0_185 = arith.constant 0 : index
    %223 = vector.load %arg13[%c1_183, %c0_184, %c0_185] : memref<9x2x8xf32, #tpu.memory_space<vmem>>, vector<1x2x8xf32>
    %224 = vector.shape_cast %223 : vector<1x2x8xf32> to vector<2x8xf32>
    %cst_186 = arith.constant dense<0.000000e+00> : vector<2x128xf32>
    %225 = tpu.matmul %224, %214, %cst_186 {dimension_numbers = #tpu.dot_dimension_numbers<[1], [0], [0], [1], [0, 0, 1, 1], [], []>} : vector<2x8xf32>, vector<8x128xf32>, vector<2x128xf32> -> vector<2x128xf32>
    %c1_187 = arith.constant 1 : index
    %c0_188 = arith.constant 0 : index
    %c0_189 = arith.constant 0 : index
    %226 = vector.load %arg14[%c1_187, %c0_188, %c0_189] : memref<9x128x128xf32, #tpu.memory_space<vmem>>, vector<1x128x128xf32>
    %227 = vector.shape_cast %226 : vector<1x128x128xf32> to vector<128x128xf32>
    %cst_190 = arith.constant dense<0.000000e+00> : vector<2x128xf32>
    %228 = tpu.matmul %225, %227, %cst_190 {dimension_numbers = #tpu.dot_dimension_numbers<[1], [0], [0], [1], [0, 0, 1, 1], [], []>} : vector<2x128xf32>, vector<128x128xf32>, vector<2x128xf32> -> vector<2x128xf32>
    %229 = arith.addf %222, %228 : vector<2x128xf32>
    %c2_191 = arith.constant 2 : index
    %c0_192 = arith.constant 0 : index
    %c0_193 = arith.constant 0 : index
    %230 = vector.load %arg13[%c2_191, %c0_192, %c0_193] : memref<9x2x8xf32, #tpu.memory_space<vmem>>, vector<1x2x8xf32>
    %231 = vector.shape_cast %230 : vector<1x2x8xf32> to vector<2x8xf32>
    %cst_194 = arith.constant dense<0.000000e+00> : vector<2x128xf32>
    %232 = tpu.matmul %231, %214, %cst_194 {dimension_numbers = #tpu.dot_dimension_numbers<[1], [0], [0], [1], [0, 0, 1, 1], [], []>} : vector<2x8xf32>, vector<8x128xf32>, vector<2x128xf32> -> vector<2x128xf32>
    %c2_195 = arith.constant 2 : index
    %c0_196 = arith.constant 0 : index
    %c0_197 = arith.constant 0 : index
    %233 = vector.load %arg14[%c2_195, %c0_196, %c0_197] : memref<9x128x128xf32, #tpu.memory_space<vmem>>, vector<1x128x128xf32>
    %234 = vector.shape_cast %233 : vector<1x128x128xf32> to vector<128x128xf32>
    %cst_198 = arith.constant dense<0.000000e+00> : vector<2x128xf32>
    %235 = tpu.matmul %232, %234, %cst_198 {dimension_numbers = #tpu.dot_dimension_numbers<[1], [0], [0], [1], [0, 0, 1, 1], [], []>} : vector<2x128xf32>, vector<128x128xf32>, vector<2x128xf32> -> vector<2x128xf32>
    %236 = arith.addf %229, %235 : vector<2x128xf32>
    %c3_199 = arith.constant 3 : index
    %c0_200 = arith.constant 0 : index
    %c0_201 = arith.constant 0 : index
    %237 = vector.load %arg13[%c3_199, %c0_200, %c0_201] : memref<9x2x8xf32, #tpu.memory_space<vmem>>, vector<1x2x8xf32>
    %238 = vector.shape_cast %237 : vector<1x2x8xf32> to vector<2x8xf32>
    %cst_202 = arith.constant dense<0.000000e+00> : vector<2x128xf32>
    %239 = tpu.matmul %238, %214, %cst_202 {dimension_numbers = #tpu.dot_dimension_numbers<[1], [0], [0], [1], [0, 0, 1, 1], [], []>} : vector<2x8xf32>, vector<8x128xf32>, vector<2x128xf32> -> vector<2x128xf32>
    %c3_203 = arith.constant 3 : index
    %c0_204 = arith.constant 0 : index
    %c0_205 = arith.constant 0 : index
    %240 = vector.load %arg14[%c3_203, %c0_204, %c0_205] : memref<9x128x128xf32, #tpu.memory_space<vmem>>, vector<1x128x128xf32>
    %241 = vector.shape_cast %240 : vector<1x128x128xf32> to vector<128x128xf32>
    %cst_206 = arith.constant dense<0.000000e+00> : vector<2x128xf32>
    %242 = tpu.matmul %239, %241, %cst_206 {dimension_numbers = #tpu.dot_dimension_numbers<[1], [0], [0], [1], [0, 0, 1, 1], [], []>} : vector<2x128xf32>, vector<128x128xf32>, vector<2x128xf32> -> vector<2x128xf32>
    %243 = arith.addf %236, %242 : vector<2x128xf32>
    %c4_207 = arith.constant 4 : index
    %c0_208 = arith.constant 0 : index
    %c0_209 = arith.constant 0 : index
    %244 = vector.load %arg13[%c4_207, %c0_208, %c0_209] : memref<9x2x8xf32, #tpu.memory_space<vmem>>, vector<1x2x8xf32>
    %245 = vector.shape_cast %244 : vector<1x2x8xf32> to vector<2x8xf32>
    %cst_210 = arith.constant dense<0.000000e+00> : vector<2x128xf32>
    %246 = tpu.matmul %245, %214, %cst_210 {dimension_numbers = #tpu.dot_dimension_numbers<[1], [0], [0], [1], [0, 0, 1, 1], [], []>} : vector<2x8xf32>, vector<8x128xf32>, vector<2x128xf32> -> vector<2x128xf32>
    %c4_211 = arith.constant 4 : index
    %c0_212 = arith.constant 0 : index
    %c0_213 = arith.constant 0 : index
    %247 = vector.load %arg14[%c4_211, %c0_212, %c0_213] : memref<9x128x128xf32, #tpu.memory_space<vmem>>, vector<1x128x128xf32>
    %248 = vector.shape_cast %247 : vector<1x128x128xf32> to vector<128x128xf32>
    %cst_214 = arith.constant dense<0.000000e+00> : vector<2x128xf32>
    %249 = tpu.matmul %246, %248, %cst_214 {dimension_numbers = #tpu.dot_dimension_numbers<[1], [0], [0], [1], [0, 0, 1, 1], [], []>} : vector<2x128xf32>, vector<128x128xf32>, vector<2x128xf32> -> vector<2x128xf32>
    %250 = arith.addf %243, %249 : vector<2x128xf32>
    %c5_215 = arith.constant 5 : index
    %c0_216 = arith.constant 0 : index
    %c0_217 = arith.constant 0 : index
    %251 = vector.load %arg13[%c5_215, %c0_216, %c0_217] : memref<9x2x8xf32, #tpu.memory_space<vmem>>, vector<1x2x8xf32>
    %252 = vector.shape_cast %251 : vector<1x2x8xf32> to vector<2x8xf32>
    %cst_218 = arith.constant dense<0.000000e+00> : vector<2x128xf32>
    %253 = tpu.matmul %252, %214, %cst_218 {dimension_numbers = #tpu.dot_dimension_numbers<[1], [0], [0], [1], [0, 0, 1, 1], [], []>} : vector<2x8xf32>, vector<8x128xf32>, vector<2x128xf32> -> vector<2x128xf32>
    %c5_219 = arith.constant 5 : index
    %c0_220 = arith.constant 0 : index
    %c0_221 = arith.constant 0 : index
    %254 = vector.load %arg14[%c5_219, %c0_220, %c0_221] : memref<9x128x128xf32, #tpu.memory_space<vmem>>, vector<1x128x128xf32>
    %255 = vector.shape_cast %254 : vector<1x128x128xf32> to vector<128x128xf32>
    %cst_222 = arith.constant dense<0.000000e+00> : vector<2x128xf32>
    %256 = tpu.matmul %253, %255, %cst_222 {dimension_numbers = #tpu.dot_dimension_numbers<[1], [0], [0], [1], [0, 0, 1, 1], [], []>} : vector<2x128xf32>, vector<128x128xf32>, vector<2x128xf32> -> vector<2x128xf32>
    %257 = arith.addf %250, %256 : vector<2x128xf32>
    %c6_223 = arith.constant 6 : index
    %c0_224 = arith.constant 0 : index
    %c0_225 = arith.constant 0 : index
    %258 = vector.load %arg13[%c6_223, %c0_224, %c0_225] : memref<9x2x8xf32, #tpu.memory_space<vmem>>, vector<1x2x8xf32>
    %259 = vector.shape_cast %258 : vector<1x2x8xf32> to vector<2x8xf32>
    %cst_226 = arith.constant dense<0.000000e+00> : vector<2x128xf32>
    %260 = tpu.matmul %259, %214, %cst_226 {dimension_numbers = #tpu.dot_dimension_numbers<[1], [0], [0], [1], [0, 0, 1, 1], [], []>} : vector<2x8xf32>, vector<8x128xf32>, vector<2x128xf32> -> vector<2x128xf32>
    %c6_227 = arith.constant 6 : index
    %c0_228 = arith.constant 0 : index
    %c0_229 = arith.constant 0 : index
    %261 = vector.load %arg14[%c6_227, %c0_228, %c0_229] : memref<9x128x128xf32, #tpu.memory_space<vmem>>, vector<1x128x128xf32>
    %262 = vector.shape_cast %261 : vector<1x128x128xf32> to vector<128x128xf32>
    %cst_230 = arith.constant dense<0.000000e+00> : vector<2x128xf32>
    %263 = tpu.matmul %260, %262, %cst_230 {dimension_numbers = #tpu.dot_dimension_numbers<[1], [0], [0], [1], [0, 0, 1, 1], [], []>} : vector<2x128xf32>, vector<128x128xf32>, vector<2x128xf32> -> vector<2x128xf32>
    %264 = arith.addf %257, %263 : vector<2x128xf32>
    %c7_231 = arith.constant 7 : index
    %c0_232 = arith.constant 0 : index
    %c0_233 = arith.constant 0 : index
    %265 = vector.load %arg13[%c7_231, %c0_232, %c0_233] : memref<9x2x8xf32, #tpu.memory_space<vmem>>, vector<1x2x8xf32>
    %266 = vector.shape_cast %265 : vector<1x2x8xf32> to vector<2x8xf32>
    %cst_234 = arith.constant dense<0.000000e+00> : vector<2x128xf32>
    %267 = tpu.matmul %266, %214, %cst_234 {dimension_numbers = #tpu.dot_dimension_numbers<[1], [0], [0], [1], [0, 0, 1, 1], [], []>} : vector<2x8xf32>, vector<8x128xf32>, vector<2x128xf32> -> vector<2x128xf32>
    %c7_235 = arith.constant 7 : index
    %c0_236 = arith.constant 0 : index
    %c0_237 = arith.constant 0 : index
    %268 = vector.load %arg14[%c7_235, %c0_236, %c0_237] : memref<9x128x128xf32, #tpu.memory_space<vmem>>, vector<1x128x128xf32>
    %269 = vector.shape_cast %268 : vector<1x128x128xf32> to vector<128x128xf32>
    %cst_238 = arith.constant dense<0.000000e+00> : vector<2x128xf32>
    %270 = tpu.matmul %267, %269, %cst_238 {dimension_numbers = #tpu.dot_dimension_numbers<[1], [0], [0], [1], [0, 0, 1, 1], [], []>} : vector<2x128xf32>, vector<128x128xf32>, vector<2x128xf32> -> vector<2x128xf32>
    %271 = arith.addf %264, %270 : vector<2x128xf32>
    %c8_239 = arith.constant 8 : index
    %c0_240 = arith.constant 0 : index
    %c0_241 = arith.constant 0 : index
    %272 = vector.load %arg13[%c8_239, %c0_240, %c0_241] : memref<9x2x8xf32, #tpu.memory_space<vmem>>, vector<1x2x8xf32>
    %273 = vector.shape_cast %272 : vector<1x2x8xf32> to vector<2x8xf32>
    %cst_242 = arith.constant dense<0.000000e+00> : vector<2x128xf32>
    %274 = tpu.matmul %273, %214, %cst_242 {dimension_numbers = #tpu.dot_dimension_numbers<[1], [0], [0], [1], [0, 0, 1, 1], [], []>} : vector<2x8xf32>, vector<8x128xf32>, vector<2x128xf32> -> vector<2x128xf32>
    %c8_243 = arith.constant 8 : index
    %c0_244 = arith.constant 0 : index
    %c0_245 = arith.constant 0 : index
    %275 = vector.load %arg14[%c8_243, %c0_244, %c0_245] : memref<9x128x128xf32, #tpu.memory_space<vmem>>, vector<1x128x128xf32>
    %276 = vector.shape_cast %275 : vector<1x128x128xf32> to vector<128x128xf32>
    %cst_246 = arith.constant dense<0.000000e+00> : vector<2x128xf32>
    %277 = tpu.matmul %274, %276, %cst_246 {dimension_numbers = #tpu.dot_dimension_numbers<[1], [0], [0], [1], [0, 0, 1, 1], [], []>} : vector<2x128xf32>, vector<128x128xf32>, vector<2x128xf32> -> vector<2x128xf32>
    %278 = arith.addf %271, %277 : vector<2x128xf32>
    %c0_247 = arith.constant 0 : index
    %c0_248 = arith.constant 0 : index
    %279 = vector.load %arg15[%c0_247, %c0_248] : memref<1x128xf32, #tpu.memory_space<vmem>>, vector<1x128xf32>
    %c0_249 = arith.constant 0 : index
    %c0_250 = arith.constant 0 : index
    %280 = vector.load %arg16[%c0_249, %c0_250] : memref<1x128xf32, #tpu.memory_space<vmem>>, vector<1x128xf32>
    %cst_251 = arith.constant dense<0.000000e+00> : vector<128xf32>
    %281 = vector.multi_reduction <add>, %278, %cst_251 [0] : vector<2x128xf32> to vector<128xf32>
    %282 = vector.shape_cast %281 : vector<128xf32> to vector<1x128xf32>
    %cst_252 = arith.constant 5.000000e-01 : f32
    %283 = vector.broadcast %cst_252 : f32 to vector<1x128xf32>
    %284 = arith.mulf %282, %283 : vector<1x128xf32>
    %285 = arith.mulf %278, %278 : vector<2x128xf32>
    %cst_253 = arith.constant dense<0.000000e+00> : vector<128xf32>
    %286 = vector.multi_reduction <add>, %285, %cst_253 [0] : vector<2x128xf32> to vector<128xf32>
    %287 = vector.shape_cast %286 : vector<128xf32> to vector<1x128xf32>
    %cst_254 = arith.constant 5.000000e-01 : f32
    %288 = vector.broadcast %cst_254 : f32 to vector<1x128xf32>
    %289 = arith.mulf %287, %288 : vector<1x128xf32>
    %290 = arith.mulf %284, %284 : vector<1x128xf32>
    %291 = arith.subf %289, %290 : vector<1x128xf32>
    %cst_255 = arith.constant 0.000000e+00 : f32
    %292 = vector.broadcast %cst_255 : f32 to vector<1x128xf32>
    %293 = arith.maximumf %291, %292 : vector<1x128xf32>
    %294 = vector.broadcast %284 : vector<1x128xf32> to vector<2x128xf32>
    %295 = arith.subf %278, %294 : vector<2x128xf32>
    %cst_256 = arith.constant 9.99999974E-6 : f32
    %296 = vector.broadcast %cst_256 : f32 to vector<1x128xf32>
    %297 = arith.addf %293, %296 : vector<1x128xf32>
    %298 = math.rsqrt %297 : vector<1x128xf32>
    %299 = vector.broadcast %298 : vector<1x128xf32> to vector<2x128xf32>
    %300 = arith.mulf %295, %299 : vector<2x128xf32>
    %301 = vector.broadcast %279 : vector<1x128xf32> to vector<2x128xf32>
    %302 = arith.mulf %301, %300 : vector<2x128xf32>
    %303 = vector.broadcast %280 : vector<1x128xf32> to vector<2x128xf32>
    %304 = arith.addf %302, %303 : vector<2x128xf32>
    %cst_257 = arith.constant 0.000000e+00 : f32
    %305 = vector.broadcast %cst_257 : f32 to vector<2x128xf32>
    %306 = arith.maximumf %304, %305 : vector<2x128xf32>
    %c0_258 = arith.constant 0 : index
    %c0_259 = arith.constant 0 : index
    %307 = vector.load %arg17[%c0_258, %c0_259] : memref<2x128xf32, #tpu.memory_space<vmem>>, vector<2x128xf32>
    tpu.vector_store %arg17[%c0_258, %c0_259], %306 {strides = array<i32>} : memref<2x128xf32, #tpu.memory_space<vmem>>, vector<2x128xf32>,
    return
  }
  func.func @transform_0(%arg0: i32) -> (i32, i32) {
    %c0_i32 = arith.constant 0 : i32
    %c0_i32_0 = arith.constant 0 : i32
    %c0_i32_1 = arith.constant 0 : i32
    return %c0_i32, %c0_i32_0 : i32, i32
  }
  func.func @transform_1(%arg0: i32) -> (i32, i32) {
    %c0_i32 = arith.constant 0 : i32
    %c0_i32_0 = arith.constant 0 : i32
    %c0_i32_1 = arith.constant 0 : i32
    return %c0_i32, %c0_i32_0 : i32, i32
  }
  func.func @transform_2(%arg0: i32) -> (i32, i32) {
    %c0_i32 = arith.constant 0 : i32
    %c0_i32_0 = arith.constant 0 : i32
    %c0_i32_1 = arith.constant 0 : i32
    return %c0_i32, %c0_i32_0 : i32, i32
  }
  func.func @transform_3(%arg0: i32) -> (i32, i32) {
    %c0_i32 = arith.constant 0 : i32
    %c0_i32_0 = arith.constant 0 : i32
    %c0_i32_1 = arith.constant 0 : i32
    return %c0_i32, %c0_i32_0 : i32, i32
  }
  func.func @transform_4(%arg0: i32) -> (i32, i32, i32) {
    %c0_i32 = arith.constant 0 : i32
    %c0_i32_0 = arith.constant 0 : i32
    %c0_i32_1 = arith.constant 0 : i32
    %c0_i32_2 = arith.constant 0 : i32
    return %c0_i32, %c0_i32_0, %c0_i32_1 : i32, i32, i32
  }
  func.func @transform_5(%arg0: i32) -> (i32, i32, i32) {
    %c0_i32 = arith.constant 0 : i32
    %c0_i32_0 = arith.constant 0 : i32
    %c0_i32_1 = arith.constant 0 : i32
    %c0_i32_2 = arith.constant 0 : i32
    return %c0_i32, %c0_i32_0, %c0_i32_1 : i32, i32, i32
  }
  func.func @transform_6(%arg0: i32) -> (i32, i32) {
    %c0_i32 = arith.constant 0 : i32
    %c0_i32_0 = arith.constant 0 : i32
    %c0_i32_1 = arith.constant 0 : i32
    return %c0_i32, %c0_i32_0 : i32, i32
  }
  func.func @transform_7(%arg0: i32) -> (i32, i32) {
    %c0_i32 = arith.constant 0 : i32
    %c0_i32_0 = arith.constant 0 : i32
    %c0_i32_1 = arith.constant 0 : i32
    return %c0_i32, %c0_i32_0 : i32, i32
  }
  func.func @transform_8(%arg0: i32) -> (i32, i32, i32) {
    %c0_i32 = arith.constant 0 : i32
    %c0_i32_0 = arith.constant 0 : i32
    %c0_i32_1 = arith.constant 0 : i32
    %c0_i32_2 = arith.constant 0 : i32
    return %c0_i32, %c0_i32_0, %c0_i32_1 : i32, i32, i32
  }
  func.func @transform_9(%arg0: i32) -> (i32, i32, i32) {
    %c0_i32 = arith.constant 0 : i32
    %c0_i32_0 = arith.constant 0 : i32
    %c0_i32_1 = arith.constant 0 : i32
    %c0_i32_2 = arith.constant 0 : i32
    return %c0_i32, %c0_i32_0, %c0_i32_1 : i32, i32, i32
  }
  func.func @transform_10(%arg0: i32) -> (i32, i32) {
    %c0_i32 = arith.constant 0 : i32
    %c0_i32_0 = arith.constant 0 : i32
    %c0_i32_1 = arith.constant 0 : i32
    return %c0_i32, %c0_i32_0 : i32, i32
  }
  func.func @transform_11(%arg0: i32) -> (i32, i32) {
    %c0_i32 = arith.constant 0 : i32
    %c0_i32_0 = arith.constant 0 : i32
    %c0_i32_1 = arith.constant 0 : i32
    return %c0_i32, %c0_i32_0 : i32, i32
  }
  func.func @transform_12(%arg0: i32) -> (i32, i32, i32) {
    %c0_i32 = arith.constant 0 : i32
    %c0_i32_0 = arith.constant 0 : i32
    %c0_i32_1 = arith.constant 0 : i32
    %c0_i32_2 = arith.constant 0 : i32
    return %c0_i32, %c0_i32_0, %c0_i32_1 : i32, i32, i32
  }
  func.func @transform_13(%arg0: i32) -> (i32, i32, i32) {
    %c0_i32 = arith.constant 0 : i32
    %c0_i32_0 = arith.constant 0 : i32
    %c0_i32_1 = arith.constant 0 : i32
    %c0_i32_2 = arith.constant 0 : i32
    return %c0_i32, %c0_i32_0, %c0_i32_1 : i32, i32, i32
  }
  func.func @transform_14(%arg0: i32) -> (i32, i32) {
    %c0_i32 = arith.constant 0 : i32
    %c0_i32_0 = arith.constant 0 : i32
    %c0_i32_1 = arith.constant 0 : i32
    return %c0_i32, %c0_i32_0 : i32, i32
  }
  func.func @transform_15(%arg0: i32) -> (i32, i32) {
    %c0_i32 = arith.constant 0 : i32
    %c0_i32_0 = arith.constant 0 : i32
    %c0_i32_1 = arith.constant 0 : i32
    return %c0_i32, %c0_i32_0 : i32, i32
  }
  func.func @transform_16(%arg0: i32) -> (i32, i32) {
    %c0_i32 = arith.constant 0 : i32
    %c0_i32_0 = arith.constant 0 : i32
    %c0_i32_1 = arith.constant 0 : i32
    return %c0_i32, %c0_i32_0 : i32, i32
  }
}

</mosaic_0001>

<llo_original>
// kernel: encoder_forward.1
$region0: #{encoder_forward.1}
  #allocation0 [shape = 'u32[]', space=smem, size = 0x4, offset = 0x4, fixed_abs, tag = 'smem constant byte address 0x4 - core index']
  #allocation1 [shape = 'u32[144,128]{1,0:T(1,128)}', space=vmem, size = 0x12000, scoped, tag = 'internal scratch']
  %s0 = inlined_call_operand.vmem [shape: f32[128,128], index: 0, kind: input, shape index: {}]
  %s1 = inlined_call_operand.hbm [shape: f32[128,128], index: 1, kind: input, shape index: {}]
  %s2 = inlined_call_operand.vmem [shape: f32[1,128], index: 2, kind: input, shape index: {}]
  %s3 = inlined_call_operand.vmem [shape: f32[1,128], index: 3, kind: input, shape index: {}]
  %s4 = inlined_call_operand.vmem [shape: f32[9,32,128], index: 4, kind: input, shape index: {}]
  %s5 = inlined_call_operand.vmem [shape: f32[9,128,128], index: 5, kind: input, shape index: {}]
  %s6 = inlined_call_operand.vmem [shape: f32[1,128], index: 6, kind: input, shape index: {}]
  %s7 = inlined_call_operand.hbm [shape: f32[1,128], index: 7, kind: input, shape index: {}]
  %s8 = inlined_call_operand.hbm [shape: f32[9,8,32], index: 8, kind: input, shape index: {}]
  %s9 = inlined_call_operand.vmem [shape: f32[9,128,128], index: 9, kind: input, shape index: {}]
  %s10 = inlined_call_operand.hbm [shape: f32[1,128], index: 10, kind: input, shape index: {}]
  %s11 = inlined_call_operand.vmem [shape: f32[1,128], index: 11, kind: input, shape index: {}]
  %s12 = inlined_call_operand.vmem [shape: f32[9,2,8], index: 12, kind: input, shape index: {}]
  %s13 = inlined_call_operand.vmem [shape: f32[9,128,128], index: 13, kind: input, shape index: {}]
  %s14 = inlined_call_operand.vmem [shape: f32[1,128], index: 14, kind: input, shape index: {}]
  %s15 = inlined_call_operand.vmem [shape: f32[1,128], index: 15, kind: input, shape index: {}]
  %s16 = inlined_call_operand.hbm [shape: f32[2,128], index: 16, kind: output, shape index: {}]
  %s17 = sld [smem:[#allocation0]]
  $region90: #{encoder_forward.1} parent=0
    _
  %s19 = ssub.s32 1, %s17
  %s20 = scalar_select 0, %s19, %s17
  $region1: #{encoder_forward.1} parent=0
    #allocation2 [shape = 'u8[65536]{0}', space=vmem, size = 0x10000, scoped, tag = 'input window, operand 1, single buffered']
    #allocation3 [shape = 's32[1]{0}', space=sflag, size = 0x4, scoped, tag = 'scoped memory for encoder_forward.1']
    #allocation4 [shape = 's32[1]{0}', space=sflag, size = 0x4, scoped, tag = 'scoped memory for encoder_forward.1']
    #allocation5 [shape = 'u8[512]{0}', space=vmem, size = 0x400, scoped, tag = 'input window, operand 7, single buffered']
    #allocation6 [shape = 's32[1]{0}', space=sflag, size = 0x4, scoped, tag = 'scoped memory for encoder_forward.1']
    #allocation7 [shape = 'u8[36864]{0}', space=vmem, size = 0x9000, scoped, tag = 'input window, operand 8, single buffered']
    #allocation8 [shape = 'u8[512]{0}', space=vmem, size = 0x400, scoped, tag = 'input window, operand 10, single buffered']
    #allocation9 [shape = 's32[1]{0}', space=sflag, size = 0x4, scoped, tag = 'scoped memory for encoder_forward.1']
    #allocation10 [shape = 'u8[1024]{0}', space=vmem, size = 0x400, scoped, tag = 'output window, operand 0, single buffered']
    %21 = vsyncpa [#allocation3], 0
    %22 = vsyncpa [#allocation6], 0
    %23 = vsyncpa [#allocation9], 0
    %24 = vsyncpa [#allocation4], 0
    // Predicated region
    $region2: #{encoder_forward.1} parent=1 // pred_check
      _
    $region3: #{encoder_forward.1} parent=1 // pred_check_branch
      %26 = sbr.rel (0) target = $region5
    $region4: #{encoder_forward.1} parent=1 // pred_region
      _
    $region5: #{encoder_forward.1} parent=1 // pred_fallthru
      _
    // Predicated region
    $region6: #{encoder_forward.1} parent=1 // pred_check
      _
    $region7: #{encoder_forward.1} parent=1 // pred_check_branch
      %28 = sbr.rel (0) target = $region9
    $region8: #{encoder_forward.1} parent=1 // pred_region
      %s30 = ssub.s32 2048, 2048
      %31 = vsyncadd [#allocation3], %s30
      %s32 = sshll.u32 [#allocation2], 4
      %s33 = int_to_ptr.vmem [resolvable:$true] %s32
      %38 = dma.hbm_to_vmem [thread:$0]  %s1, 2048, %s33, [#allocation3], 128, 128, 8
    $region9: #{encoder_forward.1} parent=1 // pred_fallthru
      _
    // Predicated region
    $region10: #{encoder_forward.1} parent=1 // pred_check
      _
    $region11: #{encoder_forward.1} parent=1 // pred_check_branch
      %40 = sbr.rel (0) target = $region13
    $region12: #{encoder_forward.1} parent=1 // pred_region
      _
    $region13: #{encoder_forward.1} parent=1 // pred_fallthru
      _
    // Predicated region
    $region14: #{encoder_forward.1} parent=1 // pred_check
      _
    $region15: #{encoder_forward.1} parent=1 // pred_check_branch
      %42 = sbr.rel (0) target = $region17
    $region16: #{encoder_forward.1} parent=1 // pred_region
      _
    $region17: #{encoder_forward.1} parent=1 // pred_fallthru
      _
    // Predicated region
    $region18: #{encoder_forward.1} parent=1 // pred_check
      _
    $region19: #{encoder_forward.1} parent=1 // pred_check_branch
      %44 = sbr.rel (0) target = $region21
    $region20: #{encoder_forward.1} parent=1 // pred_region
      _
    $region21: #{encoder_forward.1} parent=1 // pred_fallthru
      _
    // Predicated region
    $region22: #{encoder_forward.1} parent=1 // pred_check
      _
    $region23: #{encoder_forward.1} parent=1 // pred_check_branch
      %46 = sbr.rel (0) target = $region25
    $region24: #{encoder_forward.1} parent=1 // pred_region
      _
    $region25: #{encoder_forward.1} parent=1 // pred_fallthru
      _
    // Predicated region
    $region26: #{encoder_forward.1} parent=1 // pred_check
      _
    $region27: #{encoder_forward.1} parent=1 // pred_check_branch
      %48 = sbr.rel (0) target = $region29
    $region28: #{encoder_forward.1} parent=1 // pred_region
      _
    $region29: #{encoder_forward.1} parent=1 // pred_fallthru
      _
    // Predicated region
    $region30: #{encoder_forward.1} parent=1 // pred_check
      _
    $region31: #{encoder_forward.1} parent=1 // pred_check_branch
      %50 = sbr.rel (0) target = $region33
    $region32: #{encoder_forward.1} parent=1 // pred_region
      %s52 = ssub.s32 16, 16
      %53 = vsyncadd [#allocation6], %s52
      %s55 = sshll.u32 [#allocation5], 4
      %s56 = int_to_ptr.vmem [resolvable:$true] %s55
      %58 = dma.hbm_to_vmem [thread:$0]  %s7, 16, %s56, [#allocation6]
    $region33: #{encoder_forward.1} parent=1 // pred_fallthru
      _
    // Predicated region
    $region34: #{encoder_forward.1} parent=1 // pred_check
      _
    $region35: #{encoder_forward.1} parent=1 // pred_check_branch
      %60 = sbr.rel (0) target = $region37
    $region36: #{encoder_forward.1} parent=1 // pred_region
      %s62 = ssub.s32 1152, 1152
      %63 = vsyncadd [#allocation6], %s62
      %s64 = sshll.u32 [#allocation7], 4
      %s65 = int_to_ptr.vmem [resolvable:$true] %s64
      %70 = dma.hbm_to_vmem [thread:$0]  %s8, 1152, %s65, [#allocation6], 128, 128, 8
    $region37: #{encoder_forward.1} parent=1 // pred_fallthru
      _
    // Predicated region
    $region38: #{encoder_forward.1} parent=1 // pred_check
      _
    $region39: #{encoder_forward.1} parent=1 // pred_check_branch
      %72 = sbr.rel (0) target = $region41
    $region40: #{encoder_forward.1} parent=1 // pred_region
      _
    $region41: #{encoder_forward.1} parent=1 // pred_fallthru
      _
    // Predicated region
    $region42: #{encoder_forward.1} parent=1 // pred_check
      _
    $region43: #{encoder_forward.1} parent=1 // pred_check_branch
      %74 = sbr.rel (0) target = $region45
    $region44: #{encoder_forward.1} parent=1 // pred_region
      %s76 = ssub.s32 16, 16
      %77 = vsyncadd [#allocation9], %s76
      %s79 = sshll.u32 [#allocation8], 4
      %s80 = int_to_ptr.vmem [resolvable:$true] %s79
      %82 = dma.hbm_to_vmem [thread:$0]  %s10, 16, %s80, [#allocation9]
    $region45: #{encoder_forward.1} parent=1 // pred_fallthru
      _
    // Predicated region
    $region46: #{encoder_forward.1} parent=1 // pred_check
      _
    $region47: #{encoder_forward.1} parent=1 // pred_check_branch
      %84 = sbr.rel (0) target = $region49
    $region48: #{encoder_forward.1} parent=1 // pred_region
      _
    $region49: #{encoder_forward.1} parent=1 // pred_fallthru
      _
    // Predicated region
    $region50: #{encoder_forward.1} parent=1 // pred_check
      _
    $region51: #{encoder_forward.1} parent=1 // pred_check_branch
      %86 = sbr.rel (0) target = $region53
    $region52: #{encoder_forward.1} parent=1 // pred_region
      _
    $region53: #{encoder_forward.1} parent=1 // pred_fallthru
      _
    // Predicated region
    $region54: #{encoder_forward.1} parent=1 // pred_check
      _
    $region55: #{encoder_forward.1} parent=1 // pred_check_branch
      %88 = sbr.rel (0) target = $region57
    $region56: #{encoder_forward.1} parent=1 // pred_region
      _
    $region57: #{encoder_forward.1} parent=1 // pred_fallthru
      _
    // Predicated region
    $region58: #{encoder_forward.1} parent=1 // pred_check
      _
    $region59: #{encoder_forward.1} parent=1 // pred_check_branch
      %90 = sbr.rel (0) target = $region61
    $region60: #{encoder_forward.1} parent=1 // pred_region
      _
    $region61: #{encoder_forward.1} parent=1 // pred_fallthru
      _
    // Predicated region
    $region62: #{encoder_forward.1} parent=1 // pred_check
      _
    $region63: #{encoder_forward.1} parent=1 // pred_check_branch
      %92 = sbr.rel (0) target = $region65
    $region64: #{encoder_forward.1} parent=1 // pred_region
      _
    $region65: #{encoder_forward.1} parent=1 // pred_fallthru
      _
    // Predicated region
    $region66: #{encoder_forward.1} parent=1 // pred_check
      _
    $region67: #{encoder_forward.1} parent=1 // pred_check_branch
      %94 = sbr.rel (0) target = $region69
    $region68: #{encoder_forward.1} parent=1 // pred_region
      %95 = dma.done [#allocation3], 2048
    $region69: #{encoder_forward.1} parent=1 // pred_fallthru
      _
    // Predicated region
    $region70: #{encoder_forward.1} parent=1 // pred_check
      _
    $region71: #{encoder_forward.1} parent=1 // pred_check_branch
      %97 = sbr.rel (0) target = $region73
    $region72: #{encoder_forward.1} parent=1 // pred_region
      %98 = dma.done [#allocation6], 16
    $region73: #{encoder_forward.1} parent=1 // pred_fallthru
      _
    // Predicated region
    $region74: #{encoder_forward.1} parent=1 // pred_check
      _
    $region75: #{encoder_forward.1} parent=1 // pred_check_branch
      %100 = sbr.rel (0) target = $region77
    $region76: #{encoder_forward.1} parent=1 // pred_region
      %101 = dma.done [#allocation6], 1152
    $region77: #{encoder_forward.1} parent=1 // pred_fallthru
      _
    // Predicated region
    $region78: #{encoder_forward.1} parent=1 // pred_check
      _
    $region79: #{encoder_forward.1} parent=1 // pred_check_branch
      %103 = sbr.rel (0) target = $region81
    $region80: #{encoder_forward.1} parent=1 // pred_region
      %104 = dma.done [#allocation9], 16
    $region81: #{encoder_forward.1} parent=1 // pred_fallthru
      _
    %v105 = vld [vmem:[%s0] sm:$0xff]
    %v106 = vld [vmem:[%s0 + $0x8] sm:$0xff]
    %v107 = vld [vmem:[%s0 + $0x10] sm:$0xff]
    %v108 = vld [vmem:[%s0 + $0x18] sm:$0xff]
    %v109 = vld [vmem:[%s0 + $0x20] sm:$0xff]
    %v110 = vld [vmem:[%s0 + $0x28] sm:$0xff]
    %v111 = vld [vmem:[%s0 + $0x30] sm:$0xff]
    %v112 = vld [vmem:[%s0 + $0x38] sm:$0xff]
    %v113 = vld [vmem:[%s0 + $0x40] sm:$0xff]
    %v114 = vld [vmem:[%s0 + $0x48] sm:$0xff]
    %v115 = vld [vmem:[%s0 + $0x50] sm:$0xff]
    %v116 = vld [vmem:[%s0 + $0x58] sm:$0xff]
    %v117 = vld [vmem:[%s0 + $0x60] sm:$0xff]
    %v118 = vld [vmem:[%s0 + $0x68] sm:$0xff]
    %v119 = vld [vmem:[%s0 + $0x70] sm:$0xff]
    %v120 = vld [vmem:[%s0 + $0x78] sm:$0xff]
    %v121 = vld [vmem:[#allocation2] sm:$0xff]
    %v122 = vld [vmem:[#allocation2 + $0x8] sm:$0xff]
    %v123 = vld [vmem:[#allocation2 + $0x10] sm:$0xff]
    %v124 = vld [vmem:[#allocation2 + $0x18] sm:$0xff]
    %v125 = vld [vmem:[#allocation2 + $0x20] sm:$0xff]
    %v126 = vld [vmem:[#allocation2 + $0x28] sm:$0xff]
    %v127 = vld [vmem:[#allocation2 + $0x30] sm:$0xff]
    %v128 = vld [vmem:[#allocation2 + $0x38] sm:$0xff]
    %v129 = vld [vmem:[#allocation2 + $0x40] sm:$0xff]
    %v130 = vld [vmem:[#allocation2 + $0x48] sm:$0xff]
    %v131 = vld [vmem:[#allocation2 + $0x50] sm:$0xff]
    %v132 = vld [vmem:[#allocation2 + $0x58] sm:$0xff]
    %v133 = vld [vmem:[#allocation2 + $0x60] sm:$0xff]
    %v134 = vld [vmem:[#allocation2 + $0x68] sm:$0xff]
    %v135 = vld [vmem:[#allocation2 + $0x70] sm:$0xff]
    %v136 = vld [vmem:[#allocation2 + $0x78] sm:$0xff]
    %137 = vmatprep.subr.mxu0 0.0
    %138 = vmatpush1.msra.mxu0 %v121
    %139 = vmatprep.subr.mxu0 0.0
    %140 = vmatpush1.msra.mxu0 %v122
    %141 = vmatprep.subr.mxu0 0.0
    %142 = vmatpush1.msra.mxu0 %v123
    %143 = vmatprep.subr.mxu0 0.0
    %144 = vmatpush1.msra.mxu0 %v124
    %145 = vmatprep.subr.mxu0 0.0
    %146 = vmatpush1.msra.mxu0 %v125
    %147 = vmatprep.subr.mxu0 0.0
    %148 = vmatpush1.msra.mxu0 %v126
    %149 = vmatprep.subr.mxu0 0.0
    %150 = vmatpush1.msra.mxu0 %v127
    %151 = vmatprep.subr.mxu0 0.0
    %152 = vmatpush1.msra.mxu0 %v128
    %153 = vmatprep.subr.mxu0 0.0
    %154 = vmatpush1.msra.mxu0 %v129
    %155 = vmatprep.subr.mxu0 0.0
    %156 = vmatpush1.msra.mxu0 %v130
    %157 = vmatprep.subr.mxu0 0.0
    %158 = vmatpush1.msra.mxu0 %v131
    %159 = vmatprep.subr.mxu0 0.0
    %160 = vmatpush1.msra.mxu0 %v132
    %161 = vmatprep.subr.mxu0 0.0
    %162 = vmatpush1.msra.mxu0 %v133
    %163 = vmatprep.subr.mxu0 0.0
    %164 = vmatpush1.msra.mxu0 %v134
    %165 = vmatprep.subr.mxu0 0.0
    %166 = vmatpush1.msra.mxu0 %v135
    %167 = vmatprep.subr.mxu0 0.0
    %168 = vmatpush1.msra.mxu0 %v136
    %169 = vmatprep.subr.mxu0 0.0
    %170 = vmatpush1.msra.mxu0 0.0
    %171 = vmatprep.subr.mxu0 0.0
    %172 = vmatpush1.msra.mxu0 0.0
    %173 = vmatprep.subr.mxu0 0.0
    %174 = vmatpush1.msra.mxu0 0.0
    %175 = vmatprep.subr.mxu0 0.0
    %176 = vmatpush1.msra.mxu0 0.0
    %177 = vmatprep.subr.mxu0 0.0
    %178 = vmatpush1.msra.mxu0 0.0
    %179 = vmatprep.subr.mxu0 0.0
    %180 = vmatpush1.msra.mxu0 0.0
    %181 = vmatprep.subr.mxu0 0.0
    %182 = vmatpush1.msra.mxu0 0.0
    %183 = vmatprep.subr.mxu0 0.0
    %184 = vmatpush1.msra.mxu0 0.0
    %185 = vmatprep.subr.mxu0 0.0
    %186 = vmatpush1.msra.mxu0 0.0
    %187 = vmatprep.subr.mxu0 0.0
    %188 = vmatpush1.msra.mxu0 0.0
    %189 = vmatprep.subr.mxu0 0.0
    %190 = vmatpush1.msra.mxu0 0.0
    %191 = vmatprep.subr.mxu0 0.0
    %192 = vmatpush1.msra.mxu0 0.0
    %193 = vmatprep.subr.mxu0 0.0
    %194 = vmatpush1.msra.mxu0 0.0
    %195 = vmatprep.subr.mxu0 0.0
    %196 = vmatpush1.msra.mxu0 0.0
    %197 = vmatprep.subr.mxu0 0.0
    %198 = vmatpush1.msra.mxu0 0.0
    %199 = vmatprep.subr.mxu0 0.0
    %200 = vmatpush1.msra.mxu0 0.0
    %201 = vmatprep.mubr.f32.mxu0 0.0
    %202 = vmatmul.mubr.f32.gmra.mrb[0].mxu0 %v105
    %v203 = vpop.f32.mrb[0].mxu0
    %v204 = vadd.f32 0.0, %v203
    %v205 = vpop.f32.mrb[0].mxu0
    %206 = vmatprep.mubr.f32.mxu0 0.0
    %207 = vmatmul.mubr.f32.gmra.mrb[0].mxu0 %v106
    %v208 = vpop.f32.mrb[0].mxu0
    %v209 = vadd.f32 0.0, %v208
    %v210 = vpop.f32.mrb[0].mxu0
    %211 = vmatprep.mubr.f32.mxu0 0.0
    %212 = vmatmul.mubr.f32.gmra.mrb[0].mxu0 %v107
    %v213 = vpop.f32.mrb[0].mxu0
    %v214 = vadd.f32 0.0, %v213
    %v215 = vpop.f32.mrb[0].mxu0
    %216 = vmatprep.mubr.f32.mxu0 0.0
    %217 = vmatmul.mubr.f32.gmra.mrb[0].mxu0 %v108
    %v218 = vpop.f32.mrb[0].mxu0
    %v219 = vadd.f32 0.0, %v218
    %v220 = vpop.f32.mrb[0].mxu0
    %221 = vmatprep.mubr.f32.mxu0 0.0
    %222 = vmatmul.mubr.f32.gmra.mrb[0].mxu0 %v109
    %v223 = vpop.f32.mrb[0].mxu0
    %v224 = vadd.f32 0.0, %v223
    %v225 = vpop.f32.mrb[0].mxu0
    %226 = vmatprep.mubr.f32.mxu0 0.0
    %227 = vmatmul.mubr.f32.gmra.mrb[0].mxu0 %v110
    %v228 = vpop.f32.mrb[0].mxu0
    %v229 = vadd.f32 0.0, %v228
    %v230 = vpop.f32.mrb[0].mxu0
    %231 = vmatprep.mubr.f32.mxu0 0.0
    %232 = vmatmul.mubr.f32.gmra.mrb[0].mxu0 %v111
    %v233 = vpop.f32.mrb[0].mxu0
    %v234 = vadd.f32 0.0, %v233
    %v235 = vpop.f32.mrb[0].mxu0
    %236 = vmatprep.mubr.f32.mxu0 0.0
    %237 = vmatmul.mubr.f32.gmra.mrb[0].mxu0 %v112
    %v238 = vpop.f32.mrb[0].mxu0
    %v239 = vadd.f32 0.0, %v238
    %v240 = vpop.f32.mrb[0].mxu0
    %241 = vmatprep.mubr.f32.mxu0 0.0
    %242 = vmatmul.mubr.f32.gmra.mrb[0].mxu0 %v113
    %v243 = vpop.f32.mrb[0].mxu0
    %v244 = vadd.f32 0.0, %v243
    %v245 = vpop.f32.mrb[0].mxu0
    %246 = vmatprep.mubr.f32.mxu0 0.0
    %247 = vmatmul.mubr.f32.gmra.mrb[0].mxu0 %v114
    %v248 = vpop.f32.mrb[0].mxu0
    %v249 = vadd.f32 0.0, %v248
    %v250 = vpop.f32.mrb[0].mxu0
    %251 = vmatprep.mubr.f32.mxu0 0.0
    %252 = vmatmul.mubr.f32.gmra.mrb[0].mxu0 %v115
    %v253 = vpop.f32.mrb[0].mxu0
    %v254 = vadd.f32 0.0, %v253
    %v255 = vpop.f32.mrb[0].mxu0
    %256 = vmatprep.mubr.f32.mxu0 0.0
    %257 = vmatmul.mubr.f32.gmra.mrb[0].mxu0 %v116
    %v258 = vpop.f32.mrb[0].mxu0
    %v259 = vadd.f32 0.0, %v258
    %v260 = vpop.f32.mrb[0].mxu0
    %261 = vmatprep.mubr.f32.mxu0 0.0
    %262 = vmatmul.mubr.f32.gmra.mrb[0].mxu0 %v117
    %v263 = vpop.f32.mrb[0].mxu0
    %v264 = vadd.f32 0.0, %v263
    %v265 = vpop.f32.mrb[0].mxu0
    %266 = vmatprep.mubr.f32.mxu0 0.0
    %267 = vmatmul.mubr.f32.gmra.mrb[0].mxu0 %v118
    %v268 = vpop.f32.mrb[0].mxu0
    %v269 = vadd.f32 0.0, %v268
    %v270 = vpop.f32.mrb[0].mxu0
    %271 = vmatprep.mubr.f32.mxu0 0.0
    %272 = vmatmul.mubr.f32.gmra.mrb[0].mxu0 %v119
    %v273 = vpop.f32.mrb[0].mxu0
    %v274 = vadd.f32 0.0, %v273
    %v275 = vpop.f32.mrb[0].mxu0
    %276 = vmatprep.mubr.f32.mxu0 0.0
    %277 = vmatmul.mubr.f32.gmra.mrb[0].mxu0 %v120
    %v278 = vpop.f32.mrb[0].mxu0
    %v279 = vadd.f32 0.0, %v278
    %v280 = vpop.f32.mrb[0].mxu0
    %281 = vdwg.mxu0
    %v282 = vld [vmem:[%s2] sm:$0x1]
    %v283 = vld [vmem:[%s3] sm:$0x1]
    %v284 = vadd.f32 %v204, %v209
    %v285 = vadd.f32 %v284, %v214
    %v286 = vadd.f32 %v285, %v219
    %v287 = vadd.f32 %v286, %v224
    %v288 = vadd.f32 %v287, %v229
    %v289 = vadd.f32 %v288, %v234
    %v290 = vadd.f32 %v289, %v239
    %v291 = vadd.f32 %v290, %v244
    %v292 = vadd.f32 %v291, %v249
    %v293 = vadd.f32 %v292, %v254
    %v294 = vadd.f32 %v293, %v259
    %v295 = vadd.f32 %v294, %v264
    %v296 = vadd.f32 %v295, %v269
    %v297 = vadd.f32 %v296, %v274
    %v298 = vadd.f32 %v297, %v279
    %v299 = vrot.slane %v298, 4
    %v300 = vadd.f32 %v298, %v299
    %v301 = vrot.slane %v300, 2
    %v302 = vadd.f32 %v300, %v301
    %v303 = vrot.slane %v302, 1
    %v304 = vadd.f32 %v302, %v303
    %v305 = vmul.f32 %v304, 0.0078125
    %v306 = vmul.f32 %v204, %v204
    %v307 = vmul.f32 %v209, %v209
    %v308 = vmul.f32 %v214, %v214
    %v309 = vmul.f32 %v219, %v219
    %v310 = vmul.f32 %v224, %v224
    %v311 = vmul.f32 %v229, %v229
    %v312 = vmul.f32 %v234, %v234
    %v313 = vmul.f32 %v239, %v239
    %v314 = vmul.f32 %v244, %v244
    %v315 = vmul.f32 %v249, %v249
    %v316 = vmul.f32 %v254, %v254
    %v317 = vmul.f32 %v259, %v259
    %v318 = vmul.f32 %v264, %v264
    %v319 = vmul.f32 %v269, %v269
    %v320 = vmul.f32 %v274, %v274
    %v321 = vmul.f32 %v279, %v279
    %v322 = vadd.f32 %v306, %v307
    %v323 = vadd.f32 %v322, %v308
    %v324 = vadd.f32 %v323, %v309
    %v325 = vadd.f32 %v324, %v310
    %v326 = vadd.f32 %v325, %v311
    %v327 = vadd.f32 %v326, %v312
    %v328 = vadd.f32 %v327, %v313
    %v329 = vadd.f32 %v328, %v314
    %v330 = vadd.f32 %v329, %v315
    %v331 = vadd.f32 %v330, %v316
    %v332 = vadd.f32 %v331, %v317
    %v333 = vadd.f32 %v332, %v318
    %v334 = vadd.f32 %v333, %v319
    %v335 = vadd.f32 %v334, %v320
    %v336 = vadd.f32 %v335, %v321
    %v337 = vrot.slane %v336, 4
    %v338 = vadd.f32 %v336, %v337
    %v339 = vrot.slane %v338, 2
    %v340 = vadd.f32 %v338, %v339
    %v341 = vrot.slane %v340, 1
    %v342 = vadd.f32 %v340, %v341
    %v343 = vmul.f32 %v342, 0.0078125
    %v344 = vmul.f32 %v305, %v305
    %v345 = vsub.f32 %v343, %v344
    %v346 = vmax.f32 %v345, 0.0
    %v347 = vsub.f32 %v204, %v305
    %v348 = vsub.f32 %v209, %v305
    %v349 = vsub.f32 %v214, %v305
    %v350 = vsub.f32 %v219, %v305
    %v351 = vsub.f32 %v224, %v305
    %v352 = vsub.f32 %v229, %v305
    %v353 = vsub.f32 %v234, %v305
    %v354 = vsub.f32 %v239, %v305
    %v355 = vsub.f32 %v244, %v305
    %v356 = vsub.f32 %v249, %v305
    %v357 = vsub.f32 %v254, %v305
    %v358 = vsub.f32 %v259, %v305
    %v359 = vsub.f32 %v264, %v305
    %v360 = vsub.f32 %v269, %v305
    %v361 = vsub.f32 %v274, %v305
    %v362 = vsub.f32 %v279, %v305
    %v363 = vadd.f32 %v346, 1e-05
    %v364 = vrsqrt.pop %v363
    %v365 = vmul.f32 %v347, %v364
    %v366 = vmul.f32 %v348, %v364
    %v367 = vmul.f32 %v349, %v364
    %v368 = vmul.f32 %v350, %v364
    %v369 = vmul.f32 %v351, %v364
    %v370 = vmul.f32 %v352, %v364
    %v371 = vmul.f32 %v353, %v364
    %v372 = vmul.f32 %v354, %v364
    %v373 = vmul.f32 %v355, %v364
    %v374 = vmul.f32 %v356, %v364
    %v375 = vmul.f32 %v357, %v364
    %v376 = vmul.f32 %v358, %v364
    %v377 = vmul.f32 %v359, %v364
    %v378 = vmul.f32 %v360, %v364
    %v379 = vmul.f32 %v361, %v364
    %v380 = vmul.f32 %v362, %v364
    %v382 = vlaneseq
    %v383 = vshrl.u32 %v382, 7
    %v384 = vsub.s32 0, %v383
    %v385 = vrot.slane %v282, %v384
    %v387 = vmul.f32 %v385, %v365
    %v388 = vmul.f32 %v385, %v366
    %v389 = vmul.f32 %v385, %v367
    %v390 = vmul.f32 %v385, %v368
    %v391 = vmul.f32 %v385, %v369
    %v392 = vmul.f32 %v385, %v370
    %v393 = vmul.f32 %v385, %v371
    %v394 = vmul.f32 %v385, %v372
    %v395 = vmul.f32 %v385, %v373
    %v396 = vmul.f32 %v385, %v374
    %v397 = vmul.f32 %v385, %v375
    %v398 = vmul.f32 %v385, %v376
    %v399 = vmul.f32 %v385, %v377
    %v400 = vmul.f32 %v385, %v378
    %v401 = vmul.f32 %v385, %v379
    %v402 = vmul.f32 %v385, %v380
    %v404 = vlaneseq
    %v405 = vshrl.u32 %v404, 7
    %v406 = vsub.s32 0, %v405
    %v407 = vrot.slane %v283, %v406
    %v409 = vadd.f32 %v387, %v407
    %v410 = vadd.f32 %v388, %v407
    %v411 = vadd.f32 %v389, %v407
    %v412 = vadd.f32 %v390, %v407
    %v413 = vadd.f32 %v391, %v407
    %v414 = vadd.f32 %v392, %v407
    %v415 = vadd.f32 %v393, %v407
    %v416 = vadd.f32 %v394, %v407
    %v417 = vadd.f32 %v395, %v407
    %v418 = vadd.f32 %v396, %v407
    %v419 = vadd.f32 %v397, %v407
    %v420 = vadd.f32 %v398, %v407
    %v421 = vadd.f32 %v399, %v407
    %v422 = vadd.f32 %v400, %v407
    %v423 = vadd.f32 %v401, %v407
    %v424 = vadd.f32 %v402, %v407
    %v425 = vmax.f32 %v409, 0.0
    %v426 = vmax.f32 %v410, 0.0
    %v427 = vmax.f32 %v411, 0.0
    %v428 = vmax.f32 %v412, 0.0
    %v429 = vmax.f32 %v413, 0.0
    %v430 = vmax.f32 %v414, 0.0
    %v431 = vmax.f32 %v415, 0.0
    %v432 = vmax.f32 %v416, 0.0
    %v433 = vmax.f32 %v417, 0.0
    %v434 = vmax.f32 %v418, 0.0
    %v435 = vmax.f32 %v419, 0.0
    %v436 = vmax.f32 %v420, 0.0
    %v437 = vmax.f32 %v421, 0.0
    %v438 = vmax.f32 %v422, 0.0
    %v439 = vmax.f32 %v423, 0.0
    %v440 = vmax.f32 %v424, 0.0
    %v441 = vld [vmem:[%s4] sm:$0xff]
    %v442 = vld [vmem:[%s4 + $0x8] sm:$0xff]
    %v443 = vld [vmem:[%s4 + $0x10] sm:$0xff]
    %v444 = vld [vmem:[%s4 + $0x18] sm:$0xff]
    %445 = vmatprep.subr.mxu0 0.0
    %446 = vmatpush1.msra.mxu0 %v425
    %447 = vmatprep.subr.mxu0 0.0
    %448 = vmatpush1.msra.mxu0 %v426
    %449 = vmatprep.subr.mxu0 0.0
    %450 = vmatpush1.msra.mxu0 %v427
    %451 = vmatprep.subr.mxu0 0.0
    %452 = vmatpush1.msra.mxu0 %v428
    %453 = vmatprep.subr.mxu0 0.0
    %454 = vmatpush1.msra.mxu0 %v429
    %455 = vmatprep.subr.mxu0 0.0
    %456 = vmatpush1.msra.mxu0 %v430
    %457 = vmatprep.subr.mxu0 0.0
    %458 = vmatpush1.msra.mxu0 %v431
    %459 = vmatprep.subr.mxu0 0.0
    %460 = vmatpush1.msra.mxu0 %v432
    %461 = vmatprep.subr.mxu0 0.0
    %462 = vmatpush1.msra.mxu0 %v433
    %463 = vmatprep.subr.mxu0 0.0
    %464 = vmatpush1.msra.mxu0 %v434
    %465 = vmatprep.subr.mxu0 0.0
    %466 = vmatpush1.msra.mxu0 %v435
    %467 = vmatprep.subr.mxu0 0.0
    %468 = vmatpush1.msra.mxu0 %v436
    %469 = vmatprep.subr.mxu0 0.0
    %470 = vmatpush1.msra.mxu0 %v437
    %471 = vmatprep.subr.mxu0 0.0
    %472 = vmatpush1.msra.mxu0 %v438
    %473 = vmatprep.subr.mxu0 0.0
    %474 = vmatpush1.msra.mxu0 %v439
    %475 = vmatprep.subr.mxu0 0.0
    %476 = vmatpush1.msra.mxu0 %v440
    %477 = vmatprep.subr.mxu0 0.0
    %478 = vmatpush1.msra.mxu0 0.0
    %479 = vmatprep.subr.mxu0 0.0
    %480 = vmatpush1.msra.mxu0 0.0
    %481 = vmatprep.subr.mxu0 0.0
    %482 = vmatpush1.msra.mxu0 0.0
    %483 = vmatprep.subr.mxu0 0.0
    %484 = vmatpush1.msra.mxu0 0.0
    %485 = vmatprep.subr.mxu0 0.0
    %486 = vmatpush1.msra.mxu0 0.0
    %487 = vmatprep.subr.mxu0 0.0
    %488 = vmatpush1.msra.mxu0 0.0
    %489 = vmatprep.subr.mxu0 0.0
    %490 = vmatpush1.msra.mxu0 0.0
    %491 = vmatprep.subr.mxu0 0.0
    %492 = vmatpush1.msra.mxu0 0.0
    %493 = vmatprep.subr.mxu0 0.0
    %494 = vmatpush1.msra.mxu0 0.0
    %495 = vmatprep.subr.mxu0 0.0
    %496 = vmatpush1.msra.mxu0 0.0
    %497 = vmatprep.subr.mxu0 0.0
    %498 = vmatpush1.msra.mxu0 0.0
    %499 = vmatprep.subr.mxu0 0.0
    %500 = vmatpush1.msra.mxu0 0.0
    %501 = vmatprep.subr.mxu0 0.0
    %502 = vmatpush1.msra.mxu0 0.0
    %503 = vmatprep.subr.mxu0 0.0
    %504 = vmatpush1.msra.mxu0 0.0
    %505 = vmatprep.subr.mxu0 0.0
    %506 = vmatpush1.msra.mxu0 0.0
    %507 = vmatprep.subr.mxu0 0.0
    %508 = vmatpush1.msra.mxu0 0.0
    %509 = vmatprep.mubr.f32.mxu0 0.0
    %510 = vmatmul.mubr.f32.gmra.mrb[0].mxu0 %v441
    %v511 = vpop.f32.mrb[0].mxu0
    %v512 = vadd.f32 0.0, %v511
    %v513 = vpop.f32.mrb[0].mxu0
    %514 = vmatprep.mubr.f32.mxu0 0.0
    %515 = vmatmul.mubr.f32.gmra.mrb[0].mxu0 %v442
    %v516 = vpop.f32.mrb[0].mxu0
    %v517 = vadd.f32 0.0, %v516
    %v518 = vpop.f32.mrb[0].mxu0
    %519 = vmatprep.mubr.f32.mxu0 0.0
    %520 = vmatmul.mubr.f32.gmra.mrb[0].mxu0 %v443
    %v521 = vpop.f32.mrb[0].mxu0
    %v522 = vadd.f32 0.0, %v521
    %v523 = vpop.f32.mrb[0].mxu0
    %524 = vmatprep.mubr.f32.mxu0 0.0
    %525 = vmatmul.mubr.f32.gmra.mrb[0].mxu0 %v444
    %v526 = vpop.f32.mrb[0].mxu0
    %v527 = vadd.f32 0.0, %v526
    %v528 = vpop.f32.mrb[0].mxu0
    %529 = vdwg.mxu0
    %v530 = vld [vmem:[%s5] sm:$0xff]
    %v531 = vld [vmem:[%s5 + $0x8] sm:$0xff]
    %v532 = vld [vmem:[%s5 + $0x10] sm:$0xff]
    %v533 = vld [vmem:[%s5 + $0x18] sm:$0xff]
    %v534 = vld [vmem:[%s5 + $0x20] sm:$0xff]
    %v535 = vld [vmem:[%s5 + $0x28] sm:$0xff]
    %v536 = vld [vmem:[%s5 + $0x30] sm:$0xff]
    %v537 = vld [vmem:[%s5 + $0x38] sm:$0xff]
    %v538 = vld [vmem:[%s5 + $0x40] sm:$0xff]
    %v539 = vld [vmem:[%s5 + $0x48] sm:$0xff]
    %v540 = vld [vmem:[%s5 + $0x50] sm:$0xff]
    %v541 = vld [vmem:[%s5 + $0x58] sm:$0xff]
    %v542 = vld [vmem:[%s5 + $0x60] sm:$0xff]
    %v543 = vld [vmem:[%s5 + $0x68] sm:$0xff]
    %v544 = vld [vmem:[%s5 + $0x70] sm:$0xff]
    %v545 = vld [vmem:[%s5 + $0x78] sm:$0xff]
    %s546 = scalar_lea.vmem %s4, 32
    %v547 = vld [vmem:[%s546] sm:$0xff]
    %v548 = vld [vmem:[%s546 + $0x8] sm:$0xff]
    %v549 = vld [vmem:[%s546 + $0x10] sm:$0xff]
    %v550 = vld [vmem:[%s546 + $0x18] sm:$0xff]
    %551 = vmatprep.subr.mxu0 0.0
    %552 = vmatpush1.msra.mxu0 %v425
    %553 = vmatprep.subr.mxu0 0.0
    %554 = vmatpush1.msra.mxu0 %v426
    %555 = vmatprep.subr.mxu0 0.0
    %556 = vmatpush1.msra.mxu0 %v427
    %557 = vmatprep.subr.mxu0 0.0
    %558 = vmatpush1.msra.mxu0 %v428
    %559 = vmatprep.subr.mxu0 0.0
    %560 = vmatpush1.msra.mxu0 %v429
    %561 = vmatprep.subr.mxu0 0.0
    %562 = vmatpush1.msra.mxu0 %v430
    %563 = vmatprep.subr.mxu0 0.0
    %564 = vmatpush1.msra.mxu0 %v431
    %565 = vmatprep.subr.mxu0 0.0
    %566 = vmatpush1.msra.mxu0 %v432
    %567 = vmatprep.subr.mxu0 0.0
    %568 = vmatpush1.msra.mxu0 %v433
    %569 = vmatprep.subr.mxu0 0.0
    %570 = vmatpush1.msra.mxu0 %v434
    %571 = vmatprep.subr.mxu0 0.0
    %572 = vmatpush1.msra.mxu0 %v435
    %573 = vmatprep.subr.mxu0 0.0
    %574 = vmatpush1.msra.mxu0 %v436
    %575 = vmatprep.subr.mxu0 0.0
    %576 = vmatpush1.msra.mxu0 %v437
    %577 = vmatprep.subr.mxu0 0.0
    %578 = vmatpush1.msra.mxu0 %v438
    %579 = vmatprep.subr.mxu0 0.0
    %580 = vmatpush1.msra.mxu0 %v439
    %581 = vmatprep.subr.mxu0 0.0
    %582 = vmatpush1.msra.mxu0 %v440
    %583 = vmatprep.subr.mxu0 0.0
    %584 = vmatpush1.msra.mxu0 0.0
    %585 = vmatprep.subr.mxu0 0.0
    %586 = vmatpush1.msra.mxu0 0.0
    %587 = vmatprep.subr.mxu0 0.0
    %588 = vmatpush1.msra.mxu0 0.0
    %589 = vmatprep.subr.mxu0 0.0
    %590 = vmatpush1.msra.mxu0 0.0
    %591 = vmatprep.subr.mxu0 0.0
    %592 = vmatpush1.msra.mxu0 0.0
    %593 = vmatprep.subr.mxu0 0.0
    %594 = vmatpush1.msra.mxu0 0.0
    %595 = vmatprep.subr.mxu0 0.0
    %596 = vmatpush1.msra.mxu0 0.0
    %597 = vmatprep.subr.mxu0 0.0
    %598 = vmatpush1.msra.mxu0 0.0
    %599 = vmatprep.subr.mxu0 0.0
    %600 = vmatpush1.msra.mxu0 0.0
    %601 = vmatprep.subr.mxu0 0.0
    %602 = vmatpush1.msra.mxu0 0.0
    %603 = vmatprep.subr.mxu0 0.0
    %604 = vmatpush1.msra.mxu0 0.0
    %605 = vmatprep.subr.mxu0 0.0
    %606 = vmatpush1.msra.mxu0 0.0
    %607 = vmatprep.subr.mxu0 0.0
    %608 = vmatpush1.msra.mxu0 0.0
    %609 = vmatprep.subr.mxu0 0.0
    %610 = vmatpush1.msra.mxu0 0.0
    %611 = vmatprep.subr.mxu0 0.0
    %612 = vmatpush1.msra.mxu0 0.0
    %613 = vmatprep.subr.mxu0 0.0
    %614 = vmatpush1.msra.mxu0 0.0
    %615 = vmatprep.mubr.f32.mxu0 0.0
    %616 = vmatmul.mubr.f32.gmra.mrb[0].mxu0 %v547
    %v617 = vpop.f32.mrb[0].mxu0
    %v618 = vadd.f32 0.0, %v617
    %v619 = vpop.f32.mrb[0].mxu0
    %620 = vmatprep.mubr.f32.mxu0 0.0
    %621 = vmatmul.mubr.f32.gmra.mrb[0].mxu0 %v548
    %v622 = vpop.f32.mrb[0].mxu0
    %v623 = vadd.f32 0.0, %v622
    %v624 = vpop.f32.mrb[0].mxu0
    %625 = vmatprep.mubr.f32.mxu0 0.0
    %626 = vmatmul.mubr.f32.gmra.mrb[0].mxu0 %v549
    %v627 = vpop.f32.mrb[0].mxu0
    %v628 = vadd.f32 0.0, %v627
    %v629 = vpop.f32.mrb[0].mxu0
    %630 = vmatprep.mubr.f32.mxu0 0.0
    %631 = vmatmul.mubr.f32.gmra.mrb[0].mxu0 %v550
    %v632 = vpop.f32.mrb[0].mxu0
    %v633 = vadd.f32 0.0, %v632
    %v634 = vpop.f32.mrb[0].mxu0
    %635 = vdwg.mxu0
    %s636 = scalar_lea.vmem %s5, 128
    %v637 = vld [vmem:[%s636] sm:$0xff]
    %v638 = vld [vmem:[%s636 + $0x8] sm:$0xff]
    %v639 = vld [vmem:[%s636 + $0x10] sm:$0xff]
    %v640 = vld [vmem:[%s636 + $0x18] sm:$0xff]
    %v641 = vld [vmem:[%s636 + $0x20] sm:$0xff]
    %v642 = vld [vmem:[%s636 + $0x28] sm:$0xff]
    %v643 = vld [vmem:[%s636 + $0x30] sm:$0xff]
    %v644 = vld [vmem:[%s636 + $0x38] sm:$0xff]
    %v645 = vld [vmem:[%s636 + $0x40] sm:$0xff]
    %v646 = vld [vmem:[%s636 + $0x48] sm:$0xff]
    %v647 = vld [vmem:[%s636 + $0x50] sm:$0xff]
    %v648 = vld [vmem:[%s636 + $0x58] sm:$0xff]
    %v649 = vld [vmem:[%s636 + $0x60] sm:$0xff]
    %v650 = vld [vmem:[%s636 + $0x68] sm:$0xff]
    %v651 = vld [vmem:[%s636 + $0x70] sm:$0xff]
    %v652 = vld [vmem:[%s636 + $0x78] sm:$0xff]
    %653 = vmatprep.subr.mxu0 0.0
    %654 = vmatpush1.msra.mxu0 %v637
    %655 = vmatprep.subr.mxu0 0.0
    %656 = vmatpush1.msra.mxu0 %v638
    %657 = vmatprep.subr.mxu0 0.0
    %658 = vmatpush1.msra.mxu0 %v639
    %659 = vmatprep.subr.mxu0 0.0
    %660 = vmatpush1.msra.mxu0 %v640
    %661 = vmatprep.subr.mxu0 0.0
    %662 = vmatpush1.msra.mxu0 %v641
    %663 = vmatprep.subr.mxu0 0.0
    %664 = vmatpush1.msra.mxu0 %v642
    %665 = vmatprep.subr.mxu0 0.0
    %666 = vmatpush1.msra.mxu0 %v643
    %667 = vmatprep.subr.mxu0 0.0
    %668 = vmatpush1.msra.mxu0 %v644
    %669 = vmatprep.subr.mxu0 0.0
    %670 = vmatpush1.msra.mxu0 %v645
    %671 = vmatprep.subr.mxu0 0.0
    %672 = vmatpush1.msra.mxu0 %v646
    %673 = vmatprep.subr.mxu0 0.0
    %674 = vmatpush1.msra.mxu0 %v647
    %675 = vmatprep.subr.mxu0 0.0
    %676 = vmatpush1.msra.mxu0 %v648
    %677 = vmatprep.subr.mxu0 0.0
    %678 = vmatpush1.msra.mxu0 %v649
    %679 = vmatprep.subr.mxu0 0.0
    %680 = vmatpush1.msra.mxu0 %v650
    %681 = vmatprep.subr.mxu0 0.0
    %682 = vmatpush1.msra.mxu0 %v651
    %683 = vmatprep.subr.mxu0 0.0
    %684 = vmatpush1.msra.mxu0 %v652
    %685 = vmatprep.subr.mxu0 0.0
    %686 = vmatpush1.msra.mxu0 0.0
    %687 = vmatprep.subr.mxu0 0.0
    %688 = vmatpush1.msra.mxu0 0.0
    %689 = vmatprep.subr.mxu0 0.0
    %690 = vmatpush1.msra.mxu0 0.0
    %691 = vmatprep.subr.mxu0 0.0
    %692 = vmatpush1.msra.mxu0 0.0
    %693 = vmatprep.subr.mxu0 0.0
    %694 = vmatpush1.msra.mxu0 0.0
    %695 = vmatprep.subr.mxu0 0.0
    %696 = vmatpush1.msra.mxu0 0.0
    %697 = vmatprep.subr.mxu0 0.0
    %698 = vmatpush1.msra.mxu0 0.0
    %699 = vmatprep.subr.mxu0 0.0
    %700 = vmatpush1.msra.mxu0 0.0
    %701 = vmatprep.subr.mxu0 0.0
    %702 = vmatpush1.msra.mxu0 0.0
    %703 = vmatprep.subr.mxu0 0.0
    %704 = vmatpush1.msra.mxu0 0.0
    %705 = vmatprep.subr.mxu0 0.0
    %706 = vmatpush1.msra.mxu0 0.0
    %707 = vmatprep.subr.mxu0 0.0
    %708 = vmatpush1.msra.mxu0 0.0
    %709 = vmatprep.subr.mxu0 0.0
    %710 = vmatpush1.msra.mxu0 0.0
    %711 = vmatprep.subr.mxu0 0.0
    %712 = vmatpush1.msra.mxu0 0.0
    %713 = vmatprep.subr.mxu0 0.0
    %714 = vmatpush1.msra.mxu0 0.0
    %715 = vmatprep.subr.mxu0 0.0
    %716 = vmatpush1.msra.mxu0 0.0
    %717 = vmatprep.mubr.f32.mxu0 0.0
    %718 = vmatmul.mubr.f32.gmra.mrb[0].mxu0 %v618
    %v719 = vpop.f32.mrb[0].mxu0
    %v720 = vadd.f32 0.0, %v719
    %v721 = vpop.f32.mrb[0].mxu0
    %722 = vmatprep.mubr.f32.mxu0 0.0
    %723 = vmatmul.mubr.f32.gmra.mrb[0].mxu0 %v623
    %v724 = vpop.f32.mrb[0].mxu0
    %v725 = vadd.f32 0.0, %v724
    %v726 = vpop.f32.mrb[0].mxu0
    %727 = vmatprep.mubr.f32.mxu0 0.0
    %728 = vmatmul.mubr.f32.gmra.mrb[0].mxu0 %v628
    %v729 = vpop.f32.mrb[0].mxu0
    %v730 = vadd.f32 0.0, %v729
    %v731 = vpop.f32.mrb[0].mxu0
    %732 = vmatprep.mubr.f32.mxu0 0.0
    %733 = vmatmul.mubr.f32.gmra.mrb[0].mxu0 %v633
    %v734 = vpop.f32.mrb[0].mxu0
    %v735 = vadd.f32 0.0, %v734
    %v736 = vpop.f32.mrb[0].mxu0
    %737 = vdwg.mxu0
    %738 = vmatprep.subr.mxu0 0.0
    %739 = vmatpush1.msra.mxu0 %v530
    %740 = vmatprep.subr.mxu0 0.0
    %741 = vmatpush1.msra.mxu0 %v531
    %742 = vmatprep.subr.mxu0 0.0
    %743 = vmatpush1.msra.mxu0 %v532
    %744 = vmatprep.subr.mxu0 0.0
    %745 = vmatpush1.msra.mxu0 %v533
    %746 = vmatprep.subr.mxu0 0.0
    %747 = vmatpush1.msra.mxu0 %v534
    %748 = vmatprep.subr.mxu0 0.0
    %749 = vmatpush1.msra.mxu0 %v535
    %750 = vmatprep.subr.mxu0 0.0
    %751 = vmatpush1.msra.mxu0 %v536
    %752 = vmatprep.subr.mxu0 0.0
    %753 = vmatpush1.msra.mxu0 %v537
    %754 = vmatprep.subr.mxu0 0.0
    %755 = vmatpush1.msra.mxu0 %v538
    %756 = vmatprep.subr.mxu0 0.0
    %757 = vmatpush1.msra.mxu0 %v539
    %758 = vmatprep.subr.mxu0 0.0
    %759 = vmatpush1.msra.mxu0 %v540
    %760 = vmatprep.subr.mxu0 0.0
    %761 = vmatpush1.msra.mxu0 %v541
    %762 = vmatprep.subr.mxu0 0.0
    %763 = vmatpush1.msra.mxu0 %v542
    %764 = vmatprep.subr.mxu0 0.0
    %765 = vmatpush1.msra.mxu0 %v543
    %766 = vmatprep.subr.mxu0 0.0
    %767 = vmatpush1.msra.mxu0 %v544
    %768 = vmatprep.subr.mxu0 0.0
    %769 = vmatpush1.msra.mxu0 %v545
    %770 = vmatprep.subr.mxu0 0.0
    %771 = vmatpush1.msra.mxu0 0.0
    %772 = vmatprep.subr.mxu0 0.0
    %773 = vmatpush1.msra.mxu0 0.0
    %774 = vmatprep.subr.mxu0 0.0
    %775 = vmatpush1.msra.mxu0 0.0
    %776 = vmatprep.subr.mxu0 0.0
    %777 = vmatpush1.msra.mxu0 0.0
    %778 = vmatprep.subr.mxu0 0.0
    %779 = vmatpush1.msra.mxu0 0.0
    %780 = vmatprep.subr.mxu0 0.0
    %781 = vmatpush1.msra.mxu0 0.0
    %782 = vmatprep.subr.mxu0 0.0
    %783 = vmatpush1.msra.mxu0 0.0
    %784 = vmatprep.subr.mxu0 0.0
    %785 = vmatpush1.msra.mxu0 0.0
    %786 = vmatprep.subr.mxu0 0.0
    %787 = vmatpush1.msra.mxu0 0.0
    %788 = vmatprep.subr.mxu0 0.0
    %789 = vmatpush1.msra.mxu0 0.0
    %790 = vmatprep.subr.mxu0 0.0
    %791 = vmatpush1.msra.mxu0 0.0
    %792 = vmatprep.subr.mxu0 0.0
    %793 = vmatpush1.msra.mxu0 0.0
    %794 = vmatprep.subr.mxu0 0.0
    %795 = vmatpush1.msra.mxu0 0.0
    %796 = vmatprep.subr.mxu0 0.0
    %797 = vmatpush1.msra.mxu0 0.0
    %798 = vmatprep.subr.mxu0 0.0
    %799 = vmatpush1.msra.mxu0 0.0
    %800 = vmatprep.subr.mxu0 0.0
    %801 = vmatpush1.msra.mxu0 0.0
    %802 = vmatprep.mubr.f32.mxu0 0.0
    %803 = vmatmul.mubr.f32.gmra.mrb[0].mxu0 %v512
    %v804 = vpop.f32.mrb[0].mxu0
    %v805 = vadd.f32 %v720, %v804
    %v806 = vpop.f32.mrb[0].mxu0
    %807 = vmatprep.mubr.f32.mxu0 0.0
    %808 = vmatmul.mubr.f32.gmra.mrb[0].mxu0 %v517
    %v809 = vpop.f32.mrb[0].mxu0
    %v810 = vadd.f32 %v725, %v809
    %v811 = vpop.f32.mrb[0].mxu0
    %812 = vmatprep.mubr.f32.mxu0 0.0
    %813 = vmatmul.mubr.f32.gmra.mrb[0].mxu0 %v522
    %v814 = vpop.f32.mrb[0].mxu0
    %v815 = vadd.f32 %v730, %v814
    %v816 = vpop.f32.mrb[0].mxu0
    %817 = vmatprep.mubr.f32.mxu0 0.0
    %818 = vmatmul.mubr.f32.gmra.mrb[0].mxu0 %v527
    %v819 = vpop.f32.mrb[0].mxu0
    %v820 = vadd.f32 %v735, %v819
    %v821 = vpop.f32.mrb[0].mxu0
    %822 = vdwg.mxu0
    %s823 = scalar_lea.vmem %s4, 64
    %v824 = vld [vmem:[%s823] sm:$0xff]
    %v825 = vld [vmem:[%s823 + $0x8] sm:$0xff]
    %v826 = vld [vmem:[%s823 + $0x10] sm:$0xff]
    %v827 = vld [vmem:[%s823 + $0x18] sm:$0xff]
    %828 = vmatprep.subr.mxu0 0.0
    %829 = vmatpush1.msra.mxu0 %v425
    %830 = vmatprep.subr.mxu0 0.0
    %831 = vmatpush1.msra.mxu0 %v426
    %832 = vmatprep.subr.mxu0 0.0
    %833 = vmatpush1.msra.mxu0 %v427
    %834 = vmatprep.subr.mxu0 0.0
    %835 = vmatpush1.msra.mxu0 %v428
    %836 = vmatprep.subr.mxu0 0.0
    %837 = vmatpush1.msra.mxu0 %v429
    %838 = vmatprep.subr.mxu0 0.0
    %839 = vmatpush1.msra.mxu0 %v430
    %840 = vmatprep.subr.mxu0 0.0
    %841 = vmatpush1.msra.mxu0 %v431
    %842 = vmatprep.subr.mxu0 0.0
    %843 = vmatpush1.msra.mxu0 %v432
    %844 = vmatprep.subr.mxu0 0.0
    %845 = vmatpush1.msra.mxu0 %v433
    %846 = vmatprep.subr.mxu0 0.0
    %847 = vmatpush1.msra.mxu0 %v434
    %848 = vmatprep.subr.mxu0 0.0
    %849 = vmatpush1.msra.mxu0 %v435
    %850 = vmatprep.subr.mxu0 0.0
    %851 = vmatpush1.msra.mxu0 %v436
    %852 = vmatprep.subr.mxu0 0.0
    %853 = vmatpush1.msra.mxu0 %v437
    %854 = vmatprep.subr.mxu0 0.0
    %855 = vmatpush1.msra.mxu0 %v438
    %856 = vmatprep.subr.mxu0 0.0
    %857 = vmatpush1.msra.mxu0 %v439
    %858 = vmatprep.subr.mxu0 0.0
    %859 = vmatpush1.msra.mxu0 %v440
    %860 = vmatprep.subr.mxu0 0.0
    %861 = vmatpush1.msra.mxu0 0.0
    %862 = vmatprep.subr.mxu0 0.0
    %863 = vmatpush1.msra.mxu0 0.0
    %864 = vmatprep.subr.mxu0 0.0
    %865 = vmatpush1.msra.mxu0 0.0
    %866 = vmatprep.subr.mxu0 0.0
    %867 = vmatpush1.msra.mxu0 0.0
    %868 = vmatprep.subr.mxu0 0.0
    %869 = vmatpush1.msra.mxu0 0.0
    %870 = vmatprep.subr.mxu0 0.0
    %871 = vmatpush1.msra.mxu0 0.0
    %872 = vmatprep.subr.mxu0 0.0
    %873 = vmatpush1.msra.mxu0 0.0
    %874 = vmatprep.subr.mxu0 0.0
    %875 = vmatpush1.msra.mxu0 0.0
    %876 = vmatprep.subr.mxu0 0.0
    %877 = vmatpush1.msra.mxu0 0.0
    %878 = vmatprep.subr.mxu0 0.0
    %879 = vmatpush1.msra.mxu0 0.0
    %880 = vmatprep.subr.mxu0 0.0
    %881 = vmatpush1.msra.mxu0 0.0
    %882 = vmatprep.subr.mxu0 0.0
    %883 = vmatpush1.msra.mxu0 0.0
    %884 = vmatprep.subr.mxu0 0.0
    %885 = vmatpush1.msra.mxu0 0.0
    %886 = vmatprep.subr.mxu0 0.0
    %887 = vmatpush1.msra.mxu0 0.0
    %888 = vmatprep.subr.mxu0 0.0
    %889 = vmatpush1.msra.mxu0 0.0
    %890 = vmatprep.subr.mxu0 0.0
    %891 = vmatpush1.msra.mxu0 0.0
    %892 = vmatprep.mubr.f32.mxu0 0.0
    %893 = vmatmul.mubr.f32.gmra.mrb[0].mxu0 %v824
    %v894 = vpop.f32.mrb[0].mxu0
    %v895 = vadd.f32 0.0, %v894
    %v896 = vpop.f32.mrb[0].mxu0
    %897 = vmatprep.mubr.f32.mxu0 0.0
    %898 = vmatmul.mubr.f32.gmra.mrb[0].mxu0 %v825
    %v899 = vpop.f32.mrb[0].mxu0
    %v900 = vadd.f32 0.0, %v899
    %v901 = vpop.f32.mrb[0].mxu0
    %902 = vmatprep.mubr.f32.mxu0 0.0
    %903 = vmatmul.mubr.f32.gmra.mrb[0].mxu0 %v826
    %v904 = vpop.f32.mrb[0].mxu0
    %v905 = vadd.f32 0.0, %v904
    %v906 = vpop.f32.mrb[0].mxu0
    %907 = vmatprep.mubr.f32.mxu0 0.0
    %908 = vmatmul.mubr.f32.gmra.mrb[0].mxu0 %v827
    %v909 = vpop.f32.mrb[0].mxu0
    %v910 = vadd.f32 0.0, %v909
    %v911 = vpop.f32.mrb[0].mxu0
    %912 = vdwg.mxu0
    %s913 = scalar_lea.vmem %s5, 256
    %v914 = vld [vmem:[%s913] sm:$0xff]
    %v915 = vld [vmem:[%s913 + $0x8] sm:$0xff]
    %v916 = vld [vmem:[%s913 + $0x10] sm:$0xff]
    %v917 = vld [vmem:[%s913 + $0x18] sm:$0xff]
    %v918 = vld [vmem:[%s913 + $0x20] sm:$0xff]
    %v919 = vld [vmem:[%s913 + $0x28] sm:$0xff]
    %v920 = vld [vmem:[%s913 + $0x30] sm:$0xff]
    %v921 = vld [vmem:[%s913 + $0x38] sm:$0xff]
    %v922 = vld [vmem:[%s913 + $0x40] sm:$0xff]
    %v923 = vld [vmem:[%s913 + $0x48] sm:$0xff]
    %v924 = vld [vmem:[%s913 + $0x50] sm:$0xff]
    %v925 = vld [vmem:[%s913 + $0x58] sm:$0xff]
    %v926 = vld [vmem:[%s913 + $0x60] sm:$0xff]
    %v927 = vld [vmem:[%s913 + $0x68] sm:$0xff]
    %v928 = vld [vmem:[%s913 + $0x70] sm:$0xff]
    %v929 = vld [vmem:[%s913 + $0x78] sm:$0xff]
    %930 = vmatprep.subr.mxu0 0.0
    %931 = vmatpush1.msra.mxu0 %v914
    %932 = vmatprep.subr.mxu0 0.0
    %933 = vmatpush1.msra.mxu0 %v915
    %934 = vmatprep.subr.mxu0 0.0
    %935 = vmatpush1.msra.mxu0 %v916
    %936 = vmatprep.subr.mxu0 0.0
    %937 = vmatpush1.msra.mxu0 %v917
    %938 = vmatprep.subr.mxu0 0.0
    %939 = vmatpush1.msra.mxu0 %v918
    %940 = vmatprep.subr.mxu0 0.0
    %941 = vmatpush1.msra.mxu0 %v919
    %942 = vmatprep.subr.mxu0 0.0
    %943 = vmatpush1.msra.mxu0 %v920
    %944 = vmatprep.subr.mxu0 0.0
    %945 = vmatpush1.msra.mxu0 %v921
    %946 = vmatprep.subr.mxu0 0.0
    %947 = vmatpush1.msra.mxu0 %v922
    %948 = vmatprep.subr.mxu0 0.0
    %949 = vmatpush1.msra.mxu0 %v923
    %950 = vmatprep.subr.mxu0 0.0
    %951 = vmatpush1.msra.mxu0 %v924
    %952 = vmatprep.subr.mxu0 0.0
    %953 = vmatpush1.msra.mxu0 %v925
    %954 = vmatprep.subr.mxu0 0.0
    %955 = vmatpush1.msra.mxu0 %v926
    %956 = vmatprep.subr.mxu0 0.0
    %957 = vmatpush1.msra.mxu0 %v927
    %958 = vmatprep.subr.mxu0 0.0
    %959 = vmatpush1.msra.mxu0 %v928
    %960 = vmatprep.subr.mxu0 0.0
    %961 = vmatpush1.msra.mxu0 %v929
    %962 = vmatprep.subr.mxu0 0.0
    %963 = vmatpush1.msra.mxu0 0.0
    %964 = vmatprep.subr.mxu0 0.0
    %965 = vmatpush1.msra.mxu0 0.0
    %966 = vmatprep.subr.mxu0 0.0
    %967 = vmatpush1.msra.mxu0 0.0
    %968 = vmatprep.subr.mxu0 0.0
    %969 = vmatpush1.msra.mxu0 0.0
    %970 = vmatprep.subr.mxu0 0.0
    %971 = vmatpush1.msra.mxu0 0.0
    %972 = vmatprep.subr.mxu0 0.0
    %973 = vmatpush1.msra.mxu0 0.0
    %974 = vmatprep.subr.mxu0 0.0
    %975 = vmatpush1.msra.mxu0 0.0
    %976 = vmatprep.subr.mxu0 0.0
    %977 = vmatpush1.msra.mxu0 0.0
    %978 = vmatprep.subr.mxu0 0.0
    %979 = vmatpush1.msra.mxu0 0.0
    %980 = vmatprep.subr.mxu0 0.0
    %981 = vmatpush1.msra.mxu0 0.0
    %982 = vmatprep.subr.mxu0 0.0
    %983 = vmatpush1.msra.mxu0 0.0
    %984 = vmatprep.subr.mxu0 0.0
    %985 = vmatpush1.msra.mxu0 0.0
    %986 = vmatprep.subr.mxu0 0.0
    %987 = vmatpush1.msra.mxu0 0.0
    %988 = vmatprep.subr.mxu0 0.0
    %989 = vmatpush1.msra.mxu0 0.0
    %990 = vmatprep.subr.mxu0 0.0
    %991 = vmatpush1.msra.mxu0 0.0
    %992 = vmatprep.subr.mxu0 0.0
    %993 = vmatpush1.msra.mxu0 0.0
    %994 = vmatprep.mubr.f32.mxu0 0.0
    %995 = vmatmul.mubr.f32.gmra.mrb[0].mxu0 %v895
    %v996 = vpop.f32.mrb[0].mxu0
    %v997 = vadd.f32 0.0, %v996
    %v998 = vpop.f32.mrb[0].mxu0
    %999 = vmatprep.mubr.f32.mxu0 0.0
    %1000 = vmatmul.mubr.f32.gmra.mrb[0].mxu0 %v900
    %v1001 = vpop.f32.mrb[0].mxu0
    %v1002 = vadd.f32 0.0, %v1001
    %v1003 = vpop.f32.mrb[0].mxu0
    %1004 = vmatprep.mubr.f32.mxu0 0.0
    %1005 = vmatmul.mubr.f32.gmra.mrb[0].mxu0 %v905
    %v1006 = vpop.f32.mrb[0].mxu0
    %v1007 = vadd.f32 0.0, %v1006
    %v1008 = vpop.f32.mrb[0].mxu0
    %1009 = vmatprep.mubr.f32.mxu0 0.0
    %1010 = vmatmul.mubr.f32.gmra.mrb[0].mxu0 %v910
    %v1011 = vpop.f32.mrb[0].mxu0
    %v1012 = vadd.f32 0.0, %v1011
    %v1013 = vpop.f32.mrb[0].mxu0
    %1014 = vdwg.mxu0
    %v1015 = vadd.f32 %v805, %v997
    %v1016 = vadd.f32 %v810, %v1002
    %v1017 = vadd.f32 %v815, %v1007
    %v1018 = vadd.f32 %v820, %v1012
    %s1019 = scalar_lea.vmem %s4, 96
    %v1020 = vld [vmem:[%s1019] sm:$0xff]
    %v1021 = vld [vmem:[%s1019 + $0x8] sm:$0xff]
    %v1022 = vld [vmem:[%s1019 + $0x10] sm:$0xff]
    %v1023 = vld [vmem:[%s1019 + $0x18] sm:$0xff]
    %1024 = vmatprep.subr.mxu0 0.0
    %1025 = vmatpush1.msra.mxu0 %v425
    %1026 = vmatprep.subr.mxu0 0.0
    %1027 = vmatpush1.msra.mxu0 %v426
    %1028 = vmatprep.subr.mxu0 0.0
    %1029 = vmatpush1.msra.mxu0 %v427
    %1030 = vmatprep.subr.mxu0 0.0
    %1031 = vmatpush1.msra.mxu0 %v428
    %1032 = vmatprep.subr.mxu0 0.0
    %1033 = vmatpush1.msra.mxu0 %v429
    %1034 = vmatprep.subr.mxu0 0.0
    %1035 = vmatpush1.msra.mxu0 %v430
    %1036 = vmatprep.subr.mxu0 0.0
    %1037 = vmatpush1.msra.mxu0 %v431
    %1038 = vmatprep.subr.mxu0 0.0
    %1039 = vmatpush1.msra.mxu0 %v432
    %1040 = vmatprep.subr.mxu0 0.0
    %1041 = vmatpush1.msra.mxu0 %v433
    %1042 = vmatprep.subr.mxu0 0.0
    %1043 = vmatpush1.msra.mxu0 %v434
    %1044 = vmatprep.subr.mxu0 0.0
    %1045 = vmatpush1.msra.mxu0 %v435
    %1046 = vmatprep.subr.mxu0 0.0
    %1047 = vmatpush1.msra.mxu0 %v436
    %1048 = vmatprep.subr.mxu0 0.0
    %1049 = vmatpush1.msra.mxu0 %v437
    %1050 = vmatprep.subr.mxu0 0.0
    %1051 = vmatpush1.msra.mxu0 %v438
    %1052 = vmatprep.subr.mxu0 0.0
    %1053 = vmatpush1.msra.mxu0 %v439
    %1054 = vmatprep.subr.mxu0 0.0
    %1055 = vmatpush1.msra.mxu0 %v440
    %1056 = vmatprep.subr.mxu0 0.0
    %1057 = vmatpush1.msra.mxu0 0.0
    %1058 = vmatprep.subr.mxu0 0.0
    %1059 = vmatpush1.msra.mxu0 0.0
    %1060 = vmatprep.subr.mxu0 0.0
    %1061 = vmatpush1.msra.mxu0 0.0
    %1062 = vmatprep.subr.mxu0 0.0
    %1063 = vmatpush1.msra.mxu0 0.0
    %1064 = vmatprep.subr.mxu0 0.0
    %1065 = vmatpush1.msra.mxu0 0.0
    %1066 = vmatprep.subr.mxu0 0.0
    %1067 = vmatpush1.msra.mxu0 0.0
    %1068 = vmatprep.subr.mxu0 0.0
    %1069 = vmatpush1.msra.mxu0 0.0
    %1070 = vmatprep.subr.mxu0 0.0
    %1071 = vmatpush1.msra.mxu0 0.0
    %1072 = vmatprep.subr.mxu0 0.0
    %1073 = vmatpush1.msra.mxu0 0.0
    %1074 = vmatprep.subr.mxu0 0.0
    %1075 = vmatpush1.msra.mxu0 0.0
    %1076 = vmatprep.subr.mxu0 0.0
    %1077 = vmatpush1.msra.mxu0 0.0
    %1078 = vmatprep.subr.mxu0 0.0
    %1079 = vmatpush1.msra.mxu0 0.0
    %1080 = vmatprep.subr.mxu0 0.0
    %1081 = vmatpush1.msra.mxu0 0.0
    %1082 = vmatprep.subr.mxu0 0.0
    %1083 = vmatpush1.msra.mxu0 0.0
    %1084 = vmatprep.subr.mxu0 0.0
    %1085 = vmatpush1.msra.mxu0 0.0
    %1086 = vmatprep.subr.mxu0 0.0
    %1087 = vmatpush1.msra.mxu0 0.0
    %1088 = vmatprep.mubr.f32.mxu0 0.0
    %1089 = vmatmul.mubr.f32.gmra.mrb[0].mxu0 %v1020
    %v1090 = vpop.f32.mrb[0].mxu0
    %v1091 = vadd.f32 0.0, %v1090
    %v1092 = vpop.f32.mrb[0].mxu0
    %1093 = vmatprep.mubr.f32.mxu0 0.0
    %1094 = vmatmul.mubr.f32.gmra.mrb[0].mxu0 %v1021
    %v1095 = vpop.f32.mrb[0].mxu0
    %v1096 = vadd.f32 0.0, %v1095
    %v1097 = vpop.f32.mrb[0].mxu0
    %1098 = vmatprep.mubr.f32.mxu0 0.0
    %1099 = vmatmul.mubr.f32.gmra.mrb[0].mxu0 %v1022
    %v1100 = vpop.f32.mrb[0].mxu0
    %v1101 = vadd.f32 0.0, %v1100
    %v1102 = vpop.f32.mrb[0].mxu0
    %1103 = vmatprep.mubr.f32.mxu0 0.0
    %1104 = vmatmul.mubr.f32.gmra.mrb[0].mxu0 %v1023
    %v1105 = vpop.f32.mrb[0].mxu0
    %v1106 = vadd.f32 0.0, %v1105
    %v1107 = vpop.f32.mrb[0].mxu0
    %1108 = vdwg.mxu0
    %s1109 = scalar_lea.vmem %s5, 384
    %v1110 = vld [vmem:[%s1109] sm:$0xff]
    %v1111 = vld [vmem:[%s1109 + $0x8] sm:$0xff]
    %v1112 = vld [vmem:[%s1109 + $0x10] sm:$0xff]
    %v1113 = vld [vmem:[%s1109 + $0x18] sm:$0xff]
    %v1114 = vld [vmem:[%s1109 + $0x20] sm:$0xff]
    %v1115 = vld [vmem:[%s1109 + $0x28] sm:$0xff]
    %v1116 = vld [vmem:[%s1109 + $0x30] sm:$0xff]
    %v1117 = vld [vmem:[%s1109 + $0x38] sm:$0xff]
    %v1118 = vld [vmem:[%s1109 + $0x40] sm:$0xff]
    %v1119 = vld [vmem:[%s1109 + $0x48] sm:$0xff]
    %v1120 = vld [vmem:[%s1109 + $0x50] sm:$0xff]
    %v1121 = vld [vmem:[%s1109 + $0x58] sm:$0xff]
    %v1122 = vld [vmem:[%s1109 + $0x60] sm:$0xff]
    %v1123 = vld [vmem:[%s1109 + $0x68] sm:$0xff]
    %v1124 = vld [vmem:[%s1109 + $0x70] sm:$0xff]
    %v1125 = vld [vmem:[%s1109 + $0x78] sm:$0xff]
    %1126 = vmatprep.subr.mxu0 0.0
    %1127 = vmatpush1.msra.mxu0 %v1110
    %1128 = vmatprep.subr.mxu0 0.0
    %1129 = vmatpush1.msra.mxu0 %v1111
    %1130 = vmatprep.subr.mxu0 0.0
    %1131 = vmatpush1.msra.mxu0 %v1112
    %1132 = vmatprep.subr.mxu0 0.0
    %1133 = vmatpush1.msra.mxu0 %v1113
    %1134 = vmatprep.subr.mxu0 0.0
    %1135 = vmatpush1.msra.mxu0 %v1114
    %1136 = vmatprep.subr.mxu0 0.0
    %1137 = vmatpush1.msra.mxu0 %v1115
    %1138 = vmatprep.subr.mxu0 0.0
    %1139 = vmatpush1.msra.mxu0 %v1116
    %1140 = vmatprep.subr.mxu0 0.0
    %1141 = vmatpush1.msra.mxu0 %v1117
    %1142 = vmatprep.subr.mxu0 0.0
    %1143 = vmatpush1.msra.mxu0 %v1118
    %1144 = vmatprep.subr.mxu0 0.0
    %1145 = vmatpush1.msra.mxu0 %v1119
    %1146 = vmatprep.subr.mxu0 0.0
    %1147 = vmatpush1.msra.mxu0 %v1120
    %1148 = vmatprep.subr.mxu0 0.0
    %1149 = vmatpush1.msra.mxu0 %v1121
    %1150 = vmatprep.subr.mxu0 0.0
    %1151 = vmatpush1.msra.mxu0 %v1122
    %1152 = vmatprep.subr.mxu0 0.0
    %1153 = vmatpush1.msra.mxu0 %v1123
    %1154 = vmatprep.subr.mxu0 0.0
    %1155 = vmatpush1.msra.mxu0 %v1124
    %1156 = vmatprep.subr.mxu0 0.0
    %1157 = vmatpush1.msra.mxu0 %v1125
    %1158 = vmatprep.subr.mxu0 0.0
    %1159 = vmatpush1.msra.mxu0 0.0
    %1160 = vmatprep.subr.mxu0 0.0
    %1161 = vmatpush1.msra.mxu0 0.0
    %1162 = vmatprep.subr.mxu0 0.0
    %1163 = vmatpush1.msra.mxu0 0.0
    %1164 = vmatprep.subr.mxu0 0.0
    %1165 = vmatpush1.msra.mxu0 0.0
    %1166 = vmatprep.subr.mxu0 0.0
    %1167 = vmatpush1.msra.mxu0 0.0
    %1168 = vmatprep.subr.mxu0 0.0
    %1169 = vmatpush1.msra.mxu0 0.0
    %1170 = vmatprep.subr.mxu0 0.0
    %1171 = vmatpush1.msra.mxu0 0.0
    %1172 = vmatprep.subr.mxu0 0.0
    %1173 = vmatpush1.msra.mxu0 0.0
    %1174 = vmatprep.subr.mxu0 0.0
    %1175 = vmatpush1.msra.mxu0 0.0
    %1176 = vmatprep.subr.mxu0 0.0
    %1177 = vmatpush1.msra.mxu0 0.0
    %1178 = vmatprep.subr.mxu0 0.0
    %1179 = vmatpush1.msra.mxu0 0.0
    %1180 = vmatprep.subr.mxu0 0.0
    %1181 = vmatpush1.msra.mxu0 0.0
    %1182 = vmatprep.subr.mxu0 0.0
    %1183 = vmatpush1.msra.mxu0 0.0
    %1184 = vmatprep.subr.mxu0 0.0
    %1185 = vmatpush1.msra.mxu0 0.0
    %1186 = vmatprep.subr.mxu0 0.0
    %1187 = vmatpush1.msra.mxu0 0.0
    %1188 = vmatprep.subr.mxu0 0.0
    %1189 = vmatpush1.msra.mxu0 0.0
    %1190 = vmatprep.mubr.f32.mxu0 0.0
    %1191 = vmatmul.mubr.f32.gmra.mrb[0].mxu0 %v1091
    %v1192 = vpop.f32.mrb[0].mxu0
    %v1193 = vadd.f32 0.0, %v1192
    %v1194 = vpop.f32.mrb[0].mxu0
    %1195 = vmatprep.mubr.f32.mxu0 0.0
    %1196 = vmatmul.mubr.f32.gmra.mrb[0].mxu0 %v1096
    %v1197 = vpop.f32.mrb[0].mxu0
    %v1198 = vadd.f32 0.0, %v1197
    %v1199 = vpop.f32.mrb[0].mxu0
    %1200 = vmatprep.mubr.f32.mxu0 0.0
    %1201 = vmatmul.mubr.f32.gmra.mrb[0].mxu0 %v1101
    %v1202 = vpop.f32.mrb[0].mxu0
    %v1203 = vadd.f32 0.0, %v1202
    %v1204 = vpop.f32.mrb[0].mxu0
    %1205 = vmatprep.mubr.f32.mxu0 0.0
    %1206 = vmatmul.mubr.f32.gmra.mrb[0].mxu0 %v1106
    %v1207 = vpop.f32.mrb[0].mxu0
    %v1208 = vadd.f32 0.0, %v1207
    %v1209 = vpop.f32.mrb[0].mxu0
    %1210 = vdwg.mxu0
    %v1211 = vadd.f32 %v1015, %v1193
    %v1212 = vadd.f32 %v1016, %v1198
    %v1213 = vadd.f32 %v1017, %v1203
    %v1214 = vadd.f32 %v1018, %v1208
    %s1215 = scalar_lea.vmem %s4, 128
    %v1216 = vld [vmem:[%s1215] sm:$0xff]
    %v1217 = vld [vmem:[%s1215 + $0x8] sm:$0xff]
    %v1218 = vld [vmem:[%s1215 + $0x10] sm:$0xff]
    %v1219 = vld [vmem:[%s1215 + $0x18] sm:$0xff]
    %1220 = vmatprep.subr.mxu0 0.0
    %1221 = vmatpush1.msra.mxu0 %v425
    %1222 = vmatprep.subr.mxu0 0.0
    %1223 = vmatpush1.msra.mxu0 %v426
    %1224 = vmatprep.subr.mxu0 0.0
    %1225 = vmatpush1.msra.mxu0 %v427
    %1226 = vmatprep.subr.mxu0 0.0
    %1227 = vmatpush1.msra.mxu0 %v428
    %1228 = vmatprep.subr.mxu0 0.0
    %1229 = vmatpush1.msra.mxu0 %v429
    %1230 = vmatprep.subr.mxu0 0.0
    %1231 = vmatpush1.msra.mxu0 %v430
    %1232 = vmatprep.subr.mxu0 0.0
    %1233 = vmatpush1.msra.mxu0 %v431
    %1234 = vmatprep.subr.mxu0 0.0
    %1235 = vmatpush1.msra.mxu0 %v432
    %1236 = vmatprep.subr.mxu0 0.0
    %1237 = vmatpush1.msra.mxu0 %v433
    %1238 = vmatprep.subr.mxu0 0.0
    %1239 = vmatpush1.msra.mxu0 %v434
    %1240 = vmatprep.subr.mxu0 0.0
    %1241 = vmatpush1.msra.mxu0 %v435
    %1242 = vmatprep.subr.mxu0 0.0
    %1243 = vmatpush1.msra.mxu0 %v436
    %1244 = vmatprep.subr.mxu0 0.0
    %1245 = vmatpush1.msra.mxu0 %v437
    %1246 = vmatprep.subr.mxu0 0.0
    %1247 = vmatpush1.msra.mxu0 %v438
    %1248 = vmatprep.subr.mxu0 0.0
    %1249 = vmatpush1.msra.mxu0 %v439
    %1250 = vmatprep.subr.mxu0 0.0
    %1251 = vmatpush1.msra.mxu0 %v440
    %1252 = vmatprep.subr.mxu0 0.0
    %1253 = vmatpush1.msra.mxu0 0.0
    %1254 = vmatprep.subr.mxu0 0.0
    %1255 = vmatpush1.msra.mxu0 0.0
    %1256 = vmatprep.subr.mxu0 0.0
    %1257 = vmatpush1.msra.mxu0 0.0
    %1258 = vmatprep.subr.mxu0 0.0
    %1259 = vmatpush1.msra.mxu0 0.0
    %1260 = vmatprep.subr.mxu0 0.0
    %1261 = vmatpush1.msra.mxu0 0.0
    %1262 = vmatprep.subr.mxu0 0.0
    %1263 = vmatpush1.msra.mxu0 0.0
    %1264 = vmatprep.subr.mxu0 0.0
    %1265 = vmatpush1.msra.mxu0 0.0
    %1266 = vmatprep.subr.mxu0 0.0
    %1267 = vmatpush1.msra.mxu0 0.0
    %1268 = vmatprep.subr.mxu0 0.0
    %1269 = vmatpush1.msra.mxu0 0.0
    %1270 = vmatprep.subr.mxu0 0.0
    %1271 = vmatpush1.msra.mxu0 0.0
    %1272 = vmatprep.subr.mxu0 0.0
    %1273 = vmatpush1.msra.mxu0 0.0
    %1274 = vmatprep.subr.mxu0 0.0
    %1275 = vmatpush1.msra.mxu0 0.0
    %1276 = vmatprep.subr.mxu0 0.0
    %1277 = vmatpush1.msra.mxu0 0.0
    %1278 = vmatprep.subr.mxu0 0.0
    %1279 = vmatpush1.msra.mxu0 0.0
    %1280 = vmatprep.subr.mxu0 0.0
    %1281 = vmatpush1.msra.mxu0 0.0
    %1282 = vmatprep.subr.mxu0 0.0
    %1283 = vmatpush1.msra.mxu0 0.0
    %1284 = vmatprep.mubr.f32.mxu0 0.0
    %1285 = vmatmul.mubr.f32.gmra.mrb[0].mxu0 %v1216
    %v1286 = vpop.f32.mrb[0].mxu0
    %v1287 = vadd.f32 0.0, %v1286
    %v1288 = vpop.f32.mrb[0].mxu0
    %1289 = vmatprep.mubr.f32.mxu0 0.0
    %1290 = vmatmul.mubr.f32.gmra.mrb[0].mxu0 %v1217
    %v1291 = vpop.f32.mrb[0].mxu0
    %v1292 = vadd.f32 0.0, %v1291
    %v1293 = vpop.f32.mrb[0].mxu0
    %1294 = vmatprep.mubr.f32.mxu0 0.0
    %1295 = vmatmul.mubr.f32.gmra.mrb[0].mxu0 %v1218
    %v1296 = vpop.f32.mrb[0].mxu0
    %v1297 = vadd.f32 0.0, %v1296
    %v1298 = vpop.f32.mrb[0].mxu0
    %1299 = vmatprep.mubr.f32.mxu0 0.0
    %1300 = vmatmul.mubr.f32.gmra.mrb[0].mxu0 %v1219
    %v1301 = vpop.f32.mrb[0].mxu0
    %v1302 = vadd.f32 0.0, %v1301
    %v1303 = vpop.f32.mrb[0].mxu0
    %1304 = vdwg.mxu0
    %s1305 = scalar_lea.vmem %s5, 512
    %v1306 = vld [vmem:[%s1305] sm:$0xff]
    %v1307 = vld [vmem:[%s1305 + $0x8] sm:$0xff]
    %v1308 = vld [vmem:[%s1305 + $0x10] sm:$0xff]
    %v1309 = vld [vmem:[%s1305 + $0x18] sm:$0xff]
    %v1310 = vld [vmem:[%s1305 + $0x20] sm:$0xff]
    %v1311 = vld [vmem:[%s1305 + $0x28] sm:$0xff]
    %v1312 = vld [vmem:[%s1305 + $0x30] sm:$0xff]
    %v1313 = vld [vmem:[%s1305 + $0x38] sm:$0xff]
    %v1314 = vld [vmem:[%s1305 + $0x40] sm:$0xff]
    %v1315 = vld [vmem:[%s1305 + $0x48] sm:$0xff]
    %v1316 = vld [vmem:[%s1305 + $0x50] sm:$0xff]
    %v1317 = vld [vmem:[%s1305 + $0x58] sm:$0xff]
    %v1318 = vld [vmem:[%s1305 + $0x60] sm:$0xff]
    %v1319 = vld [vmem:[%s1305 + $0x68] sm:$0xff]
    %v1320 = vld [vmem:[%s1305 + $0x70] sm:$0xff]
    %v1321 = vld [vmem:[%s1305 + $0x78] sm:$0xff]
    %1322 = vmatprep.subr.mxu0 0.0
    %1323 = vmatpush1.msra.mxu0 %v1306
    %1324 = vmatprep.subr.mxu0 0.0
    %1325 = vmatpush1.msra.mxu0 %v1307
    %1326 = vmatprep.subr.mxu0 0.0
    %1327 = vmatpush1.msra.mxu0 %v1308
    %1328 = vmatprep.subr.mxu0 0.0
    %1329 = vmatpush1.msra.mxu0 %v1309
    %1330 = vmatprep.subr.mxu0 0.0
    %1331 = vmatpush1.msra.mxu0 %v1310
    %1332 = vmatprep.subr.mxu0 0.0
    %1333 = vmatpush1.msra.mxu0 %v1311
    %1334 = vmatprep.subr.mxu0 0.0
    %1335 = vmatpush1.msra.mxu0 %v1312
    %1336 = vmatprep.subr.mxu0 0.0
    %1337 = vmatpush1.msra.mxu0 %v1313
    %1338 = vmatprep.subr.mxu0 0.0
    %1339 = vmatpush1.msra.mxu0 %v1314
    %1340 = vmatprep.subr.mxu0 0.0
    %1341 = vmatpush1.msra.mxu0 %v1315
    %1342 = vmatprep.subr.mxu0 0.0
    %1343 = vmatpush1.msra.mxu0 %v1316
    %1344 = vmatprep.subr.mxu0 0.0
    %1345 = vmatpush1.msra.mxu0 %v1317
    %1346 = vmatprep.subr.mxu0 0.0
    %1347 = vmatpush1.msra.mxu0 %v1318
    %1348 = vmatprep.subr.mxu0 0.0
    %1349 = vmatpush1.msra.mxu0 %v1319
    %1350 = vmatprep.subr.mxu0 0.0
    %1351 = vmatpush1.msra.mxu0 %v1320
    %1352 = vmatprep.subr.mxu0 0.0
    %1353 = vmatpush1.msra.mxu0 %v1321
    %1354 = vmatprep.subr.mxu0 0.0
    %1355 = vmatpush1.msra.mxu0 0.0
    %1356 = vmatprep.subr.mxu0 0.0
    %1357 = vmatpush1.msra.mxu0 0.0
    %1358 = vmatprep.subr.mxu0 0.0
    %1359 = vmatpush1.msra.mxu0 0.0
    %1360 = vmatprep.subr.mxu0 0.0
    %1361 = vmatpush1.msra.mxu0 0.0
    %1362 = vmatprep.subr.mxu0 0.0
    %1363 = vmatpush1.msra.mxu0 0.0
    %1364 = vmatprep.subr.mxu0 0.0
    %1365 = vmatpush1.msra.mxu0 0.0
    %1366 = vmatprep.subr.mxu0 0.0
    %1367 = vmatpush1.msra.mxu0 0.0
    %1368 = vmatprep.subr.mxu0 0.0
    %1369 = vmatpush1.msra.mxu0 0.0
    %1370 = vmatprep.subr.mxu0 0.0
    %1371 = vmatpush1.msra.mxu0 0.0
    %1372 = vmatprep.subr.mxu0 0.0
    %1373 = vmatpush1.msra.mxu0 0.0
    %1374 = vmatprep.subr.mxu0 0.0
    %1375 = vmatpush1.msra.mxu0 0.0
    %1376 = vmatprep.subr.mxu0 0.0
    %1377 = vmatpush1.msra.mxu0 0.0
    %1378 = vmatprep.subr.mxu0 0.0
    %1379 = vmatpush1.msra.mxu0 0.0
    %1380 = vmatprep.subr.mxu0 0.0
    %1381 = vmatpush1.msra.mxu0 0.0
    %1382 = vmatprep.subr.mxu0 0.0
    %1383 = vmatpush1.msra.mxu0 0.0
    %1384 = vmatprep.subr.mxu0 0.0
    %1385 = vmatpush1.msra.mxu0 0.0
    %1386 = vmatprep.mubr.f32.mxu0 0.0
    %1387 = vmatmul.mubr.f32.gmra.mrb[0].mxu0 %v1287
    %v1388 = vpop.f32.mrb[0].mxu0
    %v1389 = vadd.f32 0.0, %v1388
    %v1390 = vpop.f32.mrb[0].mxu0
    %1391 = vmatprep.mubr.f32.mxu0 0.0
    %1392 = vmatmul.mubr.f32.gmra.mrb[0].mxu0 %v1292
    %v1393 = vpop.f32.mrb[0].mxu0
    %v1394 = vadd.f32 0.0, %v1393
    %v1395 = vpop.f32.mrb[0].mxu0
    %1396 = vmatprep.mubr.f32.mxu0 0.0
    %1397 = vmatmul.mubr.f32.gmra.mrb[0].mxu0 %v1297
    %v1398 = vpop.f32.mrb[0].mxu0
    %v1399 = vadd.f32 0.0, %v1398
    %v1400 = vpop.f32.mrb[0].mxu0
    %1401 = vmatprep.mubr.f32.mxu0 0.0
    %1402 = vmatmul.mubr.f32.gmra.mrb[0].mxu0 %v1302
    %v1403 = vpop.f32.mrb[0].mxu0
    %v1404 = vadd.f32 0.0, %v1403
    %v1405 = vpop.f32.mrb[0].mxu0
    %1406 = vdwg.mxu0
    %v1407 = vadd.f32 %v1211, %v1389
    %v1408 = vadd.f32 %v1212, %v1394
    %v1409 = vadd.f32 %v1213, %v1399
    %v1410 = vadd.f32 %v1214, %v1404
    %s1411 = scalar_lea.vmem %s4, 160
    %v1412 = vld [vmem:[%s1411] sm:$0xff]
    %v1413 = vld [vmem:[%s1411 + $0x8] sm:$0xff]
    %v1414 = vld [vmem:[%s1411 + $0x10] sm:$0xff]
    %v1415 = vld [vmem:[%s1411 + $0x18] sm:$0xff]
    %1416 = vmatprep.subr.mxu0 0.0
    %1417 = vmatpush1.msra.mxu0 %v425
    %1418 = vmatprep.subr.mxu0 0.0
    %1419 = vmatpush1.msra.mxu0 %v426
    %1420 = vmatprep.subr.mxu0 0.0
    %1421 = vmatpush1.msra.mxu0 %v427
    %1422 = vmatprep.subr.mxu0 0.0
    %1423 = vmatpush1.msra.mxu0 %v428
    %1424 = vmatprep.subr.mxu0 0.0
    %1425 = vmatpush1.msra.mxu0 %v429
    %1426 = vmatprep.subr.mxu0 0.0
    %1427 = vmatpush1.msra.mxu0 %v430
    %1428 = vmatprep.subr.mxu0 0.0
    %1429 = vmatpush1.msra.mxu0 %v431
    %1430 = vmatprep.subr.mxu0 0.0
    %1431 = vmatpush1.msra.mxu0 %v432
    %1432 = vmatprep.subr.mxu0 0.0
    %1433 = vmatpush1.msra.mxu0 %v433
    %1434 = vmatprep.subr.mxu0 0.0
    %1435 = vmatpush1.msra.mxu0 %v434
    %1436 = vmatprep.subr.mxu0 0.0
    %1437 = vmatpush1.msra.mxu0 %v435
    %1438 = vmatprep.subr.mxu0 0.0
    %1439 = vmatpush1.msra.mxu0 %v436
    %1440 = vmatprep.subr.mxu0 0.0
    %1441 = vmatpush1.msra.mxu0 %v437
    %1442 = vmatprep.subr.mxu0 0.0
    %1443 = vmatpush1.msra.mxu0 %v438
    %1444 = vmatprep.subr.mxu0 0.0
    %1445 = vmatpush1.msra.mxu0 %v439
    %1446 = vmatprep.subr.mxu0 0.0
    %1447 = vmatpush1.msra.mxu0 %v440
    %1448 = vmatprep.subr.mxu0 0.0
    %1449 = vmatpush1.msra.mxu0 0.0
    %1450 = vmatprep.subr.mxu0 0.0
    %1451 = vmatpush1.msra.mxu0 0.0
    %1452 = vmatprep.subr.mxu0 0.0
    %1453 = vmatpush1.msra.mxu0 0.0
    %1454 = vmatprep.subr.mxu0 0.0
    %1455 = vmatpush1.msra.mxu0 0.0
    %1456 = vmatprep.subr.mxu0 0.0
    %1457 = vmatpush1.msra.mxu0 0.0
    %1458 = vmatprep.subr.mxu0 0.0
    %1459 = vmatpush1.msra.mxu0 0.0
    %1460 = vmatprep.subr.mxu0 0.0
    %1461 = vmatpush1.msra.mxu0 0.0
    %1462 = vmatprep.subr.mxu0 0.0
    %1463 = vmatpush1.msra.mxu0 0.0
    %1464 = vmatprep.subr.mxu0 0.0
    %1465 = vmatpush1.msra.mxu0 0.0
    %1466 = vmatprep.subr.mxu0 0.0
    %1467 = vmatpush1.msra.mxu0 0.0
    %1468 = vmatprep.subr.mxu0 0.0
    %1469 = vmatpush1.msra.mxu0 0.0
    %1470 = vmatprep.subr.mxu0 0.0
    %1471 = vmatpush1.msra.mxu0 0.0
    %1472 = vmatprep.subr.mxu0 0.0
    %1473 = vmatpush1.msra.mxu0 0.0
    %1474 = vmatprep.subr.mxu0 0.0
    %1475 = vmatpush1.msra.mxu0 0.0
    %1476 = vmatprep.subr.mxu0 0.0
    %1477 = vmatpush1.msra.mxu0 0.0
    %1478 = vmatprep.subr.mxu0 0.0
    %1479 = vmatpush1.msra.mxu0 0.0
    %1480 = vmatprep.mubr.f32.mxu0 0.0
    %1481 = vmatmul.mubr.f32.gmra.mrb[0].mxu0 %v1412
    %v1482 = vpop.f32.mrb[0].mxu0
    %v1483 = vadd.f32 0.0, %v1482
    %v1484 = vpop.f32.mrb[0].mxu0
    %1485 = vmatprep.mubr.f32.mxu0 0.0
    %1486 = vmatmul.mubr.f32.gmra.mrb[0].mxu0 %v1413
    %v1487 = vpop.f32.mrb[0].mxu0
    %v1488 = vadd.f32 0.0, %v1487
    %v1489 = vpop.f32.mrb[0].mxu0
    %1490 = vmatprep.mubr.f32.mxu0 0.0
    %1491 = vmatmul.mubr.f32.gmra.mrb[0].mxu0 %v1414
    %v1492 = vpop.f32.mrb[0].mxu0
    %v1493 = vadd.f32 0.0, %v1492
    %v1494 = vpop.f32.mrb[0].mxu0
    %1495 = vmatprep.mubr.f32.mxu0 0.0
    %1496 = vmatmul.mubr.f32.gmra.mrb[0].mxu0 %v1415
    %v1497 = vpop.f32.mrb[0].mxu0
    %v1498 = vadd.f32 0.0, %v1497
    %v1499 = vpop.f32.mrb[0].mxu0
    %1500 = vdwg.mxu0
    %s1501 = scalar_lea.vmem %s5, 640
    %v1502 = vld [vmem:[%s1501] sm:$0xff]
    %v1503 = vld [vmem:[%s1501 + $0x8] sm:$0xff]
    %v1504 = vld [vmem:[%s1501 + $0x10] sm:$0xff]
    %v1505 = vld [vmem:[%s1501 + $0x18] sm:$0xff]
    %v1506 = vld [vmem:[%s1501 + $0x20] sm:$0xff]
    %v1507 = vld [vmem:[%s1501 + $0x28] sm:$0xff]
    %v1508 = vld [vmem:[%s1501 + $0x30] sm:$0xff]
    %v1509 = vld [vmem:[%s1501 + $0x38] sm:$0xff]
    %v1510 = vld [vmem:[%s1501 + $0x40] sm:$0xff]
    %v1511 = vld [vmem:[%s1501 + $0x48] sm:$0xff]
    %v1512 = vld [vmem:[%s1501 + $0x50] sm:$0xff]
    %v1513 = vld [vmem:[%s1501 + $0x58] sm:$0xff]
    %v1514 = vld [vmem:[%s1501 + $0x60] sm:$0xff]
    %v1515 = vld [vmem:[%s1501 + $0x68] sm:$0xff]
    %v1516 = vld [vmem:[%s1501 + $0x70] sm:$0xff]
    %v1517 = vld [vmem:[%s1501 + $0x78] sm:$0xff]
    %1518 = vmatprep.subr.mxu0 0.0
    %1519 = vmatpush1.msra.mxu0 %v1502
    %1520 = vmatprep.subr.mxu0 0.0
    %1521 = vmatpush1.msra.mxu0 %v1503
    %1522 = vmatprep.subr.mxu0 0.0
    %1523 = vmatpush1.msra.mxu0 %v1504
    %1524 = vmatprep.subr.mxu0 0.0
    %1525 = vmatpush1.msra.mxu0 %v1505
    %1526 = vmatprep.subr.mxu0 0.0
    %1527 = vmatpush1.msra.mxu0 %v1506
    %1528 = vmatprep.subr.mxu0 0.0
    %1529 = vmatpush1.msra.mxu0 %v1507
    %1530 = vmatprep.subr.mxu0 0.0
    %1531 = vmatpush1.msra.mxu0 %v1508
    %1532 = vmatprep.subr.mxu0 0.0
    %1533 = vmatpush1.msra.mxu0 %v1509
    %1534 = vmatprep.subr.mxu0 0.0
    %1535 = vmatpush1.msra.mxu0 %v1510
    %1536 = vmatprep.subr.mxu0 0.0
    %1537 = vmatpush1.msra.mxu0 %v1511
    %1538 = vmatprep.subr.mxu0 0.0
    %1539 = vmatpush1.msra.mxu0 %v1512
    %1540 = vmatprep.subr.mxu0 0.0
    %1541 = vmatpush1.msra.mxu0 %v1513
    %1542 = vmatprep.subr.mxu0 0.0
    %1543 = vmatpush1.msra.mxu0 %v1514
    %1544 = vmatprep.subr.mxu0 0.0
    %1545 = vmatpush1.msra.mxu0 %v1515
    %1546 = vmatprep.subr.mxu0 0.0
    %1547 = vmatpush1.msra.mxu0 %v1516
    %1548 = vmatprep.subr.mxu0 0.0
    %1549 = vmatpush1.msra.mxu0 %v1517
    %1550 = vmatprep.subr.mxu0 0.0
    %1551 = vmatpush1.msra.mxu0 0.0
    %1552 = vmatprep.subr.mxu0 0.0
    %1553 = vmatpush1.msra.mxu0 0.0
    %1554 = vmatprep.subr.mxu0 0.0
    %1555 = vmatpush1.msra.mxu0 0.0
    %1556 = vmatprep.subr.mxu0 0.0
    %1557 = vmatpush1.msra.mxu0 0.0
    %1558 = vmatprep.subr.mxu0 0.0
    %1559 = vmatpush1.msra.mxu0 0.0
    %1560 = vmatprep.subr.mxu0 0.0
    %1561 = vmatpush1.msra.mxu0 0.0
    %1562 = vmatprep.subr.mxu0 0.0
    %1563 = vmatpush1.msra.mxu0 0.0
    %1564 = vmatprep.subr.mxu0 0.0
    %1565 = vmatpush1.msra.mxu0 0.0
    %1566 = vmatprep.subr.mxu0 0.0
    %1567 = vmatpush1.msra.mxu0 0.0
    %1568 = vmatprep.subr.mxu0 0.0
    %1569 = vmatpush1.msra.mxu0 0.0
    %1570 = vmatprep.subr.mxu0 0.0
    %1571 = vmatpush1.msra.mxu0 0.0
    %1572 = vmatprep.subr.mxu0 0.0
    %1573 = vmatpush1.msra.mxu0 0.0
    %1574 = vmatprep.subr.mxu0 0.0
    %1575 = vmatpush1.msra.mxu0 0.0
    %1576 = vmatprep.subr.mxu0 0.0
    %1577 = vmatpush1.msra.mxu0 0.0
    %1578 = vmatprep.subr.mxu0 0.0
    %1579 = vmatpush1.msra.mxu0 0.0
    %1580 = vmatprep.subr.mxu0 0.0
    %1581 = vmatpush1.msra.mxu0 0.0
    %1582 = vmatprep.mubr.f32.mxu0 0.0
    %1583 = vmatmul.mubr.f32.gmra.mrb[0].mxu0 %v1483
    %v1584 = vpop.f32.mrb[0].mxu0
    %v1585 = vadd.f32 0.0, %v1584
    %v1586 = vpop.f32.mrb[0].mxu0
    %1587 = vmatprep.mubr.f32.mxu0 0.0
    %1588 = vmatmul.mubr.f32.gmra.mrb[0].mxu0 %v1488
    %v1589 = vpop.f32.mrb[0].mxu0
    %v1590 = vadd.f32 0.0, %v1589
    %v1591 = vpop.f32.mrb[0].mxu0
    %1592 = vmatprep.mubr.f32.mxu0 0.0
    %1593 = vmatmul.mubr.f32.gmra.mrb[0].mxu0 %v1493
    %v1594 = vpop.f32.mrb[0].mxu0
    %v1595 = vadd.f32 0.0, %v1594
    %v1596 = vpop.f32.mrb[0].mxu0
    %1597 = vmatprep.mubr.f32.mxu0 0.0
    %1598 = vmatmul.mubr.f32.gmra.mrb[0].mxu0 %v1498
    %v1599 = vpop.f32.mrb[0].mxu0
    %v1600 = vadd.f32 0.0, %v1599
    %v1601 = vpop.f32.mrb[0].mxu0
    %1602 = vdwg.mxu0
    %v1603 = vadd.f32 %v1407, %v1585
    %v1604 = vadd.f32 %v1408, %v1590
    %v1605 = vadd.f32 %v1409, %v1595
    %v1606 = vadd.f32 %v1410, %v1600
    %s1607 = scalar_lea.vmem %s4, 192
    %v1608 = vld [vmem:[%s1607] sm:$0xff]
    %v1609 = vld [vmem:[%s1607 + $0x8] sm:$0xff]
    %v1610 = vld [vmem:[%s1607 + $0x10] sm:$0xff]
    %v1611 = vld [vmem:[%s1607 + $0x18] sm:$0xff]
    %1612 = vmatprep.subr.mxu0 0.0
    %1613 = vmatpush1.msra.mxu0 %v425
    %1614 = vmatprep.subr.mxu0 0.0
    %1615 = vmatpush1.msra.mxu0 %v426
    %1616 = vmatprep.subr.mxu0 0.0
    %1617 = vmatpush1.msra.mxu0 %v427
    %1618 = vmatprep.subr.mxu0 0.0
    %1619 = vmatpush1.msra.mxu0 %v428
    %1620 = vmatprep.subr.mxu0 0.0
    %1621 = vmatpush1.msra.mxu0 %v429
    %1622 = vmatprep.subr.mxu0 0.0
    %1623 = vmatpush1.msra.mxu0 %v430
    %1624 = vmatprep.subr.mxu0 0.0
    %1625 = vmatpush1.msra.mxu0 %v431
    %1626 = vmatprep.subr.mxu0 0.0
    %1627 = vmatpush1.msra.mxu0 %v432
    %1628 = vmatprep.subr.mxu0 0.0
    %1629 = vmatpush1.msra.mxu0 %v433
    %1630 = vmatprep.subr.mxu0 0.0
    %1631 = vmatpush1.msra.mxu0 %v434
    %1632 = vmatprep.subr.mxu0 0.0
    %1633 = vmatpush1.msra.mxu0 %v435
    %1634 = vmatprep.subr.mxu0 0.0
    %1635 = vmatpush1.msra.mxu0 %v436
    %1636 = vmatprep.subr.mxu0 0.0
    %1637 = vmatpush1.msra.mxu0 %v437
    %1638 = vmatprep.subr.mxu0 0.0
    %1639 = vmatpush1.msra.mxu0 %v438
    %1640 = vmatprep.subr.mxu0 0.0
    %1641 = vmatpush1.msra.mxu0 %v439
    %1642 = vmatprep.subr.mxu0 0.0
    %1643 = vmatpush1.msra.mxu0 %v440
    %1644 = vmatprep.subr.mxu0 0.0
    %1645 = vmatpush1.msra.mxu0 0.0
    %1646 = vmatprep.subr.mxu0 0.0
    %1647 = vmatpush1.msra.mxu0 0.0
    %1648 = vmatprep.subr.mxu0 0.0
    %1649 = vmatpush1.msra.mxu0 0.0
    %1650 = vmatprep.subr.mxu0 0.0
    %1651 = vmatpush1.msra.mxu0 0.0
    %1652 = vmatprep.subr.mxu0 0.0
    %1653 = vmatpush1.msra.mxu0 0.0
    %1654 = vmatprep.subr.mxu0 0.0
    %1655 = vmatpush1.msra.mxu0 0.0
    %1656 = vmatprep.subr.mxu0 0.0
    %1657 = vmatpush1.msra.mxu0 0.0
    %1658 = vmatprep.subr.mxu0 0.0
    %1659 = vmatpush1.msra.mxu0 0.0
    %1660 = vmatprep.subr.mxu0 0.0
    %1661 = vmatpush1.msra.mxu0 0.0
    %1662 = vmatprep.subr.mxu0 0.0
    %1663 = vmatpush1.msra.mxu0 0.0
    %1664 = vmatprep.subr.mxu0 0.0
    %1665 = vmatpush1.msra.mxu0 0.0
    %1666 = vmatprep.subr.mxu0 0.0
    %1667 = vmatpush1.msra.mxu0 0.0
    %1668 = vmatprep.subr.mxu0 0.0
    %1669 = vmatpush1.msra.mxu0 0.0
    %1670 = vmatprep.subr.mxu0 0.0
    %1671 = vmatpush1.msra.mxu0 0.0
    %1672 = vmatprep.subr.mxu0 0.0
    %1673 = vmatpush1.msra.mxu0 0.0
    %1674 = vmatprep.subr.mxu0 0.0
    %1675 = vmatpush1.msra.mxu0 0.0
    %1676 = vmatprep.mubr.f32.mxu0 0.0
    %1677 = vmatmul.mubr.f32.gmra.mrb[0].mxu0 %v1608
    %v1678 = vpop.f32.mrb[0].mxu0
    %v1679 = vadd.f32 0.0, %v1678
    %v1680 = vpop.f32.mrb[0].mxu0
    %1681 = vmatprep.mubr.f32.mxu0 0.0
    %1682 = vmatmul.mubr.f32.gmra.mrb[0].mxu0 %v1609
    %v1683 = vpop.f32.mrb[0].mxu0
    %v1684 = vadd.f32 0.0, %v1683
    %v1685 = vpop.f32.mrb[0].mxu0
    %1686 = vmatprep.mubr.f32.mxu0 0.0
    %1687 = vmatmul.mubr.f32.gmra.mrb[0].mxu0 %v1610
    %v1688 = vpop.f32.mrb[0].mxu0
    %v1689 = vadd.f32 0.0, %v1688
    %v1690 = vpop.f32.mrb[0].mxu0
    %1691 = vmatprep.mubr.f32.mxu0 0.0
    %1692 = vmatmul.mubr.f32.gmra.mrb[0].mxu0 %v1611
    %v1693 = vpop.f32.mrb[0].mxu0
    %v1694 = vadd.f32 0.0, %v1693
    %v1695 = vpop.f32.mrb[0].mxu0
    %1696 = vdwg.mxu0
    %s1697 = scalar_lea.vmem %s5, 768
    %v1698 = vld [vmem:[%s1697] sm:$0xff]
    %v1699 = vld [vmem:[%s1697 + $0x8] sm:$0xff]
    %v1700 = vld [vmem:[%s1697 + $0x10] sm:$0xff]
    %v1701 = vld [vmem:[%s1697 + $0x18] sm:$0xff]
    %v1702 = vld [vmem:[%s1697 + $0x20] sm:$0xff]
    %v1703 = vld [vmem:[%s1697 + $0x28] sm:$0xff]
    %v1704 = vld [vmem:[%s1697 + $0x30] sm:$0xff]
    %v1705 = vld [vmem:[%s1697 + $0x38] sm:$0xff]
    %v1706 = vld [vmem:[%s1697 + $0x40] sm:$0xff]
    %v1707 = vld [vmem:[%s1697 + $0x48] sm:$0xff]
    %v1708 = vld [vmem:[%s1697 + $0x50] sm:$0xff]
    %v1709 = vld [vmem:[%s1697 + $0x58] sm:$0xff]
    %v1710 = vld [vmem:[%s1697 + $0x60] sm:$0xff]
    %v1711 = vld [vmem:[%s1697 + $0x68] sm:$0xff]
    %v1712 = vld [vmem:[%s1697 + $0x70] sm:$0xff]
    %v1713 = vld [vmem:[%s1697 + $0x78] sm:$0xff]
    %1714 = vmatprep.subr.mxu0 0.0
    %1715 = vmatpush1.msra.mxu0 %v1698
    %1716 = vmatprep.subr.mxu0 0.0
    %1717 = vmatpush1.msra.mxu0 %v1699
    %1718 = vmatprep.subr.mxu0 0.0
    %1719 = vmatpush1.msra.mxu0 %v1700
    %1720 = vmatprep.subr.mxu0 0.0
    %1721 = vmatpush1.msra.mxu0 %v1701
    %1722 = vmatprep.subr.mxu0 0.0
    %1723 = vmatpush1.msra.mxu0 %v1702
    %1724 = vmatprep.subr.mxu0 0.0
    %1725 = vmatpush1.msra.mxu0 %v1703
    %1726 = vmatprep.subr.mxu0 0.0
    %1727 = vmatpush1.msra.mxu0 %v1704
    %1728 = vmatprep.subr.mxu0 0.0
    %1729 = vmatpush1.msra.mxu0 %v1705
    %1730 = vmatprep.subr.mxu0 0.0
    %1731 = vmatpush1.msra.mxu0 %v1706
    %1732 = vmatprep.subr.mxu0 0.0
    %1733 = vmatpush1.msra.mxu0 %v1707
    %1734 = vmatprep.subr.mxu0 0.0
    %1735 = vmatpush1.msra.mxu0 %v1708
    %1736 = vmatprep.subr.mxu0 0.0
    %1737 = vmatpush1.msra.mxu0 %v1709
    %1738 = vmatprep.subr.mxu0 0.0
    %1739 = vmatpush1.msra.mxu0 %v1710
    %1740 = vmatprep.subr.mxu0 0.0
    %1741 = vmatpush1.msra.mxu0 %v1711
    %1742 = vmatprep.subr.mxu0 0.0
    %1743 = vmatpush1.msra.mxu0 %v1712
    %1744 = vmatprep.subr.mxu0 0.0
    %1745 = vmatpush1.msra.mxu0 %v1713
    %1746 = vmatprep.subr.mxu0 0.0
    %1747 = vmatpush1.msra.mxu0 0.0
    %1748 = vmatprep.subr.mxu0 0.0
    %1749 = vmatpush1.msra.mxu0 0.0
    %1750 = vmatprep.subr.mxu0 0.0
    %1751 = vmatpush1.msra.mxu0 0.0
    %1752 = vmatprep.subr.mxu0 0.0
    %1753 = vmatpush1.msra.mxu0 0.0
    %1754 = vmatprep.subr.mxu0 0.0
    %1755 = vmatpush1.msra.mxu0 0.0
    %1756 = vmatprep.subr.mxu0 0.0
    %1757 = vmatpush1.msra.mxu0 0.0
    %1758 = vmatprep.subr.mxu0 0.0
    %1759 = vmatpush1.msra.mxu0 0.0
    %1760 = vmatprep.subr.mxu0 0.0
    %1761 = vmatpush1.msra.mxu0 0.0
    %1762 = vmatprep.subr.mxu0 0.0
    %1763 = vmatpush1.msra.mxu0 0.0
    %1764 = vmatprep.subr.mxu0 0.0
    %1765 = vmatpush1.msra.mxu0 0.0
    %1766 = vmatprep.subr.mxu0 0.0
    %1767 = vmatpush1.msra.mxu0 0.0
    %1768 = vmatprep.subr.mxu0 0.0
    %1769 = vmatpush1.msra.mxu0 0.0
    %1770 = vmatprep.subr.mxu0 0.0
    %1771 = vmatpush1.msra.mxu0 0.0
    %1772 = vmatprep.subr.mxu0 0.0
    %1773 = vmatpush1.msra.mxu0 0.0
    %1774 = vmatprep.subr.mxu0 0.0
    %1775 = vmatpush1.msra.mxu0 0.0
    %1776 = vmatprep.subr.mxu0 0.0
    %1777 = vmatpush1.msra.mxu0 0.0
    %1778 = vmatprep.mubr.f32.mxu0 0.0
    %1779 = vmatmul.mubr.f32.gmra.mrb[0].mxu0 %v1679
    %v1780 = vpop.f32.mrb[0].mxu0
    %v1781 = vadd.f32 0.0, %v1780
    %v1782 = vpop.f32.mrb[0].mxu0
    %1783 = vmatprep.mubr.f32.mxu0 0.0
    %1784 = vmatmul.mubr.f32.gmra.mrb[0].mxu0 %v1684
    %v1785 = vpop.f32.mrb[0].mxu0
    %v1786 = vadd.f32 0.0, %v1785
    %v1787 = vpop.f32.mrb[0].mxu0
    %1788 = vmatprep.mubr.f32.mxu0 0.0
    %1789 = vmatmul.mubr.f32.gmra.mrb[0].mxu0 %v1689
    %v1790 = vpop.f32.mrb[0].mxu0
    %v1791 = vadd.f32 0.0, %v1790
    %v1792 = vpop.f32.mrb[0].mxu0
    %1793 = vmatprep.mubr.f32.mxu0 0.0
    %1794 = vmatmul.mubr.f32.gmra.mrb[0].mxu0 %v1694
    %v1795 = vpop.f32.mrb[0].mxu0
    %v1796 = vadd.f32 0.0, %v1795
    %v1797 = vpop.f32.mrb[0].mxu0
    %1798 = vdwg.mxu0
    %v1799 = vadd.f32 %v1603, %v1781
    %v1800 = vadd.f32 %v1604, %v1786
    %v1801 = vadd.f32 %v1605, %v1791
    %v1802 = vadd.f32 %v1606, %v1796
    %s1803 = scalar_lea.vmem %s4, 224
    %v1804 = vld [vmem:[%s1803] sm:$0xff]
    %v1805 = vld [vmem:[%s1803 + $0x8] sm:$0xff]
    %v1806 = vld [vmem:[%s1803 + $0x10] sm:$0xff]
    %v1807 = vld [vmem:[%s1803 + $0x18] sm:$0xff]
    %1808 = vmatprep.subr.mxu0 0.0
    %1809 = vmatpush1.msra.mxu0 %v425
    %1810 = vmatprep.subr.mxu0 0.0
    %1811 = vmatpush1.msra.mxu0 %v426
    %1812 = vmatprep.subr.mxu0 0.0
    %1813 = vmatpush1.msra.mxu0 %v427
    %1814 = vmatprep.subr.mxu0 0.0
    %1815 = vmatpush1.msra.mxu0 %v428
    %1816 = vmatprep.subr.mxu0 0.0
    %1817 = vmatpush1.msra.mxu0 %v429
    %1818 = vmatprep.subr.mxu0 0.0
    %1819 = vmatpush1.msra.mxu0 %v430
    %1820 = vmatprep.subr.mxu0 0.0
    %1821 = vmatpush1.msra.mxu0 %v431
    %1822 = vmatprep.subr.mxu0 0.0
    %1823 = vmatpush1.msra.mxu0 %v432
    %1824 = vmatprep.subr.mxu0 0.0
    %1825 = vmatpush1.msra.mxu0 %v433
    %1826 = vmatprep.subr.mxu0 0.0
    %1827 = vmatpush1.msra.mxu0 %v434
    %1828 = vmatprep.subr.mxu0 0.0
    %1829 = vmatpush1.msra.mxu0 %v435
    %1830 = vmatprep.subr.mxu0 0.0
    %1831 = vmatpush1.msra.mxu0 %v436
    %1832 = vmatprep.subr.mxu0 0.0
    %1833 = vmatpush1.msra.mxu0 %v437
    %1834 = vmatprep.subr.mxu0 0.0
    %1835 = vmatpush1.msra.mxu0 %v438
    %1836 = vmatprep.subr.mxu0 0.0
    %1837 = vmatpush1.msra.mxu0 %v439
    %1838 = vmatprep.subr.mxu0 0.0
    %1839 = vmatpush1.msra.mxu0 %v440
    %1840 = vmatprep.subr.mxu0 0.0
    %1841 = vmatpush1.msra.mxu0 0.0
    %1842 = vmatprep.subr.mxu0 0.0
    %1843 = vmatpush1.msra.mxu0 0.0
    %1844 = vmatprep.subr.mxu0 0.0
    %1845 = vmatpush1.msra.mxu0 0.0
    %1846 = vmatprep.subr.mxu0 0.0
    %1847 = vmatpush1.msra.mxu0 0.0
    %1848 = vmatprep.subr.mxu0 0.0
    %1849 = vmatpush1.msra.mxu0 0.0
    %1850 = vmatprep.subr.mxu0 0.0
    %1851 = vmatpush1.msra.mxu0 0.0
    %1852 = vmatprep.subr.mxu0 0.0
    %1853 = vmatpush1.msra.mxu0 0.0
    %1854 = vmatprep.subr.mxu0 0.0
    %1855 = vmatpush1.msra.mxu0 0.0
    %1856 = vmatprep.subr.mxu0 0.0
    %1857 = vmatpush1.msra.mxu0 0.0
    %1858 = vmatprep.subr.mxu0 0.0
    %1859 = vmatpush1.msra.mxu0 0.0
    %1860 = vmatprep.subr.mxu0 0.0
    %1861 = vmatpush1.msra.mxu0 0.0
    %1862 = vmatprep.subr.mxu0 0.0
    %1863 = vmatpush1.msra.mxu0 0.0
    %1864 = vmatprep.subr.mxu0 0.0
    %1865 = vmatpush1.msra.mxu0 0.0
    %1866 = vmatprep.subr.mxu0 0.0
    %1867 = vmatpush1.msra.mxu0 0.0
    %1868 = vmatprep.subr.mxu0 0.0
    %1869 = vmatpush1.msra.mxu0 0.0
    %1870 = vmatprep.subr.mxu0 0.0
    %1871 = vmatpush1.msra.mxu0 0.0
    %1872 = vmatprep.mubr.f32.mxu0 0.0
    %1873 = vmatmul.mubr.f32.gmra.mrb[0].mxu0 %v1804
    %v1874 = vpop.f32.mrb[0].mxu0
    %v1875 = vadd.f32 0.0, %v1874
    %v1876 = vpop.f32.mrb[0].mxu0
    %1877 = vmatprep.mubr.f32.mxu0 0.0
    %1878 = vmatmul.mubr.f32.gmra.mrb[0].mxu0 %v1805
    %v1879 = vpop.f32.mrb[0].mxu0
    %v1880 = vadd.f32 0.0, %v1879
    %v1881 = vpop.f32.mrb[0].mxu0
    %1882 = vmatprep.mubr.f32.mxu0 0.0
    %1883 = vmatmul.mubr.f32.gmra.mrb[0].mxu0 %v1806
    %v1884 = vpop.f32.mrb[0].mxu0
    %v1885 = vadd.f32 0.0, %v1884
    %v1886 = vpop.f32.mrb[0].mxu0
    %1887 = vmatprep.mubr.f32.mxu0 0.0
    %1888 = vmatmul.mubr.f32.gmra.mrb[0].mxu0 %v1807
    %v1889 = vpop.f32.mrb[0].mxu0
    %v1890 = vadd.f32 0.0, %v1889
    %v1891 = vpop.f32.mrb[0].mxu0
    %1892 = vdwg.mxu0
    %s1893 = scalar_lea.vmem %s5, 896
    %v1894 = vld [vmem:[%s1893] sm:$0xff]
    %v1895 = vld [vmem:[%s1893 + $0x8] sm:$0xff]
    %v1896 = vld [vmem:[%s1893 + $0x10] sm:$0xff]
    %v1897 = vld [vmem:[%s1893 + $0x18] sm:$0xff]
    %v1898 = vld [vmem:[%s1893 + $0x20] sm:$0xff]
    %v1899 = vld [vmem:[%s1893 + $0x28] sm:$0xff]
    %v1900 = vld [vmem:[%s1893 + $0x30] sm:$0xff]
    %v1901 = vld [vmem:[%s1893 + $0x38] sm:$0xff]
    %v1902 = vld [vmem:[%s1893 + $0x40] sm:$0xff]
    %v1903 = vld [vmem:[%s1893 + $0x48] sm:$0xff]
    %v1904 = vld [vmem:[%s1893 + $0x50] sm:$0xff]
    %v1905 = vld [vmem:[%s1893 + $0x58] sm:$0xff]
    %v1906 = vld [vmem:[%s1893 + $0x60] sm:$0xff]
    %v1907 = vld [vmem:[%s1893 + $0x68] sm:$0xff]
    %v1908 = vld [vmem:[%s1893 + $0x70] sm:$0xff]
    %v1909 = vld [vmem:[%s1893 + $0x78] sm:$0xff]
    %1910 = vmatprep.subr.mxu0 0.0
    %1911 = vmatpush1.msra.mxu0 %v1894
    %1912 = vmatprep.subr.mxu0 0.0
    %1913 = vmatpush1.msra.mxu0 %v1895
    %1914 = vmatprep.subr.mxu0 0.0
    %1915 = vmatpush1.msra.mxu0 %v1896
    %1916 = vmatprep.subr.mxu0 0.0
    %1917 = vmatpush1.msra.mxu0 %v1897
    %1918 = vmatprep.subr.mxu0 0.0
    %1919 = vmatpush1.msra.mxu0 %v1898
    %1920 = vmatprep.subr.mxu0 0.0
    %1921 = vmatpush1.msra.mxu0 %v1899
    %1922 = vmatprep.subr.mxu0 0.0
    %1923 = vmatpush1.msra.mxu0 %v1900
    %1924 = vmatprep.subr.mxu0 0.0
    %1925 = vmatpush1.msra.mxu0 %v1901
    %1926 = vmatprep.subr.mxu0 0.0
    %1927 = vmatpush1.msra.mxu0 %v1902
    %1928 = vmatprep.subr.mxu0 0.0
    %1929 = vmatpush1.msra.mxu0 %v1903
    %1930 = vmatprep.subr.mxu0 0.0
    %1931 = vmatpush1.msra.mxu0 %v1904
    %1932 = vmatprep.subr.mxu0 0.0
    %1933 = vmatpush1.msra.mxu0 %v1905
    %1934 = vmatprep.subr.mxu0 0.0
    %1935 = vmatpush1.msra.mxu0 %v1906
    %1936 = vmatprep.subr.mxu0 0.0
    %1937 = vmatpush1.msra.mxu0 %v1907
    %1938 = vmatprep.subr.mxu0 0.0
    %1939 = vmatpush1.msra.mxu0 %v1908
    %1940 = vmatprep.subr.mxu0 0.0
    %1941 = vmatpush1.msra.mxu0 %v1909
    %1942 = vmatprep.subr.mxu0 0.0
    %1943 = vmatpush1.msra.mxu0 0.0
    %1944 = vmatprep.subr.mxu0 0.0
    %1945 = vmatpush1.msra.mxu0 0.0
    %1946 = vmatprep.subr.mxu0 0.0
    %1947 = vmatpush1.msra.mxu0 0.0
    %1948 = vmatprep.subr.mxu0 0.0
    %1949 = vmatpush1.msra.mxu0 0.0
    %1950 = vmatprep.subr.mxu0 0.0
    %1951 = vmatpush1.msra.mxu0 0.0
    %1952 = vmatprep.subr.mxu0 0.0
    %1953 = vmatpush1.msra.mxu0 0.0
    %1954 = vmatprep.subr.mxu0 0.0
    %1955 = vmatpush1.msra.mxu0 0.0
    %1956 = vmatprep.subr.mxu0 0.0
    %1957 = vmatpush1.msra.mxu0 0.0
    %1958 = vmatprep.subr.mxu0 0.0
    %1959 = vmatpush1.msra.mxu0 0.0
    %1960 = vmatprep.subr.mxu0 0.0
    %1961 = vmatpush1.msra.mxu0 0.0
    %1962 = vmatprep.subr.mxu0 0.0
    %1963 = vmatpush1.msra.mxu0 0.0
    %1964 = vmatprep.subr.mxu0 0.0
    %1965 = vmatpush1.msra.mxu0 0.0
    %1966 = vmatprep.subr.mxu0 0.0
    %1967 = vmatpush1.msra.mxu0 0.0
    %1968 = vmatprep.subr.mxu0 0.0
    %1969 = vmatpush1.msra.mxu0 0.0
    %1970 = vmatprep.subr.mxu0 0.0
    %1971 = vmatpush1.msra.mxu0 0.0
    %1972 = vmatprep.subr.mxu0 0.0
    %1973 = vmatpush1.msra.mxu0 0.0
    %1974 = vmatprep.mubr.f32.mxu0 0.0
    %1975 = vmatmul.mubr.f32.gmra.mrb[0].mxu0 %v1875
    %v1976 = vpop.f32.mrb[0].mxu0
    %v1977 = vadd.f32 0.0, %v1976
    %v1978 = vpop.f32.mrb[0].mxu0
    %1979 = vmatprep.mubr.f32.mxu0 0.0
    %1980 = vmatmul.mubr.f32.gmra.mrb[0].mxu0 %v1880
    %v1981 = vpop.f32.mrb[0].mxu0
    %v1982 = vadd.f32 0.0, %v1981
    %v1983 = vpop.f32.mrb[0].mxu0
    %1984 = vmatprep.mubr.f32.mxu0 0.0
    %1985 = vmatmul.mubr.f32.gmra.mrb[0].mxu0 %v1885
    %v1986 = vpop.f32.mrb[0].mxu0
    %v1987 = vadd.f32 0.0, %v1986
    %v1988 = vpop.f32.mrb[0].mxu0
    %1989 = vmatprep.mubr.f32.mxu0 0.0
    %1990 = vmatmul.mubr.f32.gmra.mrb[0].mxu0 %v1890
    %v1991 = vpop.f32.mrb[0].mxu0
    %v1992 = vadd.f32 0.0, %v1991
    %v1993 = vpop.f32.mrb[0].mxu0
    %1994 = vdwg.mxu0
    %v1995 = vadd.f32 %v1799, %v1977
    %v1996 = vadd.f32 %v1800, %v1982
    %v1997 = vadd.f32 %v1801, %v1987
    %v1998 = vadd.f32 %v1802, %v1992
    %s1999 = scalar_lea.vmem %s4, 256
    %v2000 = vld [vmem:[%s1999] sm:$0xff]
    %v2001 = vld [vmem:[%s1999 + $0x8] sm:$0xff]
    %v2002 = vld [vmem:[%s1999 + $0x10] sm:$0xff]
    %v2003 = vld [vmem:[%s1999 + $0x18] sm:$0xff]
    %2004 = vmatprep.subr.mxu0 0.0
    %2005 = vmatpush1.msra.mxu0 %v425
    %2006 = vmatprep.subr.mxu0 0.0
    %2007 = vmatpush1.msra.mxu0 %v426
    %2008 = vmatprep.subr.mxu0 0.0
    %2009 = vmatpush1.msra.mxu0 %v427
    %2010 = vmatprep.subr.mxu0 0.0
    %2011 = vmatpush1.msra.mxu0 %v428
    %2012 = vmatprep.subr.mxu0 0.0
    %2013 = vmatpush1.msra.mxu0 %v429
    %2014 = vmatprep.subr.mxu0 0.0
    %2015 = vmatpush1.msra.mxu0 %v430
    %2016 = vmatprep.subr.mxu0 0.0
    %2017 = vmatpush1.msra.mxu0 %v431
    %2018 = vmatprep.subr.mxu0 0.0
    %2019 = vmatpush1.msra.mxu0 %v432
    %2020 = vmatprep.subr.mxu0 0.0
    %2021 = vmatpush1.msra.mxu0 %v433
    %2022 = vmatprep.subr.mxu0 0.0
    %2023 = vmatpush1.msra.mxu0 %v434
    %2024 = vmatprep.subr.mxu0 0.0
    %2025 = vmatpush1.msra.mxu0 %v435
    %2026 = vmatprep.subr.mxu0 0.0
    %2027 = vmatpush1.msra.mxu0 %v436
    %2028 = vmatprep.subr.mxu0 0.0
    %2029 = vmatpush1.msra.mxu0 %v437
    %2030 = vmatprep.subr.mxu0 0.0
    %2031 = vmatpush1.msra.mxu0 %v438
    %2032 = vmatprep.subr.mxu0 0.0
    %2033 = vmatpush1.msra.mxu0 %v439
    %2034 = vmatprep.subr.mxu0 0.0
    %2035 = vmatpush1.msra.mxu0 %v440
    %2036 = vmatprep.subr.mxu0 0.0
    %2037 = vmatpush1.msra.mxu0 0.0
    %2038 = vmatprep.subr.mxu0 0.0
    %2039 = vmatpush1.msra.mxu0 0.0
    %2040 = vmatprep.subr.mxu0 0.0
    %2041 = vmatpush1.msra.mxu0 0.0
    %2042 = vmatprep.subr.mxu0 0.0
    %2043 = vmatpush1.msra.mxu0 0.0
    %2044 = vmatprep.subr.mxu0 0.0
    %2045 = vmatpush1.msra.mxu0 0.0
    %2046 = vmatprep.subr.mxu0 0.0
    %2047 = vmatpush1.msra.mxu0 0.0
    %2048 = vmatprep.subr.mxu0 0.0
    %2049 = vmatpush1.msra.mxu0 0.0
    %2050 = vmatprep.subr.mxu0 0.0
    %2051 = vmatpush1.msra.mxu0 0.0
    %2052 = vmatprep.subr.mxu0 0.0
    %2053 = vmatpush1.msra.mxu0 0.0
    %2054 = vmatprep.subr.mxu0 0.0
    %2055 = vmatpush1.msra.mxu0 0.0
    %2056 = vmatprep.subr.mxu0 0.0
    %2057 = vmatpush1.msra.mxu0 0.0
    %2058 = vmatprep.subr.mxu0 0.0
    %2059 = vmatpush1.msra.mxu0 0.0
    %2060 = vmatprep.subr.mxu0 0.0
    %2061 = vmatpush1.msra.mxu0 0.0
    %2062 = vmatprep.subr.mxu0 0.0
    %2063 = vmatpush1.msra.mxu0 0.0
    %2064 = vmatprep.subr.mxu0 0.0
    %2065 = vmatpush1.msra.mxu0 0.0
    %2066 = vmatprep.subr.mxu0 0.0
    %2067 = vmatpush1.msra.mxu0 0.0
    %2068 = vmatprep.mubr.f32.mxu0 0.0
    %2069 = vmatmul.mubr.f32.gmra.mrb[0].mxu0 %v2000
    %v2070 = vpop.f32.mrb[0].mxu0
    %v2071 = vadd.f32 0.0, %v2070
    %v2072 = vpop.f32.mrb[0].mxu0
    %2073 = vmatprep.mubr.f32.mxu0 0.0
    %2074 = vmatmul.mubr.f32.gmra.mrb[0].mxu0 %v2001
    %v2075 = vpop.f32.mrb[0].mxu0
    %v2076 = vadd.f32 0.0, %v2075
    %v2077 = vpop.f32.mrb[0].mxu0
    %2078 = vmatprep.mubr.f32.mxu0 0.0
    %2079 = vmatmul.mubr.f32.gmra.mrb[0].mxu0 %v2002
    %v2080 = vpop.f32.mrb[0].mxu0
    %v2081 = vadd.f32 0.0, %v2080
    %v2082 = vpop.f32.mrb[0].mxu0
    %2083 = vmatprep.mubr.f32.mxu0 0.0
    %2084 = vmatmul.mubr.f32.gmra.mrb[0].mxu0 %v2003
    %v2085 = vpop.f32.mrb[0].mxu0
    %v2086 = vadd.f32 0.0, %v2085
    %v2087 = vpop.f32.mrb[0].mxu0
    %2088 = vdwg.mxu0
    %s2089 = scalar_lea.vmem %s5, 1024
    %v2090 = vld [vmem:[%s2089] sm:$0xff]
    %v2091 = vld [vmem:[%s2089 + $0x8] sm:$0xff]
    %v2092 = vld [vmem:[%s2089 + $0x10] sm:$0xff]
    %v2093 = vld [vmem:[%s2089 + $0x18] sm:$0xff]
    %v2094 = vld [vmem:[%s2089 + $0x20] sm:$0xff]
    %v2095 = vld [vmem:[%s2089 + $0x28] sm:$0xff]
    %v2096 = vld [vmem:[%s2089 + $0x30] sm:$0xff]
    %v2097 = vld [vmem:[%s2089 + $0x38] sm:$0xff]
    %v2098 = vld [vmem:[%s2089 + $0x40] sm:$0xff]
    %v2099 = vld [vmem:[%s2089 + $0x48] sm:$0xff]
    %v2100 = vld [vmem:[%s2089 + $0x50] sm:$0xff]
    %v2101 = vld [vmem:[%s2089 + $0x58] sm:$0xff]
    %v2102 = vld [vmem:[%s2089 + $0x60] sm:$0xff]
    %v2103 = vld [vmem:[%s2089 + $0x68] sm:$0xff]
    %v2104 = vld [vmem:[%s2089 + $0x70] sm:$0xff]
    %v2105 = vld [vmem:[%s2089 + $0x78] sm:$0xff]
    %2106 = vmatprep.subr.mxu0 0.0
    %2107 = vmatpush1.msra.mxu0 %v2090
    %2108 = vmatprep.subr.mxu0 0.0
    %2109 = vmatpush1.msra.mxu0 %v2091
    %2110 = vmatprep.subr.mxu0 0.0
    %2111 = vmatpush1.msra.mxu0 %v2092
    %2112 = vmatprep.subr.mxu0 0.0
    %2113 = vmatpush1.msra.mxu0 %v2093
    %2114 = vmatprep.subr.mxu0 0.0
    %2115 = vmatpush1.msra.mxu0 %v2094
    %2116 = vmatprep.subr.mxu0 0.0
    %2117 = vmatpush1.msra.mxu0 %v2095
    %2118 = vmatprep.subr.mxu0 0.0
    %2119 = vmatpush1.msra.mxu0 %v2096
    %2120 = vmatprep.subr.mxu0 0.0
    %2121 = vmatpush1.msra.mxu0 %v2097
    %2122 = vmatprep.subr.mxu0 0.0
    %2123 = vmatpush1.msra.mxu0 %v2098
    %2124 = vmatprep.subr.mxu0 0.0
    %2125 = vmatpush1.msra.mxu0 %v2099
    %2126 = vmatprep.subr.mxu0 0.0
    %2127 = vmatpush1.msra.mxu0 %v2100
    %2128 = vmatprep.subr.mxu0 0.0
    %2129 = vmatpush1.msra.mxu0 %v2101
    %2130 = vmatprep.subr.mxu0 0.0
    %2131 = vmatpush1.msra.mxu0 %v2102
    %2132 = vmatprep.subr.mxu0 0.0
    %2133 = vmatpush1.msra.mxu0 %v2103
    %2134 = vmatprep.subr.mxu0 0.0
    %2135 = vmatpush1.msra.mxu0 %v2104
    %2136 = vmatprep.subr.mxu0 0.0
    %2137 = vmatpush1.msra.mxu0 %v2105
    %2138 = vmatprep.subr.mxu0 0.0
    %2139 = vmatpush1.msra.mxu0 0.0
    %2140 = vmatprep.subr.mxu0 0.0
    %2141 = vmatpush1.msra.mxu0 0.0
    %2142 = vmatprep.subr.mxu0 0.0
    %2143 = vmatpush1.msra.mxu0 0.0
    %2144 = vmatprep.subr.mxu0 0.0
    %2145 = vmatpush1.msra.mxu0 0.0
    %2146 = vmatprep.subr.mxu0 0.0
    %2147 = vmatpush1.msra.mxu0 0.0
    %2148 = vmatprep.subr.mxu0 0.0
    %2149 = vmatpush1.msra.mxu0 0.0
    %2150 = vmatprep.subr.mxu0 0.0
    %2151 = vmatpush1.msra.mxu0 0.0
    %2152 = vmatprep.subr.mxu0 0.0
    %2153 = vmatpush1.msra.mxu0 0.0
    %2154 = vmatprep.subr.mxu0 0.0
    %2155 = vmatpush1.msra.mxu0 0.0
    %2156 = vmatprep.subr.mxu0 0.0
    %2157 = vmatpush1.msra.mxu0 0.0
    %2158 = vmatprep.subr.mxu0 0.0
    %2159 = vmatpush1.msra.mxu0 0.0
    %2160 = vmatprep.subr.mxu0 0.0
    %2161 = vmatpush1.msra.mxu0 0.0
    %2162 = vmatprep.subr.mxu0 0.0
    %2163 = vmatpush1.msra.mxu0 0.0
    %2164 = vmatprep.subr.mxu0 0.0
    %2165 = vmatpush1.msra.mxu0 0.0
    %2166 = vmatprep.subr.mxu0 0.0
    %2167 = vmatpush1.msra.mxu0 0.0
    %2168 = vmatprep.subr.mxu0 0.0
    %2169 = vmatpush1.msra.mxu0 0.0
    %2170 = vmatprep.mubr.f32.mxu0 0.0
    %2171 = vmatmul.mubr.f32.gmra.mrb[0].mxu0 %v2071
    %v2172 = vpop.f32.mrb[0].mxu0
    %v2173 = vadd.f32 0.0, %v2172
    %v2174 = vpop.f32.mrb[0].mxu0
    %2175 = vmatprep.mubr.f32.mxu0 0.0
    %2176 = vmatmul.mubr.f32.gmra.mrb[0].mxu0 %v2076
    %v2177 = vpop.f32.mrb[0].mxu0
    %v2178 = vadd.f32 0.0, %v2177
    %v2179 = vpop.f32.mrb[0].mxu0
    %2180 = vmatprep.mubr.f32.mxu0 0.0
    %2181 = vmatmul.mubr.f32.gmra.mrb[0].mxu0 %v2081
    %v2182 = vpop.f32.mrb[0].mxu0
    %v2183 = vadd.f32 0.0, %v2182
    %v2184 = vpop.f32.mrb[0].mxu0
    %2185 = vmatprep.mubr.f32.mxu0 0.0
    %2186 = vmatmul.mubr.f32.gmra.mrb[0].mxu0 %v2086
    %v2187 = vpop.f32.mrb[0].mxu0
    %v2188 = vadd.f32 0.0, %v2187
    %v2189 = vpop.f32.mrb[0].mxu0
    %2190 = vdwg.mxu0
    %v2191 = vadd.f32 %v1995, %v2173
    %v2192 = vadd.f32 %v1996, %v2178
    %v2193 = vadd.f32 %v1997, %v2183
    %v2194 = vadd.f32 %v1998, %v2188
    %v2195 = vld [vmem:[%s6] sm:$0x1]
    %v2196 = vld [vmem:[#allocation5] sm:$0x1]
    %v2197 = vadd.f32 %v2191, %v2192
    %v2198 = vadd.f32 %v2197, %v2193
    %v2199 = vadd.f32 %v2198, %v2194
    %v2200 = vrot.slane %v2199, 4
    %v2201 = vadd.f32 %v2199, %v2200
    %v2202 = vrot.slane %v2201, 2
    %v2203 = vadd.f32 %v2201, %v2202
    %v2204 = vrot.slane %v2203, 1
    %v2205 = vadd.f32 %v2203, %v2204
    %v2206 = vmul.f32 %v2205, 0.03125
    %v2207 = vmul.f32 %v2191, %v2191
    %v2208 = vmul.f32 %v2192, %v2192
    %v2209 = vmul.f32 %v2193, %v2193
    %v2210 = vmul.f32 %v2194, %v2194
    %v2211 = vadd.f32 %v2207, %v2208
    %v2212 = vadd.f32 %v2211, %v2209
    %v2213 = vadd.f32 %v2212, %v2210
    %v2214 = vrot.slane %v2213, 4
    %v2215 = vadd.f32 %v2213, %v2214
    %v2216 = vrot.slane %v2215, 2
    %v2217 = vadd.f32 %v2215, %v2216
    %v2218 = vrot.slane %v2217, 1
    %v2219 = vadd.f32 %v2217, %v2218
    %v2220 = vmul.f32 %v2219, 0.03125
    %v2221 = vmul.f32 %v2206, %v2206
    %v2222 = vsub.f32 %v2220, %v2221
    %v2223 = vmax.f32 %v2222, 0.0
    %v2224 = vsub.f32 %v2191, %v2206
    %v2225 = vsub.f32 %v2192, %v2206
    %v2226 = vsub.f32 %v2193, %v2206
    %v2227 = vsub.f32 %v2194, %v2206
    %v2228 = vadd.f32 %v2223, 1e-05
    %v2229 = vrsqrt.pop %v2228
    %v2230 = vmul.f32 %v2224, %v2229
    %v2231 = vmul.f32 %v2225, %v2229
    %v2232 = vmul.f32 %v2226, %v2229
    %v2233 = vmul.f32 %v2227, %v2229
    %v2235 = vlaneseq
    %v2236 = vshrl.u32 %v2235, 7
    %v2237 = vsub.s32 0, %v2236
    %v2238 = vrot.slane %v2195, %v2237
    %v2240 = vmul.f32 %v2238, %v2230
    %v2241 = vmul.f32 %v2238, %v2231
    %v2242 = vmul.f32 %v2238, %v2232
    %v2243 = vmul.f32 %v2238, %v2233
    %v2245 = vlaneseq
    %v2246 = vshrl.u32 %v2245, 7
    %v2247 = vsub.s32 0, %v2246
    %v2248 = vrot.slane %v2196, %v2247
    %v2250 = vadd.f32 %v2240, %v2248
    %v2251 = vadd.f32 %v2241, %v2248
    %v2252 = vadd.f32 %v2242, %v2248
    %v2253 = vadd.f32 %v2243, %v2248
    %v2254 = vmax.f32 %v2250, 0.0
    %v2255 = vmax.f32 %v2251, 0.0
    %v2256 = vmax.f32 %v2252, 0.0
    %v2257 = vmax.f32 %v2253, 0.0
    %v2258 = vld [vmem:[#allocation7] sm:$0xff]
    %vm2259 = vcmask 261120
    %v2261 = vsel %vm2259, %v2258, 0
    %2263 = vmatprep.subr.mxu0 0.0
    %2264 = vmatpush1.msra.mxu0 %v2254
    %2265 = vmatprep.subr.mxu0 0.0
    %2266 = vmatpush1.msra.mxu0 %v2255
    %2267 = vmatprep.subr.mxu0 0.0
    %2268 = vmatpush1.msra.mxu0 %v2256
    %2269 = vmatprep.subr.mxu0 0.0
    %2270 = vmatpush1.msra.mxu0 %v2257
    %2271 = vmatprep.subr.mxu0 0.0
    %2272 = vmatpush1.msra.mxu0 0.0
    %2273 = vmatprep.subr.mxu0 0.0
    %2274 = vmatpush1.msra.mxu0 0.0
    %2275 = vmatprep.subr.mxu0 0.0
    %2276 = vmatpush1.msra.mxu0 0.0
    %2277 = vmatprep.subr.mxu0 0.0
    %2278 = vmatpush1.msra.mxu0 0.0
    %2279 = vmatprep.subr.mxu0 0.0
    %2280 = vmatpush1.msra.mxu0 0.0
    %2281 = vmatprep.subr.mxu0 0.0
    %2282 = vmatpush1.msra.mxu0 0.0
    %2283 = vmatprep.subr.mxu0 0.0
    %2284 = vmatpush1.msra.mxu0 0.0
    %2285 = vmatprep.subr.mxu0 0.0
    %2286 = vmatpush1.msra.mxu0 0.0
    %2287 = vmatprep.subr.mxu0 0.0
    %2288 = vmatpush1.msra.mxu0 0.0
    %2289 = vmatprep.subr.mxu0 0.0
    %2290 = vmatpush1.msra.mxu0 0.0
    %2291 = vmatprep.subr.mxu0 0.0
    %2292 = vmatpush1.msra.mxu0 0.0
    %2293 = vmatprep.subr.mxu0 0.0
    %2294 = vmatpush1.msra.mxu0 0.0
    %2295 = vmatprep.subr.mxu0 0.0
    %2296 = vmatpush1.msra.mxu0 0.0
    %2297 = vmatprep.subr.mxu0 0.0
    %2298 = vmatpush1.msra.mxu0 0.0
    %2299 = vmatprep.subr.mxu0 0.0
    %2300 = vmatpush1.msra.mxu0 0.0
    %2301 = vmatprep.subr.mxu0 0.0
    %2302 = vmatpush1.msra.mxu0 0.0
    %2303 = vmatprep.subr.mxu0 0.0
    %2304 = vmatpush1.msra.mxu0 0.0
    %2305 = vmatprep.subr.mxu0 0.0
    %2306 = vmatpush1.msra.mxu0 0.0
    %2307 = vmatprep.subr.mxu0 0.0
    %2308 = vmatpush1.msra.mxu0 0.0
    %2309 = vmatprep.subr.mxu0 0.0
    %2310 = vmatpush1.msra.mxu0 0.0
    %2311 = vmatprep.subr.mxu0 0.0
    %2312 = vmatpush1.msra.mxu0 0.0
    %2313 = vmatprep.subr.mxu0 0.0
    %2314 = vmatpush1.msra.mxu0 0.0
    %2315 = vmatprep.subr.mxu0 0.0
    %2316 = vmatpush1.msra.mxu0 0.0
    %2317 = vmatprep.subr.mxu0 0.0
    %2318 = vmatpush1.msra.mxu0 0.0
    %2319 = vmatprep.subr.mxu0 0.0
    %2320 = vmatpush1.msra.mxu0 0.0
    %2321 = vmatprep.subr.mxu0 0.0
    %2322 = vmatpush1.msra.mxu0 0.0
    %2323 = vmatprep.subr.mxu0 0.0
    %2324 = vmatpush1.msra.mxu0 0.0
    %2325 = vmatprep.subr.mxu0 0.0
    %2326 = vmatpush1.msra.mxu0 0.0
    %2327 = vmatprep.mubr.f32.mxu0 0.0
    %2328 = vmatmul.mubr.f32.gmra.mrb[0].mxu0 %v2261
    %v2329 = vpop.f32.mrb[0].mxu0
    %v2330 = vadd.f32 0.0, %v2329
    %v2331 = vpop.f32.mrb[0].mxu0
    %2332 = vdwg.mxu0
    %v2333 = vld [vmem:[%s9] sm:$0xff]
    %v2334 = vld [vmem:[%s9 + $0x8] sm:$0xff]
    %v2335 = vld [vmem:[%s9 + $0x10] sm:$0xff]
    %v2336 = vld [vmem:[%s9 + $0x18] sm:$0xff]
    %v2337 = vld [vmem:[%s9 + $0x20] sm:$0xff]
    %v2338 = vld [vmem:[%s9 + $0x28] sm:$0xff]
    %v2339 = vld [vmem:[%s9 + $0x30] sm:$0xff]
    %v2340 = vld [vmem:[%s9 + $0x38] sm:$0xff]
    %v2341 = vld [vmem:[%s9 + $0x40] sm:$0xff]
    %v2342 = vld [vmem:[%s9 + $0x48] sm:$0xff]
    %v2343 = vld [vmem:[%s9 + $0x50] sm:$0xff]
    %v2344 = vld [vmem:[%s9 + $0x58] sm:$0xff]
    %v2345 = vld [vmem:[%s9 + $0x60] sm:$0xff]
    %v2346 = vld [vmem:[%s9 + $0x68] sm:$0xff]
    %v2347 = vld [vmem:[%s9 + $0x70] sm:$0xff]
    %v2348 = vld [vmem:[%s9 + $0x78] sm:$0xff]
    %s2349 = scalar_lea.vmem [#allocation7], 8
    %v2350 = vld [vmem:[%s2349] sm:$0xff]
    %v2352 = vsel %vm2259, %v2350, 0
    %2354 = vmatprep.subr.mxu0 0.0
    %2355 = vmatpush1.msra.mxu0 %v2254
    %2356 = vmatprep.subr.mxu0 0.0
    %2357 = vmatpush1.msra.mxu0 %v2255
    %2358 = vmatprep.subr.mxu0 0.0
    %2359 = vmatpush1.msra.mxu0 %v2256
    %2360 = vmatprep.subr.mxu0 0.0
    %2361 = vmatpush1.msra.mxu0 %v2257
    %2362 = vmatprep.subr.mxu0 0.0
    %2363 = vmatpush1.msra.mxu0 0.0
    %2364 = vmatprep.subr.mxu0 0.0
    %2365 = vmatpush1.msra.mxu0 0.0
    %2366 = vmatprep.subr.mxu0 0.0
    %2367 = vmatpush1.msra.mxu0 0.0
    %2368 = vmatprep.subr.mxu0 0.0
    %2369 = vmatpush1.msra.mxu0 0.0
    %2370 = vmatprep.subr.mxu0 0.0
    %2371 = vmatpush1.msra.mxu0 0.0
    %2372 = vmatprep.subr.mxu0 0.0
    %2373 = vmatpush1.msra.mxu0 0.0
    %2374 = vmatprep.subr.mxu0 0.0
    %2375 = vmatpush1.msra.mxu0 0.0
    %2376 = vmatprep.subr.mxu0 0.0
    %2377 = vmatpush1.msra.mxu0 0.0
    %2378 = vmatprep.subr.mxu0 0.0
    %2379 = vmatpush1.msra.mxu0 0.0
    %2380 = vmatprep.subr.mxu0 0.0
    %2381 = vmatpush1.msra.mxu0 0.0
    %2382 = vmatprep.subr.mxu0 0.0
    %2383 = vmatpush1.msra.mxu0 0.0
    %2384 = vmatprep.subr.mxu0 0.0
    %2385 = vmatpush1.msra.mxu0 0.0
    %2386 = vmatprep.subr.mxu0 0.0
    %2387 = vmatpush1.msra.mxu0 0.0
    %2388 = vmatprep.subr.mxu0 0.0
    %2389 = vmatpush1.msra.mxu0 0.0
    %2390 = vmatprep.subr.mxu0 0.0
    %2391 = vmatpush1.msra.mxu0 0.0
    %2392 = vmatprep.subr.mxu0 0.0
    %2393 = vmatpush1.msra.mxu0 0.0
    %2394 = vmatprep.subr.mxu0 0.0
    %2395 = vmatpush1.msra.mxu0 0.0
    %2396 = vmatprep.subr.mxu0 0.0
    %2397 = vmatpush1.msra.mxu0 0.0
    %2398 = vmatprep.subr.mxu0 0.0
    %2399 = vmatpush1.msra.mxu0 0.0
    %2400 = vmatprep.subr.mxu0 0.0
    %2401 = vmatpush1.msra.mxu0 0.0
    %2402 = vmatprep.subr.mxu0 0.0
    %2403 = vmatpush1.msra.mxu0 0.0
    %2404 = vmatprep.subr.mxu0 0.0
    %2405 = vmatpush1.msra.mxu0 0.0
    %2406 = vmatprep.subr.mxu0 0.0
    %2407 = vmatpush1.msra.mxu0 0.0
    %2408 = vmatprep.subr.mxu0 0.0
    %2409 = vmatpush1.msra.mxu0 0.0
    %2410 = vmatprep.subr.mxu0 0.0
    %2411 = vmatpush1.msra.mxu0 0.0
    %2412 = vmatprep.subr.mxu0 0.0
    %2413 = vmatpush1.msra.mxu0 0.0
    %2414 = vmatprep.subr.mxu0 0.0
    %2415 = vmatpush1.msra.mxu0 0.0
    %2416 = vmatprep.subr.mxu0 0.0
    %2417 = vmatpush1.msra.mxu0 0.0
    %2418 = vmatprep.mubr.f32.mxu0 0.0
    %2419 = vmatmul.mubr.f32.gmra.mrb[0].mxu0 %v2352
    %v2420 = vpop.f32.mrb[0].mxu0
    %v2421 = vadd.f32 0.0, %v2420
    %v2422 = vpop.f32.mrb[0].mxu0
    %2423 = vdwg.mxu0
    %s2424 = scalar_lea.vmem %s9, 128
    %v2425 = vld [vmem:[%s2424] sm:$0xff]
    %v2426 = vld [vmem:[%s2424 + $0x8] sm:$0xff]
    %v2427 = vld [vmem:[%s2424 + $0x10] sm:$0xff]
    %v2428 = vld [vmem:[%s2424 + $0x18] sm:$0xff]
    %v2429 = vld [vmem:[%s2424 + $0x20] sm:$0xff]
    %v2430 = vld [vmem:[%s2424 + $0x28] sm:$0xff]
    %v2431 = vld [vmem:[%s2424 + $0x30] sm:$0xff]
    %v2432 = vld [vmem:[%s2424 + $0x38] sm:$0xff]
    %v2433 = vld [vmem:[%s2424 + $0x40] sm:$0xff]
    %v2434 = vld [vmem:[%s2424 + $0x48] sm:$0xff]
    %v2435 = vld [vmem:[%s2424 + $0x50] sm:$0xff]
    %v2436 = vld [vmem:[%s2424 + $0x58] sm:$0xff]
    %v2437 = vld [vmem:[%s2424 + $0x60] sm:$0xff]
    %v2438 = vld [vmem:[%s2424 + $0x68] sm:$0xff]
    %v2439 = vld [vmem:[%s2424 + $0x70] sm:$0xff]
    %v2440 = vld [vmem:[%s2424 + $0x78] sm:$0xff]
    %2441 = vmatprep.subr.mxu0 0.0
    %2442 = vmatpush1.msra.mxu0 %v2425
    %2443 = vmatprep.subr.mxu0 0.0
    %2444 = vmatpush1.msra.mxu0 %v2426
    %2445 = vmatprep.subr.mxu0 0.0
    %2446 = vmatpush1.msra.mxu0 %v2427
    %2447 = vmatprep.subr.mxu0 0.0
    %2448 = vmatpush1.msra.mxu0 %v2428
    %2449 = vmatprep.subr.mxu0 0.0
    %2450 = vmatpush1.msra.mxu0 %v2429
    %2451 = vmatprep.subr.mxu0 0.0
    %2452 = vmatpush1.msra.mxu0 %v2430
    %2453 = vmatprep.subr.mxu0 0.0
    %2454 = vmatpush1.msra.mxu0 %v2431
    %2455 = vmatprep.subr.mxu0 0.0
    %2456 = vmatpush1.msra.mxu0 %v2432
    %2457 = vmatprep.subr.mxu0 0.0
    %2458 = vmatpush1.msra.mxu0 %v2433
    %2459 = vmatprep.subr.mxu0 0.0
    %2460 = vmatpush1.msra.mxu0 %v2434
    %2461 = vmatprep.subr.mxu0 0.0
    %2462 = vmatpush1.msra.mxu0 %v2435
    %2463 = vmatprep.subr.mxu0 0.0
    %2464 = vmatpush1.msra.mxu0 %v2436
    %2465 = vmatprep.subr.mxu0 0.0
    %2466 = vmatpush1.msra.mxu0 %v2437
    %2467 = vmatprep.subr.mxu0 0.0
    %2468 = vmatpush1.msra.mxu0 %v2438
    %2469 = vmatprep.subr.mxu0 0.0
    %2470 = vmatpush1.msra.mxu0 %v2439
    %2471 = vmatprep.subr.mxu0 0.0
    %2472 = vmatpush1.msra.mxu0 %v2440
    %2473 = vmatprep.subr.mxu0 0.0
    %2474 = vmatpush1.msra.mxu0 0.0
    %2475 = vmatprep.subr.mxu0 0.0
    %2476 = vmatpush1.msra.mxu0 0.0
    %2477 = vmatprep.subr.mxu0 0.0
    %2478 = vmatpush1.msra.mxu0 0.0
    %2479 = vmatprep.subr.mxu0 0.0
    %2480 = vmatpush1.msra.mxu0 0.0
    %2481 = vmatprep.subr.mxu0 0.0
    %2482 = vmatpush1.msra.mxu0 0.0
    %2483 = vmatprep.subr.mxu0 0.0
    %2484 = vmatpush1.msra.mxu0 0.0
    %2485 = vmatprep.subr.mxu0 0.0
    %2486 = vmatpush1.msra.mxu0 0.0
    %2487 = vmatprep.subr.mxu0 0.0
    %2488 = vmatpush1.msra.mxu0 0.0
    %2489 = vmatprep.subr.mxu0 0.0
    %2490 = vmatpush1.msra.mxu0 0.0
    %2491 = vmatprep.subr.mxu0 0.0
    %2492 = vmatpush1.msra.mxu0 0.0
    %2493 = vmatprep.subr.mxu0 0.0
    %2494 = vmatpush1.msra.mxu0 0.0
    %2495 = vmatprep.subr.mxu0 0.0
    %2496 = vmatpush1.msra.mxu0 0.0
    %2497 = vmatprep.subr.mxu0 0.0
    %2498 = vmatpush1.msra.mxu0 0.0
    %2499 = vmatprep.subr.mxu0 0.0
    %2500 = vmatpush1.msra.mxu0 0.0
    %2501 = vmatprep.subr.mxu0 0.0
    %2502 = vmatpush1.msra.mxu0 0.0
    %2503 = vmatprep.subr.mxu0 0.0
    %2504 = vmatpush1.msra.mxu0 0.0
    %2505 = vmatprep.mubr.f32.mxu0 0.0
    %2506 = vmatmul.mubr.f32.gmra.mrb[0].mxu0 %v2421
    %v2507 = vpop.f32.mrb[0].mxu0
    %v2508 = vadd.f32 0.0, %v2507
    %v2509 = vpop.f32.mrb[0].mxu0
    %2510 = vdwg.mxu0
    %2511 = vmatprep.subr.mxu0 0.0
    %2512 = vmatpush1.msra.mxu0 %v2333
    %2513 = vmatprep.subr.mxu0 0.0
    %2514 = vmatpush1.msra.mxu0 %v2334
    %2515 = vmatprep.subr.mxu0 0.0
    %2516 = vmatpush1.msra.mxu0 %v2335
    %2517 = vmatprep.subr.mxu0 0.0
    %2518 = vmatpush1.msra.mxu0 %v2336
    %2519 = vmatprep.subr.mxu0 0.0
    %2520 = vmatpush1.msra.mxu0 %v2337
    %2521 = vmatprep.subr.mxu0 0.0
    %2522 = vmatpush1.msra.mxu0 %v2338
    %2523 = vmatprep.subr.mxu0 0.0
    %2524 = vmatpush1.msra.mxu0 %v2339
    %2525 = vmatprep.subr.mxu0 0.0
    %2526 = vmatpush1.msra.mxu0 %v2340
    %2527 = vmatprep.subr.mxu0 0.0
    %2528 = vmatpush1.msra.mxu0 %v2341
    %2529 = vmatprep.subr.mxu0 0.0
    %2530 = vmatpush1.msra.mxu0 %v2342
    %2531 = vmatprep.subr.mxu0 0.0
    %2532 = vmatpush1.msra.mxu0 %v2343
    %2533 = vmatprep.subr.mxu0 0.0
    %2534 = vmatpush1.msra.mxu0 %v2344
    %2535 = vmatprep.subr.mxu0 0.0
    %2536 = vmatpush1.msra.mxu0 %v2345
    %2537 = vmatprep.subr.mxu0 0.0
    %2538 = vmatpush1.msra.mxu0 %v2346
    %2539 = vmatprep.subr.mxu0 0.0
    %2540 = vmatpush1.msra.mxu0 %v2347
    %2541 = vmatprep.subr.mxu0 0.0
    %2542 = vmatpush1.msra.mxu0 %v2348
    %2543 = vmatprep.subr.mxu0 0.0
    %2544 = vmatpush1.msra.mxu0 0.0
    %2545 = vmatprep.subr.mxu0 0.0
    %2546 = vmatpush1.msra.mxu0 0.0
    %2547 = vmatprep.subr.mxu0 0.0
    %2548 = vmatpush1.msra.mxu0 0.0
    %2549 = vmatprep.subr.mxu0 0.0
    %2550 = vmatpush1.msra.mxu0 0.0
    %2551 = vmatprep.subr.mxu0 0.0
    %2552 = vmatpush1.msra.mxu0 0.0
    %2553 = vmatprep.subr.mxu0 0.0
    %2554 = vmatpush1.msra.mxu0 0.0
    %2555 = vmatprep.subr.mxu0 0.0
    %2556 = vmatpush1.msra.mxu0 0.0
    %2557 = vmatprep.subr.mxu0 0.0
    %2558 = vmatpush1.msra.mxu0 0.0
    %2559 = vmatprep.subr.mxu0 0.0
    %2560 = vmatpush1.msra.mxu0 0.0
    %2561 = vmatprep.subr.mxu0 0.0
    %2562 = vmatpush1.msra.mxu0 0.0
    %2563 = vmatprep.subr.mxu0 0.0
    %2564 = vmatpush1.msra.mxu0 0.0
    %2565 = vmatprep.subr.mxu0 0.0
    %2566 = vmatpush1.msra.mxu0 0.0
    %2567 = vmatprep.subr.mxu0 0.0
    %2568 = vmatpush1.msra.mxu0 0.0
    %2569 = vmatprep.subr.mxu0 0.0
    %2570 = vmatpush1.msra.mxu0 0.0
    %2571 = vmatprep.subr.mxu0 0.0
    %2572 = vmatpush1.msra.mxu0 0.0
    %2573 = vmatprep.subr.mxu0 0.0
    %2574 = vmatpush1.msra.mxu0 0.0
    %2575 = vmatprep.mubr.f32.mxu0 0.0
    %2576 = vmatmul.mubr.f32.gmra.mrb[0].mxu0 %v2330
    %v2577 = vpop.f32.mrb[0].mxu0
    %v2578 = vadd.f32 %v2508, %v2577
    %v2579 = vpop.f32.mrb[0].mxu0
    %2580 = vdwg.mxu0
    %s2581 = scalar_lea.vmem [#allocation7], 16
    %v2582 = vld [vmem:[%s2581] sm:$0xff]
    %v2584 = vsel %vm2259, %v2582, 0
    %2586 = vmatprep.subr.mxu0 0.0
    %2587 = vmatpush1.msra.mxu0 %v2254
    %2588 = vmatprep.subr.mxu0 0.0
    %2589 = vmatpush1.msra.mxu0 %v2255
    %2590 = vmatprep.subr.mxu0 0.0
    %2591 = vmatpush1.msra.mxu0 %v2256
    %2592 = vmatprep.subr.mxu0 0.0
    %2593 = vmatpush1.msra.mxu0 %v2257
    %2594 = vmatprep.subr.mxu0 0.0
    %2595 = vmatpush1.msra.mxu0 0.0
    %2596 = vmatprep.subr.mxu0 0.0
    %2597 = vmatpush1.msra.mxu0 0.0
    %2598 = vmatprep.subr.mxu0 0.0
    %2599 = vmatpush1.msra.mxu0 0.0
    %2600 = vmatprep.subr.mxu0 0.0
    %2601 = vmatpush1.msra.mxu0 0.0
    %2602 = vmatprep.subr.mxu0 0.0
    %2603 = vmatpush1.msra.mxu0 0.0
    %2604 = vmatprep.subr.mxu0 0.0
    %2605 = vmatpush1.msra.mxu0 0.0
    %2606 = vmatprep.subr.mxu0 0.0
    %2607 = vmatpush1.msra.mxu0 0.0
    %2608 = vmatprep.subr.mxu0 0.0
    %2609 = vmatpush1.msra.mxu0 0.0
    %2610 = vmatprep.subr.mxu0 0.0
    %2611 = vmatpush1.msra.mxu0 0.0
    %2612 = vmatprep.subr.mxu0 0.0
    %2613 = vmatpush1.msra.mxu0 0.0
    %2614 = vmatprep.subr.mxu0 0.0
    %2615 = vmatpush1.msra.mxu0 0.0
    %2616 = vmatprep.subr.mxu0 0.0
    %2617 = vmatpush1.msra.mxu0 0.0
    %2618 = vmatprep.subr.mxu0 0.0
    %2619 = vmatpush1.msra.mxu0 0.0
    %2620 = vmatprep.subr.mxu0 0.0
    %2621 = vmatpush1.msra.mxu0 0.0
    %2622 = vmatprep.subr.mxu0 0.0
    %2623 = vmatpush1.msra.mxu0 0.0
    %2624 = vmatprep.subr.mxu0 0.0
    %2625 = vmatpush1.msra.mxu0 0.0
    %2626 = vmatprep.subr.mxu0 0.0
    %2627 = vmatpush1.msra.mxu0 0.0
    %2628 = vmatprep.subr.mxu0 0.0
    %2629 = vmatpush1.msra.mxu0 0.0
    %2630 = vmatprep.subr.mxu0 0.0
    %2631 = vmatpush1.msra.mxu0 0.0
    %2632 = vmatprep.subr.mxu0 0.0
    %2633 = vmatpush1.msra.mxu0 0.0
    %2634 = vmatprep.subr.mxu0 0.0
    %2635 = vmatpush1.msra.mxu0 0.0
    %2636 = vmatprep.subr.mxu0 0.0
    %2637 = vmatpush1.msra.mxu0 0.0
    %2638 = vmatprep.subr.mxu0 0.0
    %2639 = vmatpush1.msra.mxu0 0.0
    %2640 = vmatprep.subr.mxu0 0.0
    %2641 = vmatpush1.msra.mxu0 0.0
    %2642 = vmatprep.subr.mxu0 0.0
    %2643 = vmatpush1.msra.mxu0 0.0
    %2644 = vmatprep.subr.mxu0 0.0
    %2645 = vmatpush1.msra.mxu0 0.0
    %2646 = vmatprep.subr.mxu0 0.0
    %2647 = vmatpush1.msra.mxu0 0.0
    %2648 = vmatprep.subr.mxu0 0.0
    %2649 = vmatpush1.msra.mxu0 0.0
    %2650 = vmatprep.mubr.f32.mxu0 0.0
    %2651 = vmatmul.mubr.f32.gmra.mrb[0].mxu0 %v2584
    %v2652 = vpop.f32.mrb[0].mxu0
    %v2653 = vadd.f32 0.0, %v2652
    %v2654 = vpop.f32.mrb[0].mxu0
    %2655 = vdwg.mxu0
    %s2656 = scalar_lea.vmem %s9, 256
    %v2657 = vld [vmem:[%s2656] sm:$0xff]
    %v2658 = vld [vmem:[%s2656 + $0x8] sm:$0xff]
    %v2659 = vld [vmem:[%s2656 + $0x10] sm:$0xff]
    %v2660 = vld [vmem:[%s2656 + $0x18] sm:$0xff]
    %v2661 = vld [vmem:[%s2656 + $0x20] sm:$0xff]
    %v2662 = vld [vmem:[%s2656 + $0x28] sm:$0xff]
    %v2663 = vld [vmem:[%s2656 + $0x30] sm:$0xff]
    %v2664 = vld [vmem:[%s2656 + $0x38] sm:$0xff]
    %v2665 = vld [vmem:[%s2656 + $0x40] sm:$0xff]
    %v2666 = vld [vmem:[%s2656 + $0x48] sm:$0xff]
    %v2667 = vld [vmem:[%s2656 + $0x50] sm:$0xff]
    %v2668 = vld [vmem:[%s2656 + $0x58] sm:$0xff]
    %v2669 = vld [vmem:[%s2656 + $0x60] sm:$0xff]
    %v2670 = vld [vmem:[%s2656 + $0x68] sm:$0xff]
    %v2671 = vld [vmem:[%s2656 + $0x70] sm:$0xff]
    %v2672 = vld [vmem:[%s2656 + $0x78] sm:$0xff]
    %2673 = vmatprep.subr.mxu0 0.0
    %2674 = vmatpush1.msra.mxu0 %v2657
    %2675 = vmatprep.subr.mxu0 0.0
    %2676 = vmatpush1.msra.mxu0 %v2658
    %2677 = vmatprep.subr.mxu0 0.0
    %2678 = vmatpush1.msra.mxu0 %v2659
    %2679 = vmatprep.subr.mxu0 0.0
    %2680 = vmatpush1.msra.mxu0 %v2660
    %2681 = vmatprep.subr.mxu0 0.0
    %2682 = vmatpush1.msra.mxu0 %v2661
    %2683 = vmatprep.subr.mxu0 0.0
    %2684 = vmatpush1.msra.mxu0 %v2662
    %2685 = vmatprep.subr.mxu0 0.0
    %2686 = vmatpush1.msra.mxu0 %v2663
    %2687 = vmatprep.subr.mxu0 0.0
    %2688 = vmatpush1.msra.mxu0 %v2664
    %2689 = vmatprep.subr.mxu0 0.0
    %2690 = vmatpush1.msra.mxu0 %v2665
    %2691 = vmatprep.subr.mxu0 0.0
    %2692 = vmatpush1.msra.mxu0 %v2666
    %2693 = vmatprep.subr.mxu0 0.0
    %2694 = vmatpush1.msra.mxu0 %v2667
    %2695 = vmatprep.subr.mxu0 0.0
    %2696 = vmatpush1.msra.mxu0 %v2668
    %2697 = vmatprep.subr.mxu0 0.0
    %2698 = vmatpush1.msra.mxu0 %v2669
    %2699 = vmatprep.subr.mxu0 0.0
    %2700 = vmatpush1.msra.mxu0 %v2670
    %2701 = vmatprep.subr.mxu0 0.0
    %2702 = vmatpush1.msra.mxu0 %v2671
    %2703 = vmatprep.subr.mxu0 0.0
    %2704 = vmatpush1.msra.mxu0 %v2672
    %2705 = vmatprep.subr.mxu0 0.0
    %2706 = vmatpush1.msra.mxu0 0.0
    %2707 = vmatprep.subr.mxu0 0.0
    %2708 = vmatpush1.msra.mxu0 0.0
    %2709 = vmatprep.subr.mxu0 0.0
    %2710 = vmatpush1.msra.mxu0 0.0
    %2711 = vmatprep.subr.mxu0 0.0
    %2712 = vmatpush1.msra.mxu0 0.0
    %2713 = vmatprep.subr.mxu0 0.0
    %2714 = vmatpush1.msra.mxu0 0.0
    %2715 = vmatprep.subr.mxu0 0.0
    %2716 = vmatpush1.msra.mxu0 0.0
    %2717 = vmatprep.subr.mxu0 0.0
    %2718 = vmatpush1.msra.mxu0 0.0
    %2719 = vmatprep.subr.mxu0 0.0
    %2720 = vmatpush1.msra.mxu0 0.0
    %2721 = vmatprep.subr.mxu0 0.0
    %2722 = vmatpush1.msra.mxu0 0.0
    %2723 = vmatprep.subr.mxu0 0.0
    %2724 = vmatpush1.msra.mxu0 0.0
    %2725 = vmatprep.subr.mxu0 0.0
    %2726 = vmatpush1.msra.mxu0 0.0
    %2727 = vmatprep.subr.mxu0 0.0
    %2728 = vmatpush1.msra.mxu0 0.0
    %2729 = vmatprep.subr.mxu0 0.0
    %2730 = vmatpush1.msra.mxu0 0.0
    %2731 = vmatprep.subr.mxu0 0.0
    %2732 = vmatpush1.msra.mxu0 0.0
    %2733 = vmatprep.subr.mxu0 0.0
    %2734 = vmatpush1.msra.mxu0 0.0
    %2735 = vmatprep.subr.mxu0 0.0
    %2736 = vmatpush1.msra.mxu0 0.0
    %2737 = vmatprep.mubr.f32.mxu0 0.0
    %2738 = vmatmul.mubr.f32.gmra.mrb[0].mxu0 %v2653
    %v2739 = vpop.f32.mrb[0].mxu0
    %v2740 = vadd.f32 0.0, %v2739
    %v2741 = vpop.f32.mrb[0].mxu0
    %2742 = vdwg.mxu0
    %v2743 = vadd.f32 %v2578, %v2740
    %s2744 = scalar_lea.vmem [#allocation7], 24
    %v2745 = vld [vmem:[%s2744] sm:$0xff]
    %v2747 = vsel %vm2259, %v2745, 0
    %2749 = vmatprep.subr.mxu0 0.0
    %2750 = vmatpush1.msra.mxu0 %v2254
    %2751 = vmatprep.subr.mxu0 0.0
    %2752 = vmatpush1.msra.mxu0 %v2255
    %2753 = vmatprep.subr.mxu0 0.0
    %2754 = vmatpush1.msra.mxu0 %v2256
    %2755 = vmatprep.subr.mxu0 0.0
    %2756 = vmatpush1.msra.mxu0 %v2257
    %2757 = vmatprep.subr.mxu0 0.0
    %2758 = vmatpush1.msra.mxu0 0.0
    %2759 = vmatprep.subr.mxu0 0.0
    %2760 = vmatpush1.msra.mxu0 0.0
    %2761 = vmatprep.subr.mxu0 0.0
    %2762 = vmatpush1.msra.mxu0 0.0
    %2763 = vmatprep.subr.mxu0 0.0
    %2764 = vmatpush1.msra.mxu0 0.0
    %2765 = vmatprep.subr.mxu0 0.0
    %2766 = vmatpush1.msra.mxu0 0.0
    %2767 = vmatprep.subr.mxu0 0.0
    %2768 = vmatpush1.msra.mxu0 0.0
    %2769 = vmatprep.subr.mxu0 0.0
    %2770 = vmatpush1.msra.mxu0 0.0
    %2771 = vmatprep.subr.mxu0 0.0
    %2772 = vmatpush1.msra.mxu0 0.0
    %2773 = vmatprep.subr.mxu0 0.0
    %2774 = vmatpush1.msra.mxu0 0.0
    %2775 = vmatprep.subr.mxu0 0.0
    %2776 = vmatpush1.msra.mxu0 0.0
    %2777 = vmatprep.subr.mxu0 0.0
    %2778 = vmatpush1.msra.mxu0 0.0
    %2779 = vmatprep.subr.mxu0 0.0
    %2780 = vmatpush1.msra.mxu0 0.0
    %2781 = vmatprep.subr.mxu0 0.0
    %2782 = vmatpush1.msra.mxu0 0.0
    %2783 = vmatprep.subr.mxu0 0.0
    %2784 = vmatpush1.msra.mxu0 0.0
    %2785 = vmatprep.subr.mxu0 0.0
    %2786 = vmatpush1.msra.mxu0 0.0
    %2787 = vmatprep.subr.mxu0 0.0
    %2788 = vmatpush1.msra.mxu0 0.0
    %2789 = vmatprep.subr.mxu0 0.0
    %2790 = vmatpush1.msra.mxu0 0.0
    %2791 = vmatprep.subr.mxu0 0.0
    %2792 = vmatpush1.msra.mxu0 0.0
    %2793 = vmatprep.subr.mxu0 0.0
    %2794 = vmatpush1.msra.mxu0 0.0
    %2795 = vmatprep.subr.mxu0 0.0
    %2796 = vmatpush1.msra.mxu0 0.0
    %2797 = vmatprep.subr.mxu0 0.0
    %2798 = vmatpush1.msra.mxu0 0.0
    %2799 = vmatprep.subr.mxu0 0.0
    %2800 = vmatpush1.msra.mxu0 0.0
    %2801 = vmatprep.subr.mxu0 0.0
    %2802 = vmatpush1.msra.mxu0 0.0
    %2803 = vmatprep.subr.mxu0 0.0
    %2804 = vmatpush1.msra.mxu0 0.0
    %2805 = vmatprep.subr.mxu0 0.0
    %2806 = vmatpush1.msra.mxu0 0.0
    %2807 = vmatprep.subr.mxu0 0.0
    %2808 = vmatpush1.msra.mxu0 0.0
    %2809 = vmatprep.subr.mxu0 0.0
    %2810 = vmatpush1.msra.mxu0 0.0
    %2811 = vmatprep.subr.mxu0 0.0
    %2812 = vmatpush1.msra.mxu0 0.0
    %2813 = vmatprep.mubr.f32.mxu0 0.0
    %2814 = vmatmul.mubr.f32.gmra.mrb[0].mxu0 %v2747
    %v2815 = vpop.f32.mrb[0].mxu0
    %v2816 = vadd.f32 0.0, %v2815
    %v2817 = vpop.f32.mrb[0].mxu0
    %2818 = vdwg.mxu0
    %s2819 = scalar_lea.vmem %s9, 384
    %v2820 = vld [vmem:[%s2819] sm:$0xff]
    %v2821 = vld [vmem:[%s2819 + $0x8] sm:$0xff]
    %v2822 = vld [vmem:[%s2819 + $0x10] sm:$0xff]
    %v2823 = vld [vmem:[%s2819 + $0x18] sm:$0xff]
    %v2824 = vld [vmem:[%s2819 + $0x20] sm:$0xff]
    %v2825 = vld [vmem:[%s2819 + $0x28] sm:$0xff]
    %v2826 = vld [vmem:[%s2819 + $0x30] sm:$0xff]
    %v2827 = vld [vmem:[%s2819 + $0x38] sm:$0xff]
    %v2828 = vld [vmem:[%s2819 + $0x40] sm:$0xff]
    %v2829 = vld [vmem:[%s2819 + $0x48] sm:$0xff]
    %v2830 = vld [vmem:[%s2819 + $0x50] sm:$0xff]
    %v2831 = vld [vmem:[%s2819 + $0x58] sm:$0xff]
    %v2832 = vld [vmem:[%s2819 + $0x60] sm:$0xff]
    %v2833 = vld [vmem:[%s2819 + $0x68] sm:$0xff]
    %v2834 = vld [vmem:[%s2819 + $0x70] sm:$0xff]
    %v2835 = vld [vmem:[%s2819 + $0x78] sm:$0xff]
    %2836 = vmatprep.subr.mxu0 0.0
    %2837 = vmatpush1.msra.mxu0 %v2820
    %2838 = vmatprep.subr.mxu0 0.0
    %2839 = vmatpush1.msra.mxu0 %v2821
    %2840 = vmatprep.subr.mxu0 0.0
    %2841 = vmatpush1.msra.mxu0 %v2822
    %2842 = vmatprep.subr.mxu0 0.0
    %2843 = vmatpush1.msra.mxu0 %v2823
    %2844 = vmatprep.subr.mxu0 0.0
    %2845 = vmatpush1.msra.mxu0 %v2824
    %2846 = vmatprep.subr.mxu0 0.0
    %2847 = vmatpush1.msra.mxu0 %v2825
    %2848 = vmatprep.subr.mxu0 0.0
    %2849 = vmatpush1.msra.mxu0 %v2826
    %2850 = vmatprep.subr.mxu0 0.0
    %2851 = vmatpush1.msra.mxu0 %v2827
    %2852 = vmatprep.subr.mxu0 0.0
    %2853 = vmatpush1.msra.mxu0 %v2828
    %2854 = vmatprep.subr.mxu0 0.0
    %2855 = vmatpush1.msra.mxu0 %v2829
    %2856 = vmatprep.subr.mxu0 0.0
    %2857 = vmatpush1.msra.mxu0 %v2830
    %2858 = vmatprep.subr.mxu0 0.0
    %2859 = vmatpush1.msra.mxu0 %v2831
    %2860 = vmatprep.subr.mxu0 0.0
    %2861 = vmatpush1.msra.mxu0 %v2832
    %2862 = vmatprep.subr.mxu0 0.0
    %2863 = vmatpush1.msra.mxu0 %v2833
    %2864 = vmatprep.subr.mxu0 0.0
    %2865 = vmatpush1.msra.mxu0 %v2834
    %2866 = vmatprep.subr.mxu0 0.0
    %2867 = vmatpush1.msra.mxu0 %v2835
    %2868 = vmatprep.subr.mxu0 0.0
    %2869 = vmatpush1.msra.mxu0 0.0
    %2870 = vmatprep.subr.mxu0 0.0
    %2871 = vmatpush1.msra.mxu0 0.0
    %2872 = vmatprep.subr.mxu0 0.0
    %2873 = vmatpush1.msra.mxu0 0.0
    %2874 = vmatprep.subr.mxu0 0.0
    %2875 = vmatpush1.msra.mxu0 0.0
    %2876 = vmatprep.subr.mxu0 0.0
    %2877 = vmatpush1.msra.mxu0 0.0
    %2878 = vmatprep.subr.mxu0 0.0
    %2879 = vmatpush1.msra.mxu0 0.0
    %2880 = vmatprep.subr.mxu0 0.0
    %2881 = vmatpush1.msra.mxu0 0.0
    %2882 = vmatprep.subr.mxu0 0.0
    %2883 = vmatpush1.msra.mxu0 0.0
    %2884 = vmatprep.subr.mxu0 0.0
    %2885 = vmatpush1.msra.mxu0 0.0
    %2886 = vmatprep.subr.mxu0 0.0
    %2887 = vmatpush1.msra.mxu0 0.0
    %2888 = vmatprep.subr.mxu0 0.0
    %2889 = vmatpush1.msra.mxu0 0.0
    %2890 = vmatprep.subr.mxu0 0.0
    %2891 = vmatpush1.msra.mxu0 0.0
    %2892 = vmatprep.subr.mxu0 0.0
    %2893 = vmatpush1.msra.mxu0 0.0
    %2894 = vmatprep.subr.mxu0 0.0
    %2895 = vmatpush1.msra.mxu0 0.0
    %2896 = vmatprep.subr.mxu0 0.0
    %2897 = vmatpush1.msra.mxu0 0.0
    %2898 = vmatprep.subr.mxu0 0.0
    %2899 = vmatpush1.msra.mxu0 0.0
    %2900 = vmatprep.mubr.f32.mxu0 0.0
    %2901 = vmatmul.mubr.f32.gmra.mrb[0].mxu0 %v2816
    %v2902 = vpop.f32.mrb[0].mxu0
    %v2903 = vadd.f32 0.0, %v2902
    %v2904 = vpop.f32.mrb[0].mxu0
    %2905 = vdwg.mxu0
    %v2906 = vadd.f32 %v2743, %v2903
    %s2907 = scalar_lea.vmem [#allocation7], 32
    %v2908 = vld [vmem:[%s2907] sm:$0xff]
    %v2910 = vsel %vm2259, %v2908, 0
    %2912 = vmatprep.subr.mxu0 0.0
    %2913 = vmatpush1.msra.mxu0 %v2254
    %2914 = vmatprep.subr.mxu0 0.0
    %2915 = vmatpush1.msra.mxu0 %v2255
    %2916 = vmatprep.subr.mxu0 0.0
    %2917 = vmatpush1.msra.mxu0 %v2256
    %2918 = vmatprep.subr.mxu0 0.0
    %2919 = vmatpush1.msra.mxu0 %v2257
    %2920 = vmatprep.subr.mxu0 0.0
    %2921 = vmatpush1.msra.mxu0 0.0
    %2922 = vmatprep.subr.mxu0 0.0
    %2923 = vmatpush1.msra.mxu0 0.0
    %2924 = vmatprep.subr.mxu0 0.0
    %2925 = vmatpush1.msra.mxu0 0.0
    %2926 = vmatprep.subr.mxu0 0.0
    %2927 = vmatpush1.msra.mxu0 0.0
    %2928 = vmatprep.subr.mxu0 0.0
    %2929 = vmatpush1.msra.mxu0 0.0
    %2930 = vmatprep.subr.mxu0 0.0
    %2931 = vmatpush1.msra.mxu0 0.0
    %2932 = vmatprep.subr.mxu0 0.0
    %2933 = vmatpush1.msra.mxu0 0.0
    %2934 = vmatprep.subr.mxu0 0.0
    %2935 = vmatpush1.msra.mxu0 0.0
    %2936 = vmatprep.subr.mxu0 0.0
    %2937 = vmatpush1.msra.mxu0 0.0
    %2938 = vmatprep.subr.mxu0 0.0
    %2939 = vmatpush1.msra.mxu0 0.0
    %2940 = vmatprep.subr.mxu0 0.0
    %2941 = vmatpush1.msra.mxu0 0.0
    %2942 = vmatprep.subr.mxu0 0.0
    %2943 = vmatpush1.msra.mxu0 0.0
    %2944 = vmatprep.subr.mxu0 0.0
    %2945 = vmatpush1.msra.mxu0 0.0
    %2946 = vmatprep.subr.mxu0 0.0
    %2947 = vmatpush1.msra.mxu0 0.0
    %2948 = vmatprep.subr.mxu0 0.0
    %2949 = vmatpush1.msra.mxu0 0.0
    %2950 = vmatprep.subr.mxu0 0.0
    %2951 = vmatpush1.msra.mxu0 0.0
    %2952 = vmatprep.subr.mxu0 0.0
    %2953 = vmatpush1.msra.mxu0 0.0
    %2954 = vmatprep.subr.mxu0 0.0
    %2955 = vmatpush1.msra.mxu0 0.0
    %2956 = vmatprep.subr.mxu0 0.0
    %2957 = vmatpush1.msra.mxu0 0.0
    %2958 = vmatprep.subr.mxu0 0.0
    %2959 = vmatpush1.msra.mxu0 0.0
    %2960 = vmatprep.subr.mxu0 0.0
    %2961 = vmatpush1.msra.mxu0 0.0
    %2962 = vmatprep.subr.mxu0 0.0
    %2963 = vmatpush1.msra.mxu0 0.0
    %2964 = vmatprep.subr.mxu0 0.0
    %2965 = vmatpush1.msra.mxu0 0.0
    %2966 = vmatprep.subr.mxu0 0.0
    %2967 = vmatpush1.msra.mxu0 0.0
    %2968 = vmatprep.subr.mxu0 0.0
    %2969 = vmatpush1.msra.mxu0 0.0
    %2970 = vmatprep.subr.mxu0 0.0
    %2971 = vmatpush1.msra.mxu0 0.0
    %2972 = vmatprep.subr.mxu0 0.0
    %2973 = vmatpush1.msra.mxu0 0.0
    %2974 = vmatprep.subr.mxu0 0.0
    %2975 = vmatpush1.msra.mxu0 0.0
    %2976 = vmatprep.mubr.f32.mxu0 0.0
    %2977 = vmatmul.mubr.f32.gmra.mrb[0].mxu0 %v2910
    %v2978 = vpop.f32.mrb[0].mxu0
    %v2979 = vadd.f32 0.0, %v2978
    %v2980 = vpop.f32.mrb[0].mxu0
    %2981 = vdwg.mxu0
    %s2982 = scalar_lea.vmem %s9, 512
    %v2983 = vld [vmem:[%s2982] sm:$0xff]
    %v2984 = vld [vmem:[%s2982 + $0x8] sm:$0xff]
    %v2985 = vld [vmem:[%s2982 + $0x10] sm:$0xff]
    %v2986 = vld [vmem:[%s2982 + $0x18] sm:$0xff]
    %v2987 = vld [vmem:[%s2982 + $0x20] sm:$0xff]
    %v2988 = vld [vmem:[%s2982 + $0x28] sm:$0xff]
    %v2989 = vld [vmem:[%s2982 + $0x30] sm:$0xff]
    %v2990 = vld [vmem:[%s2982 + $0x38] sm:$0xff]
    %v2991 = vld [vmem:[%s2982 + $0x40] sm:$0xff]
    %v2992 = vld [vmem:[%s2982 + $0x48] sm:$0xff]
    %v2993 = vld [vmem:[%s2982 + $0x50] sm:$0xff]
    %v2994 = vld [vmem:[%s2982 + $0x58] sm:$0xff]
    %v2995 = vld [vmem:[%s2982 + $0x60] sm:$0xff]
    %v2996 = vld [vmem:[%s2982 + $0x68] sm:$0xff]
    %v2997 = vld [vmem:[%s2982 + $0x70] sm:$0xff]
    %v2998 = vld [vmem:[%s2982 + $0x78] sm:$0xff]
    %2999 = vmatprep.subr.mxu0 0.0
    %3000 = vmatpush1.msra.mxu0 %v2983
    %3001 = vmatprep.subr.mxu0 0.0
    %3002 = vmatpush1.msra.mxu0 %v2984
    %3003 = vmatprep.subr.mxu0 0.0
    %3004 = vmatpush1.msra.mxu0 %v2985
    %3005 = vmatprep.subr.mxu0 0.0
    %3006 = vmatpush1.msra.mxu0 %v2986
    %3007 = vmatprep.subr.mxu0 0.0
    %3008 = vmatpush1.msra.mxu0 %v2987
    %3009 = vmatprep.subr.mxu0 0.0
    %3010 = vmatpush1.msra.mxu0 %v2988
    %3011 = vmatprep.subr.mxu0 0.0
    %3012 = vmatpush1.msra.mxu0 %v2989
    %3013 = vmatprep.subr.mxu0 0.0
    %3014 = vmatpush1.msra.mxu0 %v2990
    %3015 = vmatprep.subr.mxu0 0.0
    %3016 = vmatpush1.msra.mxu0 %v2991
    %3017 = vmatprep.subr.mxu0 0.0
    %3018 = vmatpush1.msra.mxu0 %v2992
    %3019 = vmatprep.subr.mxu0 0.0
    %3020 = vmatpush1.msra.mxu0 %v2993
    %3021 = vmatprep.subr.mxu0 0.0
    %3022 = vmatpush1.msra.mxu0 %v2994
    %3023 = vmatprep.subr.mxu0 0.0
    %3024 = vmatpush1.msra.mxu0 %v2995
    %3025 = vmatprep.subr.mxu0 0.0
    %3026 = vmatpush1.msra.mxu0 %v2996
    %3027 = vmatprep.subr.mxu0 0.0
    %3028 = vmatpush1.msra.mxu0 %v2997
    %3029 = vmatprep.subr.mxu0 0.0
    %3030 = vmatpush1.msra.mxu0 %v2998
    %3031 = vmatprep.subr.mxu0 0.0
    %3032 = vmatpush1.msra.mxu0 0.0
    %3033 = vmatprep.subr.mxu0 0.0
    %3034 = vmatpush1.msra.mxu0 0.0
    %3035 = vmatprep.subr.mxu0 0.0
    %3036 = vmatpush1.msra.mxu0 0.0
    %3037 = vmatprep.subr.mxu0 0.0
    %3038 = vmatpush1.msra.mxu0 0.0
    %3039 = vmatprep.subr.mxu0 0.0
    %3040 = vmatpush1.msra.mxu0 0.0
    %3041 = vmatprep.subr.mxu0 0.0
    %3042 = vmatpush1.msra.mxu0 0.0
    %3043 = vmatprep.subr.mxu0 0.0
    %3044 = vmatpush1.msra.mxu0 0.0
    %3045 = vmatprep.subr.mxu0 0.0
    %3046 = vmatpush1.msra.mxu0 0.0
    %3047 = vmatprep.subr.mxu0 0.0
    %3048 = vmatpush1.msra.mxu0 0.0
    %3049 = vmatprep.subr.mxu0 0.0
    %3050 = vmatpush1.msra.mxu0 0.0
    %3051 = vmatprep.subr.mxu0 0.0
    %3052 = vmatpush1.msra.mxu0 0.0
    %3053 = vmatprep.subr.mxu0 0.0
    %3054 = vmatpush1.msra.mxu0 0.0
    %3055 = vmatprep.subr.mxu0 0.0
    %3056 = vmatpush1.msra.mxu0 0.0
    %3057 = vmatprep.subr.mxu0 0.0
    %3058 = vmatpush1.msra.mxu0 0.0
    %3059 = vmatprep.subr.mxu0 0.0
    %3060 = vmatpush1.msra.mxu0 0.0
    %3061 = vmatprep.subr.mxu0 0.0
    %3062 = vmatpush1.msra.mxu0 0.0
    %3063 = vmatprep.mubr.f32.mxu0 0.0
    %3064 = vmatmul.mubr.f32.gmra.mrb[0].mxu0 %v2979
    %v3065 = vpop.f32.mrb[0].mxu0
    %v3066 = vadd.f32 0.0, %v3065
    %v3067 = vpop.f32.mrb[0].mxu0
    %3068 = vdwg.mxu0
    %v3069 = vadd.f32 %v2906, %v3066
    %s3070 = scalar_lea.vmem [#allocation7], 40
    %v3071 = vld [vmem:[%s3070] sm:$0xff]
    %v3073 = vsel %vm2259, %v3071, 0
    %3075 = vmatprep.subr.mxu0 0.0
    %3076 = vmatpush1.msra.mxu0 %v2254
    %3077 = vmatprep.subr.mxu0 0.0
    %3078 = vmatpush1.msra.mxu0 %v2255
    %3079 = vmatprep.subr.mxu0 0.0
    %3080 = vmatpush1.msra.mxu0 %v2256
    %3081 = vmatprep.subr.mxu0 0.0
    %3082 = vmatpush1.msra.mxu0 %v2257
    %3083 = vmatprep.subr.mxu0 0.0
    %3084 = vmatpush1.msra.mxu0 0.0
    %3085 = vmatprep.subr.mxu0 0.0
    %3086 = vmatpush1.msra.mxu0 0.0
    %3087 = vmatprep.subr.mxu0 0.0
    %3088 = vmatpush1.msra.mxu0 0.0
    %3089 = vmatprep.subr.mxu0 0.0
    %3090 = vmatpush1.msra.mxu0 0.0
    %3091 = vmatprep.subr.mxu0 0.0
    %3092 = vmatpush1.msra.mxu0 0.0
    %3093 = vmatprep.subr.mxu0 0.0
    %3094 = vmatpush1.msra.mxu0 0.0
    %3095 = vmatprep.subr.mxu0 0.0
    %3096 = vmatpush1.msra.mxu0 0.0
    %3097 = vmatprep.subr.mxu0 0.0
    %3098 = vmatpush1.msra.mxu0 0.0
    %3099 = vmatprep.subr.mxu0 0.0
    %3100 = vmatpush1.msra.mxu0 0.0
    %3101 = vmatprep.subr.mxu0 0.0
    %3102 = vmatpush1.msra.mxu0 0.0
    %3103 = vmatprep.subr.mxu0 0.0
    %3104 = vmatpush1.msra.mxu0 0.0
    %3105 = vmatprep.subr.mxu0 0.0
    %3106 = vmatpush1.msra.mxu0 0.0
    %3107 = vmatprep.subr.mxu0 0.0
    %3108 = vmatpush1.msra.mxu0 0.0
    %3109 = vmatprep.subr.mxu0 0.0
    %3110 = vmatpush1.msra.mxu0 0.0
    %3111 = vmatprep.subr.mxu0 0.0
    %3112 = vmatpush1.msra.mxu0 0.0
    %3113 = vmatprep.subr.mxu0 0.0
    %3114 = vmatpush1.msra.mxu0 0.0
    %3115 = vmatprep.subr.mxu0 0.0
    %3116 = vmatpush1.msra.mxu0 0.0
    %3117 = vmatprep.subr.mxu0 0.0
    %3118 = vmatpush1.msra.mxu0 0.0
    %3119 = vmatprep.subr.mxu0 0.0
    %3120 = vmatpush1.msra.mxu0 0.0
    %3121 = vmatprep.subr.mxu0 0.0
    %3122 = vmatpush1.msra.mxu0 0.0
    %3123 = vmatprep.subr.mxu0 0.0
    %3124 = vmatpush1.msra.mxu0 0.0
    %3125 = vmatprep.subr.mxu0 0.0
    %3126 = vmatpush1.msra.mxu0 0.0
    %3127 = vmatprep.subr.mxu0 0.0
    %3128 = vmatpush1.msra.mxu0 0.0
    %3129 = vmatprep.subr.mxu0 0.0
    %3130 = vmatpush1.msra.mxu0 0.0
    %3131 = vmatprep.subr.mxu0 0.0
    %3132 = vmatpush1.msra.mxu0 0.0
    %3133 = vmatprep.subr.mxu0 0.0
    %3134 = vmatpush1.msra.mxu0 0.0
    %3135 = vmatprep.subr.mxu0 0.0
    %3136 = vmatpush1.msra.mxu0 0.0
    %3137 = vmatprep.subr.mxu0 0.0
    %3138 = vmatpush1.msra.mxu0 0.0
    %3139 = vmatprep.mubr.f32.mxu0 0.0
    %3140 = vmatmul.mubr.f32.gmra.mrb[0].mxu0 %v3073
    %v3141 = vpop.f32.mrb[0].mxu0
    %v3142 = vadd.f32 0.0, %v3141
    %v3143 = vpop.f32.mrb[0].mxu0
    %3144 = vdwg.mxu0
    %s3145 = scalar_lea.vmem %s9, 640
    %v3146 = vld [vmem:[%s3145] sm:$0xff]
    %v3147 = vld [vmem:[%s3145 + $0x8] sm:$0xff]
    %v3148 = vld [vmem:[%s3145 + $0x10] sm:$0xff]
    %v3149 = vld [vmem:[%s3145 + $0x18] sm:$0xff]
    %v3150 = vld [vmem:[%s3145 + $0x20] sm:$0xff]
    %v3151 = vld [vmem:[%s3145 + $0x28] sm:$0xff]
    %v3152 = vld [vmem:[%s3145 + $0x30] sm:$0xff]
    %v3153 = vld [vmem:[%s3145 + $0x38] sm:$0xff]
    %v3154 = vld [vmem:[%s3145 + $0x40] sm:$0xff]
    %v3155 = vld [vmem:[%s3145 + $0x48] sm:$0xff]
    %v3156 = vld [vmem:[%s3145 + $0x50] sm:$0xff]
    %v3157 = vld [vmem:[%s3145 + $0x58] sm:$0xff]
    %v3158 = vld [vmem:[%s3145 + $0x60] sm:$0xff]
    %v3159 = vld [vmem:[%s3145 + $0x68] sm:$0xff]
    %v3160 = vld [vmem:[%s3145 + $0x70] sm:$0xff]
    %v3161 = vld [vmem:[%s3145 + $0x78] sm:$0xff]
    %3162 = vmatprep.subr.mxu0 0.0
    %3163 = vmatpush1.msra.mxu0 %v3146
    %3164 = vmatprep.subr.mxu0 0.0
    %3165 = vmatpush1.msra.mxu0 %v3147
    %3166 = vmatprep.subr.mxu0 0.0
    %3167 = vmatpush1.msra.mxu0 %v3148
    %3168 = vmatprep.subr.mxu0 0.0
    %3169 = vmatpush1.msra.mxu0 %v3149
    %3170 = vmatprep.subr.mxu0 0.0
    %3171 = vmatpush1.msra.mxu0 %v3150
    %3172 = vmatprep.subr.mxu0 0.0
    %3173 = vmatpush1.msra.mxu0 %v3151
    %3174 = vmatprep.subr.mxu0 0.0
    %3175 = vmatpush1.msra.mxu0 %v3152
    %3176 = vmatprep.subr.mxu0 0.0
    %3177 = vmatpush1.msra.mxu0 %v3153
    %3178 = vmatprep.subr.mxu0 0.0
    %3179 = vmatpush1.msra.mxu0 %v3154
    %3180 = vmatprep.subr.mxu0 0.0
    %3181 = vmatpush1.msra.mxu0 %v3155
    %3182 = vmatprep.subr.mxu0 0.0
    %3183 = vmatpush1.msra.mxu0 %v3156
    %3184 = vmatprep.subr.mxu0 0.0
    %3185 = vmatpush1.msra.mxu0 %v3157
    %3186 = vmatprep.subr.mxu0 0.0
    %3187 = vmatpush1.msra.mxu0 %v3158
    %3188 = vmatprep.subr.mxu0 0.0
    %3189 = vmatpush1.msra.mxu0 %v3159
    %3190 = vmatprep.subr.mxu0 0.0
    %3191 = vmatpush1.msra.mxu0 %v3160
    %3192 = vmatprep.subr.mxu0 0.0
    %3193 = vmatpush1.msra.mxu0 %v3161
    %3194 = vmatprep.subr.mxu0 0.0
    %3195 = vmatpush1.msra.mxu0 0.0
    %3196 = vmatprep.subr.mxu0 0.0
    %3197 = vmatpush1.msra.mxu0 0.0
    %3198 = vmatprep.subr.mxu0 0.0
    %3199 = vmatpush1.msra.mxu0 0.0
    %3200 = vmatprep.subr.mxu0 0.0
    %3201 = vmatpush1.msra.mxu0 0.0
    %3202 = vmatprep.subr.mxu0 0.0
    %3203 = vmatpush1.msra.mxu0 0.0
    %3204 = vmatprep.subr.mxu0 0.0
    %3205 = vmatpush1.msra.mxu0 0.0
    %3206 = vmatprep.subr.mxu0 0.0
    %3207 = vmatpush1.msra.mxu0 0.0
    %3208 = vmatprep.subr.mxu0 0.0
    %3209 = vmatpush1.msra.mxu0 0.0
    %3210 = vmatprep.subr.mxu0 0.0
    %3211 = vmatpush1.msra.mxu0 0.0
    %3212 = vmatprep.subr.mxu0 0.0
    %3213 = vmatpush1.msra.mxu0 0.0
    %3214 = vmatprep.subr.mxu0 0.0
    %3215 = vmatpush1.msra.mxu0 0.0
    %3216 = vmatprep.subr.mxu0 0.0
    %3217 = vmatpush1.msra.mxu0 0.0
    %3218 = vmatprep.subr.mxu0 0.0
    %3219 = vmatpush1.msra.mxu0 0.0
    %3220 = vmatprep.subr.mxu0 0.0
    %3221 = vmatpush1.msra.mxu0 0.0
    %3222 = vmatprep.subr.mxu0 0.0
    %3223 = vmatpush1.msra.mxu0 0.0
    %3224 = vmatprep.subr.mxu0 0.0
    %3225 = vmatpush1.msra.mxu0 0.0
    %3226 = vmatprep.mubr.f32.mxu0 0.0
    %3227 = vmatmul.mubr.f32.gmra.mrb[0].mxu0 %v3142
    %v3228 = vpop.f32.mrb[0].mxu0
    %v3229 = vadd.f32 0.0, %v3228
    %v3230 = vpop.f32.mrb[0].mxu0
    %3231 = vdwg.mxu0
    %v3232 = vadd.f32 %v3069, %v3229
    %s3233 = scalar_lea.vmem [#allocation7], 48
    %v3234 = vld [vmem:[%s3233] sm:$0xff]
    %v3236 = vsel %vm2259, %v3234, 0
    %3238 = vmatprep.subr.mxu0 0.0
    %3239 = vmatpush1.msra.mxu0 %v2254
    %3240 = vmatprep.subr.mxu0 0.0
    %3241 = vmatpush1.msra.mxu0 %v2255
    %3242 = vmatprep.subr.mxu0 0.0
    %3243 = vmatpush1.msra.mxu0 %v2256
    %3244 = vmatprep.subr.mxu0 0.0
    %3245 = vmatpush1.msra.mxu0 %v2257
    %3246 = vmatprep.subr.mxu0 0.0
    %3247 = vmatpush1.msra.mxu0 0.0
    %3248 = vmatprep.subr.mxu0 0.0
    %3249 = vmatpush1.msra.mxu0 0.0
    %3250 = vmatprep.subr.mxu0 0.0
    %3251 = vmatpush1.msra.mxu0 0.0
    %3252 = vmatprep.subr.mxu0 0.0
    %3253 = vmatpush1.msra.mxu0 0.0
    %3254 = vmatprep.subr.mxu0 0.0
    %3255 = vmatpush1.msra.mxu0 0.0
    %3256 = vmatprep.subr.mxu0 0.0
    %3257 = vmatpush1.msra.mxu0 0.0
    %3258 = vmatprep.subr.mxu0 0.0
    %3259 = vmatpush1.msra.mxu0 0.0
    %3260 = vmatprep.subr.mxu0 0.0
    %3261 = vmatpush1.msra.mxu0 0.0
    %3262 = vmatprep.subr.mxu0 0.0
    %3263 = vmatpush1.msra.mxu0 0.0
    %3264 = vmatprep.subr.mxu0 0.0
    %3265 = vmatpush1.msra.mxu0 0.0
    %3266 = vmatprep.subr.mxu0 0.0
    %3267 = vmatpush1.msra.mxu0 0.0
    %3268 = vmatprep.subr.mxu0 0.0
    %3269 = vmatpush1.msra.mxu0 0.0
    %3270 = vmatprep.subr.mxu0 0.0
    %3271 = vmatpush1.msra.mxu0 0.0
    %3272 = vmatprep.subr.mxu0 0.0
    %3273 = vmatpush1.msra.mxu0 0.0
    %3274 = vmatprep.subr.mxu0 0.0
    %3275 = vmatpush1.msra.mxu0 0.0
    %3276 = vmatprep.subr.mxu0 0.0
    %3277 = vmatpush1.msra.mxu0 0.0
    %3278 = vmatprep.subr.mxu0 0.0
    %3279 = vmatpush1.msra.mxu0 0.0
    %3280 = vmatprep.subr.mxu0 0.0
    %3281 = vmatpush1.msra.mxu0 0.0
    %3282 = vmatprep.subr.mxu0 0.0
    %3283 = vmatpush1.msra.mxu0 0.0
    %3284 = vmatprep.subr.mxu0 0.0
    %3285 = vmatpush1.msra.mxu0 0.0
    %3286 = vmatprep.subr.mxu0 0.0
    %3287 = vmatpush1.msra.mxu0 0.0
    %3288 = vmatprep.subr.mxu0 0.0
    %3289 = vmatpush1.msra.mxu0 0.0
    %3290 = vmatprep.subr.mxu0 0.0
    %3291 = vmatpush1.msra.mxu0 0.0
    %3292 = vmatprep.subr.mxu0 0.0
    %3293 = vmatpush1.msra.mxu0 0.0
    %3294 = vmatprep.subr.mxu0 0.0
    %3295 = vmatpush1.msra.mxu0 0.0
    %3296 = vmatprep.subr.mxu0 0.0
    %3297 = vmatpush1.msra.mxu0 0.0
    %3298 = vmatprep.subr.mxu0 0.0
    %3299 = vmatpush1.msra.mxu0 0.0
    %3300 = vmatprep.subr.mxu0 0.0
    %3301 = vmatpush1.msra.mxu0 0.0
    %3302 = vmatprep.mubr.f32.mxu0 0.0
    %3303 = vmatmul.mubr.f32.gmra.mrb[0].mxu0 %v3236
    %v3304 = vpop.f32.mrb[0].mxu0
    %v3305 = vadd.f32 0.0, %v3304
    %v3306 = vpop.f32.mrb[0].mxu0
    %3307 = vdwg.mxu0
    %s3308 = scalar_lea.vmem %s9, 768
    %v3309 = vld [vmem:[%s3308] sm:$0xff]
    %v3310 = vld [vmem:[%s3308 + $0x8] sm:$0xff]
    %v3311 = vld [vmem:[%s3308 + $0x10] sm:$0xff]
    %v3312 = vld [vmem:[%s3308 + $0x18] sm:$0xff]
    %v3313 = vld [vmem:[%s3308 + $0x20] sm:$0xff]
    %v3314 = vld [vmem:[%s3308 + $0x28] sm:$0xff]
    %v3315 = vld [vmem:[%s3308 + $0x30] sm:$0xff]
    %v3316 = vld [vmem:[%s3308 + $0x38] sm:$0xff]
    %v3317 = vld [vmem:[%s3308 + $0x40] sm:$0xff]
    %v3318 = vld [vmem:[%s3308 + $0x48] sm:$0xff]
    %v3319 = vld [vmem:[%s3308 + $0x50] sm:$0xff]
    %v3320 = vld [vmem:[%s3308 + $0x58] sm:$0xff]
    %v3321 = vld [vmem:[%s3308 + $0x60] sm:$0xff]
    %v3322 = vld [vmem:[%s3308 + $0x68] sm:$0xff]
    %v3323 = vld [vmem:[%s3308 + $0x70] sm:$0xff]
    %v3324 = vld [vmem:[%s3308 + $0x78] sm:$0xff]
    %3325 = vmatprep.subr.mxu0 0.0
    %3326 = vmatpush1.msra.mxu0 %v3309
    %3327 = vmatprep.subr.mxu0 0.0
    %3328 = vmatpush1.msra.mxu0 %v3310
    %3329 = vmatprep.subr.mxu0 0.0
    %3330 = vmatpush1.msra.mxu0 %v3311
    %3331 = vmatprep.subr.mxu0 0.0
    %3332 = vmatpush1.msra.mxu0 %v3312
    %3333 = vmatprep.subr.mxu0 0.0
    %3334 = vmatpush1.msra.mxu0 %v3313
    %3335 = vmatprep.subr.mxu0 0.0
    %3336 = vmatpush1.msra.mxu0 %v3314
    %3337 = vmatprep.subr.mxu0 0.0
    %3338 = vmatpush1.msra.mxu0 %v3315
    %3339 = vmatprep.subr.mxu0 0.0
    %3340 = vmatpush1.msra.mxu0 %v3316
    %3341 = vmatprep.subr.mxu0 0.0
    %3342 = vmatpush1.msra.mxu0 %v3317
    %3343 = vmatprep.subr.mxu0 0.0
    %3344 = vmatpush1.msra.mxu0 %v3318
    %3345 = vmatprep.subr.mxu0 0.0
    %3346 = vmatpush1.msra.mxu0 %v3319
    %3347 = vmatprep.subr.mxu0 0.0
    %3348 = vmatpush1.msra.mxu0 %v3320
    %3349 = vmatprep.subr.mxu0 0.0
    %3350 = vmatpush1.msra.mxu0 %v3321
    %3351 = vmatprep.subr.mxu0 0.0
    %3352 = vmatpush1.msra.mxu0 %v3322
    %3353 = vmatprep.subr.mxu0 0.0
    %3354 = vmatpush1.msra.mxu0 %v3323
    %3355 = vmatprep.subr.mxu0 0.0
    %3356 = vmatpush1.msra.mxu0 %v3324
    %3357 = vmatprep.subr.mxu0 0.0
    %3358 = vmatpush1.msra.mxu0 0.0
    %3359 = vmatprep.subr.mxu0 0.0
    %3360 = vmatpush1.msra.mxu0 0.0
    %3361 = vmatprep.subr.mxu0 0.0
    %3362 = vmatpush1.msra.mxu0 0.0
    %3363 = vmatprep.subr.mxu0 0.0
    %3364 = vmatpush1.msra.mxu0 0.0
    %3365 = vmatprep.subr.mxu0 0.0
    %3366 = vmatpush1.msra.mxu0 0.0
    %3367 = vmatprep.subr.mxu0 0.0
    %3368 = vmatpush1.msra.mxu0 0.0
    %3369 = vmatprep.subr.mxu0 0.0
    %3370 = vmatpush1.msra.mxu0 0.0
    %3371 = vmatprep.subr.mxu0 0.0
    %3372 = vmatpush1.msra.mxu0 0.0
    %3373 = vmatprep.subr.mxu0 0.0
    %3374 = vmatpush1.msra.mxu0 0.0
    %3375 = vmatprep.subr.mxu0 0.0
    %3376 = vmatpush1.msra.mxu0 0.0
    %3377 = vmatprep.subr.mxu0 0.0
    %3378 = vmatpush1.msra.mxu0 0.0
    %3379 = vmatprep.subr.mxu0 0.0
    %3380 = vmatpush1.msra.mxu0 0.0
    %3381 = vmatprep.subr.mxu0 0.0
    %3382 = vmatpush1.msra.mxu0 0.0
    %3383 = vmatprep.subr.mxu0 0.0
    %3384 = vmatpush1.msra.mxu0 0.0
    %3385 = vmatprep.subr.mxu0 0.0
    %3386 = vmatpush1.msra.mxu0 0.0
    %3387 = vmatprep.subr.mxu0 0.0
    %3388 = vmatpush1.msra.mxu0 0.0
    %3389 = vmatprep.mubr.f32.mxu0 0.0
    %3390 = vmatmul.mubr.f32.gmra.mrb[0].mxu0 %v3305
    %v3391 = vpop.f32.mrb[0].mxu0
    %v3392 = vadd.f32 0.0, %v3391
    %v3393 = vpop.f32.mrb[0].mxu0
    %3394 = vdwg.mxu0
    %v3395 = vadd.f32 %v3232, %v3392
    %s3396 = scalar_lea.vmem [#allocation7], 56
    %v3397 = vld [vmem:[%s3396] sm:$0xff]
    %v3399 = vsel %vm2259, %v3397, 0
    %3401 = vmatprep.subr.mxu0 0.0
    %3402 = vmatpush1.msra.mxu0 %v2254
    %3403 = vmatprep.subr.mxu0 0.0
    %3404 = vmatpush1.msra.mxu0 %v2255
    %3405 = vmatprep.subr.mxu0 0.0
    %3406 = vmatpush1.msra.mxu0 %v2256
    %3407 = vmatprep.subr.mxu0 0.0
    %3408 = vmatpush1.msra.mxu0 %v2257
    %3409 = vmatprep.subr.mxu0 0.0
    %3410 = vmatpush1.msra.mxu0 0.0
    %3411 = vmatprep.subr.mxu0 0.0
    %3412 = vmatpush1.msra.mxu0 0.0
    %3413 = vmatprep.subr.mxu0 0.0
    %3414 = vmatpush1.msra.mxu0 0.0
    %3415 = vmatprep.subr.mxu0 0.0
    %3416 = vmatpush1.msra.mxu0 0.0
    %3417 = vmatprep.subr.mxu0 0.0
    %3418 = vmatpush1.msra.mxu0 0.0
    %3419 = vmatprep.subr.mxu0 0.0
    %3420 = vmatpush1.msra.mxu0 0.0
    %3421 = vmatprep.subr.mxu0 0.0
    %3422 = vmatpush1.msra.mxu0 0.0
    %3423 = vmatprep.subr.mxu0 0.0
    %3424 = vmatpush1.msra.mxu0 0.0
    %3425 = vmatprep.subr.mxu0 0.0
    %3426 = vmatpush1.msra.mxu0 0.0
    %3427 = vmatprep.subr.mxu0 0.0
    %3428 = vmatpush1.msra.mxu0 0.0
    %3429 = vmatprep.subr.mxu0 0.0
    %3430 = vmatpush1.msra.mxu0 0.0
    %3431 = vmatprep.subr.mxu0 0.0
    %3432 = vmatpush1.msra.mxu0 0.0
    %3433 = vmatprep.subr.mxu0 0.0
    %3434 = vmatpush1.msra.mxu0 0.0
    %3435 = vmatprep.subr.mxu0 0.0
    %3436 = vmatpush1.msra.mxu0 0.0
    %3437 = vmatprep.subr.mxu0 0.0
    %3438 = vmatpush1.msra.mxu0 0.0
    %3439 = vmatprep.subr.mxu0 0.0
    %3440 = vmatpush1.msra.mxu0 0.0
    %3441 = vmatprep.subr.mxu0 0.0
    %3442 = vmatpush1.msra.mxu0 0.0
    %3443 = vmatprep.subr.mxu0 0.0
    %3444 = vmatpush1.msra.mxu0 0.0
    %3445 = vmatprep.subr.mxu0 0.0
    %3446 = vmatpush1.msra.mxu0 0.0
    %3447 = vmatprep.subr.mxu0 0.0
    %3448 = vmatpush1.msra.mxu0 0.0
    %3449 = vmatprep.subr.mxu0 0.0
    %3450 = vmatpush1.msra.mxu0 0.0
    %3451 = vmatprep.subr.mxu0 0.0
    %3452 = vmatpush1.msra.mxu0 0.0
    %3453 = vmatprep.subr.mxu0 0.0
    %3454 = vmatpush1.msra.mxu0 0.0
    %3455 = vmatprep.subr.mxu0 0.0
    %3456 = vmatpush1.msra.mxu0 0.0
    %3457 = vmatprep.subr.mxu0 0.0
    %3458 = vmatpush1.msra.mxu0 0.0
    %3459 = vmatprep.subr.mxu0 0.0
    %3460 = vmatpush1.msra.mxu0 0.0
    %3461 = vmatprep.subr.mxu0 0.0
    %3462 = vmatpush1.msra.mxu0 0.0
    %3463 = vmatprep.subr.mxu0 0.0
    %3464 = vmatpush1.msra.mxu0 0.0
    %3465 = vmatprep.mubr.f32.mxu0 0.0
    %3466 = vmatmul.mubr.f32.gmra.mrb[0].mxu0 %v3399
    %v3467 = vpop.f32.mrb[0].mxu0
    %v3468 = vadd.f32 0.0, %v3467
    %v3469 = vpop.f32.mrb[0].mxu0
    %3470 = vdwg.mxu0
    %s3471 = scalar_lea.vmem %s9, 896
    %v3472 = vld [vmem:[%s3471] sm:$0xff]
    %v3473 = vld [vmem:[%s3471 + $0x8] sm:$0xff]
    %v3474 = vld [vmem:[%s3471 + $0x10] sm:$0xff]
    %v3475 = vld [vmem:[%s3471 + $0x18] sm:$0xff]
    %v3476 = vld [vmem:[%s3471 + $0x20] sm:$0xff]
    %v3477 = vld [vmem:[%s3471 + $0x28] sm:$0xff]
    %v3478 = vld [vmem:[%s3471 + $0x30] sm:$0xff]
    %v3479 = vld [vmem:[%s3471 + $0x38] sm:$0xff]
    %v3480 = vld [vmem:[%s3471 + $0x40] sm:$0xff]
    %v3481 = vld [vmem:[%s3471 + $0x48] sm:$0xff]
    %v3482 = vld [vmem:[%s3471 + $0x50] sm:$0xff]
    %v3483 = vld [vmem:[%s3471 + $0x58] sm:$0xff]
    %v3484 = vld [vmem:[%s3471 + $0x60] sm:$0xff]
    %v3485 = vld [vmem:[%s3471 + $0x68] sm:$0xff]
    %v3486 = vld [vmem:[%s3471 + $0x70] sm:$0xff]
    %v3487 = vld [vmem:[%s3471 + $0x78] sm:$0xff]
    %3488 = vmatprep.subr.mxu0 0.0
    %3489 = vmatpush1.msra.mxu0 %v3472
    %3490 = vmatprep.subr.mxu0 0.0
    %3491 = vmatpush1.msra.mxu0 %v3473
    %3492 = vmatprep.subr.mxu0 0.0
    %3493 = vmatpush1.msra.mxu0 %v3474
    %3494 = vmatprep.subr.mxu0 0.0
    %3495 = vmatpush1.msra.mxu0 %v3475
    %3496 = vmatprep.subr.mxu0 0.0
    %3497 = vmatpush1.msra.mxu0 %v3476
    %3498 = vmatprep.subr.mxu0 0.0
    %3499 = vmatpush1.msra.mxu0 %v3477
    %3500 = vmatprep.subr.mxu0 0.0
    %3501 = vmatpush1.msra.mxu0 %v3478
    %3502 = vmatprep.subr.mxu0 0.0
    %3503 = vmatpush1.msra.mxu0 %v3479
    %3504 = vmatprep.subr.mxu0 0.0
    %3505 = vmatpush1.msra.mxu0 %v3480
    %3506 = vmatprep.subr.mxu0 0.0
    %3507 = vmatpush1.msra.mxu0 %v3481
    %3508 = vmatprep.subr.mxu0 0.0
    %3509 = vmatpush1.msra.mxu0 %v3482
    %3510 = vmatprep.subr.mxu0 0.0
    %3511 = vmatpush1.msra.mxu0 %v3483
    %3512 = vmatprep.subr.mxu0 0.0
    %3513 = vmatpush1.msra.mxu0 %v3484
    %3514 = vmatprep.subr.mxu0 0.0
    %3515 = vmatpush1.msra.mxu0 %v3485
    %3516 = vmatprep.subr.mxu0 0.0
    %3517 = vmatpush1.msra.mxu0 %v3486
    %3518 = vmatprep.subr.mxu0 0.0
    %3519 = vmatpush1.msra.mxu0 %v3487
    %3520 = vmatprep.subr.mxu0 0.0
    %3521 = vmatpush1.msra.mxu0 0.0
    %3522 = vmatprep.subr.mxu0 0.0
    %3523 = vmatpush1.msra.mxu0 0.0
    %3524 = vmatprep.subr.mxu0 0.0
    %3525 = vmatpush1.msra.mxu0 0.0
    %3526 = vmatprep.subr.mxu0 0.0
    %3527 = vmatpush1.msra.mxu0 0.0
    %3528 = vmatprep.subr.mxu0 0.0
    %3529 = vmatpush1.msra.mxu0 0.0
    %3530 = vmatprep.subr.mxu0 0.0
    %3531 = vmatpush1.msra.mxu0 0.0
    %3532 = vmatprep.subr.mxu0 0.0
    %3533 = vmatpush1.msra.mxu0 0.0
    %3534 = vmatprep.subr.mxu0 0.0
    %3535 = vmatpush1.msra.mxu0 0.0
    %3536 = vmatprep.subr.mxu0 0.0
    %3537 = vmatpush1.msra.mxu0 0.0
    %3538 = vmatprep.subr.mxu0 0.0
    %3539 = vmatpush1.msra.mxu0 0.0
    %3540 = vmatprep.subr.mxu0 0.0
    %3541 = vmatpush1.msra.mxu0 0.0
    %3542 = vmatprep.subr.mxu0 0.0
    %3543 = vmatpush1.msra.mxu0 0.0
    %3544 = vmatprep.subr.mxu0 0.0
    %3545 = vmatpush1.msra.mxu0 0.0
    %3546 = vmatprep.subr.mxu0 0.0
    %3547 = vmatpush1.msra.mxu0 0.0
    %3548 = vmatprep.subr.mxu0 0.0
    %3549 = vmatpush1.msra.mxu0 0.0
    %3550 = vmatprep.subr.mxu0 0.0
    %3551 = vmatpush1.msra.mxu0 0.0
    %3552 = vmatprep.mubr.f32.mxu0 0.0
    %3553 = vmatmul.mubr.f32.gmra.mrb[0].mxu0 %v3468
    %v3554 = vpop.f32.mrb[0].mxu0
    %v3555 = vadd.f32 0.0, %v3554
    %v3556 = vpop.f32.mrb[0].mxu0
    %3557 = vdwg.mxu0
    %v3558 = vadd.f32 %v3395, %v3555
    %s3559 = scalar_lea.vmem [#allocation7], 64
    %v3560 = vld [vmem:[%s3559] sm:$0xff]
    %v3562 = vsel %vm2259, %v3560, 0
    %3564 = vmatprep.subr.mxu0 0.0
    %3565 = vmatpush1.msra.mxu0 %v2254
    %3566 = vmatprep.subr.mxu0 0.0
    %3567 = vmatpush1.msra.mxu0 %v2255
    %3568 = vmatprep.subr.mxu0 0.0
    %3569 = vmatpush1.msra.mxu0 %v2256
    %3570 = vmatprep.subr.mxu0 0.0
    %3571 = vmatpush1.msra.mxu0 %v2257
    %3572 = vmatprep.subr.mxu0 0.0
    %3573 = vmatpush1.msra.mxu0 0.0
    %3574 = vmatprep.subr.mxu0 0.0
    %3575 = vmatpush1.msra.mxu0 0.0
    %3576 = vmatprep.subr.mxu0 0.0
    %3577 = vmatpush1.msra.mxu0 0.0
    %3578 = vmatprep.subr.mxu0 0.0
    %3579 = vmatpush1.msra.mxu0 0.0
    %3580 = vmatprep.subr.mxu0 0.0
    %3581 = vmatpush1.msra.mxu0 0.0
    %3582 = vmatprep.subr.mxu0 0.0
    %3583 = vmatpush1.msra.mxu0 0.0
    %3584 = vmatprep.subr.mxu0 0.0
    %3585 = vmatpush1.msra.mxu0 0.0
    %3586 = vmatprep.subr.mxu0 0.0
    %3587 = vmatpush1.msra.mxu0 0.0
    %3588 = vmatprep.subr.mxu0 0.0
    %3589 = vmatpush1.msra.mxu0 0.0
    %3590 = vmatprep.subr.mxu0 0.0
    %3591 = vmatpush1.msra.mxu0 0.0
    %3592 = vmatprep.subr.mxu0 0.0
    %3593 = vmatpush1.msra.mxu0 0.0
    %3594 = vmatprep.subr.mxu0 0.0
    %3595 = vmatpush1.msra.mxu0 0.0
    %3596 = vmatprep.subr.mxu0 0.0
    %3597 = vmatpush1.msra.mxu0 0.0
    %3598 = vmatprep.subr.mxu0 0.0
    %3599 = vmatpush1.msra.mxu0 0.0
    %3600 = vmatprep.subr.mxu0 0.0
    %3601 = vmatpush1.msra.mxu0 0.0
    %3602 = vmatprep.subr.mxu0 0.0
    %3603 = vmatpush1.msra.mxu0 0.0
    %3604 = vmatprep.subr.mxu0 0.0
    %3605 = vmatpush1.msra.mxu0 0.0
    %3606 = vmatprep.subr.mxu0 0.0
    %3607 = vmatpush1.msra.mxu0 0.0
    %3608 = vmatprep.subr.mxu0 0.0
    %3609 = vmatpush1.msra.mxu0 0.0
    %3610 = vmatprep.subr.mxu0 0.0
    %3611 = vmatpush1.msra.mxu0 0.0
    %3612 = vmatprep.subr.mxu0 0.0
    %3613 = vmatpush1.msra.mxu0 0.0
    %3614 = vmatprep.subr.mxu0 0.0
    %3615 = vmatpush1.msra.mxu0 0.0
    %3616 = vmatprep.subr.mxu0 0.0
    %3617 = vmatpush1.msra.mxu0 0.0
    %3618 = vmatprep.subr.mxu0 0.0
    %3619 = vmatpush1.msra.mxu0 0.0
    %3620 = vmatprep.subr.mxu0 0.0
    %3621 = vmatpush1.msra.mxu0 0.0
    %3622 = vmatprep.subr.mxu0 0.0
    %3623 = vmatpush1.msra.mxu0 0.0
    %3624 = vmatprep.subr.mxu0 0.0
    %3625 = vmatpush1.msra.mxu0 0.0
    %3626 = vmatprep.subr.mxu0 0.0
    %3627 = vmatpush1.msra.mxu0 0.0
    %3628 = vmatprep.mubr.f32.mxu0 0.0
    %3629 = vmatmul.mubr.f32.gmra.mrb[0].mxu0 %v3562
    %v3630 = vpop.f32.mrb[0].mxu0
    %v3631 = vadd.f32 0.0, %v3630
    %v3632 = vpop.f32.mrb[0].mxu0
    %3633 = vdwg.mxu0
    %s3634 = scalar_lea.vmem %s9, 1024
    %v3635 = vld [vmem:[%s3634] sm:$0xff]
    %v3636 = vld [vmem:[%s3634 + $0x8] sm:$0xff]
    %v3637 = vld [vmem:[%s3634 + $0x10] sm:$0xff]
    %v3638 = vld [vmem:[%s3634 + $0x18] sm:$0xff]
    %v3639 = vld [vmem:[%s3634 + $0x20] sm:$0xff]
    %v3640 = vld [vmem:[%s3634 + $0x28] sm:$0xff]
    %v3641 = vld [vmem:[%s3634 + $0x30] sm:$0xff]
    %v3642 = vld [vmem:[%s3634 + $0x38] sm:$0xff]
    %v3643 = vld [vmem:[%s3634 + $0x40] sm:$0xff]
    %v3644 = vld [vmem:[%s3634 + $0x48] sm:$0xff]
    %v3645 = vld [vmem:[%s3634 + $0x50] sm:$0xff]
    %v3646 = vld [vmem:[%s3634 + $0x58] sm:$0xff]
    %v3647 = vld [vmem:[%s3634 + $0x60] sm:$0xff]
    %v3648 = vld [vmem:[%s3634 + $0x68] sm:$0xff]
    %v3649 = vld [vmem:[%s3634 + $0x70] sm:$0xff]
    %v3650 = vld [vmem:[%s3634 + $0x78] sm:$0xff]
    %3651 = vmatprep.subr.mxu0 0.0
    %3652 = vmatpush1.msra.mxu0 %v3635
    %3653 = vmatprep.subr.mxu0 0.0
    %3654 = vmatpush1.msra.mxu0 %v3636
    %3655 = vmatprep.subr.mxu0 0.0
    %3656 = vmatpush1.msra.mxu0 %v3637
    %3657 = vmatprep.subr.mxu0 0.0
    %3658 = vmatpush1.msra.mxu0 %v3638
    %3659 = vmatprep.subr.mxu0 0.0
    %3660 = vmatpush1.msra.mxu0 %v3639
    %3661 = vmatprep.subr.mxu0 0.0
    %3662 = vmatpush1.msra.mxu0 %v3640
    %3663 = vmatprep.subr.mxu0 0.0
    %3664 = vmatpush1.msra.mxu0 %v3641
    %3665 = vmatprep.subr.mxu0 0.0
    %3666 = vmatpush1.msra.mxu0 %v3642
    %3667 = vmatprep.subr.mxu0 0.0
    %3668 = vmatpush1.msra.mxu0 %v3643
    %3669 = vmatprep.subr.mxu0 0.0
    %3670 = vmatpush1.msra.mxu0 %v3644
    %3671 = vmatprep.subr.mxu0 0.0
    %3672 = vmatpush1.msra.mxu0 %v3645
    %3673 = vmatprep.subr.mxu0 0.0
    %3674 = vmatpush1.msra.mxu0 %v3646
    %3675 = vmatprep.subr.mxu0 0.0
    %3676 = vmatpush1.msra.mxu0 %v3647
    %3677 = vmatprep.subr.mxu0 0.0
    %3678 = vmatpush1.msra.mxu0 %v3648
    %3679 = vmatprep.subr.mxu0 0.0
    %3680 = vmatpush1.msra.mxu0 %v3649
    %3681 = vmatprep.subr.mxu0 0.0
    %3682 = vmatpush1.msra.mxu0 %v3650
    %3683 = vmatprep.subr.mxu0 0.0
    %3684 = vmatpush1.msra.mxu0 0.0
    %3685 = vmatprep.subr.mxu0 0.0
    %3686 = vmatpush1.msra.mxu0 0.0
    %3687 = vmatprep.subr.mxu0 0.0
    %3688 = vmatpush1.msra.mxu0 0.0
    %3689 = vmatprep.subr.mxu0 0.0
    %3690 = vmatpush1.msra.mxu0 0.0
    %3691 = vmatprep.subr.mxu0 0.0
    %3692 = vmatpush1.msra.mxu0 0.0
    %3693 = vmatprep.subr.mxu0 0.0
    %3694 = vmatpush1.msra.mxu0 0.0
    %3695 = vmatprep.subr.mxu0 0.0
    %3696 = vmatpush1.msra.mxu0 0.0
    %3697 = vmatprep.subr.mxu0 0.0
    %3698 = vmatpush1.msra.mxu0 0.0
    %3699 = vmatprep.subr.mxu0 0.0
    %3700 = vmatpush1.msra.mxu0 0.0
    %3701 = vmatprep.subr.mxu0 0.0
    %3702 = vmatpush1.msra.mxu0 0.0
    %3703 = vmatprep.subr.mxu0 0.0
    %3704 = vmatpush1.msra.mxu0 0.0
    %3705 = vmatprep.subr.mxu0 0.0
    %3706 = vmatpush1.msra.mxu0 0.0
    %3707 = vmatprep.subr.mxu0 0.0
    %3708 = vmatpush1.msra.mxu0 0.0
    %3709 = vmatprep.subr.mxu0 0.0
    %3710 = vmatpush1.msra.mxu0 0.0
    %3711 = vmatprep.subr.mxu0 0.0
    %3712 = vmatpush1.msra.mxu0 0.0
    %3713 = vmatprep.subr.mxu0 0.0
    %3714 = vmatpush1.msra.mxu0 0.0
    %3715 = vmatprep.mubr.f32.mxu0 0.0
    %3716 = vmatmul.mubr.f32.gmra.mrb[0].mxu0 %v3631
    %v3717 = vpop.f32.mrb[0].mxu0
    %v3718 = vadd.f32 0.0, %v3717
    %v3719 = vpop.f32.mrb[0].mxu0
    %3720 = vdwg.mxu0
    %v3721 = vadd.f32 %v3558, %v3718
    %v3722 = vld [vmem:[#allocation8] sm:$0x1]
    %v3723 = vld [vmem:[%s11] sm:$0x1]
    %v3724 = vrot.slane %v3721, 4
    %v3725 = vadd.f32 %v3721, %v3724
    %v3726 = vrot.slane %v3725, 2
    %v3727 = vadd.f32 %v3725, %v3726
    %v3728 = vrot.slane %v3727, 1
    %v3729 = vadd.f32 %v3727, %v3728
    %v3730 = vmul.f32 %v3729, 0.125
    %v3731 = vmul.f32 %v3721, %v3721
    %v3732 = vrot.slane %v3731, 4
    %v3733 = vadd.f32 %v3731, %v3732
    %v3734 = vrot.slane %v3733, 2
    %v3735 = vadd.f32 %v3733, %v3734
    %v3736 = vrot.slane %v3735, 1
    %v3737 = vadd.f32 %v3735, %v3736
    %v3738 = vmul.f32 %v3737, 0.125
    %v3739 = vmul.f32 %v3730, %v3730
    %v3740 = vsub.f32 %v3738, %v3739
    %v3741 = vmax.f32 %v3740, 0.0
    %v3742 = vsub.f32 %v3721, %v3730
    %v3743 = vadd.f32 %v3741, 1e-05
    %v3744 = vrsqrt.pop %v3743
    %v3745 = vmul.f32 %v3742, %v3744
    %v3747 = vlaneseq
    %v3748 = vshrl.u32 %v3747, 7
    %v3749 = vsub.s32 0, %v3748
    %v3750 = vrot.slane %v3722, %v3749
    %v3752 = vmul.f32 %v3750, %v3745
    %v3754 = vlaneseq
    %v3755 = vshrl.u32 %v3754, 7
    %v3756 = vsub.s32 0, %v3755
    %v3757 = vrot.slane %v3723, %v3756
    %v3759 = vadd.f32 %v3752, %v3757
    %v3760 = vmax.f32 %v3759, 0.0
    %v3761 = vld [vmem:[%s12] sm:$0x3]
    %vm3762 = vcmask 64512
    %v3764 = vsel %vm3762, %v3761, 0
    %3766 = vmatprep.subr.mxu0 0.0
    %3767 = vmatpush1.msra.mxu0 %v3760
    %3768 = vmatprep.subr.mxu0 0.0
    %3769 = vmatpush1.msra.mxu0 0.0
    %3770 = vmatprep.subr.mxu0 0.0
    %3771 = vmatpush1.msra.mxu0 0.0
    %3772 = vmatprep.subr.mxu0 0.0
    %3773 = vmatpush1.msra.mxu0 0.0
    %3774 = vmatprep.subr.mxu0 0.0
    %3775 = vmatpush1.msra.mxu0 0.0
    %3776 = vmatprep.subr.mxu0 0.0
    %3777 = vmatpush1.msra.mxu0 0.0
    %3778 = vmatprep.subr.mxu0 0.0
    %3779 = vmatpush1.msra.mxu0 0.0
    %3780 = vmatprep.subr.mxu0 0.0
    %3781 = vmatpush1.msra.mxu0 0.0
    %3782 = vmatprep.subr.mxu0 0.0
    %3783 = vmatpush1.msra.mxu0 0.0
    %3784 = vmatprep.subr.mxu0 0.0
    %3785 = vmatpush1.msra.mxu0 0.0
    %3786 = vmatprep.subr.mxu0 0.0
    %3787 = vmatpush1.msra.mxu0 0.0
    %3788 = vmatprep.subr.mxu0 0.0
    %3789 = vmatpush1.msra.mxu0 0.0
    %3790 = vmatprep.subr.mxu0 0.0
    %3791 = vmatpush1.msra.mxu0 0.0
    %3792 = vmatprep.subr.mxu0 0.0
    %3793 = vmatpush1.msra.mxu0 0.0
    %3794 = vmatprep.subr.mxu0 0.0
    %3795 = vmatpush1.msra.mxu0 0.0
    %3796 = vmatprep.subr.mxu0 0.0
    %3797 = vmatpush1.msra.mxu0 0.0
    %3798 = vmatprep.subr.mxu0 0.0
    %3799 = vmatpush1.msra.mxu0 0.0
    %3800 = vmatprep.subr.mxu0 0.0
    %3801 = vmatpush1.msra.mxu0 0.0
    %3802 = vmatprep.subr.mxu0 0.0
    %3803 = vmatpush1.msra.mxu0 0.0
    %3804 = vmatprep.subr.mxu0 0.0
    %3805 = vmatpush1.msra.mxu0 0.0
    %3806 = vmatprep.subr.mxu0 0.0
    %3807 = vmatpush1.msra.mxu0 0.0
    %3808 = vmatprep.subr.mxu0 0.0
    %3809 = vmatpush1.msra.mxu0 0.0
    %3810 = vmatprep.subr.mxu0 0.0
    %3811 = vmatpush1.msra.mxu0 0.0
    %3812 = vmatprep.subr.mxu0 0.0
    %3813 = vmatpush1.msra.mxu0 0.0
    %3814 = vmatprep.subr.mxu0 0.0
    %3815 = vmatpush1.msra.mxu0 0.0
    %3816 = vmatprep.subr.mxu0 0.0
    %3817 = vmatpush1.msra.mxu0 0.0
    %3818 = vmatprep.subr.mxu0 0.0
    %3819 = vmatpush1.msra.mxu0 0.0
    %3820 = vmatprep.subr.mxu0 0.0
    %3821 = vmatpush1.msra.mxu0 0.0
    %3822 = vmatprep.subr.mxu0 0.0
    %3823 = vmatpush1.msra.mxu0 0.0
    %3824 = vmatprep.subr.mxu0 0.0
    %3825 = vmatpush1.msra.mxu0 0.0
    %3826 = vmatprep.subr.mxu0 0.0
    %3827 = vmatpush1.msra.mxu0 0.0
    %3828 = vmatprep.subr.mxu0 0.0
    %3829 = vmatpush1.msra.mxu0 0.0
    %3830 = vmatprep.mubr.f32.mxu0 0.0
    %3831 = vmatmul.mubr.f32.gmra.mrb[0].mxu0 %v3764
    %v3832 = vpop.f32.mrb[0].mxu0
    %v3833 = vadd.f32 0.0, %v3832
    %v3834 = vpop.f32.mrb[0].mxu0
    %3835 = vdwg.mxu0
    %v3836 = vld [vmem:[%s13] sm:$0xff]
    %v3837 = vld [vmem:[%s13 + $0x8] sm:$0xff]
    %v3838 = vld [vmem:[%s13 + $0x10] sm:$0xff]
    %v3839 = vld [vmem:[%s13 + $0x18] sm:$0xff]
    %v3840 = vld [vmem:[%s13 + $0x20] sm:$0xff]
    %v3841 = vld [vmem:[%s13 + $0x28] sm:$0xff]
    %v3842 = vld [vmem:[%s13 + $0x30] sm:$0xff]
    %v3843 = vld [vmem:[%s13 + $0x38] sm:$0xff]
    %v3844 = vld [vmem:[%s13 + $0x40] sm:$0xff]
    %v3845 = vld [vmem:[%s13 + $0x48] sm:$0xff]
    %v3846 = vld [vmem:[%s13 + $0x50] sm:$0xff]
    %v3847 = vld [vmem:[%s13 + $0x58] sm:$0xff]
    %v3848 = vld [vmem:[%s13 + $0x60] sm:$0xff]
    %v3849 = vld [vmem:[%s13 + $0x68] sm:$0xff]
    %v3850 = vld [vmem:[%s13 + $0x70] sm:$0xff]
    %v3851 = vld [vmem:[%s13 + $0x78] sm:$0xff]
    %s3852 = scalar_lea.vmem %s12, 2
    %v3853 = vld [vmem:[%s3852] sm:$0x3]
    %v3855 = vsel %vm3762, %v3853, 0
    %3857 = vmatprep.subr.mxu0 0.0
    %3858 = vmatpush1.msra.mxu0 %v3760
    %3859 = vmatprep.subr.mxu0 0.0
    %3860 = vmatpush1.msra.mxu0 0.0
    %3861 = vmatprep.subr.mxu0 0.0
    %3862 = vmatpush1.msra.mxu0 0.0
    %3863 = vmatprep.subr.mxu0 0.0
    %3864 = vmatpush1.msra.mxu0 0.0
    %3865 = vmatprep.subr.mxu0 0.0
    %3866 = vmatpush1.msra.mxu0 0.0
    %3867 = vmatprep.subr.mxu0 0.0
    %3868 = vmatpush1.msra.mxu0 0.0
    %3869 = vmatprep.subr.mxu0 0.0
    %3870 = vmatpush1.msra.mxu0 0.0
    %3871 = vmatprep.subr.mxu0 0.0
    %3872 = vmatpush1.msra.mxu0 0.0
    %3873 = vmatprep.subr.mxu0 0.0
    %3874 = vmatpush1.msra.mxu0 0.0
    %3875 = vmatprep.subr.mxu0 0.0
    %3876 = vmatpush1.msra.mxu0 0.0
    %3877 = vmatprep.subr.mxu0 0.0
    %3878 = vmatpush1.msra.mxu0 0.0
    %3879 = vmatprep.subr.mxu0 0.0
    %3880 = vmatpush1.msra.mxu0 0.0
    %3881 = vmatprep.subr.mxu0 0.0
    %3882 = vmatpush1.msra.mxu0 0.0
    %3883 = vmatprep.subr.mxu0 0.0
    %3884 = vmatpush1.msra.mxu0 0.0
    %3885 = vmatprep.subr.mxu0 0.0
    %3886 = vmatpush1.msra.mxu0 0.0
    %3887 = vmatprep.subr.mxu0 0.0
    %3888 = vmatpush1.msra.mxu0 0.0
    %3889 = vmatprep.subr.mxu0 0.0
    %3890 = vmatpush1.msra.mxu0 0.0
    %3891 = vmatprep.subr.mxu0 0.0
    %3892 = vmatpush1.msra.mxu0 0.0
    %3893 = vmatprep.subr.mxu0 0.0
    %3894 = vmatpush1.msra.mxu0 0.0
    %3895 = vmatprep.subr.mxu0 0.0
    %3896 = vmatpush1.msra.mxu0 0.0
    %3897 = vmatprep.subr.mxu0 0.0
    %3898 = vmatpush1.msra.mxu0 0.0
    %3899 = vmatprep.subr.mxu0 0.0
    %3900 = vmatpush1.msra.mxu0 0.0
    %3901 = vmatprep.subr.mxu0 0.0
    %3902 = vmatpush1.msra.mxu0 0.0
    %3903 = vmatprep.subr.mxu0 0.0
    %3904 = vmatpush1.msra.mxu0 0.0
    %3905 = vmatprep.subr.mxu0 0.0
    %3906 = vmatpush1.msra.mxu0 0.0
    %3907 = vmatprep.subr.mxu0 0.0
    %3908 = vmatpush1.msra.mxu0 0.0
    %3909 = vmatprep.subr.mxu0 0.0
    %3910 = vmatpush1.msra.mxu0 0.0
    %3911 = vmatprep.subr.mxu0 0.0
    %3912 = vmatpush1.msra.mxu0 0.0
    %3913 = vmatprep.subr.mxu0 0.0
    %3914 = vmatpush1.msra.mxu0 0.0
    %3915 = vmatprep.subr.mxu0 0.0
    %3916 = vmatpush1.msra.mxu0 0.0
    %3917 = vmatprep.subr.mxu0 0.0
    %3918 = vmatpush1.msra.mxu0 0.0
    %3919 = vmatprep.subr.mxu0 0.0
    %3920 = vmatpush1.msra.mxu0 0.0
    %3921 = vmatprep.mubr.f32.mxu0 0.0
    %3922 = vmatmul.mubr.f32.gmra.mrb[0].mxu0 %v3855
    %v3923 = vpop.f32.mrb[0].mxu0
    %v3924 = vadd.f32 0.0, %v3923
    %v3925 = vpop.f32.mrb[0].mxu0
    %3926 = vdwg.mxu0
    %s3927 = scalar_lea.vmem %s13, 128
    %v3928 = vld [vmem:[%s3927] sm:$0xff]
    %v3929 = vld [vmem:[%s3927 + $0x8] sm:$0xff]
    %v3930 = vld [vmem:[%s3927 + $0x10] sm:$0xff]
    %v3931 = vld [vmem:[%s3927 + $0x18] sm:$0xff]
    %v3932 = vld [vmem:[%s3927 + $0x20] sm:$0xff]
    %v3933 = vld [vmem:[%s3927 + $0x28] sm:$0xff]
    %v3934 = vld [vmem:[%s3927 + $0x30] sm:$0xff]
    %v3935 = vld [vmem:[%s3927 + $0x38] sm:$0xff]
    %v3936 = vld [vmem:[%s3927 + $0x40] sm:$0xff]
    %v3937 = vld [vmem:[%s3927 + $0x48] sm:$0xff]
    %v3938 = vld [vmem:[%s3927 + $0x50] sm:$0xff]
    %v3939 = vld [vmem:[%s3927 + $0x58] sm:$0xff]
    %v3940 = vld [vmem:[%s3927 + $0x60] sm:$0xff]
    %v3941 = vld [vmem:[%s3927 + $0x68] sm:$0xff]
    %v3942 = vld [vmem:[%s3927 + $0x70] sm:$0xff]
    %v3943 = vld [vmem:[%s3927 + $0x78] sm:$0xff]
    %3944 = vmatprep.subr.mxu0 0.0
    %3945 = vmatpush1.msra.mxu0 %v3928
    %3946 = vmatprep.subr.mxu0 0.0
    %3947 = vmatpush1.msra.mxu0 %v3929
    %3948 = vmatprep.subr.mxu0 0.0
    %3949 = vmatpush1.msra.mxu0 %v3930
    %3950 = vmatprep.subr.mxu0 0.0
    %3951 = vmatpush1.msra.mxu0 %v3931
    %3952 = vmatprep.subr.mxu0 0.0
    %3953 = vmatpush1.msra.mxu0 %v3932
    %3954 = vmatprep.subr.mxu0 0.0
    %3955 = vmatpush1.msra.mxu0 %v3933
    %3956 = vmatprep.subr.mxu0 0.0
    %3957 = vmatpush1.msra.mxu0 %v3934
    %3958 = vmatprep.subr.mxu0 0.0
    %3959 = vmatpush1.msra.mxu0 %v3935
    %3960 = vmatprep.subr.mxu0 0.0
    %3961 = vmatpush1.msra.mxu0 %v3936
    %3962 = vmatprep.subr.mxu0 0.0
    %3963 = vmatpush1.msra.mxu0 %v3937
    %3964 = vmatprep.subr.mxu0 0.0
    %3965 = vmatpush1.msra.mxu0 %v3938
    %3966 = vmatprep.subr.mxu0 0.0
    %3967 = vmatpush1.msra.mxu0 %v3939
    %3968 = vmatprep.subr.mxu0 0.0
    %3969 = vmatpush1.msra.mxu0 %v3940
    %3970 = vmatprep.subr.mxu0 0.0
    %3971 = vmatpush1.msra.mxu0 %v3941
    %3972 = vmatprep.subr.mxu0 0.0
    %3973 = vmatpush1.msra.mxu0 %v3942
    %3974 = vmatprep.subr.mxu0 0.0
    %3975 = vmatpush1.msra.mxu0 %v3943
    %3976 = vmatprep.subr.mxu0 0.0
    %3977 = vmatpush1.msra.mxu0 0.0
    %3978 = vmatprep.subr.mxu0 0.0
    %3979 = vmatpush1.msra.mxu0 0.0
    %3980 = vmatprep.subr.mxu0 0.0
    %3981 = vmatpush1.msra.mxu0 0.0
    %3982 = vmatprep.subr.mxu0 0.0
    %3983 = vmatpush1.msra.mxu0 0.0
    %3984 = vmatprep.subr.mxu0 0.0
    %3985 = vmatpush1.msra.mxu0 0.0
    %3986 = vmatprep.subr.mxu0 0.0
    %3987 = vmatpush1.msra.mxu0 0.0
    %3988 = vmatprep.subr.mxu0 0.0
    %3989 = vmatpush1.msra.mxu0 0.0
    %3990 = vmatprep.subr.mxu0 0.0
    %3991 = vmatpush1.msra.mxu0 0.0
    %3992 = vmatprep.subr.mxu0 0.0
    %3993 = vmatpush1.msra.mxu0 0.0
    %3994 = vmatprep.subr.mxu0 0.0
    %3995 = vmatpush1.msra.mxu0 0.0
    %3996 = vmatprep.subr.mxu0 0.0
    %3997 = vmatpush1.msra.mxu0 0.0
    %3998 = vmatprep.subr.mxu0 0.0
    %3999 = vmatpush1.msra.mxu0 0.0
    %4000 = vmatprep.subr.mxu0 0.0
    %4001 = vmatpush1.msra.mxu0 0.0
    %4002 = vmatprep.subr.mxu0 0.0
    %4003 = vmatpush1.msra.mxu0 0.0
    %4004 = vmatprep.subr.mxu0 0.0
    %4005 = vmatpush1.msra.mxu0 0.0
    %4006 = vmatprep.subr.mxu0 0.0
    %4007 = vmatpush1.msra.mxu0 0.0
    %4008 = vmatprep.mubr.f32.mxu0 0.0
    %4009 = vmatmul.mubr.f32.gmra.mrb[0].mxu0 %v3924
    %v4010 = vpop.f32.mrb[0].mxu0
    %v4011 = vadd.f32 0.0, %v4010
    %v4012 = vpop.f32.mrb[0].mxu0
    %4013 = vdwg.mxu0
    %4014 = vmatprep.subr.mxu0 0.0
    %4015 = vmatpush1.msra.mxu0 %v3836
    %4016 = vmatprep.subr.mxu0 0.0
    %4017 = vmatpush1.msra.mxu0 %v3837
    %4018 = vmatprep.subr.mxu0 0.0
    %4019 = vmatpush1.msra.mxu0 %v3838
    %4020 = vmatprep.subr.mxu0 0.0
    %4021 = vmatpush1.msra.mxu0 %v3839
    %4022 = vmatprep.subr.mxu0 0.0
    %4023 = vmatpush1.msra.mxu0 %v3840
    %4024 = vmatprep.subr.mxu0 0.0
    %4025 = vmatpush1.msra.mxu0 %v3841
    %4026 = vmatprep.subr.mxu0 0.0
    %4027 = vmatpush1.msra.mxu0 %v3842
    %4028 = vmatprep.subr.mxu0 0.0
    %4029 = vmatpush1.msra.mxu0 %v3843
    %4030 = vmatprep.subr.mxu0 0.0
    %4031 = vmatpush1.msra.mxu0 %v3844
    %4032 = vmatprep.subr.mxu0 0.0
    %4033 = vmatpush1.msra.mxu0 %v3845
    %4034 = vmatprep.subr.mxu0 0.0
    %4035 = vmatpush1.msra.mxu0 %v3846
    %4036 = vmatprep.subr.mxu0 0.0
    %4037 = vmatpush1.msra.mxu0 %v3847
    %4038 = vmatprep.subr.mxu0 0.0
    %4039 = vmatpush1.msra.mxu0 %v3848
    %4040 = vmatprep.subr.mxu0 0.0
    %4041 = vmatpush1.msra.mxu0 %v3849
    %4042 = vmatprep.subr.mxu0 0.0
    %4043 = vmatpush1.msra.mxu0 %v3850
    %4044 = vmatprep.subr.mxu0 0.0
    %4045 = vmatpush1.msra.mxu0 %v3851
    %4046 = vmatprep.subr.mxu0 0.0
    %4047 = vmatpush1.msra.mxu0 0.0
    %4048 = vmatprep.subr.mxu0 0.0
    %4049 = vmatpush1.msra.mxu0 0.0
    %4050 = vmatprep.subr.mxu0 0.0
    %4051 = vmatpush1.msra.mxu0 0.0
    %4052 = vmatprep.subr.mxu0 0.0
    %4053 = vmatpush1.msra.mxu0 0.0
    %4054 = vmatprep.subr.mxu0 0.0
    %4055 = vmatpush1.msra.mxu0 0.0
    %4056 = vmatprep.subr.mxu0 0.0
    %4057 = vmatpush1.msra.mxu0 0.0
    %4058 = vmatprep.subr.mxu0 0.0
    %4059 = vmatpush1.msra.mxu0 0.0
    %4060 = vmatprep.subr.mxu0 0.0
    %4061 = vmatpush1.msra.mxu0 0.0
    %4062 = vmatprep.subr.mxu0 0.0
    %4063 = vmatpush1.msra.mxu0 0.0
    %4064 = vmatprep.subr.mxu0 0.0
    %4065 = vmatpush1.msra.mxu0 0.0
    %4066 = vmatprep.subr.mxu0 0.0
    %4067 = vmatpush1.msra.mxu0 0.0
    %4068 = vmatprep.subr.mxu0 0.0
    %4069 = vmatpush1.msra.mxu0 0.0
    %4070 = vmatprep.subr.mxu0 0.0
    %4071 = vmatpush1.msra.mxu0 0.0
    %4072 = vmatprep.subr.mxu0 0.0
    %4073 = vmatpush1.msra.mxu0 0.0
    %4074 = vmatprep.subr.mxu0 0.0
    %4075 = vmatpush1.msra.mxu0 0.0
    %4076 = vmatprep.subr.mxu0 0.0
    %4077 = vmatpush1.msra.mxu0 0.0
    %4078 = vmatprep.mubr.f32.mxu0 0.0
    %4079 = vmatmul.mubr.f32.gmra.mrb[0].mxu0 %v3833
    %v4080 = vpop.f32.mrb[0].mxu0
    %v4081 = vadd.f32 %v4011, %v4080
    %v4082 = vpop.f32.mrb[0].mxu0
    %4083 = vdwg.mxu0
    %s4084 = scalar_lea.vmem %s12, 4
    %v4085 = vld [vmem:[%s4084] sm:$0x3]
    %v4087 = vsel %vm3762, %v4085, 0
    %4089 = vmatprep.subr.mxu0 0.0
    %4090 = vmatpush1.msra.mxu0 %v3760
    %4091 = vmatprep.subr.mxu0 0.0
    %4092 = vmatpush1.msra.mxu0 0.0
    %4093 = vmatprep.subr.mxu0 0.0
    %4094 = vmatpush1.msra.mxu0 0.0
    %4095 = vmatprep.subr.mxu0 0.0
    %4096 = vmatpush1.msra.mxu0 0.0
    %4097 = vmatprep.subr.mxu0 0.0
    %4098 = vmatpush1.msra.mxu0 0.0
    %4099 = vmatprep.subr.mxu0 0.0
    %4100 = vmatpush1.msra.mxu0 0.0
    %4101 = vmatprep.subr.mxu0 0.0
    %4102 = vmatpush1.msra.mxu0 0.0
    %4103 = vmatprep.subr.mxu0 0.0
    %4104 = vmatpush1.msra.mxu0 0.0
    %4105 = vmatprep.subr.mxu0 0.0
    %4106 = vmatpush1.msra.mxu0 0.0
    %4107 = vmatprep.subr.mxu0 0.0
    %4108 = vmatpush1.msra.mxu0 0.0
    %4109 = vmatprep.subr.mxu0 0.0
    %4110 = vmatpush1.msra.mxu0 0.0
    %4111 = vmatprep.subr.mxu0 0.0
    %4112 = vmatpush1.msra.mxu0 0.0
    %4113 = vmatprep.subr.mxu0 0.0
    %4114 = vmatpush1.msra.mxu0 0.0
    %4115 = vmatprep.subr.mxu0 0.0
    %4116 = vmatpush1.msra.mxu0 0.0
    %4117 = vmatprep.subr.mxu0 0.0
    %4118 = vmatpush1.msra.mxu0 0.0
    %4119 = vmatprep.subr.mxu0 0.0
    %4120 = vmatpush1.msra.mxu0 0.0
    %4121 = vmatprep.subr.mxu0 0.0
    %4122 = vmatpush1.msra.mxu0 0.0
    %4123 = vmatprep.subr.mxu0 0.0
    %4124 = vmatpush1.msra.mxu0 0.0
    %4125 = vmatprep.subr.mxu0 0.0
    %4126 = vmatpush1.msra.mxu0 0.0
    %4127 = vmatprep.subr.mxu0 0.0
    %4128 = vmatpush1.msra.mxu0 0.0
    %4129 = vmatprep.subr.mxu0 0.0
    %4130 = vmatpush1.msra.mxu0 0.0
    %4131 = vmatprep.subr.mxu0 0.0
    %4132 = vmatpush1.msra.mxu0 0.0
    %4133 = vmatprep.subr.mxu0 0.0
    %4134 = vmatpush1.msra.mxu0 0.0
    %4135 = vmatprep.subr.mxu0 0.0
    %4136 = vmatpush1.msra.mxu0 0.0
    %4137 = vmatprep.subr.mxu0 0.0
    %4138 = vmatpush1.msra.mxu0 0.0
    %4139 = vmatprep.subr.mxu0 0.0
    %4140 = vmatpush1.msra.mxu0 0.0
    %4141 = vmatprep.subr.mxu0 0.0
    %4142 = vmatpush1.msra.mxu0 0.0
    %4143 = vmatprep.subr.mxu0 0.0
    %4144 = vmatpush1.msra.mxu0 0.0
    %4145 = vmatprep.subr.mxu0 0.0
    %4146 = vmatpush1.msra.mxu0 0.0
    %4147 = vmatprep.subr.mxu0 0.0
    %4148 = vmatpush1.msra.mxu0 0.0
    %4149 = vmatprep.subr.mxu0 0.0
    %4150 = vmatpush1.msra.mxu0 0.0
    %4151 = vmatprep.subr.mxu0 0.0
    %4152 = vmatpush1.msra.mxu0 0.0
    %4153 = vmatprep.mubr.f32.mxu0 0.0
    %4154 = vmatmul.mubr.f32.gmra.mrb[0].mxu0 %v4087
    %v4155 = vpop.f32.mrb[0].mxu0
    %v4156 = vadd.f32 0.0, %v4155
    %v4157 = vpop.f32.mrb[0].mxu0
    %4158 = vdwg.mxu0
    %s4159 = scalar_lea.vmem %s13, 256
    %v4160 = vld [vmem:[%s4159] sm:$0xff]
    %v4161 = vld [vmem:[%s4159 + $0x8] sm:$0xff]
    %v4162 = vld [vmem:[%s4159 + $0x10] sm:$0xff]
    %v4163 = vld [vmem:[%s4159 + $0x18] sm:$0xff]
    %v4164 = vld [vmem:[%s4159 + $0x20] sm:$0xff]
    %v4165 = vld [vmem:[%s4159 + $0x28] sm:$0xff]
    %v4166 = vld [vmem:[%s4159 + $0x30] sm:$0xff]
    %v4167 = vld [vmem:[%s4159 + $0x38] sm:$0xff]
    %v4168 = vld [vmem:[%s4159 + $0x40] sm:$0xff]
    %v4169 = vld [vmem:[%s4159 + $0x48] sm:$0xff]
    %v4170 = vld [vmem:[%s4159 + $0x50] sm:$0xff]
    %v4171 = vld [vmem:[%s4159 + $0x58] sm:$0xff]
    %v4172 = vld [vmem:[%s4159 + $0x60] sm:$0xff]
    %v4173 = vld [vmem:[%s4159 + $0x68] sm:$0xff]
    %v4174 = vld [vmem:[%s4159 + $0x70] sm:$0xff]
    %v4175 = vld [vmem:[%s4159 + $0x78] sm:$0xff]
    %4176 = vmatprep.subr.mxu0 0.0
    %4177 = vmatpush1.msra.mxu0 %v4160
    %4178 = vmatprep.subr.mxu0 0.0
    %4179 = vmatpush1.msra.mxu0 %v4161
    %4180 = vmatprep.subr.mxu0 0.0
    %4181 = vmatpush1.msra.mxu0 %v4162
    %4182 = vmatprep.subr.mxu0 0.0
    %4183 = vmatpush1.msra.mxu0 %v4163
    %4184 = vmatprep.subr.mxu0 0.0
    %4185 = vmatpush1.msra.mxu0 %v4164
    %4186 = vmatprep.subr.mxu0 0.0
    %4187 = vmatpush1.msra.mxu0 %v4165
    %4188 = vmatprep.subr.mxu0 0.0
    %4189 = vmatpush1.msra.mxu0 %v4166
    %4190 = vmatprep.subr.mxu0 0.0
    %4191 = vmatpush1.msra.mxu0 %v4167
    %4192 = vmatprep.subr.mxu0 0.0
    %4193 = vmatpush1.msra.mxu0 %v4168
    %4194 = vmatprep.subr.mxu0 0.0
    %4195 = vmatpush1.msra.mxu0 %v4169
    %4196 = vmatprep.subr.mxu0 0.0
    %4197 = vmatpush1.msra.mxu0 %v4170
    %4198 = vmatprep.subr.mxu0 0.0
    %4199 = vmatpush1.msra.mxu0 %v4171
    %4200 = vmatprep.subr.mxu0 0.0
    %4201 = vmatpush1.msra.mxu0 %v4172
    %4202 = vmatprep.subr.mxu0 0.0
    %4203 = vmatpush1.msra.mxu0 %v4173
    %4204 = vmatprep.subr.mxu0 0.0
    %4205 = vmatpush1.msra.mxu0 %v4174
    %4206 = vmatprep.subr.mxu0 0.0
    %4207 = vmatpush1.msra.mxu0 %v4175
    %4208 = vmatprep.subr.mxu0 0.0
    %4209 = vmatpush1.msra.mxu0 0.0
    %4210 = vmatprep.subr.mxu0 0.0
    %4211 = vmatpush1.msra.mxu0 0.0
    %4212 = vmatprep.subr.mxu0 0.0
    %4213 = vmatpush1.msra.mxu0 0.0
    %4214 = vmatprep.subr.mxu0 0.0
    %4215 = vmatpush1.msra.mxu0 0.0
    %4216 = vmatprep.subr.mxu0 0.0
    %4217 = vmatpush1.msra.mxu0 0.0
    %4218 = vmatprep.subr.mxu0 0.0
    %4219 = vmatpush1.msra.mxu0 0.0
    %4220 = vmatprep.subr.mxu0 0.0
    %4221 = vmatpush1.msra.mxu0 0.0
    %4222 = vmatprep.subr.mxu0 0.0
    %4223 = vmatpush1.msra.mxu0 0.0
    %4224 = vmatprep.subr.mxu0 0.0
    %4225 = vmatpush1.msra.mxu0 0.0
    %4226 = vmatprep.subr.mxu0 0.0
    %4227 = vmatpush1.msra.mxu0 0.0
    %4228 = vmatprep.subr.mxu0 0.0
    %4229 = vmatpush1.msra.mxu0 0.0
    %4230 = vmatprep.subr.mxu0 0.0
    %4231 = vmatpush1.msra.mxu0 0.0
    %4232 = vmatprep.subr.mxu0 0.0
    %4233 = vmatpush1.msra.mxu0 0.0
    %4234 = vmatprep.subr.mxu0 0.0
    %4235 = vmatpush1.msra.mxu0 0.0
    %4236 = vmatprep.subr.mxu0 0.0
    %4237 = vmatpush1.msra.mxu0 0.0
    %4238 = vmatprep.subr.mxu0 0.0
    %4239 = vmatpush1.msra.mxu0 0.0
    %4240 = vmatprep.mubr.f32.mxu0 0.0
    %4241 = vmatmul.mubr.f32.gmra.mrb[0].mxu0 %v4156
    %v4242 = vpop.f32.mrb[0].mxu0
    %v4243 = vadd.f32 0.0, %v4242
    %v4244 = vpop.f32.mrb[0].mxu0
    %4245 = vdwg.mxu0
    %v4246 = vadd.f32 %v4081, %v4243
    %s4247 = scalar_lea.vmem %s12, 6
    %v4248 = vld [vmem:[%s4247] sm:$0x3]
    %v4250 = vsel %vm3762, %v4248, 0
    %4252 = vmatprep.subr.mxu0 0.0
    %4253 = vmatpush1.msra.mxu0 %v3760
    %4254 = vmatprep.subr.mxu0 0.0
    %4255 = vmatpush1.msra.mxu0 0.0
    %4256 = vmatprep.subr.mxu0 0.0
    %4257 = vmatpush1.msra.mxu0 0.0
    %4258 = vmatprep.subr.mxu0 0.0
    %4259 = vmatpush1.msra.mxu0 0.0
    %4260 = vmatprep.subr.mxu0 0.0
    %4261 = vmatpush1.msra.mxu0 0.0
    %4262 = vmatprep.subr.mxu0 0.0
    %4263 = vmatpush1.msra.mxu0 0.0
    %4264 = vmatprep.subr.mxu0 0.0
    %4265 = vmatpush1.msra.mxu0 0.0
    %4266 = vmatprep.subr.mxu0 0.0
    %4267 = vmatpush1.msra.mxu0 0.0
    %4268 = vmatprep.subr.mxu0 0.0
    %4269 = vmatpush1.msra.mxu0 0.0
    %4270 = vmatprep.subr.mxu0 0.0
    %4271 = vmatpush1.msra.mxu0 0.0
    %4272 = vmatprep.subr.mxu0 0.0
    %4273 = vmatpush1.msra.mxu0 0.0
    %4274 = vmatprep.subr.mxu0 0.0
    %4275 = vmatpush1.msra.mxu0 0.0
    %4276 = vmatprep.subr.mxu0 0.0
    %4277 = vmatpush1.msra.mxu0 0.0
    %4278 = vmatprep.subr.mxu0 0.0
    %4279 = vmatpush1.msra.mxu0 0.0
    %4280 = vmatprep.subr.mxu0 0.0
    %4281 = vmatpush1.msra.mxu0 0.0
    %4282 = vmatprep.subr.mxu0 0.0
    %4283 = vmatpush1.msra.mxu0 0.0
    %4284 = vmatprep.subr.mxu0 0.0
    %4285 = vmatpush1.msra.mxu0 0.0
    %4286 = vmatprep.subr.mxu0 0.0
    %4287 = vmatpush1.msra.mxu0 0.0
    %4288 = vmatprep.subr.mxu0 0.0
    %4289 = vmatpush1.msra.mxu0 0.0
    %4290 = vmatprep.subr.mxu0 0.0
    %4291 = vmatpush1.msra.mxu0 0.0
    %4292 = vmatprep.subr.mxu0 0.0
    %4293 = vmatpush1.msra.mxu0 0.0
    %4294 = vmatprep.subr.mxu0 0.0
    %4295 = vmatpush1.msra.mxu0 0.0
    %4296 = vmatprep.subr.mxu0 0.0
    %4297 = vmatpush1.msra.mxu0 0.0
    %4298 = vmatprep.subr.mxu0 0.0
    %4299 = vmatpush1.msra.mxu0 0.0
    %4300 = vmatprep.subr.mxu0 0.0
    %4301 = vmatpush1.msra.mxu0 0.0
    %4302 = vmatprep.subr.mxu0 0.0
    %4303 = vmatpush1.msra.mxu0 0.0
    %4304 = vmatprep.subr.mxu0 0.0
    %4305 = vmatpush1.msra.mxu0 0.0
    %4306 = vmatprep.subr.mxu0 0.0
    %4307 = vmatpush1.msra.mxu0 0.0
    %4308 = vmatprep.subr.mxu0 0.0
    %4309 = vmatpush1.msra.mxu0 0.0
    %4310 = vmatprep.subr.mxu0 0.0
    %4311 = vmatpush1.msra.mxu0 0.0
    %4312 = vmatprep.subr.mxu0 0.0
    %4313 = vmatpush1.msra.mxu0 0.0
    %4314 = vmatprep.subr.mxu0 0.0
    %4315 = vmatpush1.msra.mxu0 0.0
    %4316 = vmatprep.mubr.f32.mxu0 0.0
    %4317 = vmatmul.mubr.f32.gmra.mrb[0].mxu0 %v4250
    %v4318 = vpop.f32.mrb[0].mxu0
    %v4319 = vadd.f32 0.0, %v4318
    %v4320 = vpop.f32.mrb[0].mxu0
    %4321 = vdwg.mxu0
    %s4322 = scalar_lea.vmem %s13, 384
    %v4323 = vld [vmem:[%s4322] sm:$0xff]
    %v4324 = vld [vmem:[%s4322 + $0x8] sm:$0xff]
    %v4325 = vld [vmem:[%s4322 + $0x10] sm:$0xff]
    %v4326 = vld [vmem:[%s4322 + $0x18] sm:$0xff]
    %v4327 = vld [vmem:[%s4322 + $0x20] sm:$0xff]
    %v4328 = vld [vmem:[%s4322 + $0x28] sm:$0xff]
    %v4329 = vld [vmem:[%s4322 + $0x30] sm:$0xff]
    %v4330 = vld [vmem:[%s4322 + $0x38] sm:$0xff]
    %v4331 = vld [vmem:[%s4322 + $0x40] sm:$0xff]
    %v4332 = vld [vmem:[%s4322 + $0x48] sm:$0xff]
    %v4333 = vld [vmem:[%s4322 + $0x50] sm:$0xff]
    %v4334 = vld [vmem:[%s4322 + $0x58] sm:$0xff]
    %v4335 = vld [vmem:[%s4322 + $0x60] sm:$0xff]
    %v4336 = vld [vmem:[%s4322 + $0x68] sm:$0xff]
    %v4337 = vld [vmem:[%s4322 + $0x70] sm:$0xff]
    %v4338 = vld [vmem:[%s4322 + $0x78] sm:$0xff]
    %4339 = vmatprep.subr.mxu0 0.0
    %4340 = vmatpush1.msra.mxu0 %v4323
    %4341 = vmatprep.subr.mxu0 0.0
    %4342 = vmatpush1.msra.mxu0 %v4324
    %4343 = vmatprep.subr.mxu0 0.0
    %4344 = vmatpush1.msra.mxu0 %v4325
    %4345 = vmatprep.subr.mxu0 0.0
    %4346 = vmatpush1.msra.mxu0 %v4326
    %4347 = vmatprep.subr.mxu0 0.0
    %4348 = vmatpush1.msra.mxu0 %v4327
    %4349 = vmatprep.subr.mxu0 0.0
    %4350 = vmatpush1.msra.mxu0 %v4328
    %4351 = vmatprep.subr.mxu0 0.0
    %4352 = vmatpush1.msra.mxu0 %v4329
    %4353 = vmatprep.subr.mxu0 0.0
    %4354 = vmatpush1.msra.mxu0 %v4330
    %4355 = vmatprep.subr.mxu0 0.0
    %4356 = vmatpush1.msra.mxu0 %v4331
    %4357 = vmatprep.subr.mxu0 0.0
    %4358 = vmatpush1.msra.mxu0 %v4332
    %4359 = vmatprep.subr.mxu0 0.0
    %4360 = vmatpush1.msra.mxu0 %v4333
    %4361 = vmatprep.subr.mxu0 0.0
    %4362 = vmatpush1.msra.mxu0 %v4334
    %4363 = vmatprep.subr.mxu0 0.0
    %4364 = vmatpush1.msra.mxu0 %v4335
    %4365 = vmatprep.subr.mxu0 0.0
    %4366 = vmatpush1.msra.mxu0 %v4336
    %4367 = vmatprep.subr.mxu0 0.0
    %4368 = vmatpush1.msra.mxu0 %v4337
    %4369 = vmatprep.subr.mxu0 0.0
    %4370 = vmatpush1.msra.mxu0 %v4338
    %4371 = vmatprep.subr.mxu0 0.0
    %4372 = vmatpush1.msra.mxu0 0.0
    %4373 = vmatprep.subr.mxu0 0.0
    %4374 = vmatpush1.msra.mxu0 0.0
    %4375 = vmatprep.subr.mxu0 0.0
    %4376 = vmatpush1.msra.mxu0 0.0
    %4377 = vmatprep.subr.mxu0 0.0
    %4378 = vmatpush1.msra.mxu0 0.0
    %4379 = vmatprep.subr.mxu0 0.0
    %4380 = vmatpush1.msra.mxu0 0.0
    %4381 = vmatprep.subr.mxu0 0.0
    %4382 = vmatpush1.msra.mxu0 0.0
    %4383 = vmatprep.subr.mxu0 0.0
    %4384 = vmatpush1.msra.mxu0 0.0
    %4385 = vmatprep.subr.mxu0 0.0
    %4386 = vmatpush1.msra.mxu0 0.0
    %4387 = vmatprep.subr.mxu0 0.0
    %4388 = vmatpush1.msra.mxu0 0.0
    %4389 = vmatprep.subr.mxu0 0.0
    %4390 = vmatpush1.msra.mxu0 0.0
    %4391 = vmatprep.subr.mxu0 0.0
    %4392 = vmatpush1.msra.mxu0 0.0
    %4393 = vmatprep.subr.mxu0 0.0
    %4394 = vmatpush1.msra.mxu0 0.0
    %4395 = vmatprep.subr.mxu0 0.0
    %4396 = vmatpush1.msra.mxu0 0.0
    %4397 = vmatprep.subr.mxu0 0.0
    %4398 = vmatpush1.msra.mxu0 0.0
    %4399 = vmatprep.subr.mxu0 0.0
    %4400 = vmatpush1.msra.mxu0 0.0
    %4401 = vmatprep.subr.mxu0 0.0
    %4402 = vmatpush1.msra.mxu0 0.0
    %4403 = vmatprep.mubr.f32.mxu0 0.0
    %4404 = vmatmul.mubr.f32.gmra.mrb[0].mxu0 %v4319
    %v4405 = vpop.f32.mrb[0].mxu0
    %v4406 = vadd.f32 0.0, %v4405
    %v4407 = vpop.f32.mrb[0].mxu0
    %4408 = vdwg.mxu0
    %v4409 = vadd.f32 %v4246, %v4406
    %s4410 = scalar_lea.vmem %s12, 8
    %v4411 = vld [vmem:[%s4410] sm:$0x3]
    %v4413 = vsel %vm3762, %v4411, 0
    %4415 = vmatprep.subr.mxu0 0.0
    %4416 = vmatpush1.msra.mxu0 %v3760
    %4417 = vmatprep.subr.mxu0 0.0
    %4418 = vmatpush1.msra.mxu0 0.0
    %4419 = vmatprep.subr.mxu0 0.0
    %4420 = vmatpush1.msra.mxu0 0.0
    %4421 = vmatprep.subr.mxu0 0.0
    %4422 = vmatpush1.msra.mxu0 0.0
    %4423 = vmatprep.subr.mxu0 0.0
    %4424 = vmatpush1.msra.mxu0 0.0
    %4425 = vmatprep.subr.mxu0 0.0
    %4426 = vmatpush1.msra.mxu0 0.0
    %4427 = vmatprep.subr.mxu0 0.0
    %4428 = vmatpush1.msra.mxu0 0.0
    %4429 = vmatprep.subr.mxu0 0.0
    %4430 = vmatpush1.msra.mxu0 0.0
    %4431 = vmatprep.subr.mxu0 0.0
    %4432 = vmatpush1.msra.mxu0 0.0
    %4433 = vmatprep.subr.mxu0 0.0
    %4434 = vmatpush1.msra.mxu0 0.0
    %4435 = vmatprep.subr.mxu0 0.0
    %4436 = vmatpush1.msra.mxu0 0.0
    %4437 = vmatprep.subr.mxu0 0.0
    %4438 = vmatpush1.msra.mxu0 0.0
    %4439 = vmatprep.subr.mxu0 0.0
    %4440 = vmatpush1.msra.mxu0 0.0
    %4441 = vmatprep.subr.mxu0 0.0
    %4442 = vmatpush1.msra.mxu0 0.0
    %4443 = vmatprep.subr.mxu0 0.0
    %4444 = vmatpush1.msra.mxu0 0.0
    %4445 = vmatprep.subr.mxu0 0.0
    %4446 = vmatpush1.msra.mxu0 0.0
    %4447 = vmatprep.subr.mxu0 0.0
    %4448 = vmatpush1.msra.mxu0 0.0
    %4449 = vmatprep.subr.mxu0 0.0
    %4450 = vmatpush1.msra.mxu0 0.0
    %4451 = vmatprep.subr.mxu0 0.0
    %4452 = vmatpush1.msra.mxu0 0.0
    %4453 = vmatprep.subr.mxu0 0.0
    %4454 = vmatpush1.msra.mxu0 0.0
    %4455 = vmatprep.subr.mxu0 0.0
    %4456 = vmatpush1.msra.mxu0 0.0
    %4457 = vmatprep.subr.mxu0 0.0
    %4458 = vmatpush1.msra.mxu0 0.0
    %4459 = vmatprep.subr.mxu0 0.0
    %4460 = vmatpush1.msra.mxu0 0.0
    %4461 = vmatprep.subr.mxu0 0.0
    %4462 = vmatpush1.msra.mxu0 0.0
    %4463 = vmatprep.subr.mxu0 0.0
    %4464 = vmatpush1.msra.mxu0 0.0
    %4465 = vmatprep.subr.mxu0 0.0
    %4466 = vmatpush1.msra.mxu0 0.0
    %4467 = vmatprep.subr.mxu0 0.0
    %4468 = vmatpush1.msra.mxu0 0.0
    %4469 = vmatprep.subr.mxu0 0.0
    %4470 = vmatpush1.msra.mxu0 0.0
    %4471 = vmatprep.subr.mxu0 0.0
    %4472 = vmatpush1.msra.mxu0 0.0
    %4473 = vmatprep.subr.mxu0 0.0
    %4474 = vmatpush1.msra.mxu0 0.0
    %4475 = vmatprep.subr.mxu0 0.0
    %4476 = vmatpush1.msra.mxu0 0.0
    %4477 = vmatprep.subr.mxu0 0.0
    %4478 = vmatpush1.msra.mxu0 0.0
    %4479 = vmatprep.mubr.f32.mxu0 0.0
    %4480 = vmatmul.mubr.f32.gmra.mrb[0].mxu0 %v4413
    %v4481 = vpop.f32.mrb[0].mxu0
    %v4482 = vadd.f32 0.0, %v4481
    %v4483 = vpop.f32.mrb[0].mxu0
    %4484 = vdwg.mxu0
    %s4485 = scalar_lea.vmem %s13, 512
    %v4486 = vld [vmem:[%s4485] sm:$0xff]
    %v4487 = vld [vmem:[%s4485 + $0x8] sm:$0xff]
    %v4488 = vld [vmem:[%s4485 + $0x10] sm:$0xff]
    %v4489 = vld [vmem:[%s4485 + $0x18] sm:$0xff]
    %v4490 = vld [vmem:[%s4485 + $0x20] sm:$0xff]
    %v4491 = vld [vmem:[%s4485 + $0x28] sm:$0xff]
    %v4492 = vld [vmem:[%s4485 + $0x30] sm:$0xff]
    %v4493 = vld [vmem:[%s4485 + $0x38] sm:$0xff]
    %v4494 = vld [vmem:[%s4485 + $0x40] sm:$0xff]
    %v4495 = vld [vmem:[%s4485 + $0x48] sm:$0xff]
    %v4496 = vld [vmem:[%s4485 + $0x50] sm:$0xff]
    %v4497 = vld [vmem:[%s4485 + $0x58] sm:$0xff]
    %v4498 = vld [vmem:[%s4485 + $0x60] sm:$0xff]
    %v4499 = vld [vmem:[%s4485 + $0x68] sm:$0xff]
    %v4500 = vld [vmem:[%s4485 + $0x70] sm:$0xff]
    %v4501 = vld [vmem:[%s4485 + $0x78] sm:$0xff]
    %4502 = vmatprep.subr.mxu0 0.0
    %4503 = vmatpush1.msra.mxu0 %v4486
    %4504 = vmatprep.subr.mxu0 0.0
    %4505 = vmatpush1.msra.mxu0 %v4487
    %4506 = vmatprep.subr.mxu0 0.0
    %4507 = vmatpush1.msra.mxu0 %v4488
    %4508 = vmatprep.subr.mxu0 0.0
    %4509 = vmatpush1.msra.mxu0 %v4489
    %4510 = vmatprep.subr.mxu0 0.0
    %4511 = vmatpush1.msra.mxu0 %v4490
    %4512 = vmatprep.subr.mxu0 0.0
    %4513 = vmatpush1.msra.mxu0 %v4491
    %4514 = vmatprep.subr.mxu0 0.0
    %4515 = vmatpush1.msra.mxu0 %v4492
    %4516 = vmatprep.subr.mxu0 0.0
    %4517 = vmatpush1.msra.mxu0 %v4493
    %4518 = vmatprep.subr.mxu0 0.0
    %4519 = vmatpush1.msra.mxu0 %v4494
    %4520 = vmatprep.subr.mxu0 0.0
    %4521 = vmatpush1.msra.mxu0 %v4495
    %4522 = vmatprep.subr.mxu0 0.0
    %4523 = vmatpush1.msra.mxu0 %v4496
    %4524 = vmatprep.subr.mxu0 0.0
    %4525 = vmatpush1.msra.mxu0 %v4497
    %4526 = vmatprep.subr.mxu0 0.0
    %4527 = vmatpush1.msra.mxu0 %v4498
    %4528 = vmatprep.subr.mxu0 0.0
    %4529 = vmatpush1.msra.mxu0 %v4499
    %4530 = vmatprep.subr.mxu0 0.0
    %4531 = vmatpush1.msra.mxu0 %v4500
    %4532 = vmatprep.subr.mxu0 0.0
    %4533 = vmatpush1.msra.mxu0 %v4501
    %4534 = vmatprep.subr.mxu0 0.0
    %4535 = vmatpush1.msra.mxu0 0.0
    %4536 = vmatprep.subr.mxu0 0.0
    %4537 = vmatpush1.msra.mxu0 0.0
    %4538 = vmatprep.subr.mxu0 0.0
    %4539 = vmatpush1.msra.mxu0 0.0
    %4540 = vmatprep.subr.mxu0 0.0
    %4541 = vmatpush1.msra.mxu0 0.0
    %4542 = vmatprep.subr.mxu0 0.0
    %4543 = vmatpush1.msra.mxu0 0.0
    %4544 = vmatprep.subr.mxu0 0.0
    %4545 = vmatpush1.msra.mxu0 0.0
    %4546 = vmatprep.subr.mxu0 0.0
    %4547 = vmatpush1.msra.mxu0 0.0
    %4548 = vmatprep.subr.mxu0 0.0
    %4549 = vmatpush1.msra.mxu0 0.0
    %4550 = vmatprep.subr.mxu0 0.0
    %4551 = vmatpush1.msra.mxu0 0.0
    %4552 = vmatprep.subr.mxu0 0.0
    %4553 = vmatpush1.msra.mxu0 0.0
    %4554 = vmatprep.subr.mxu0 0.0
    %4555 = vmatpush1.msra.mxu0 0.0
    %4556 = vmatprep.subr.mxu0 0.0
    %4557 = vmatpush1.msra.mxu0 0.0
    %4558 = vmatprep.subr.mxu0 0.0
    %4559 = vmatpush1.msra.mxu0 0.0
    %4560 = vmatprep.subr.mxu0 0.0
    %4561 = vmatpush1.msra.mxu0 0.0
    %4562 = vmatprep.subr.mxu0 0.0
    %4563 = vmatpush1.msra.mxu0 0.0
    %4564 = vmatprep.subr.mxu0 0.0
    %4565 = vmatpush1.msra.mxu0 0.0
    %4566 = vmatprep.mubr.f32.mxu0 0.0
    %4567 = vmatmul.mubr.f32.gmra.mrb[0].mxu0 %v4482
    %v4568 = vpop.f32.mrb[0].mxu0
    %v4569 = vadd.f32 0.0, %v4568
    %v4570 = vpop.f32.mrb[0].mxu0
    %4571 = vdwg.mxu0
    %v4572 = vadd.f32 %v4409, %v4569
    %s4573 = scalar_lea.vmem %s12, 10
    %v4574 = vld [vmem:[%s4573] sm:$0x3]
    %v4576 = vsel %vm3762, %v4574, 0
    %4578 = vmatprep.subr.mxu0 0.0
    %4579 = vmatpush1.msra.mxu0 %v3760
    %4580 = vmatprep.subr.mxu0 0.0
    %4581 = vmatpush1.msra.mxu0 0.0
    %4582 = vmatprep.subr.mxu0 0.0
    %4583 = vmatpush1.msra.mxu0 0.0
    %4584 = vmatprep.subr.mxu0 0.0
    %4585 = vmatpush1.msra.mxu0 0.0
    %4586 = vmatprep.subr.mxu0 0.0
    %4587 = vmatpush1.msra.mxu0 0.0
    %4588 = vmatprep.subr.mxu0 0.0
    %4589 = vmatpush1.msra.mxu0 0.0
    %4590 = vmatprep.subr.mxu0 0.0
    %4591 = vmatpush1.msra.mxu0 0.0
    %4592 = vmatprep.subr.mxu0 0.0
    %4593 = vmatpush1.msra.mxu0 0.0
    %4594 = vmatprep.subr.mxu0 0.0
    %4595 = vmatpush1.msra.mxu0 0.0
    %4596 = vmatprep.subr.mxu0 0.0
    %4597 = vmatpush1.msra.mxu0 0.0
    %4598 = vmatprep.subr.mxu0 0.0
    %4599 = vmatpush1.msra.mxu0 0.0
    %4600 = vmatprep.subr.mxu0 0.0
    %4601 = vmatpush1.msra.mxu0 0.0
    %4602 = vmatprep.subr.mxu0 0.0
    %4603 = vmatpush1.msra.mxu0 0.0
    %4604 = vmatprep.subr.mxu0 0.0
    %4605 = vmatpush1.msra.mxu0 0.0
    %4606 = vmatprep.subr.mxu0 0.0
    %4607 = vmatpush1.msra.mxu0 0.0
    %4608 = vmatprep.subr.mxu0 0.0
    %4609 = vmatpush1.msra.mxu0 0.0
    %4610 = vmatprep.subr.mxu0 0.0
    %4611 = vmatpush1.msra.mxu0 0.0
    %4612 = vmatprep.subr.mxu0 0.0
    %4613 = vmatpush1.msra.mxu0 0.0
    %4614 = vmatprep.subr.mxu0 0.0
    %4615 = vmatpush1.msra.mxu0 0.0
    %4616 = vmatprep.subr.mxu0 0.0
    %4617 = vmatpush1.msra.mxu0 0.0
    %4618 = vmatprep.subr.mxu0 0.0
    %4619 = vmatpush1.msra.mxu0 0.0
    %4620 = vmatprep.subr.mxu0 0.0
    %4621 = vmatpush1.msra.mxu0 0.0
    %4622 = vmatprep.subr.mxu0 0.0
    %4623 = vmatpush1.msra.mxu0 0.0
    %4624 = vmatprep.subr.mxu0 0.0
    %4625 = vmatpush1.msra.mxu0 0.0
    %4626 = vmatprep.subr.mxu0 0.0
    %4627 = vmatpush1.msra.mxu0 0.0
    %4628 = vmatprep.subr.mxu0 0.0
    %4629 = vmatpush1.msra.mxu0 0.0
    %4630 = vmatprep.subr.mxu0 0.0
    %4631 = vmatpush1.msra.mxu0 0.0
    %4632 = vmatprep.subr.mxu0 0.0
    %4633 = vmatpush1.msra.mxu0 0.0
    %4634 = vmatprep.subr.mxu0 0.0
    %4635 = vmatpush1.msra.mxu0 0.0
    %4636 = vmatprep.subr.mxu0 0.0
    %4637 = vmatpush1.msra.mxu0 0.0
    %4638 = vmatprep.subr.mxu0 0.0
    %4639 = vmatpush1.msra.mxu0 0.0
    %4640 = vmatprep.subr.mxu0 0.0
    %4641 = vmatpush1.msra.mxu0 0.0
    %4642 = vmatprep.mubr.f32.mxu0 0.0
    %4643 = vmatmul.mubr.f32.gmra.mrb[0].mxu0 %v4576
    %v4644 = vpop.f32.mrb[0].mxu0
    %v4645 = vadd.f32 0.0, %v4644
    %v4646 = vpop.f32.mrb[0].mxu0
    %4647 = vdwg.mxu0
    %s4648 = scalar_lea.vmem %s13, 640
    %v4649 = vld [vmem:[%s4648] sm:$0xff]
    %v4650 = vld [vmem:[%s4648 + $0x8] sm:$0xff]
    %v4651 = vld [vmem:[%s4648 + $0x10] sm:$0xff]
    %v4652 = vld [vmem:[%s4648 + $0x18] sm:$0xff]
    %v4653 = vld [vmem:[%s4648 + $0x20] sm:$0xff]
    %v4654 = vld [vmem:[%s4648 + $0x28] sm:$0xff]
    %v4655 = vld [vmem:[%s4648 + $0x30] sm:$0xff]
    %v4656 = vld [vmem:[%s4648 + $0x38] sm:$0xff]
    %v4657 = vld [vmem:[%s4648 + $0x40] sm:$0xff]
    %v4658 = vld [vmem:[%s4648 + $0x48] sm:$0xff]
    %v4659 = vld [vmem:[%s4648 + $0x50] sm:$0xff]
    %v4660 = vld [vmem:[%s4648 + $0x58] sm:$0xff]
    %v4661 = vld [vmem:[%s4648 + $0x60] sm:$0xff]
    %v4662 = vld [vmem:[%s4648 + $0x68] sm:$0xff]
    %v4663 = vld [vmem:[%s4648 + $0x70] sm:$0xff]
    %v4664 = vld [vmem:[%s4648 + $0x78] sm:$0xff]
    %4665 = vmatprep.subr.mxu0 0.0
    %4666 = vmatpush1.msra.mxu0 %v4649
    %4667 = vmatprep.subr.mxu0 0.0
    %4668 = vmatpush1.msra.mxu0 %v4650
    %4669 = vmatprep.subr.mxu0 0.0
    %4670 = vmatpush1.msra.mxu0 %v4651
    %4671 = vmatprep.subr.mxu0 0.0
    %4672 = vmatpush1.msra.mxu0 %v4652
    %4673 = vmatprep.subr.mxu0 0.0
    %4674 = vmatpush1.msra.mxu0 %v4653
    %4675 = vmatprep.subr.mxu0 0.0
    %4676 = vmatpush1.msra.mxu0 %v4654
    %4677 = vmatprep.subr.mxu0 0.0
    %4678 = vmatpush1.msra.mxu0 %v4655
    %4679 = vmatprep.subr.mxu0 0.0
    %4680 = vmatpush1.msra.mxu0 %v4656
    %4681 = vmatprep.subr.mxu0 0.0
    %4682 = vmatpush1.msra.mxu0 %v4657
    %4683 = vmatprep.subr.mxu0 0.0
    %4684 = vmatpush1.msra.mxu0 %v4658
    %4685 = vmatprep.subr.mxu0 0.0
    %4686 = vmatpush1.msra.mxu0 %v4659
    %4687 = vmatprep.subr.mxu0 0.0
    %4688 = vmatpush1.msra.mxu0 %v4660
    %4689 = vmatprep.subr.mxu0 0.0
    %4690 = vmatpush1.msra.mxu0 %v4661
    %4691 = vmatprep.subr.mxu0 0.0
    %4692 = vmatpush1.msra.mxu0 %v4662
    %4693 = vmatprep.subr.mxu0 0.0
    %4694 = vmatpush1.msra.mxu0 %v4663
    %4695 = vmatprep.subr.mxu0 0.0
    %4696 = vmatpush1.msra.mxu0 %v4664
    %4697 = vmatprep.subr.mxu0 0.0
    %4698 = vmatpush1.msra.mxu0 0.0
    %4699 = vmatprep.subr.mxu0 0.0
    %4700 = vmatpush1.msra.mxu0 0.0
    %4701 = vmatprep.subr.mxu0 0.0
    %4702 = vmatpush1.msra.mxu0 0.0
    %4703 = vmatprep.subr.mxu0 0.0
    %4704 = vmatpush1.msra.mxu0 0.0
    %4705 = vmatprep.subr.mxu0 0.0
    %4706 = vmatpush1.msra.mxu0 0.0
    %4707 = vmatprep.subr.mxu0 0.0
    %4708 = vmatpush1.msra.mxu0 0.0
    %4709 = vmatprep.subr.mxu0 0.0
    %4710 = vmatpush1.msra.mxu0 0.0
    %4711 = vmatprep.subr.mxu0 0.0
    %4712 = vmatpush1.msra.mxu0 0.0
    %4713 = vmatprep.subr.mxu0 0.0
    %4714 = vmatpush1.msra.mxu0 0.0
    %4715 = vmatprep.subr.mxu0 0.0
    %4716 = vmatpush1.msra.mxu0 0.0
    %4717 = vmatprep.subr.mxu0 0.0
    %4718 = vmatpush1.msra.mxu0 0.0
    %4719 = vmatprep.subr.mxu0 0.0
    %4720 = vmatpush1.msra.mxu0 0.0
    %4721 = vmatprep.subr.mxu0 0.0
    %4722 = vmatpush1.msra.mxu0 0.0
    %4723 = vmatprep.subr.mxu0 0.0
    %4724 = vmatpush1.msra.mxu0 0.0
    %4725 = vmatprep.subr.mxu0 0.0
    %4726 = vmatpush1.msra.mxu0 0.0
    %4727 = vmatprep.subr.mxu0 0.0
    %4728 = vmatpush1.msra.mxu0 0.0
    %4729 = vmatprep.mubr.f32.mxu0 0.0
    %4730 = vmatmul.mubr.f32.gmra.mrb[0].mxu0 %v4645
    %v4731 = vpop.f32.mrb[0].mxu0
    %v4732 = vadd.f32 0.0, %v4731
    %v4733 = vpop.f32.mrb[0].mxu0
    %4734 = vdwg.mxu0
    %v4735 = vadd.f32 %v4572, %v4732
    %s4736 = scalar_lea.vmem %s12, 12
    %v4737 = vld [vmem:[%s4736] sm:$0x3]
    %v4739 = vsel %vm3762, %v4737, 0
    %4741 = vmatprep.subr.mxu0 0.0
    %4742 = vmatpush1.msra.mxu0 %v3760
    %4743 = vmatprep.subr.mxu0 0.0
    %4744 = vmatpush1.msra.mxu0 0.0
    %4745 = vmatprep.subr.mxu0 0.0
    %4746 = vmatpush1.msra.mxu0 0.0
    %4747 = vmatprep.subr.mxu0 0.0
    %4748 = vmatpush1.msra.mxu0 0.0
    %4749 = vmatprep.subr.mxu0 0.0
    %4750 = vmatpush1.msra.mxu0 0.0
    %4751 = vmatprep.subr.mxu0 0.0
    %4752 = vmatpush1.msra.mxu0 0.0
    %4753 = vmatprep.subr.mxu0 0.0
    %4754 = vmatpush1.msra.mxu0 0.0
    %4755 = vmatprep.subr.mxu0 0.0
    %4756 = vmatpush1.msra.mxu0 0.0
    %4757 = vmatprep.subr.mxu0 0.0
    %4758 = vmatpush1.msra.mxu0 0.0
    %4759 = vmatprep.subr.mxu0 0.0
    %4760 = vmatpush1.msra.mxu0 0.0
    %4761 = vmatprep.subr.mxu0 0.0
    %4762 = vmatpush1.msra.mxu0 0.0
    %4763 = vmatprep.subr.mxu0 0.0
    %4764 = vmatpush1.msra.mxu0 0.0
    %4765 = vmatprep.subr.mxu0 0.0
    %4766 = vmatpush1.msra.mxu0 0.0
    %4767 = vmatprep.subr.mxu0 0.0
    %4768 = vmatpush1.msra.mxu0 0.0
    %4769 = vmatprep.subr.mxu0 0.0
    %4770 = vmatpush1.msra.mxu0 0.0
    %4771 = vmatprep.subr.mxu0 0.0
    %4772 = vmatpush1.msra.mxu0 0.0
    %4773 = vmatprep.subr.mxu0 0.0
    %4774 = vmatpush1.msra.mxu0 0.0
    %4775 = vmatprep.subr.mxu0 0.0
    %4776 = vmatpush1.msra.mxu0 0.0
    %4777 = vmatprep.subr.mxu0 0.0
    %4778 = vmatpush1.msra.mxu0 0.0
    %4779 = vmatprep.subr.mxu0 0.0
    %4780 = vmatpush1.msra.mxu0 0.0
    %4781 = vmatprep.subr.mxu0 0.0
    %4782 = vmatpush1.msra.mxu0 0.0
    %4783 = vmatprep.subr.mxu0 0.0
    %4784 = vmatpush1.msra.mxu0 0.0
    %4785 = vmatprep.subr.mxu0 0.0
    %4786 = vmatpush1.msra.mxu0 0.0
    %4787 = vmatprep.subr.mxu0 0.0
    %4788 = vmatpush1.msra.mxu0 0.0
    %4789 = vmatprep.subr.mxu0 0.0
    %4790 = vmatpush1.msra.mxu0 0.0
    %4791 = vmatprep.subr.mxu0 0.0
    %4792 = vmatpush1.msra.mxu0 0.0
    %4793 = vmatprep.subr.mxu0 0.0
    %4794 = vmatpush1.msra.mxu0 0.0
    %4795 = vmatprep.subr.mxu0 0.0
    %4796 = vmatpush1.msra.mxu0 0.0
    %4797 = vmatprep.subr.mxu0 0.0
    %4798 = vmatpush1.msra.mxu0 0.0
    %4799 = vmatprep.subr.mxu0 0.0
    %4800 = vmatpush1.msra.mxu0 0.0
    %4801 = vmatprep.subr.mxu0 0.0
    %4802 = vmatpush1.msra.mxu0 0.0
    %4803 = vmatprep.subr.mxu0 0.0
    %4804 = vmatpush1.msra.mxu0 0.0
    %4805 = vmatprep.mubr.f32.mxu0 0.0
    %4806 = vmatmul.mubr.f32.gmra.mrb[0].mxu0 %v4739
    %v4807 = vpop.f32.mrb[0].mxu0
    %v4808 = vadd.f32 0.0, %v4807
    %v4809 = vpop.f32.mrb[0].mxu0
    %4810 = vdwg.mxu0
    %s4811 = scalar_lea.vmem %s13, 768
    %v4812 = vld [vmem:[%s4811] sm:$0xff]
    %v4813 = vld [vmem:[%s4811 + $0x8] sm:$0xff]
    %v4814 = vld [vmem:[%s4811 + $0x10] sm:$0xff]
    %v4815 = vld [vmem:[%s4811 + $0x18] sm:$0xff]
    %v4816 = vld [vmem:[%s4811 + $0x20] sm:$0xff]
    %v4817 = vld [vmem:[%s4811 + $0x28] sm:$0xff]
    %v4818 = vld [vmem:[%s4811 + $0x30] sm:$0xff]
    %v4819 = vld [vmem:[%s4811 + $0x38] sm:$0xff]
    %v4820 = vld [vmem:[%s4811 + $0x40] sm:$0xff]
    %v4821 = vld [vmem:[%s4811 + $0x48] sm:$0xff]
    %v4822 = vld [vmem:[%s4811 + $0x50] sm:$0xff]
    %v4823 = vld [vmem:[%s4811 + $0x58] sm:$0xff]
    %v4824 = vld [vmem:[%s4811 + $0x60] sm:$0xff]
    %v4825 = vld [vmem:[%s4811 + $0x68] sm:$0xff]
    %v4826 = vld [vmem:[%s4811 + $0x70] sm:$0xff]
    %v4827 = vld [vmem:[%s4811 + $0x78] sm:$0xff]
    %4828 = vmatprep.subr.mxu0 0.0
    %4829 = vmatpush1.msra.mxu0 %v4812
    %4830 = vmatprep.subr.mxu0 0.0
    %4831 = vmatpush1.msra.mxu0 %v4813
    %4832 = vmatprep.subr.mxu0 0.0
    %4833 = vmatpush1.msra.mxu0 %v4814
    %4834 = vmatprep.subr.mxu0 0.0
    %4835 = vmatpush1.msra.mxu0 %v4815
    %4836 = vmatprep.subr.mxu0 0.0
    %4837 = vmatpush1.msra.mxu0 %v4816
    %4838 = vmatprep.subr.mxu0 0.0
    %4839 = vmatpush1.msra.mxu0 %v4817
    %4840 = vmatprep.subr.mxu0 0.0
    %4841 = vmatpush1.msra.mxu0 %v4818
    %4842 = vmatprep.subr.mxu0 0.0
    %4843 = vmatpush1.msra.mxu0 %v4819
    %4844 = vmatprep.subr.mxu0 0.0
    %4845 = vmatpush1.msra.mxu0 %v4820
    %4846 = vmatprep.subr.mxu0 0.0
    %4847 = vmatpush1.msra.mxu0 %v4821
    %4848 = vmatprep.subr.mxu0 0.0
    %4849 = vmatpush1.msra.mxu0 %v4822
    %4850 = vmatprep.subr.mxu0 0.0
    %4851 = vmatpush1.msra.mxu0 %v4823
    %4852 = vmatprep.subr.mxu0 0.0
    %4853 = vmatpush1.msra.mxu0 %v4824
    %4854 = vmatprep.subr.mxu0 0.0
    %4855 = vmatpush1.msra.mxu0 %v4825
    %4856 = vmatprep.subr.mxu0 0.0
    %4857 = vmatpush1.msra.mxu0 %v4826
    %4858 = vmatprep.subr.mxu0 0.0
    %4859 = vmatpush1.msra.mxu0 %v4827
    %4860 = vmatprep.subr.mxu0 0.0
    %4861 = vmatpush1.msra.mxu0 0.0
    %4862 = vmatprep.subr.mxu0 0.0
    %4863 = vmatpush1.msra.mxu0 0.0
    %4864 = vmatprep.subr.mxu0 0.0
    %4865 = vmatpush1.msra.mxu0 0.0
    %4866 = vmatprep.subr.mxu0 0.0
    %4867 = vmatpush1.msra.mxu0 0.0
    %4868 = vmatprep.subr.mxu0 0.0
    %4869 = vmatpush1.msra.mxu0 0.0
    %4870 = vmatprep.subr.mxu0 0.0
    %4871 = vmatpush1.msra.mxu0 0.0
    %4872 = vmatprep.subr.mxu0 0.0
    %4873 = vmatpush1.msra.mxu0 0.0
    %4874 = vmatprep.subr.mxu0 0.0
    %4875 = vmatpush1.msra.mxu0 0.0
    %4876 = vmatprep.subr.mxu0 0.0
    %4877 = vmatpush1.msra.mxu0 0.0
    %4878 = vmatprep.subr.mxu0 0.0
    %4879 = vmatpush1.msra.mxu0 0.0
    %4880 = vmatprep.subr.mxu0 0.0
    %4881 = vmatpush1.msra.mxu0 0.0
    %4882 = vmatprep.subr.mxu0 0.0
    %4883 = vmatpush1.msra.mxu0 0.0
    %4884 = vmatprep.subr.mxu0 0.0
    %4885 = vmatpush1.msra.mxu0 0.0
    %4886 = vmatprep.subr.mxu0 0.0
    %4887 = vmatpush1.msra.mxu0 0.0
    %4888 = vmatprep.subr.mxu0 0.0
    %4889 = vmatpush1.msra.mxu0 0.0
    %4890 = vmatprep.subr.mxu0 0.0
    %4891 = vmatpush1.msra.mxu0 0.0
    %4892 = vmatprep.mubr.f32.mxu0 0.0
    %4893 = vmatmul.mubr.f32.gmra.mrb[0].mxu0 %v4808
    %v4894 = vpop.f32.mrb[0].mxu0
    %v4895 = vadd.f32 0.0, %v4894
    %v4896 = vpop.f32.mrb[0].mxu0
    %4897 = vdwg.mxu0
    %v4898 = vadd.f32 %v4735, %v4895
    %s4899 = scalar_lea.vmem %s12, 14
    %v4900 = vld [vmem:[%s4899] sm:$0x3]
    %v4902 = vsel %vm3762, %v4900, 0
    %4904 = vmatprep.subr.mxu0 0.0
    %4905 = vmatpush1.msra.mxu0 %v3760
    %4906 = vmatprep.subr.mxu0 0.0
    %4907 = vmatpush1.msra.mxu0 0.0
    %4908 = vmatprep.subr.mxu0 0.0
    %4909 = vmatpush1.msra.mxu0 0.0
    %4910 = vmatprep.subr.mxu0 0.0
    %4911 = vmatpush1.msra.mxu0 0.0
    %4912 = vmatprep.subr.mxu0 0.0
    %4913 = vmatpush1.msra.mxu0 0.0
    %4914 = vmatprep.subr.mxu0 0.0
    %4915 = vmatpush1.msra.mxu0 0.0
    %4916 = vmatprep.subr.mxu0 0.0
    %4917 = vmatpush1.msra.mxu0 0.0
    %4918 = vmatprep.subr.mxu0 0.0
    %4919 = vmatpush1.msra.mxu0 0.0
    %4920 = vmatprep.subr.mxu0 0.0
    %4921 = vmatpush1.msra.mxu0 0.0
    %4922 = vmatprep.subr.mxu0 0.0
    %4923 = vmatpush1.msra.mxu0 0.0
    %4924 = vmatprep.subr.mxu0 0.0
    %4925 = vmatpush1.msra.mxu0 0.0
    %4926 = vmatprep.subr.mxu0 0.0
    %4927 = vmatpush1.msra.mxu0 0.0
    %4928 = vmatprep.subr.mxu0 0.0
    %4929 = vmatpush1.msra.mxu0 0.0
    %4930 = vmatprep.subr.mxu0 0.0
    %4931 = vmatpush1.msra.mxu0 0.0
    %4932 = vmatprep.subr.mxu0 0.0
    %4933 = vmatpush1.msra.mxu0 0.0
    %4934 = vmatprep.subr.mxu0 0.0
    %4935 = vmatpush1.msra.mxu0 0.0
    %4936 = vmatprep.subr.mxu0 0.0
    %4937 = vmatpush1.msra.mxu0 0.0
    %4938 = vmatprep.subr.mxu0 0.0
    %4939 = vmatpush1.msra.mxu0 0.0
    %4940 = vmatprep.subr.mxu0 0.0
    %4941 = vmatpush1.msra.mxu0 0.0
    %4942 = vmatprep.subr.mxu0 0.0
    %4943 = vmatpush1.msra.mxu0 0.0
    %4944 = vmatprep.subr.mxu0 0.0
    %4945 = vmatpush1.msra.mxu0 0.0
    %4946 = vmatprep.subr.mxu0 0.0
    %4947 = vmatpush1.msra.mxu0 0.0
    %4948 = vmatprep.subr.mxu0 0.0
    %4949 = vmatpush1.msra.mxu0 0.0
    %4950 = vmatprep.subr.mxu0 0.0
    %4951 = vmatpush1.msra.mxu0 0.0
    %4952 = vmatprep.subr.mxu0 0.0
    %4953 = vmatpush1.msra.mxu0 0.0
    %4954 = vmatprep.subr.mxu0 0.0
    %4955 = vmatpush1.msra.mxu0 0.0
    %4956 = vmatprep.subr.mxu0 0.0
    %4957 = vmatpush1.msra.mxu0 0.0
    %4958 = vmatprep.subr.mxu0 0.0
    %4959 = vmatpush1.msra.mxu0 0.0
    %4960 = vmatprep.subr.mxu0 0.0
    %4961 = vmatpush1.msra.mxu0 0.0
    %4962 = vmatprep.subr.mxu0 0.0
    %4963 = vmatpush1.msra.mxu0 0.0
    %4964 = vmatprep.subr.mxu0 0.0
    %4965 = vmatpush1.msra.mxu0 0.0
    %4966 = vmatprep.subr.mxu0 0.0
    %4967 = vmatpush1.msra.mxu0 0.0
    %4968 = vmatprep.mubr.f32.mxu0 0.0
    %4969 = vmatmul.mubr.f32.gmra.mrb[0].mxu0 %v4902
    %v4970 = vpop.f32.mrb[0].mxu0
    %v4971 = vadd.f32 0.0, %v4970
    %v4972 = vpop.f32.mrb[0].mxu0
    %4973 = vdwg.mxu0
    %s4974 = scalar_lea.vmem %s13, 896
    %v4975 = vld [vmem:[%s4974] sm:$0xff]
    %v4976 = vld [vmem:[%s4974 + $0x8] sm:$0xff]
    %v4977 = vld [vmem:[%s4974 + $0x10] sm:$0xff]
    %v4978 = vld [vmem:[%s4974 + $0x18] sm:$0xff]
    %v4979 = vld [vmem:[%s4974 + $0x20] sm:$0xff]
    %v4980 = vld [vmem:[%s4974 + $0x28] sm:$0xff]
    %v4981 = vld [vmem:[%s4974 + $0x30] sm:$0xff]
    %v4982 = vld [vmem:[%s4974 + $0x38] sm:$0xff]
    %v4983 = vld [vmem:[%s4974 + $0x40] sm:$0xff]
    %v4984 = vld [vmem:[%s4974 + $0x48] sm:$0xff]
    %v4985 = vld [vmem:[%s4974 + $0x50] sm:$0xff]
    %v4986 = vld [vmem:[%s4974 + $0x58] sm:$0xff]
    %v4987 = vld [vmem:[%s4974 + $0x60] sm:$0xff]
    %v4988 = vld [vmem:[%s4974 + $0x68] sm:$0xff]
    %v4989 = vld [vmem:[%s4974 + $0x70] sm:$0xff]
    %v4990 = vld [vmem:[%s4974 + $0x78] sm:$0xff]
    %4991 = vmatprep.subr.mxu0 0.0
    %4992 = vmatpush1.msra.mxu0 %v4975
    %4993 = vmatprep.subr.mxu0 0.0
    %4994 = vmatpush1.msra.mxu0 %v4976
    %4995 = vmatprep.subr.mxu0 0.0
    %4996 = vmatpush1.msra.mxu0 %v4977
    %4997 = vmatprep.subr.mxu0 0.0
    %4998 = vmatpush1.msra.mxu0 %v4978
    %4999 = vmatprep.subr.mxu0 0.0
    %5000 = vmatpush1.msra.mxu0 %v4979
    %5001 = vmatprep.subr.mxu0 0.0
    %5002 = vmatpush1.msra.mxu0 %v4980
    %5003 = vmatprep.subr.mxu0 0.0
    %5004 = vmatpush1.msra.mxu0 %v4981
    %5005 = vmatprep.subr.mxu0 0.0
    %5006 = vmatpush1.msra.mxu0 %v4982
    %5007 = vmatprep.subr.mxu0 0.0
    %5008 = vmatpush1.msra.mxu0 %v4983
    %5009 = vmatprep.subr.mxu0 0.0
    %5010 = vmatpush1.msra.mxu0 %v4984
    %5011 = vmatprep.subr.mxu0 0.0
    %5012 = vmatpush1.msra.mxu0 %v4985
    %5013 = vmatprep.subr.mxu0 0.0
    %5014 = vmatpush1.msra.mxu0 %v4986
    %5015 = vmatprep.subr.mxu0 0.0
    %5016 = vmatpush1.msra.mxu0 %v4987
    %5017 = vmatprep.subr.mxu0 0.0
    %5018 = vmatpush1.msra.mxu0 %v4988
    %5019 = vmatprep.subr.mxu0 0.0
    %5020 = vmatpush1.msra.mxu0 %v4989
    %5021 = vmatprep.subr.mxu0 0.0
    %5022 = vmatpush1.msra.mxu0 %v4990
    %5023 = vmatprep.subr.mxu0 0.0
    %5024 = vmatpush1.msra.mxu0 0.0
    %5025 = vmatprep.subr.mxu0 0.0
    %5026 = vmatpush1.msra.mxu0 0.0
    %5027 = vmatprep.subr.mxu0 0.0
    %5028 = vmatpush1.msra.mxu0 0.0
    %5029 = vmatprep.subr.mxu0 0.0
    %5030 = vmatpush1.msra.mxu0 0.0
    %5031 = vmatprep.subr.mxu0 0.0
    %5032 = vmatpush1.msra.mxu0 0.0
    %5033 = vmatprep.subr.mxu0 0.0
    %5034 = vmatpush1.msra.mxu0 0.0
    %5035 = vmatprep.subr.mxu0 0.0
    %5036 = vmatpush1.msra.mxu0 0.0
    %5037 = vmatprep.subr.mxu0 0.0
    %5038 = vmatpush1.msra.mxu0 0.0
    %5039 = vmatprep.subr.mxu0 0.0
    %5040 = vmatpush1.msra.mxu0 0.0
    %5041 = vmatprep.subr.mxu0 0.0
    %5042 = vmatpush1.msra.mxu0 0.0
    %5043 = vmatprep.subr.mxu0 0.0
    %5044 = vmatpush1.msra.mxu0 0.0
    %5045 = vmatprep.subr.mxu0 0.0
    %5046 = vmatpush1.msra.mxu0 0.0
    %5047 = vmatprep.subr.mxu0 0.0
    %5048 = vmatpush1.msra.mxu0 0.0
    %5049 = vmatprep.subr.mxu0 0.0
    %5050 = vmatpush1.msra.mxu0 0.0
    %5051 = vmatprep.subr.mxu0 0.0
    %5052 = vmatpush1.msra.mxu0 0.0
    %5053 = vmatprep.subr.mxu0 0.0
    %5054 = vmatpush1.msra.mxu0 0.0
    %5055 = vmatprep.mubr.f32.mxu0 0.0
    %5056 = vmatmul.mubr.f32.gmra.mrb[0].mxu0 %v4971
    %v5057 = vpop.f32.mrb[0].mxu0
    %v5058 = vadd.f32 0.0, %v5057
    %v5059 = vpop.f32.mrb[0].mxu0
    %5060 = vdwg.mxu0
    %v5061 = vadd.f32 %v4898, %v5058
    %s5062 = scalar_lea.vmem %s12, 16
    %v5063 = vld [vmem:[%s5062] sm:$0x3]
    %v5065 = vsel %vm3762, %v5063, 0
    %5067 = vmatprep.subr.mxu0 0.0
    %5068 = vmatpush1.msra.mxu0 %v3760
    %5069 = vmatprep.subr.mxu0 0.0
    %5070 = vmatpush1.msra.mxu0 0.0
    %5071 = vmatprep.subr.mxu0 0.0
    %5072 = vmatpush1.msra.mxu0 0.0
    %5073 = vmatprep.subr.mxu0 0.0
    %5074 = vmatpush1.msra.mxu0 0.0
    %5075 = vmatprep.subr.mxu0 0.0
    %5076 = vmatpush1.msra.mxu0 0.0
    %5077 = vmatprep.subr.mxu0 0.0
    %5078 = vmatpush1.msra.mxu0 0.0
    %5079 = vmatprep.subr.mxu0 0.0
    %5080 = vmatpush1.msra.mxu0 0.0
    %5081 = vmatprep.subr.mxu0 0.0
    %5082 = vmatpush1.msra.mxu0 0.0
    %5083 = vmatprep.subr.mxu0 0.0
    %5084 = vmatpush1.msra.mxu0 0.0
    %5085 = vmatprep.subr.mxu0 0.0
    %5086 = vmatpush1.msra.mxu0 0.0
    %5087 = vmatprep.subr.mxu0 0.0
    %5088 = vmatpush1.msra.mxu0 0.0
    %5089 = vmatprep.subr.mxu0 0.0
    %5090 = vmatpush1.msra.mxu0 0.0
    %5091 = vmatprep.subr.mxu0 0.0
    %5092 = vmatpush1.msra.mxu0 0.0
    %5093 = vmatprep.subr.mxu0 0.0
    %5094 = vmatpush1.msra.mxu0 0.0
    %5095 = vmatprep.subr.mxu0 0.0
    %5096 = vmatpush1.msra.mxu0 0.0
    %5097 = vmatprep.subr.mxu0 0.0
    %5098 = vmatpush1.msra.mxu0 0.0
    %5099 = vmatprep.subr.mxu0 0.0
    %5100 = vmatpush1.msra.mxu0 0.0
    %5101 = vmatprep.subr.mxu0 0.0
    %5102 = vmatpush1.msra.mxu0 0.0
    %5103 = vmatprep.subr.mxu0 0.0
    %5104 = vmatpush1.msra.mxu0 0.0
    %5105 = vmatprep.subr.mxu0 0.0
    %5106 = vmatpush1.msra.mxu0 0.0
    %5107 = vmatprep.subr.mxu0 0.0
    %5108 = vmatpush1.msra.mxu0 0.0
    %5109 = vmatprep.subr.mxu0 0.0
    %5110 = vmatpush1.msra.mxu0 0.0
    %5111 = vmatprep.subr.mxu0 0.0
    %5112 = vmatpush1.msra.mxu0 0.0
    %5113 = vmatprep.subr.mxu0 0.0
    %5114 = vmatpush1.msra.mxu0 0.0
    %5115 = vmatprep.subr.mxu0 0.0
    %5116 = vmatpush1.msra.mxu0 0.0
    %5117 = vmatprep.subr.mxu0 0.0
    %5118 = vmatpush1.msra.mxu0 0.0
    %5119 = vmatprep.subr.mxu0 0.0
    %5120 = vmatpush1.msra.mxu0 0.0
    %5121 = vmatprep.subr.mxu0 0.0
    %5122 = vmatpush1.msra.mxu0 0.0
    %5123 = vmatprep.subr.mxu0 0.0
    %5124 = vmatpush1.msra.mxu0 0.0
    %5125 = vmatprep.subr.mxu0 0.0
    %5126 = vmatpush1.msra.mxu0 0.0
    %5127 = vmatprep.subr.mxu0 0.0
    %5128 = vmatpush1.msra.mxu0 0.0
    %5129 = vmatprep.subr.mxu0 0.0
    %5130 = vmatpush1.msra.mxu0 0.0
    %5131 = vmatprep.mubr.f32.mxu0 0.0
    %5132 = vmatmul.mubr.f32.gmra.mrb[0].mxu0 %v5065
    %v5133 = vpop.f32.mrb[0].mxu0
    %v5134 = vadd.f32 0.0, %v5133
    %v5135 = vpop.f32.mrb[0].mxu0
    %5136 = vdwg.mxu0
    %s5137 = scalar_lea.vmem %s13, 1024
    %v5138 = vld [vmem:[%s5137] sm:$0xff]
    %v5139 = vld [vmem:[%s5137 + $0x8] sm:$0xff]
    %v5140 = vld [vmem:[%s5137 + $0x10] sm:$0xff]
    %v5141 = vld [vmem:[%s5137 + $0x18] sm:$0xff]
    %v5142 = vld [vmem:[%s5137 + $0x20] sm:$0xff]
    %v5143 = vld [vmem:[%s5137 + $0x28] sm:$0xff]
    %v5144 = vld [vmem:[%s5137 + $0x30] sm:$0xff]
    %v5145 = vld [vmem:[%s5137 + $0x38] sm:$0xff]
    %v5146 = vld [vmem:[%s5137 + $0x40] sm:$0xff]
    %v5147 = vld [vmem:[%s5137 + $0x48] sm:$0xff]
    %v5148 = vld [vmem:[%s5137 + $0x50] sm:$0xff]
    %v5149 = vld [vmem:[%s5137 + $0x58] sm:$0xff]
    %v5150 = vld [vmem:[%s5137 + $0x60] sm:$0xff]
    %v5151 = vld [vmem:[%s5137 + $0x68] sm:$0xff]
    %v5152 = vld [vmem:[%s5137 + $0x70] sm:$0xff]
    %v5153 = vld [vmem:[%s5137 + $0x78] sm:$0xff]
    %5154 = vmatprep.subr.mxu0 0.0
    %5155 = vmatpush1.msra.mxu0 %v5138
    %5156 = vmatprep.subr.mxu0 0.0
    %5157 = vmatpush1.msra.mxu0 %v5139
    %5158 = vmatprep.subr.mxu0 0.0
    %5159 = vmatpush1.msra.mxu0 %v5140
    %5160 = vmatprep.subr.mxu0 0.0
    %5161 = vmatpush1.msra.mxu0 %v5141
    %5162 = vmatprep.subr.mxu0 0.0
    %5163 = vmatpush1.msra.mxu0 %v5142
    %5164 = vmatprep.subr.mxu0 0.0
    %5165 = vmatpush1.msra.mxu0 %v5143
    %5166 = vmatprep.subr.mxu0 0.0
    %5167 = vmatpush1.msra.mxu0 %v5144
    %5168 = vmatprep.subr.mxu0 0.0
    %5169 = vmatpush1.msra.mxu0 %v5145
    %5170 = vmatprep.subr.mxu0 0.0
    %5171 = vmatpush1.msra.mxu0 %v5146
    %5172 = vmatprep.subr.mxu0 0.0
    %5173 = vmatpush1.msra.mxu0 %v5147
    %5174 = vmatprep.subr.mxu0 0.0
    %5175 = vmatpush1.msra.mxu0 %v5148
    %5176 = vmatprep.subr.mxu0 0.0
    %5177 = vmatpush1.msra.mxu0 %v5149
    %5178 = vmatprep.subr.mxu0 0.0
    %5179 = vmatpush1.msra.mxu0 %v5150
    %5180 = vmatprep.subr.mxu0 0.0
    %5181 = vmatpush1.msra.mxu0 %v5151
    %5182 = vmatprep.subr.mxu0 0.0
    %5183 = vmatpush1.msra.mxu0 %v5152
    %5184 = vmatprep.subr.mxu0 0.0
    %5185 = vmatpush1.msra.mxu0 %v5153
    %5186 = vmatprep.subr.mxu0 0.0
    %5187 = vmatpush1.msra.mxu0 0.0
    %5188 = vmatprep.subr.mxu0 0.0
    %5189 = vmatpush1.msra.mxu0 0.0
    %5190 = vmatprep.subr.mxu0 0.0
    %5191 = vmatpush1.msra.mxu0 0.0
    %5192 = vmatprep.subr.mxu0 0.0
    %5193 = vmatpush1.msra.mxu0 0.0
    %5194 = vmatprep.subr.mxu0 0.0
    %5195 = vmatpush1.msra.mxu0 0.0
    %5196 = vmatprep.subr.mxu0 0.0
    %5197 = vmatpush1.msra.mxu0 0.0
    %5198 = vmatprep.subr.mxu0 0.0
    %5199 = vmatpush1.msra.mxu0 0.0
    %5200 = vmatprep.subr.mxu0 0.0
    %5201 = vmatpush1.msra.mxu0 0.0
    %5202 = vmatprep.subr.mxu0 0.0
    %5203 = vmatpush1.msra.mxu0 0.0
    %5204 = vmatprep.subr.mxu0 0.0
    %5205 = vmatpush1.msra.mxu0 0.0
    %5206 = vmatprep.subr.mxu0 0.0
    %5207 = vmatpush1.msra.mxu0 0.0
    %5208 = vmatprep.subr.mxu0 0.0
    %5209 = vmatpush1.msra.mxu0 0.0
    %5210 = vmatprep.subr.mxu0 0.0
    %5211 = vmatpush1.msra.mxu0 0.0
    %5212 = vmatprep.subr.mxu0 0.0
    %5213 = vmatpush1.msra.mxu0 0.0
    %5214 = vmatprep.subr.mxu0 0.0
    %5215 = vmatpush1.msra.mxu0 0.0
    %5216 = vmatprep.subr.mxu0 0.0
    %5217 = vmatpush1.msra.mxu0 0.0
    %5218 = vmatprep.mubr.f32.mxu0 0.0
    %5219 = vmatmul.mubr.f32.gmra.mrb[0].mxu0 %v5134
    %v5220 = vpop.f32.mrb[0].mxu0
    %v5221 = vadd.f32 0.0, %v5220
    %v5222 = vpop.f32.mrb[0].mxu0
    %5223 = vdwg.mxu0
    %v5224 = vadd.f32 %v5061, %v5221
    %v5225 = vld [vmem:[%s14] sm:$0x1]
    %v5226 = vld [vmem:[%s15] sm:$0x1]
    %vm5227 = vcmask 1041408
    %v5228 = vsel %vm5227, %v5224, 0.0
    %v5229 = vrot.slane %v5228, 4
    %v5230 = vadd.f32 %v5228, %v5229
    %v5231 = vrot.slane %v5230, 2
    %v5232 = vadd.f32 %v5230, %v5231
    %v5233 = vrot.slane %v5232, 1
    %v5234 = vadd.f32 %v5232, %v5233
    %v5235 = vmul.f32 %v5234, 0.5
    %v5236 = vmul.f32 %v5224, %v5224
    %v5237 = vsel %vm5227, %v5236, 0.0
    %v5238 = vrot.slane %v5237, 4
    %v5239 = vadd.f32 %v5237, %v5238
    %v5240 = vrot.slane %v5239, 2
    %v5241 = vadd.f32 %v5239, %v5240
    %v5242 = vrot.slane %v5241, 1
    %v5243 = vadd.f32 %v5241, %v5242
    %v5244 = vmul.f32 %v5243, 0.5
    %v5245 = vmul.f32 %v5235, %v5235
    %v5246 = vsub.f32 %v5244, %v5245
    %v5247 = vmax.f32 %v5246, 0.0
    %v5248 = vsub.f32 %v5224, %v5235
    %v5249 = vadd.f32 %v5247, 1e-05
    %v5250 = vrsqrt.pop %v5249
    %v5251 = vmul.f32 %v5248, %v5250
    %v5253 = vlaneseq
    %v5254 = vshrl.u32 %v5253, 7
    %v5255 = vsub.s32 0, %v5254
    %v5256 = vrot.slane %v5225, %v5255
    %v5258 = vmul.f32 %v5256, %v5251
    %v5260 = vlaneseq
    %v5261 = vshrl.u32 %v5260, 7
    %v5262 = vsub.s32 0, %v5261
    %v5263 = vrot.slane %v5226, %v5262
    %v5265 = vadd.f32 %v5258, %v5263
    %v5266 = vmax.f32 %v5265, 0.0
    %5267 = vst [vmem:[#allocation10] sm:$0x3] %v5266
    // Predicated region
    $region82: #{encoder_forward.1} parent=1 // pred_check
      _
    $region83: #{encoder_forward.1} parent=1 // pred_check_branch
      %5269 = sbr.rel (0) target = $region85
    $region84: #{encoder_forward.1} parent=1 // pred_region
      %s5271 = ssub.s32 32, 32
      %5272 = vsyncadd [#allocation4], %s5271
      %s5274 = sshll.u32 [#allocation10], 4
      %s5275 = int_to_ptr.vmem [resolvable:$true] %s5274
      %5277 = dma.vmem_to_hbm [thread:$0]  %s5275, 32, %s16, [#allocation4]
    $region85: #{encoder_forward.1} parent=1 // pred_fallthru
      _
    // Predicated region
    $region86: #{encoder_forward.1} parent=1 // pred_check
      _
    $region87: #{encoder_forward.1} parent=1 // pred_check_branch
      %5279 = sbr.rel (0) target = $region89
    $region88: #{encoder_forward.1} parent=1 // pred_region
      %5280 = dma.done [#allocation4], 32
    $region89: #{encoder_forward.1} parent=1 // pred_fallthru
      _
    %5281 = vsyncpa [#allocation3], 1
    %5282 = vsyncpa [#allocation6], 1
    %5283 = vsyncpa [#allocation9], 1
    %5284 = vsyncpa [#allocation4], 1

</llo_original>
